<compile_context>
chip_gen: v6e
topology: v6e:2x2x1
jax: 0.10.0
libtpu: 0.0.40
codegen_flags: <defaults>
</compile_context>

<pallas_src>
import math

import jax
import jax.numpy as jnp
from jax import lax
from jax.experimental import pallas as pl
from jax.experimental.pallas import tpu as pltpu

D_MODEL = 512              # policy hidden size
N_LAYERS = 2
TAU = 5                    # tau_historical_cells
N_ACTIONS = 6
ACT_EMB = 64
VIS_TOKENS = 49
IN_FEATS = VIS_TOKENS * ACT_EMB + ACT_EMB   # 3200 = LSTM input size
K_CAT = IN_FEATS + D_MODEL                  # 3712 = [x(3200) ++ h0(512)]
GATES = 4 * D_MODEL                         # 2048
NBLK = 8                                    # gate-column blocks (pipelining)
BLK = GATES // NBLK                         # 256 lanes per block
HEAD_PAD = 128                              # lane-dense padded head width


# --------------------------------------------------------------------------
# Single fused kernel.
#   grid steps j = 0..NBLK-1:
#     g0[:, blk_j]  = b0[:, blk_j] + [x, h0] @ [W_ih0 ; W_hh0][:, blk_j]
#     g1p[:, blk_j] = b1[:, blk_j] + h1      @ W_hh1[:, blk_j]
#   epilogue (j == NBLK-1):
#     layer-0 forget-attn LSTM cell, W_ih1 GEMV, layer-1 cell, packed heads.
# --------------------------------------------------------------------------
def _fused_policy_kernel(x_ref, wcat_ref, h1in_ref, whh1_ref, b0_ref, b1_ref,
                         h_ref, c_ref, hist_ref, pe_ref,
                         wih1_ref, whead_ref, bhead_ref,
                         heads_ref, hnew_ref, cnew_ref,
                         g0_acc, g1p_acc):
    j = pl.program_id(0)

    # ---- per-block gate GEMVs (the streamed weight blocks live here) -------
    g0_blk = b0_ref[...] + jnp.dot(
        x_ref[...], wcat_ref[...], preferred_element_type=jnp.float32)
    g1p_blk = b1_ref[...] + jnp.dot(
        h1in_ref[...], whh1_ref[...], preferred_element_type=jnp.float32)

    # static-slice stores guarded by pl.when (no dynamic minor-dim offsets)
    for k in range(NBLK):
        @pl.when(j == k)
        def _(k=k):
            g0_acc[:, k * BLK:(k + 1) * BLK] = g0_blk
            g1p_acc[:, k * BLK:(k + 1) * BLK] = g1p_blk

    # ---- epilogue: forget-attention LSTM step + packed actor/critic head ---
    @pl.when(j == NBLK - 1)
    def _():
        H = D_MODEL
        inv_sqrt_d = 1.0 / math.sqrt(float(H))
        pe = pe_ref[...]                                     # (TAU, H)

        def forget_attention(h_prev, hist_l):
            scores = lax.dot_general(h_prev, hist_l, (((1,), (1,)), ((), ())),
                                     preferred_element_type=jnp.float32)
            scores = scores * inv_sqrt_d                     # (1, TAU)
            scores = scores - jnp.max(scores, axis=-1, keepdims=True)
            e = jnp.exp(scores)
            attn = e * pl.reciprocal(jnp.sum(e, axis=-1, keepdims=True),
                                     approx=True)
            return jnp.dot(attn, hist_l, preferred_element_type=jnp.float32)

        def lstm_cell(gates, h_prev, c_prev, hist_l):
            i = jax.nn.sigmoid(gates[:, 0 * H:1 * H])
            f = jax.nn.sigmoid(gates[:, 1 * H:2 * H])
            g = jnp.tanh(gates[:, 2 * H:3 * H])
            o = jax.nn.sigmoid(gates[:, 3 * H:4 * H])
            c_hist = forget_attention(h_prev, hist_l)
            c_new = f * (c_prev + c_hist) + i * g
            h_new = o * jnp.tanh(c_new)
            return h_new, c_new

        # ----- layer 0 (gates fully accumulated across the grid) -----
        h0 = h_ref[0:1, :]
        c0 = c_ref[0:1, :]
        h0_new, c0_new = lstm_cell(g0_acc[...], h0, c0, hist_ref[0] + pe)

        # ----- layer 1 (W_ih1 was resident since the prologue) -----
        gates1 = g1p_acc[...] + jnp.dot(
            h0_new.astype(jnp.bfloat16), wih1_ref[...],
            preferred_element_type=jnp.float32)
        h1 = h_ref[1:2, :]
        c1 = c_ref[1:2, :]
        h1_new, c1_new = lstm_cell(gates1, h1, c1, hist_ref[1] + pe)

        # ----- folded actor/critic head, lane-dense packed:
        # heads[:, 0:6] = actor logits, heads[:, 6] = critic value
        heads_ref[...] = jnp.dot(
            h1_new.astype(jnp.bfloat16), whead_ref[...],
            preferred_element_type=jnp.float32) + bhead_ref[...]

        hnew_ref[0:1, :] = h0_new
        hnew_ref[1:2, :] = h1_new
        cnew_ref[0:1, :] = c0_new
        cnew_ref[1:2, :] = c1_new


def fused_policy_step(x_cat, h1_bf16, h, c, hist, pe_slice, p):
    const2 = lambda j: (0, 0)
    const3 = lambda j: (0, 0, 0)
    colblk = lambda j: (0, j)
    out_shape = (
        jax.ShapeDtypeStruct((1, HEAD_PAD), jnp.float32),          # packed heads
        jax.ShapeDtypeStruct((N_LAYERS, D_MODEL), jnp.float32),    # h_new
        jax.ShapeDtypeStruct((N_LAYERS, D_MODEL), jnp.float32),    # c_new
    )
    return pl.pallas_call(
        _fused_policy_kernel,
        out_shape=out_shape,
        grid_spec=pltpu.PrefetchScalarGridSpec(
            num_scalar_prefetch=0,
            grid=(NBLK,),
            in_specs=[
                pl.BlockSpec((1, K_CAT), const2),                 # x_cat (bf16)
                pl.BlockSpec((K_CAT, BLK), colblk),               # [Wih0;Whh0]
                pl.BlockSpec((1, D_MODEL), const2),               # h1 (bf16)
                pl.BlockSpec((D_MODEL, BLK), colblk),             # W_hh1 block
                pl.BlockSpec((1, BLK), colblk),                   # b0 block
                pl.BlockSpec((1, BLK), colblk),                   # b1 block
                pl.BlockSpec((N_LAYERS, D_MODEL), const2),        # h
                pl.BlockSpec((N_LAYERS, D_MODEL), const2),        # c
                pl.BlockSpec((N_LAYERS, TAU, D_MODEL), const3),   # hist
                pl.BlockSpec((TAU, D_MODEL), const2),             # pe slice
                pl.BlockSpec((D_MODEL, GATES), const2),           # W_ih1 resident
                pl.BlockSpec((D_MODEL, HEAD_PAD), const2),        # packed head W
                pl.BlockSpec((1, HEAD_PAD), const2),              # packed head b
            ],
            out_specs=(
                pl.BlockSpec((1, HEAD_PAD), const2),
                pl.BlockSpec((N_LAYERS, D_MODEL), const2),
                pl.BlockSpec((N_LAYERS, D_MODEL), const2),
            ),
            scratch_shapes=[pltpu.VMEM((1, GATES), jnp.float32),   # g0 acc
                            pltpu.VMEM((1, GATES), jnp.float32)],  # g1p acc
        ),
        compiler_params=pltpu.CompilerParams(
            # sequential grid: the epilogue depends on every column block.
            dimension_semantics=("arbitrary",)),
    )(x_cat, p["w_cat0"], h1_bf16, p["w_hh1"], p["b0"], p["b1"],
      h, c, hist, pe_slice, p["w_ih1"], p["w_head"], p["b_head"])


# --------------------------------------------------------------------------
# Parameter / buffer construction (deterministic, PyTorch-style fan-in init)
# --------------------------------------------------------------------------
def _uniform(key, shape, fan_in):
    k = 1.0 / math.sqrt(float(fan_in))
    return jax.random.uniform(key, shape, jnp.float32, minval=-k, maxval=k)


def make_params(seed=42):
    keys = jax.random.split(jax.random.PRNGKey(seed), 16)

    # ForgetAttnLSTM weights (PyTorch LSTM init, biases zeroed by
    # init_policy_bias_as_zero; single b per layer suffices since b_ih=b_hh=0).
    w_ih0 = _uniform(keys[2], (IN_FEATS, GATES), D_MODEL)
    w_hh0 = _uniform(keys[3], (D_MODEL, GATES), D_MODEL)
    w_ih1 = _uniform(keys[4], (D_MODEL, GATES), D_MODEL)
    w_hh1 = _uniform(keys[5], (D_MODEL, GATES), D_MODEL)

    # actor_linear: Linear(512,3) -> Linear(3,6) (no activation between ⇒ fold)
    # critic_linear: Linear(512,1)
    wa1 = _uniform(keys[6], (D_MODEL, N_ACTIONS // 2), D_MODEL)
    ba1 = _uniform(keys[7], (N_ACTIONS // 2,), D_MODEL)
    wa2 = _uniform(keys[8], (N_ACTIONS // 2, N_ACTIONS), N_ACTIONS // 2)
    ba2 = _uniform(keys[9], (N_ACTIONS,), N_ACTIONS // 2)
    wc = _uniform(keys[10], (D_MODEL, 1), D_MODEL)
    bc = _uniform(keys[11], (1,), D_MODEL)

    w_actor_eff = wa1 @ wa2                         # (512, 6)
    b_actor_eff = ba1 @ wa2 + ba2                   # (6,)

    # Pack heads lane-dense into a single (512, 128) bf16 matrix:
    # cols 0..5 = folded actor, col 6 = critic.
    w_head = jnp.zeros((D_MODEL, HEAD_PAD), jnp.float32)
    w_head = w_head.at[:, 0:N_ACTIONS].set(w_actor_eff).at[:, N_ACTIONS:N_ACTIONS + 1].set(wc)
    b_head = jnp.zeros((1, HEAD_PAD), jnp.float32)
    b_head = b_head.at[0, 0:N_ACTIONS].set(b_actor_eff).at[0, N_ACTIONS].set(bc[0])

    return {
        # action_embed_linear: Linear(6, 64) + ReLU (stays fp32, computed in jnp)
        "w_act": _uniform(keys[0], (N_ACTIONS, ACT_EMB), N_ACTIONS),
        "b_act": _uniform(keys[1], (1, ACT_EMB), N_ACTIONS),
        # big weights in bfloat16 (HBM-bound GEMV → bytes are everything)
        "w_cat0": jnp.concatenate([w_ih0, w_hh0], axis=0).astype(jnp.bfloat16),
        "w_ih1": w_ih1.astype(jnp.bfloat16),
        "w_hh1": w_hh1.astype(jnp.bfloat16),
        "b0": jnp.zeros((1, GATES), jnp.float32),
        "b1": jnp.zeros((1, GATES), jnp.float32),
        "w_head": w_head.astype(jnp.bfloat16),
        "b_head": b_head,
    }


def positional_encoding(max_len=1000, d_model=D_MODEL):
    pos = jnp.arange(max_len, dtype=jnp.float32)[:, None]
    div = jnp.exp(jnp.arange(0, d_model, 2, dtype=jnp.float32)
                  * (-math.log(10000.0) / d_model))
    pe = jnp.zeros((max_len, d_model), jnp.float32)
    pe = pe.at[:, 0::2].set(jnp.sin(pos * div))
    pe = pe.at[:, 1::2].set(jnp.cos(pos * div))
    return pe


# --------------------------------------------------------------------------
# Full forward pass (functional; historical_cells carried explicitly with the
# lane-friendly layout (N_LAYERS, TAU, D_MODEL)).  n_steps is static.
# --------------------------------------------------------------------------
def _navigation_policy_step(params, pe_table, visual_representation,
                            last_action, policy_h, policy_c,
                            historical_cells, *, n_steps):
    # n_steps == 0 -> reset historical cells (torch buffer re-init).
    # (The n_steps % train_num_steps detach() is a training-only no-op here.)
    if n_steps == 0:
        historical_cells = jnp.zeros((N_LAYERS, TAU, D_MODEL), jnp.float32)

    # --- action embedding: tiny, plain jnp (pallas_call overhead > work) -----
    act_emb = jax.nn.relu(
        jnp.dot(last_action, params["w_act"]) + params["b_act"])      # (1, 64)

    h = policy_h.reshape(N_LAYERS, D_MODEL)
    c = policy_c.reshape(N_LAYERS, D_MODEL)

    # --- policy input: [flattened visual ++ action_emb ++ h0] ---------------
    embedding = jnp.concatenate(
        [visual_representation.reshape(1, VIS_TOKENS * ACT_EMB), act_emb],
        axis=1)                                                        # (1, 3200)
    x_cat = jnp.concatenate([embedding, h[0:1, :]], axis=1).astype(jnp.bfloat16)
    h1_bf16 = h[1:2, :].astype(jnp.bfloat16)

    # --- temporal embedding slice (add_temporal_embedding=True) -------------
    lo = max(n_steps - TAU, 0)
    hi = max(n_steps, TAU)
    pe_slice = pe_table[lo:hi]                                         # (TAU, 512)

    # --- single fused Pallas kernel: gate GEMVs + forget-attn LSTM + heads ---
    heads, h_new, c_new = fused_policy_step(x_cat, h1_bf16, h, c,
                                            historical_cells, pe_slice, params)

    actor_out = heads[:, 0:N_ACTIONS]                                  # (1, 6)
    critic_out = heads[:, N_ACTIONS:N_ACTIONS + 1]                     # (1, 1)
    state_rep = h_new[1:2, :]                                          # (1, 512)

    # --- historical cells shift-and-append; the reference stores
    # hidden_state[0] (the hidden states h_n), not the cell states. -----------
    historical_cells = jnp.concatenate(
        [historical_cells[:, 1:, :], h_new[:, None, :]], axis=1)

    return {
        "actor_output": actor_out,
        "critic_output": critic_out,
        "policy_hidden_states": (h_new.reshape(N_LAYERS, 1, D_MODEL),
                                 c_new.reshape(N_LAYERS, 1, D_MODEL)),
        "state_representation": state_rep,
        "historical_cells": historical_cells,       # (N_LAYERS, TAU, D_MODEL)
    }


navigation_policy_forward = jax.jit(_navigation_policy_step,
                                    static_argnames=("n_steps",))


# --------------------------------------------------------------------------
if __name__ == "__main__":
    params = make_params(seed=42)
    pe_table = positional_encoding(max_len=1000, d_model=D_MODEL)

    key = jax.random.PRNGKey(0)
    k1, k2, k3, k4 = jax.random.split(key, 4)
    visual_representation = jax.random.normal(k1, (1, VIS_TOKENS, ACT_EMB),
                                              jnp.float32)
    last_action = jax.nn.softmax(jax.random.normal(k2, (1, N_ACTIONS),
                                                   jnp.float32), axis=-1)
    policy_h = 0.1 * jax.random.normal(k3, (N_LAYERS, 1, D_MODEL), jnp.float32)
    policy_c = 0.1 * jax.random.normal(k4, (N_LAYERS, 1, D_MODEL), jnp.float32)
    historical_cells = jnp.zeros((N_LAYERS, TAU, D_MODEL), jnp.float32)

    # step 0 (resets historical cells)
    out = navigation_policy_forward(params, pe_table, visual_representation,
                                    last_action, policy_h, policy_c,
                                    historical_cells, n_steps=0)
    jax.block_until_ready(out)

    # step 1 (carries state / historical cells forward)
    h_next, c_next = out["policy_hidden_states"]
    next_action = jax.nn.softmax(out["actor_output"], axis=-1)
    out = navigation_policy_forward(params, pe_table, visual_representation,
                                    next_action, h_next, c_next,
                                    out["historical_cells"], n_steps=1)
    jax.block_until_ready(out)

    assert out["actor_output"].shape == (1, N_ACTIONS)
    assert out["critic_output"].shape == (1, 1)
    assert out["state_representation"].shape == (1, D_MODEL)
    assert out["policy_hidden_states"][0].shape == (N_LAYERS, 1, D_MODEL)
    assert out["policy_hidden_states"][1].shape == (N_LAYERS, 1, D_MODEL)
    assert out["historical_cells"].shape == (N_LAYERS, TAU, D_MODEL)
    assert all(bool(jnp.all(jnp.isfinite(v))) for v in
               [out["actor_output"], out["critic_output"],
                out["state_representation"], out["historical_cells"]])
    print("KERNEL_OK")
</pallas_src>

<mosaic_0001>
module attributes {stable_mosaic.version = 11 : i64} {
  func.func @_fused_policy_kernel(%arg0: i32, %arg1: memref<1x3712xbf16, #tpu.memory_space<vmem>>, %arg2: memref<3712x256xbf16, #tpu.memory_space<vmem>>, %arg3: memref<1x512xbf16, #tpu.memory_space<vmem>>, %arg4: memref<512x256xbf16, #tpu.memory_space<vmem>>, %arg5: memref<1x256xf32, #tpu.memory_space<vmem>>, %arg6: memref<1x256xf32, #tpu.memory_space<vmem>>, %arg7: memref<2x512xf32, #tpu.memory_space<vmem>>, %arg8: memref<2x512xf32, #tpu.memory_space<vmem>>, %arg9: memref<2x5x512xf32, #tpu.memory_space<vmem>>, %arg10: memref<5x512xf32, #tpu.memory_space<vmem>>, %arg11: memref<512x2048xbf16, #tpu.memory_space<vmem>>, %arg12: memref<512x128xbf16, #tpu.memory_space<vmem>>, %arg13: memref<1x128xf32, #tpu.memory_space<vmem>>, %arg14: memref<1x128xf32, #tpu.memory_space<vmem>>, %arg15: memref<2x512xf32, #tpu.memory_space<vmem>>, %arg16: memref<2x512xf32, #tpu.memory_space<vmem>>, %arg17: memref<1x2048xf32, #tpu.memory_space<vmem>>, %arg18: memref<1x2048xf32, #tpu.memory_space<vmem>>) attributes {dimension_semantics = [#tpu.dimension_semantics<arbitrary>], iteration_bounds = array<i64: 8>, scalar_prefetch = 0 : i64, scratch_operands = 2 : i64, tpu.core_type = #tpu.core_type<tc>, window_params = [{pipeline_mode = #tpu.pipeline_mode<synchronous>, transform_indices = @transform_0, window_bounds = array<i64: 1, 3712>}, {transform_indices = @transform_1, window_bounds = array<i64: 3712, 256>}, {pipeline_mode = #tpu.pipeline_mode<synchronous>, transform_indices = @transform_2, window_bounds = array<i64: 1, 512>}, {transform_indices = @transform_3, window_bounds = array<i64: 512, 256>}, {transform_indices = @transform_4, window_bounds = array<i64: 1, 256>}, {transform_indices = @transform_5, window_bounds = array<i64: 1, 256>}, {pipeline_mode = #tpu.pipeline_mode<synchronous>, transform_indices = @transform_6, window_bounds = array<i64: 2, 512>}, {pipeline_mode = #tpu.pipeline_mode<synchronous>, transform_indices = @transform_7, window_bounds = array<i64: 2, 512>}, {pipeline_mode = #tpu.pipeline_mode<synchronous>, transform_indices = @transform_8, window_bounds = array<i64: 2, 5, 512>}, {pipeline_mode = #tpu.pipeline_mode<synchronous>, transform_indices = @transform_9, window_bounds = array<i64: 5, 512>}, {pipeline_mode = #tpu.pipeline_mode<synchronous>, transform_indices = @transform_10, window_bounds = array<i64: 512, 2048>}, {pipeline_mode = #tpu.pipeline_mode<synchronous>, transform_indices = @transform_11, window_bounds = array<i64: 512, 128>}, {pipeline_mode = #tpu.pipeline_mode<synchronous>, transform_indices = @transform_12, window_bounds = array<i64: 1, 128>}, {pipeline_mode = #tpu.pipeline_mode<synchronous>, transform_indices = @transform_13, window_bounds = array<i64: 1, 128>}, {pipeline_mode = #tpu.pipeline_mode<synchronous>, transform_indices = @transform_14, window_bounds = array<i64: 2, 512>}, {pipeline_mode = #tpu.pipeline_mode<synchronous>, transform_indices = @transform_15, window_bounds = array<i64: 2, 512>}]} {
    %c0 = arith.constant 0 : index
    %c0_0 = arith.constant 0 : index
    %0 = vector.load %arg5[%c0, %c0_0] : memref<1x256xf32, #tpu.memory_space<vmem>>, vector<1x256xf32>
    %c0_1 = arith.constant 0 : index
    %c0_2 = arith.constant 0 : index
    %1 = vector.load %arg1[%c0_1, %c0_2] : memref<1x3712xbf16, #tpu.memory_space<vmem>>, vector<1x3712xbf16>
    %c0_3 = arith.constant 0 : index
    %c0_4 = arith.constant 0 : index
    %2 = vector.load %arg2[%c0_3, %c0_4] : memref<3712x256xbf16, #tpu.memory_space<vmem>>, vector<3712x256xbf16>
    %cst = arith.constant dense<0.000000e+00> : vector<1x256xf32>
    %3 = tpu.matmul %1, %2, %cst {dimension_numbers = #tpu.dot_dimension_numbers<[1], [0], [0], [1], [0, 0, 1, 1], [], []>} : vector<1x3712xbf16>, vector<3712x256xbf16>, vector<1x256xf32> -> vector<1x256xf32>
    %4 = arith.addf %0, %3 : vector<1x256xf32>
    %c0_5 = arith.constant 0 : index
    %c0_6 = arith.constant 0 : index
    %5 = vector.load %arg6[%c0_5, %c0_6] : memref<1x256xf32, #tpu.memory_space<vmem>>, vector<1x256xf32>
    %c0_7 = arith.constant 0 : index
    %c0_8 = arith.constant 0 : index
    %6 = vector.load %arg3[%c0_7, %c0_8] : memref<1x512xbf16, #tpu.memory_space<vmem>>, vector<1x512xbf16>
    %c0_9 = arith.constant 0 : index
    %c0_10 = arith.constant 0 : index
    %7 = vector.load %arg4[%c0_9, %c0_10] : memref<512x256xbf16, #tpu.memory_space<vmem>>, vector<512x256xbf16>
    %cst_11 = arith.constant dense<0.000000e+00> : vector<1x256xf32>
    %8 = tpu.matmul %6, %7, %cst_11 {dimension_numbers = #tpu.dot_dimension_numbers<[1], [0], [0], [1], [0, 0, 1, 1], [], []>} : vector<1x512xbf16>, vector<512x256xbf16>, vector<1x256xf32> -> vector<1x256xf32>
    %9 = arith.addf %5, %8 : vector<1x256xf32>
    %c0_i32 = arith.constant 0 : i32
    %10 = arith.cmpi eq, %arg0, %c0_i32 : i32
    %11 = arith.extui %10 : i1 to i32
    %c0_i32_12 = arith.constant 0 : i32
    %12 = arith.cmpi ne, %11, %c0_i32_12 : i32
    scf.if %12 {
      %c0_22 = arith.constant 0 : index
      %c0_23 = arith.constant 0 : index
      %37 = vector.load %arg17[%c0_22, %c0_23] : memref<1x2048xf32, #tpu.memory_space<vmem>>, vector<1x256xf32>
      tpu.vector_store %arg17[%c0_22, %c0_23], %4 {strides = array<i32>} : memref<1x2048xf32, #tpu.memory_space<vmem>>, vector<1x256xf32>,
      %c0_24 = arith.constant 0 : index
      %c0_25 = arith.constant 0 : index
      %38 = vector.load %arg18[%c0_24, %c0_25] : memref<1x2048xf32, #tpu.memory_space<vmem>>, vector<1x256xf32>
      tpu.vector_store %arg18[%c0_24, %c0_25], %9 {strides = array<i32>} : memref<1x2048xf32, #tpu.memory_space<vmem>>, vector<1x256xf32>,
    } else {
    }
    %c1_i32 = arith.constant 1 : i32
    %13 = arith.cmpi eq, %arg0, %c1_i32 : i32
    %14 = arith.extui %13 : i1 to i32
    %c0_i32_13 = arith.constant 0 : i32
    %15 = arith.cmpi ne, %14, %c0_i32_13 : i32
    scf.if %15 {
      %c0_22 = arith.constant 0 : index
      %c256 = arith.constant 256 : index
      %37 = vector.load %arg17[%c0_22, %c256] : memref<1x2048xf32, #tpu.memory_space<vmem>>, vector<1x256xf32>
      tpu.vector_store %arg17[%c0_22, %c256], %4 {strides = array<i32>} : memref<1x2048xf32, #tpu.memory_space<vmem>>, vector<1x256xf32>,
      %c0_23 = arith.constant 0 : index
      %c256_24 = arith.constant 256 : index
      %38 = vector.load %arg18[%c0_23, %c256_24] : memref<1x2048xf32, #tpu.memory_space<vmem>>, vector<1x256xf32>
      tpu.vector_store %arg18[%c0_23, %c256_24], %9 {strides = array<i32>} : memref<1x2048xf32, #tpu.memory_space<vmem>>, vector<1x256xf32>,
    } else {
    }
    %c2_i32 = arith.constant 2 : i32
    %16 = arith.cmpi eq, %arg0, %c2_i32 : i32
    %17 = arith.extui %16 : i1 to i32
    %c0_i32_14 = arith.constant 0 : i32
    %18 = arith.cmpi ne, %17, %c0_i32_14 : i32
    scf.if %18 {
      %c0_22 = arith.constant 0 : index
      %c512 = arith.constant 512 : index
      %37 = vector.load %arg17[%c0_22, %c512] : memref<1x2048xf32, #tpu.memory_space<vmem>>, vector<1x256xf32>
      tpu.vector_store %arg17[%c0_22, %c512], %4 {strides = array<i32>} : memref<1x2048xf32, #tpu.memory_space<vmem>>, vector<1x256xf32>,
      %c0_23 = arith.constant 0 : index
      %c512_24 = arith.constant 512 : index
      %38 = vector.load %arg18[%c0_23, %c512_24] : memref<1x2048xf32, #tpu.memory_space<vmem>>, vector<1x256xf32>
      tpu.vector_store %arg18[%c0_23, %c512_24], %9 {strides = array<i32>} : memref<1x2048xf32, #tpu.memory_space<vmem>>, vector<1x256xf32>,
    } else {
    }
    %c3_i32 = arith.constant 3 : i32
    %19 = arith.cmpi eq, %arg0, %c3_i32 : i32
    %20 = arith.extui %19 : i1 to i32
    %c0_i32_15 = arith.constant 0 : i32
    %21 = arith.cmpi ne, %20, %c0_i32_15 : i32
    scf.if %21 {
      %c0_22 = arith.constant 0 : index
      %c768 = arith.constant 768 : index
      %37 = vector.load %arg17[%c0_22, %c768] : memref<1x2048xf32, #tpu.memory_space<vmem>>, vector<1x256xf32>
      tpu.vector_store %arg17[%c0_22, %c768], %4 {strides = array<i32>} : memref<1x2048xf32, #tpu.memory_space<vmem>>, vector<1x256xf32>,
      %c0_23 = arith.constant 0 : index
      %c768_24 = arith.constant 768 : index
      %38 = vector.load %arg18[%c0_23, %c768_24] : memref<1x2048xf32, #tpu.memory_space<vmem>>, vector<1x256xf32>
      tpu.vector_store %arg18[%c0_23, %c768_24], %9 {strides = array<i32>} : memref<1x2048xf32, #tpu.memory_space<vmem>>, vector<1x256xf32>,
    } else {
    }
    %c4_i32 = arith.constant 4 : i32
    %22 = arith.cmpi eq, %arg0, %c4_i32 : i32
    %23 = arith.extui %22 : i1 to i32
    %c0_i32_16 = arith.constant 0 : i32
    %24 = arith.cmpi ne, %23, %c0_i32_16 : i32
    scf.if %24 {
      %c0_22 = arith.constant 0 : index
      %c1024 = arith.constant 1024 : index
      %37 = vector.load %arg17[%c0_22, %c1024] : memref<1x2048xf32, #tpu.memory_space<vmem>>, vector<1x256xf32>
      tpu.vector_store %arg17[%c0_22, %c1024], %4 {strides = array<i32>} : memref<1x2048xf32, #tpu.memory_space<vmem>>, vector<1x256xf32>,
      %c0_23 = arith.constant 0 : index
      %c1024_24 = arith.constant 1024 : index
      %38 = vector.load %arg18[%c0_23, %c1024_24] : memref<1x2048xf32, #tpu.memory_space<vmem>>, vector<1x256xf32>
      tpu.vector_store %arg18[%c0_23, %c1024_24], %9 {strides = array<i32>} : memref<1x2048xf32, #tpu.memory_space<vmem>>, vector<1x256xf32>,
    } else {
    }
    %c5_i32 = arith.constant 5 : i32
    %25 = arith.cmpi eq, %arg0, %c5_i32 : i32
    %26 = arith.extui %25 : i1 to i32
    %c0_i32_17 = arith.constant 0 : i32
    %27 = arith.cmpi ne, %26, %c0_i32_17 : i32
    scf.if %27 {
      %c0_22 = arith.constant 0 : index
      %c1280 = arith.constant 1280 : index
      %37 = vector.load %arg17[%c0_22, %c1280] : memref<1x2048xf32, #tpu.memory_space<vmem>>, vector<1x256xf32>
      tpu.vector_store %arg17[%c0_22, %c1280], %4 {strides = array<i32>} : memref<1x2048xf32, #tpu.memory_space<vmem>>, vector<1x256xf32>,
      %c0_23 = arith.constant 0 : index
      %c1280_24 = arith.constant 1280 : index
      %38 = vector.load %arg18[%c0_23, %c1280_24] : memref<1x2048xf32, #tpu.memory_space<vmem>>, vector<1x256xf32>
      tpu.vector_store %arg18[%c0_23, %c1280_24], %9 {strides = array<i32>} : memref<1x2048xf32, #tpu.memory_space<vmem>>, vector<1x256xf32>,
    } else {
    }
    %c6_i32 = arith.constant 6 : i32
    %28 = arith.cmpi eq, %arg0, %c6_i32 : i32
    %29 = arith.extui %28 : i1 to i32
    %c0_i32_18 = arith.constant 0 : i32
    %30 = arith.cmpi ne, %29, %c0_i32_18 : i32
    scf.if %30 {
      %c0_22 = arith.constant 0 : index
      %c1536 = arith.constant 1536 : index
      %37 = vector.load %arg17[%c0_22, %c1536] : memref<1x2048xf32, #tpu.memory_space<vmem>>, vector<1x256xf32>
      tpu.vector_store %arg17[%c0_22, %c1536], %4 {strides = array<i32>} : memref<1x2048xf32, #tpu.memory_space<vmem>>, vector<1x256xf32>,
      %c0_23 = arith.constant 0 : index
      %c1536_24 = arith.constant 1536 : index
      %38 = vector.load %arg18[%c0_23, %c1536_24] : memref<1x2048xf32, #tpu.memory_space<vmem>>, vector<1x256xf32>
      tpu.vector_store %arg18[%c0_23, %c1536_24], %9 {strides = array<i32>} : memref<1x2048xf32, #tpu.memory_space<vmem>>, vector<1x256xf32>,
    } else {
    }
    %c7_i32 = arith.constant 7 : i32
    %31 = arith.cmpi eq, %arg0, %c7_i32 : i32
    %32 = arith.extui %31 : i1 to i32
    %c0_i32_19 = arith.constant 0 : i32
    %33 = arith.cmpi ne, %32, %c0_i32_19 : i32
    scf.if %33 {
      %c0_22 = arith.constant 0 : index
      %c1792 = arith.constant 1792 : index
      %37 = vector.load %arg17[%c0_22, %c1792] : memref<1x2048xf32, #tpu.memory_space<vmem>>, vector<1x256xf32>
      tpu.vector_store %arg17[%c0_22, %c1792], %4 {strides = array<i32>} : memref<1x2048xf32, #tpu.memory_space<vmem>>, vector<1x256xf32>,
      %c0_23 = arith.constant 0 : index
      %c1792_24 = arith.constant 1792 : index
      %38 = vector.load %arg18[%c0_23, %c1792_24] : memref<1x2048xf32, #tpu.memory_space<vmem>>, vector<1x256xf32>
      tpu.vector_store %arg18[%c0_23, %c1792_24], %9 {strides = array<i32>} : memref<1x2048xf32, #tpu.memory_space<vmem>>, vector<1x256xf32>,
    } else {
    }
    %c7_i32_20 = arith.constant 7 : i32
    %34 = arith.cmpi eq, %arg0, %c7_i32_20 : i32
    %35 = arith.extui %34 : i1 to i32
    %c0_i32_21 = arith.constant 0 : i32
    %36 = arith.cmpi ne, %35, %c0_i32_21 : i32
    scf.if %36 {
      %c0_22 = arith.constant 0 : index
      %c0_23 = arith.constant 0 : index
      %37 = vector.load %arg10[%c0_22, %c0_23] : memref<5x512xf32, #tpu.memory_space<vmem>>, vector<5x512xf32>
      %c0_24 = arith.constant 0 : index
      %c0_25 = arith.constant 0 : index
      %38 = vector.load %arg7[%c0_24, %c0_25] : memref<2x512xf32, #tpu.memory_space<vmem>>, vector<1x512xf32>
      %c0_26 = arith.constant 0 : index
      %c0_27 = arith.constant 0 : index
      %39 = vector.load %arg8[%c0_26, %c0_27] : memref<2x512xf32, #tpu.memory_space<vmem>>, vector<1x512xf32>
      %c0_28 = arith.constant 0 : index
      %c0_29 = arith.constant 0 : index
      %40 = vector.load %arg17[%c0_28, %c0_29] : memref<1x2048xf32, #tpu.memory_space<vmem>>, vector<1x2048xf32>
      %c0_30 = arith.constant 0 : index
      %c0_31 = arith.constant 0 : index
      %c0_32 = arith.constant 0 : index
      %41 = vector.load %arg9[%c0_30, %c0_31, %c0_32] : memref<2x5x512xf32, #tpu.memory_space<vmem>>, vector<1x5x512xf32>
      %42 = vector.shape_cast %41 : vector<1x5x512xf32> to vector<5x512xf32>
      %43 = arith.addf %42, %37 : vector<5x512xf32>
      %44 = vector.extract_strided_slice %40 {offsets = [0, 0], sizes = [1, 512], strides = [1, 1]} : vector<1x2048xf32> to vector<1x512xf32>
      %45 = arith.negf %44 : vector<1x512xf32>
      %46 = math.exp %45 : vector<1x512xf32>
      %cst_33 = arith.constant 1.000000e+00 : f32
      %47 = vector.broadcast %cst_33 : f32 to vector<1x512xf32>
      %48 = arith.addf %47, %46 : vector<1x512xf32>
      %49 = arith.divf %47, %48 : vector<1x512xf32>
      %50 = vector.extract_strided_slice %40 {offsets = [0, 512], sizes = [1, 512], strides = [1, 1]} : vector<1x2048xf32> to vector<1x512xf32>
      %51 = arith.negf %50 : vector<1x512xf32>
      %52 = math.exp %51 : vector<1x512xf32>
      %cst_34 = arith.constant 1.000000e+00 : f32
      %53 = vector.broadcast %cst_34 : f32 to vector<1x512xf32>
      %54 = arith.addf %53, %52 : vector<1x512xf32>
      %55 = arith.divf %53, %54 : vector<1x512xf32>
      %56 = vector.extract_strided_slice %40 {offsets = [0, 1024], sizes = [1, 512], strides = [1, 1]} : vector<1x2048xf32> to vector<1x512xf32>
      %57 = math.tanh %56 : vector<1x512xf32>
      %58 = vector.extract_strided_slice %40 {offsets = [0, 1536], sizes = [1, 512], strides = [1, 1]} : vector<1x2048xf32> to vector<1x512xf32>
      %59 = arith.negf %58 : vector<1x512xf32>
      %60 = math.exp %59 : vector<1x512xf32>
      %cst_35 = arith.constant 1.000000e+00 : f32
      %61 = vector.broadcast %cst_35 : f32 to vector<1x512xf32>
      %62 = arith.addf %61, %60 : vector<1x512xf32>
      %63 = arith.divf %61, %62 : vector<1x512xf32>
      %cst_36 = arith.constant dense<0.000000e+00> : vector<1x5xf32>
      %64 = tpu.matmul %38, %43, %cst_36 {dimension_numbers = #tpu.dot_dimension_numbers<[1], [1], [0], [0], [0, 0, 1, 0], [], []>} : vector<1x512xf32>, vector<5x512xf32>, vector<1x5xf32> -> vector<1x5xf32>
      %cst_37 = arith.constant 0.0441941731 : f32
      %65 = vector.broadcast %cst_37 : f32 to vector<1x5xf32>
      %66 = arith.mulf %64, %65 : vector<1x5xf32>
      %cst_38 = arith.constant dense<0xFF800000> : vector<1xf32>
      %67 = vector.multi_reduction <maximumf>, %66, %cst_38 [1] : vector<1x5xf32> to vector<1xf32>
      %68 = vector.shape_cast %67 : vector<1xf32> to vector<1x1xf32>
      %69 = vector.broadcast %68 : vector<1x1xf32> to vector<1x5xf32>
      %70 = arith.subf %66, %69 : vector<1x5xf32>
      %71 = math.exp %70 : vector<1x5xf32>
      %cst_39 = arith.constant dense<0.000000e+00> : vector<1xf32>
      %72 = vector.multi_reduction <add>, %71, %cst_39 [1] : vector<1x5xf32> to vector<1xf32>
      %73 = vector.shape_cast %72 : vector<1xf32> to vector<1x1xf32>
      %74 = tpu.reciprocal %73 {approx = true} : vector<1x1xf32> -> vector<1x1xf32>
      %75 = vector.broadcast %74 : vector<1x1xf32> to vector<1x5xf32>
      %76 = arith.mulf %71, %75 : vector<1x5xf32>
      %cst_40 = arith.constant dense<0.000000e+00> : vector<1x512xf32>
      %77 = tpu.matmul %76, %43, %cst_40 {dimension_numbers = #tpu.dot_dimension_numbers<[1], [0], [0], [1], [0, 0, 1, 1], [], []>} : vector<1x5xf32>, vector<5x512xf32>, vector<1x512xf32> -> vector<1x512xf32>
      %78 = arith.addf %39, %77 : vector<1x512xf32>
      %79 = arith.mulf %55, %78 : vector<1x512xf32>
      %80 = arith.mulf %49, %57 : vector<1x512xf32>
      %81 = arith.addf %79, %80 : vector<1x512xf32>
      %82 = math.tanh %81 : vector<1x512xf32>
      %83 = arith.mulf %63, %82 : vector<1x512xf32>
      %c0_41 = arith.constant 0 : index
      %c0_42 = arith.constant 0 : index
      %84 = vector.load %arg18[%c0_41, %c0_42] : memref<1x2048xf32, #tpu.memory_space<vmem>>, vector<1x2048xf32>
      %85 = arith.truncf %83 : vector<1x512xf32> to vector<1x512xbf16>
      %c0_43 = arith.constant 0 : index
      %c0_44 = arith.constant 0 : index
      %86 = vector.load %arg11[%c0_43, %c0_44] : memref<512x2048xbf16, #tpu.memory_space<vmem>>, vector<512x2048xbf16>
      %cst_45 = arith.constant dense<0.000000e+00> : vector<1x2048xf32>
      %87 = tpu.matmul %85, %86, %cst_45 {dimension_numbers = #tpu.dot_dimension_numbers<[1], [0], [0], [1], [0, 0, 1, 1], [], []>} : vector<1x512xbf16>, vector<512x2048xbf16>, vector<1x2048xf32> -> vector<1x2048xf32>
      %88 = arith.addf %84, %87 : vector<1x2048xf32>
      %c1 = arith.constant 1 : index
      %c0_46 = arith.constant 0 : index
      %89 = vector.load %arg7[%c1, %c0_46] : memref<2x512xf32, #tpu.memory_space<vmem>>, vector<1x512xf32>
      %c1_47 = arith.constant 1 : index
      %c0_48 = arith.constant 0 : index
      %90 = vector.load %arg8[%c1_47, %c0_48] : memref<2x512xf32, #tpu.memory_space<vmem>>, vector<1x512xf32>
      %c1_49 = arith.constant 1 : index
      %c0_50 = arith.constant 0 : index
      %c0_51 = arith.constant 0 : index
      %91 = vector.load %arg9[%c1_49, %c0_50, %c0_51] : memref<2x5x512xf32, #tpu.memory_space<vmem>>, vector<1x5x512xf32>
      %92 = vector.shape_cast %91 : vector<1x5x512xf32> to vector<5x512xf32>
      %93 = arith.addf %92, %37 : vector<5x512xf32>
      %94 = vector.extract_strided_slice %88 {offsets = [0, 0], sizes = [1, 512], strides = [1, 1]} : vector<1x2048xf32> to vector<1x512xf32>
      %95 = arith.negf %94 : vector<1x512xf32>
      %96 = math.exp %95 : vector<1x512xf32>
      %cst_52 = arith.constant 1.000000e+00 : f32
      %97 = vector.broadcast %cst_52 : f32 to vector<1x512xf32>
      %98 = arith.addf %97, %96 : vector<1x512xf32>
      %99 = arith.divf %97, %98 : vector<1x512xf32>
      %100 = vector.extract_strided_slice %88 {offsets = [0, 512], sizes = [1, 512], strides = [1, 1]} : vector<1x2048xf32> to vector<1x512xf32>
      %101 = arith.negf %100 : vector<1x512xf32>
      %102 = math.exp %101 : vector<1x512xf32>
      %cst_53 = arith.constant 1.000000e+00 : f32
      %103 = vector.broadcast %cst_53 : f32 to vector<1x512xf32>
      %104 = arith.addf %103, %102 : vector<1x512xf32>
      %105 = arith.divf %103, %104 : vector<1x512xf32>
      %106 = vector.extract_strided_slice %88 {offsets = [0, 1024], sizes = [1, 512], strides = [1, 1]} : vector<1x2048xf32> to vector<1x512xf32>
      %107 = math.tanh %106 : vector<1x512xf32>
      %108 = vector.extract_strided_slice %88 {offsets = [0, 1536], sizes = [1, 512], strides = [1, 1]} : vector<1x2048xf32> to vector<1x512xf32>
      %109 = arith.negf %108 : vector<1x512xf32>
      %110 = math.exp %109 : vector<1x512xf32>
      %cst_54 = arith.constant 1.000000e+00 : f32
      %111 = vector.broadcast %cst_54 : f32 to vector<1x512xf32>
      %112 = arith.addf %111, %110 : vector<1x512xf32>
      %113 = arith.divf %111, %112 : vector<1x512xf32>
      %cst_55 = arith.constant dense<0.000000e+00> : vector<1x5xf32>
      %114 = tpu.matmul %89, %93, %cst_55 {dimension_numbers = #tpu.dot_dimension_numbers<[1], [1], [0], [0], [0, 0, 1, 0], [], []>} : vector<1x512xf32>, vector<5x512xf32>, vector<1x5xf32> -> vector<1x5xf32>
      %cst_56 = arith.constant 0.0441941731 : f32
      %115 = vector.broadcast %cst_56 : f32 to vector<1x5xf32>
      %116 = arith.mulf %114, %115 : vector<1x5xf32>
      %cst_57 = arith.constant dense<0xFF800000> : vector<1xf32>
      %117 = vector.multi_reduction <maximumf>, %116, %cst_57 [1] : vector<1x5xf32> to vector<1xf32>
      %118 = vector.shape_cast %117 : vector<1xf32> to vector<1x1xf32>
      %119 = vector.broadcast %118 : vector<1x1xf32> to vector<1x5xf32>
      %120 = arith.subf %116, %119 : vector<1x5xf32>
      %121 = math.exp %120 : vector<1x5xf32>
      %cst_58 = arith.constant dense<0.000000e+00> : vector<1xf32>
      %122 = vector.multi_reduction <add>, %121, %cst_58 [1] : vector<1x5xf32> to vector<1xf32>
      %123 = vector.shape_cast %122 : vector<1xf32> to vector<1x1xf32>
      %124 = tpu.reciprocal %123 {approx = true} : vector<1x1xf32> -> vector<1x1xf32>
      %125 = vector.broadcast %124 : vector<1x1xf32> to vector<1x5xf32>
      %126 = arith.mulf %121, %125 : vector<1x5xf32>
      %cst_59 = arith.constant dense<0.000000e+00> : vector<1x512xf32>
      %127 = tpu.matmul %126, %93, %cst_59 {dimension_numbers = #tpu.dot_dimension_numbers<[1], [0], [0], [1], [0, 0, 1, 1], [], []>} : vector<1x5xf32>, vector<5x512xf32>, vector<1x512xf32> -> vector<1x512xf32>
      %128 = arith.addf %90, %127 : vector<1x512xf32>
      %129 = arith.mulf %105, %128 : vector<1x512xf32>
      %130 = arith.mulf %99, %107 : vector<1x512xf32>
      %131 = arith.addf %129, %130 : vector<1x512xf32>
      %132 = math.tanh %131 : vector<1x512xf32>
      %133 = arith.mulf %113, %132 : vector<1x512xf32>
      %134 = arith.truncf %133 : vector<1x512xf32> to vector<1x512xbf16>
      %c0_60 = arith.constant 0 : index
      %c0_61 = arith.constant 0 : index
      %135 = vector.load %arg12[%c0_60, %c0_61] : memref<512x128xbf16, #tpu.memory_space<vmem>>, vector<512x128xbf16>
      %cst_62 = arith.constant dense<0.000000e+00> : vector<1x128xf32>
      %136 = tpu.matmul %134, %135, %cst_62 {dimension_numbers = #tpu.dot_dimension_numbers<[1], [0], [0], [1], [0, 0, 1, 1], [], []>} : vector<1x512xbf16>, vector<512x128xbf16>, vector<1x128xf32> -> vector<1x128xf32>
      %c0_63 = arith.constant 0 : index
      %c0_64 = arith.constant 0 : index
      %137 = vector.load %arg13[%c0_63, %c0_64] : memref<1x128xf32, #tpu.memory_space<vmem>>, vector<1x128xf32>
      %138 = arith.addf %136, %137 : vector<1x128xf32>
      %c0_65 = arith.constant 0 : index
      %c0_66 = arith.constant 0 : index
      %139 = vector.load %arg14[%c0_65, %c0_66] : memref<1x128xf32, #tpu.memory_space<vmem>>, vector<1x128xf32>
      tpu.vector_store %arg14[%c0_65, %c0_66], %138 {strides = array<i32>} : memref<1x128xf32, #tpu.memory_space<vmem>>, vector<1x128xf32>,
      %c0_67 = arith.constant 0 : index
      %c0_68 = arith.constant 0 : index
      %140 = vector.load %arg15[%c0_67, %c0_68] : memref<2x512xf32, #tpu.memory_space<vmem>>, vector<1x512xf32>
      tpu.vector_store %arg15[%c0_67, %c0_68], %83 {strides = array<i32>} : memref<2x512xf32, #tpu.memory_space<vmem>>, vector<1x512xf32>,
      %c1_69 = arith.constant 1 : index
      %c0_70 = arith.constant 0 : index
      %141 = vector.load %arg15[%c1_69, %c0_70] : memref<2x512xf32, #tpu.memory_space<vmem>>, vector<1x512xf32>
      tpu.vector_store %arg15[%c1_69, %c0_70], %133 {strides = array<i32>} : memref<2x512xf32, #tpu.memory_space<vmem>>, vector<1x512xf32>,
      %c0_71 = arith.constant 0 : index
      %c0_72 = arith.constant 0 : index
      %142 = vector.load %arg16[%c0_71, %c0_72] : memref<2x512xf32, #tpu.memory_space<vmem>>, vector<1x512xf32>
      tpu.vector_store %arg16[%c0_71, %c0_72], %81 {strides = array<i32>} : memref<2x512xf32, #tpu.memory_space<vmem>>, vector<1x512xf32>,
      %c1_73 = arith.constant 1 : index
      %c0_74 = arith.constant 0 : index
      %143 = vector.load %arg16[%c1_73, %c0_74] : memref<2x512xf32, #tpu.memory_space<vmem>>, vector<1x512xf32>
      tpu.vector_store %arg16[%c1_73, %c0_74], %131 {strides = array<i32>} : memref<2x512xf32, #tpu.memory_space<vmem>>, vector<1x512xf32>,
    } else {
    }
    return
  }
  func.func @transform_0(%arg0: i32) -> (i32, i32) {
    %c0_i32 = arith.constant 0 : i32
    %c0_i32_0 = arith.constant 0 : i32
    %c0_i32_1 = arith.constant 0 : i32
    return %c0_i32, %c0_i32_0 : i32, i32
  }
  func.func @transform_1(%arg0: i32) -> (i32, i32) {
    %c0_i32 = arith.constant 0 : i32
    %c0_i32_0 = arith.constant 0 : i32
    return %c0_i32, %arg0 : i32, i32
  }
  func.func @transform_2(%arg0: i32) -> (i32, i32) {
    %c0_i32 = arith.constant 0 : i32
    %c0_i32_0 = arith.constant 0 : i32
    %c0_i32_1 = arith.constant 0 : i32
    return %c0_i32, %c0_i32_0 : i32, i32
  }
  func.func @transform_3(%arg0: i32) -> (i32, i32) {
    %c0_i32 = arith.constant 0 : i32
    %c0_i32_0 = arith.constant 0 : i32
    return %c0_i32, %arg0 : i32, i32
  }
  func.func @transform_4(%arg0: i32) -> (i32, i32) {
    %c0_i32 = arith.constant 0 : i32
    %c0_i32_0 = arith.constant 0 : i32
    return %c0_i32, %arg0 : i32, i32
  }
  func.func @transform_5(%arg0: i32) -> (i32, i32) {
    %c0_i32 = arith.constant 0 : i32
    %c0_i32_0 = arith.constant 0 : i32
    return %c0_i32, %arg0 : i32, i32
  }
  func.func @transform_6(%arg0: i32) -> (i32, i32) {
    %c0_i32 = arith.constant 0 : i32
    %c0_i32_0 = arith.constant 0 : i32
    %c0_i32_1 = arith.constant 0 : i32
    return %c0_i32, %c0_i32_0 : i32, i32
  }
  func.func @transform_7(%arg0: i32) -> (i32, i32) {
    %c0_i32 = arith.constant 0 : i32
    %c0_i32_0 = arith.constant 0 : i32
    %c0_i32_1 = arith.constant 0 : i32
    return %c0_i32, %c0_i32_0 : i32, i32
  }
  func.func @transform_8(%arg0: i32) -> (i32, i32, i32) {
    %c0_i32 = arith.constant 0 : i32
    %c0_i32_0 = arith.constant 0 : i32
    %c0_i32_1 = arith.constant 0 : i32
    %c0_i32_2 = arith.constant 0 : i32
    return %c0_i32, %c0_i32_0, %c0_i32_1 : i32, i32, i32
  }
  func.func @transform_9(%arg0: i32) -> (i32, i32) {
    %c0_i32 = arith.constant 0 : i32
    %c0_i32_0 = arith.constant 0 : i32
    %c0_i32_1 = arith.constant 0 : i32
    return %c0_i32, %c0_i32_0 : i32, i32
  }
  func.func @transform_10(%arg0: i32) -> (i32, i32) {
    %c0_i32 = arith.constant 0 : i32
    %c0_i32_0 = arith.constant 0 : i32
    %c0_i32_1 = arith.constant 0 : i32
    return %c0_i32, %c0_i32_0 : i32, i32
  }
  func.func @transform_11(%arg0: i32) -> (i32, i32) {
    %c0_i32 = arith.constant 0 : i32
    %c0_i32_0 = arith.constant 0 : i32
    %c0_i32_1 = arith.constant 0 : i32
    return %c0_i32, %c0_i32_0 : i32, i32
  }
  func.func @transform_12(%arg0: i32) -> (i32, i32) {
    %c0_i32 = arith.constant 0 : i32
    %c0_i32_0 = arith.constant 0 : i32
    %c0_i32_1 = arith.constant 0 : i32
    return %c0_i32, %c0_i32_0 : i32, i32
  }
  func.func @transform_13(%arg0: i32) -> (i32, i32) {
    %c0_i32 = arith.constant 0 : i32
    %c0_i32_0 = arith.constant 0 : i32
    %c0_i32_1 = arith.constant 0 : i32
    return %c0_i32, %c0_i32_0 : i32, i32
  }
  func.func @transform_14(%arg0: i32) -> (i32, i32) {
    %c0_i32 = arith.constant 0 : i32
    %c0_i32_0 = arith.constant 0 : i32
    %c0_i32_1 = arith.constant 0 : i32
    return %c0_i32, %c0_i32_0 : i32, i32
  }
  func.func @transform_15(%arg0: i32) -> (i32, i32) {
    %c0_i32 = arith.constant 0 : i32
    %c0_i32_0 = arith.constant 0 : i32
    %c0_i32_1 = arith.constant 0 : i32
    return %c0_i32, %c0_i32_0 : i32, i32
  }
}

</mosaic_0001>

<llo_original>
// kernel: _navigation_policy_step.1
$region0: #{_navigation_policy_step.1}
  #allocation0 [shape = 'u32[]', space=smem, size = 0x4, offset = 0x4, fixed_abs, tag = 'smem constant byte address 0x4 - core index']
  #allocation1 [shape = 'u32[144,128]{1,0:T(1,128)}', space=vmem, size = 0x12000, scoped, tag = 'internal scratch']
  #allocation2 [shape = 'f32[1,2048]{1,0:T(1,128)}', space=vmem, size = 0x2000, scoped, tag = 'scratch operand']
  #allocation3 [shape = 'f32[1,2048]{1,0:T(1,128)}', space=vmem, size = 0x2000, scoped, tag = 'scratch operand']
  %s0 = inlined_call_operand.vmem [shape: bf16[1,3712], index: 0, kind: input, shape index: {}]
  %s1 = inlined_call_operand.hbm [shape: bf16[3712,2048], index: 1, kind: input, shape index: {}]
  %s2 = inlined_call_operand.vmem [shape: bf16[1,512], index: 2, kind: input, shape index: {}]
  %s3 = inlined_call_operand.hbm [shape: bf16[512,2048], index: 3, kind: input, shape index: {}]
  %s4 = inlined_call_operand.hbm [shape: f32[1,2048], index: 4, kind: input, shape index: {}]
  %s5 = inlined_call_operand.hbm [shape: f32[1,2048], index: 5, kind: input, shape index: {}]
  %s6 = inlined_call_operand.vmem [shape: f32[2,512], index: 6, kind: input, shape index: {}]
  %s7 = inlined_call_operand.vmem [shape: f32[2,512], index: 7, kind: input, shape index: {}]
  %s8 = inlined_call_operand.vmem [shape: f32[2,5,512], index: 8, kind: input, shape index: {}]
  %s9 = inlined_call_operand.vmem [shape: f32[5,512], index: 9, kind: input, shape index: {}]
  %s10 = inlined_call_operand.hbm [shape: bf16[512,2048], index: 10, kind: input, shape index: {}]
  %s11 = inlined_call_operand.hbm [shape: bf16[512,128], index: 11, kind: input, shape index: {}]
  %s12 = inlined_call_operand.hbm [shape: f32[1,128], index: 12, kind: input, shape index: {}]
  %s13 = inlined_call_operand.vmem [shape: f32[1,128], index: 13, kind: output, shape index: {0}]
  %s14 = inlined_call_operand.vmem [shape: f32[2,512], index: 14, kind: output, shape index: {1}]
  %s15 = inlined_call_operand.vmem [shape: f32[2,512], index: 15, kind: output, shape index: {2}]
  %16 = xla_tuple %s13, %s14, %s15
  %s17 = sld [smem:[#allocation0]]
  $region161: #{_navigation_policy_step.1} parent=0
    _
  %s19 = ssub.s32 1, %s17
  %s20 = scalar_select 0, %s19, %s17
  $region1: #{_navigation_policy_step.1} parent=0
    #allocation4 [shape = 'u8[3801088]{0}', space=vmem, size = 0x3a0000, scoped, tag = 'input window, operand 1']
    #allocation5 [shape = 's32[2]{0}', space=sflag, size = 0x8, scoped, tag = 'scoped memory for _navigation_policy_step.1']
    #allocation6 [shape = 'u8[524288]{0}', space=vmem, size = 0x80000, scoped, tag = 'input window, operand 3']
    #allocation7 [shape = 's32[2]{0}', space=sflag, size = 0x8, scoped, tag = 'scoped memory for _navigation_policy_step.1']
    #allocation8 [shape = 'u8[2048]{0}', space=vmem, size = 0x800, scoped, tag = 'input window, operand 4']
    #allocation9 [shape = 'u8[2048]{0}', space=vmem, size = 0x800, scoped, tag = 'input window, operand 5']
    #allocation10 [shape = 's32[2]{0}', space=sflag, size = 0x8, scoped, tag = 'scoped memory for _navigation_policy_step.1']
    #allocation11 [shape = 'u8[2097152]{0}', space=vmem, size = 0x200000, scoped, tag = 'input window, operand 10, single buffered']
    #allocation12 [shape = 'u8[131072]{0}', space=vmem, size = 0x20000, scoped, tag = 'input window, operand 11, single buffered']
    #allocation13 [shape = 's32[1]{0}', space=sflag, size = 0x4, scoped, tag = 'scoped memory for _navigation_policy_step.1']
    #allocation14 [shape = 'u8[512]{0}', space=vmem, size = 0x400, scoped, tag = 'input window, operand 12, single buffered']
    %21 = vsyncpa [#allocation5], 0
    %s22 = scalar_lea.sflag [#allocation5], 1
    %23 = vsyncpa %s22, 0
    %24 = vsyncpa [#allocation7], 0
    %s25 = scalar_lea.sflag [#allocation7], 1
    %26 = vsyncpa %s25, 0
    %27 = vsyncpa [#allocation10], 0
    %s28 = scalar_lea.sflag [#allocation10], 1
    %29 = vsyncpa %s28, 0
    %30 = vsyncpa [#allocation13], 0
    loop: start=0, step=1, limit=10
    $region2: #{_navigation_policy_step.1} parent=1 // loop_pre_header
      _
    $region3: #{_navigation_policy_step.1} parent=1 // loop_header
      %s32 = sphi 0, %s36
      %p33 = scmp.ge.s32.totalorder %s32, 10
      %s40 = sphi 0, %s40
      %s42 = sphi 0, %s40
      %s43 = sphi 0, %s42
      %s57 = sphi 0, %s43
      %s63 = sphi 0, %s65
      %s66 = sphi 0, %s63
      %s67 = sphi 0, %s66
      %s83 = sphi 0, %s67
      %s87 = sphi 0, %s87
      %s89 = sphi 0, %s87
      %s90 = sphi 0, %s89
      %s104 = sphi 0, %s90
      %s110 = sphi 0, %s112
      %s113 = sphi 0, %s110
      %s114 = sphi 0, %s113
      %s130 = sphi 0, %s114
      %s136 = sphi 0, %s138
      %s139 = sphi 0, %s136
      %s140 = sphi 0, %s139
      %s156 = sphi 0, %s140
      %s162 = sphi 0, %s164
      %s165 = sphi 0, %s162
      %s166 = sphi 0, %s165
      %s182 = sphi 0, %s166
      %s186 = sphi 0, %s186
      %s188 = sphi 0, %s186
      %s189 = sphi 0, %s188
      %s203 = sphi 0, %s189
      %s207 = sphi 0, %s207
      %s209 = sphi 0, %s207
      %s210 = sphi 0, %s209
      %s224 = sphi 0, %s210
      %s228 = sphi 0, %s228
      %s230 = sphi 0, %s228
      %s231 = sphi 0, %s230
      %s245 = sphi 0, %s231
      %s249 = sphi 0, %s249
      %s251 = sphi 0, %s249
      %s252 = sphi 0, %s251
      %s266 = sphi 0, %s252
      %s270 = sphi 0, %s270
      %s272 = sphi 0, %s270
      %s273 = sphi 0, %s272
      %s287 = sphi 0, %s273
      %s291 = sphi 0, %s291
      %s293 = sphi 0, %s291
      %s294 = sphi 0, %s293
      %s308 = sphi 0, %s294
      %s312 = sphi 0, %s312
      %s314 = sphi 0, %s312
      %s315 = sphi 0, %s314
      %s329 = sphi 0, %s315
      %s333 = sphi 0, %s333
      %s335 = sphi 0, %s333
      %s336 = sphi 0, %s335
      %s350 = sphi 0, %s336
      %s354 = sphi 0, %s354
      %s356 = sphi 0, %s354
      %s357 = sphi 0, %s356
      %s371 = sphi 0, %s357
      %s375 = sphi 0, %s375
      %s377 = sphi 0, %s375
      %s378 = sphi 0, %s377
      %s392 = sphi 0, %s378
    $region4: #{_navigation_policy_step.1} parent=1 // loop_header_branch
      %35 = sbr.rel (%p33) target = $region8
    $region5: #{_navigation_policy_step.1} parent=1 // loop_body
      %s37 = ssub.s32 %s32, 1
      %s38 = ssub.s32 %s32, 2
      %s39 = sadd.s32 %s32, 1
      %s41 = sadd.s32 %s40, 1
      %p44 = scmp.eq.s32.totalorder %s32, 7
      %p45 = scmp.ne.s32.totalorder %s40, %s42
      %p46 = scmp.eq.s32.totalorder %s32, 0
      %p47 = por %p45, %p46
      %p48 = scmp.ne.s32.totalorder %s40, %s42
      %p49 = scmp.eq.s32.totalorder %s37, 7
      %p50 = por %p48, %p49
      %p51 = scmp.ne.s32.totalorder %s42, %s43
      %p52 = scmp.eq.s32.totalorder %s37, 0
      %p53 = por %p51, %p52
      %p54 = scmp.ne.s32.totalorder %s42, %s43
      %p55 = scmp.eq.s32.totalorder %s38, 7
      %p56 = por %p54, %p55
      %p58 = scmp.ne.s32.totalorder %s43, %s57
      %p59 = scmp.eq.s32.totalorder %s38, 0
      %p60 = por %p58, %p59
      %s61 = ssub.s32 %s32, %s39
      %p62 = scmp.eq.s32.totalorder %s61, 0
      %s64 = sadd.s32 %s63, 1
      %s65 = scalar_select %p62, %s63, %s64
      %p68 = pneg %p62
      %p69 = scmp.eq.s32.totalorder %s32, 7
      %p70 = por %p68, %p69
      %p71 = scmp.ne.s32.totalorder %s63, %s66
      %p72 = scmp.eq.s32.totalorder %s32, 0
      %p73 = por %p71, %p72
      %p74 = scmp.ne.s32.totalorder %s63, %s66
      %p75 = scmp.eq.s32.totalorder %s37, 7
      %p76 = por %p74, %p75
      %p77 = scmp.ne.s32.totalorder %s66, %s67
      %p78 = scmp.eq.s32.totalorder %s37, 0
      %p79 = por %p77, %p78
      %p80 = scmp.ne.s32.totalorder %s66, %s67
      %p81 = scmp.eq.s32.totalorder %s38, 7
      %p82 = por %p80, %p81
      %p84 = scmp.ne.s32.totalorder %s67, %s83
      %p85 = scmp.eq.s32.totalorder %s38, 0
      %p86 = por %p84, %p85
      %s88 = sadd.s32 %s87, 1
      %p91 = scmp.eq.s32.totalorder %s32, 7
      %p92 = scmp.ne.s32.totalorder %s87, %s89
      %p93 = scmp.eq.s32.totalorder %s32, 0
      %p94 = por %p92, %p93
      %p95 = scmp.ne.s32.totalorder %s87, %s89
      %p96 = scmp.eq.s32.totalorder %s37, 7
      %p97 = por %p95, %p96
      %p98 = scmp.ne.s32.totalorder %s89, %s90
      %p99 = scmp.eq.s32.totalorder %s37, 0
      %p100 = por %p98, %p99
      %p101 = scmp.ne.s32.totalorder %s89, %s90
      %p102 = scmp.eq.s32.totalorder %s38, 7
      %p103 = por %p101, %p102
      %p105 = scmp.ne.s32.totalorder %s90, %s104
      %p106 = scmp.eq.s32.totalorder %s38, 0
      %p107 = por %p105, %p106
      %s108 = ssub.s32 %s32, %s39
      %p109 = scmp.eq.s32.totalorder %s108, 0
      %s111 = sadd.s32 %s110, 1
      %s112 = scalar_select %p109, %s110, %s111
      %p115 = pneg %p109
      %p116 = scmp.eq.s32.totalorder %s32, 7
      %p117 = por %p115, %p116
      %p118 = scmp.ne.s32.totalorder %s110, %s113
      %p119 = scmp.eq.s32.totalorder %s32, 0
      %p120 = por %p118, %p119
      %p121 = scmp.ne.s32.totalorder %s110, %s113
      %p122 = scmp.eq.s32.totalorder %s37, 7
      %p123 = por %p121, %p122
      %p124 = scmp.ne.s32.totalorder %s113, %s114
      %p125 = scmp.eq.s32.totalorder %s37, 0
      %p126 = por %p124, %p125
      %p127 = scmp.ne.s32.totalorder %s113, %s114
      %p128 = scmp.eq.s32.totalorder %s38, 7
      %p129 = por %p127, %p128
      %p131 = scmp.ne.s32.totalorder %s114, %s130
      %p132 = scmp.eq.s32.totalorder %s38, 0
      %p133 = por %p131, %p132
      %s134 = ssub.s32 %s32, %s39
      %p135 = scmp.eq.s32.totalorder %s134, 0
      %s137 = sadd.s32 %s136, 1
      %s138 = scalar_select %p135, %s136, %s137
      %p141 = pneg %p135
      %p142 = scmp.eq.s32.totalorder %s32, 7
      %p143 = por %p141, %p142
      %p144 = scmp.ne.s32.totalorder %s136, %s139
      %p145 = scmp.eq.s32.totalorder %s32, 0
      %p146 = por %p144, %p145
      %p147 = scmp.ne.s32.totalorder %s136, %s139
      %p148 = scmp.eq.s32.totalorder %s37, 7
      %p149 = por %p147, %p148
      %p150 = scmp.ne.s32.totalorder %s139, %s140
      %p151 = scmp.eq.s32.totalorder %s37, 0
      %p152 = por %p150, %p151
      %p153 = scmp.ne.s32.totalorder %s139, %s140
      %p154 = scmp.eq.s32.totalorder %s38, 7
      %p155 = por %p153, %p154
      %p157 = scmp.ne.s32.totalorder %s140, %s156
      %p158 = scmp.eq.s32.totalorder %s38, 0
      %p159 = por %p157, %p158
      %s160 = ssub.s32 %s32, %s39
      %p161 = scmp.eq.s32.totalorder %s160, 0
      %s163 = sadd.s32 %s162, 1
      %s164 = scalar_select %p161, %s162, %s163
      %p167 = pneg %p161
      %p168 = scmp.eq.s32.totalorder %s32, 7
      %p169 = por %p167, %p168
      %p170 = scmp.ne.s32.totalorder %s162, %s165
      %p171 = scmp.eq.s32.totalorder %s32, 0
      %p172 = por %p170, %p171
      %p173 = scmp.ne.s32.totalorder %s162, %s165
      %p174 = scmp.eq.s32.totalorder %s37, 7
      %p175 = por %p173, %p174
      %p176 = scmp.ne.s32.totalorder %s165, %s166
      %p177 = scmp.eq.s32.totalorder %s37, 0
      %p178 = por %p176, %p177
      %p179 = scmp.ne.s32.totalorder %s165, %s166
      %p180 = scmp.eq.s32.totalorder %s38, 7
      %p181 = por %p179, %p180
      %p183 = scmp.ne.s32.totalorder %s166, %s182
      %p184 = scmp.eq.s32.totalorder %s38, 0
      %p185 = por %p183, %p184
      %s187 = sadd.s32 %s186, 1
      %p190 = scmp.eq.s32.totalorder %s32, 7
      %p191 = scmp.ne.s32.totalorder %s186, %s188
      %p192 = scmp.eq.s32.totalorder %s32, 0
      %p193 = por %p191, %p192
      %p194 = scmp.ne.s32.totalorder %s186, %s188
      %p195 = scmp.eq.s32.totalorder %s37, 7
      %p196 = por %p194, %p195
      %p197 = scmp.ne.s32.totalorder %s188, %s189
      %p198 = scmp.eq.s32.totalorder %s37, 0
      %p199 = por %p197, %p198
      %p200 = scmp.ne.s32.totalorder %s188, %s189
      %p201 = scmp.eq.s32.totalorder %s38, 7
      %p202 = por %p200, %p201
      %p204 = scmp.ne.s32.totalorder %s189, %s203
      %p205 = scmp.eq.s32.totalorder %s38, 0
      %p206 = por %p204, %p205
      %s208 = sadd.s32 %s207, 1
      %p211 = scmp.eq.s32.totalorder %s32, 7
      %p212 = scmp.ne.s32.totalorder %s207, %s209
      %p213 = scmp.eq.s32.totalorder %s32, 0
      %p214 = por %p212, %p213
      %p215 = scmp.ne.s32.totalorder %s207, %s209
      %p216 = scmp.eq.s32.totalorder %s37, 7
      %p217 = por %p215, %p216
      %p218 = scmp.ne.s32.totalorder %s209, %s210
      %p219 = scmp.eq.s32.totalorder %s37, 0
      %p220 = por %p218, %p219
      %p221 = scmp.ne.s32.totalorder %s209, %s210
      %p222 = scmp.eq.s32.totalorder %s38, 7
      %p223 = por %p221, %p222
      %p225 = scmp.ne.s32.totalorder %s210, %s224
      %p226 = scmp.eq.s32.totalorder %s38, 0
      %p227 = por %p225, %p226
      %s229 = sadd.s32 %s228, 1
      %p232 = scmp.eq.s32.totalorder %s32, 7
      %p233 = scmp.ne.s32.totalorder %s228, %s230
      %p234 = scmp.eq.s32.totalorder %s32, 0
      %p235 = por %p233, %p234
      %p236 = scmp.ne.s32.totalorder %s228, %s230
      %p237 = scmp.eq.s32.totalorder %s37, 7
      %p238 = por %p236, %p237
      %p239 = scmp.ne.s32.totalorder %s230, %s231
      %p240 = scmp.eq.s32.totalorder %s37, 0
      %p241 = por %p239, %p240
      %p242 = scmp.ne.s32.totalorder %s230, %s231
      %p243 = scmp.eq.s32.totalorder %s38, 7
      %p244 = por %p242, %p243
      %p246 = scmp.ne.s32.totalorder %s231, %s245
      %p247 = scmp.eq.s32.totalorder %s38, 0
      %p248 = por %p246, %p247
      %s250 = sadd.s32 %s249, 1
      %p253 = scmp.eq.s32.totalorder %s32, 7
      %p254 = scmp.ne.s32.totalorder %s249, %s251
      %p255 = scmp.eq.s32.totalorder %s32, 0
      %p256 = por %p254, %p255
      %p257 = scmp.ne.s32.totalorder %s249, %s251
      %p258 = scmp.eq.s32.totalorder %s37, 7
      %p259 = por %p257, %p258
      %p260 = scmp.ne.s32.totalorder %s251, %s252
      %p261 = scmp.eq.s32.totalorder %s37, 0
      %p262 = por %p260, %p261
      %p263 = scmp.ne.s32.totalorder %s251, %s252
      %p264 = scmp.eq.s32.totalorder %s38, 7
      %p265 = por %p263, %p264
      %p267 = scmp.ne.s32.totalorder %s252, %s266
      %p268 = scmp.eq.s32.totalorder %s38, 0
      %p269 = por %p267, %p268
      %s271 = sadd.s32 %s270, 1
      %p274 = scmp.eq.s32.totalorder %s32, 7
      %p275 = scmp.ne.s32.totalorder %s270, %s272
      %p276 = scmp.eq.s32.totalorder %s32, 0
      %p277 = por %p275, %p276
      %p278 = scmp.ne.s32.totalorder %s270, %s272
      %p279 = scmp.eq.s32.totalorder %s37, 7
      %p280 = por %p278, %p279
      %p281 = scmp.ne.s32.totalorder %s272, %s273
      %p282 = scmp.eq.s32.totalorder %s37, 0
      %p283 = por %p281, %p282
      %p284 = scmp.ne.s32.totalorder %s272, %s273
      %p285 = scmp.eq.s32.totalorder %s38, 7
      %p286 = por %p284, %p285
      %p288 = scmp.ne.s32.totalorder %s273, %s287
      %p289 = scmp.eq.s32.totalorder %s38, 0
      %p290 = por %p288, %p289
      %s292 = sadd.s32 %s291, 1
      %p295 = scmp.eq.s32.totalorder %s32, 7
      %p296 = scmp.ne.s32.totalorder %s291, %s293
      %p297 = scmp.eq.s32.totalorder %s32, 0
      %p298 = por %p296, %p297
      %p299 = scmp.ne.s32.totalorder %s291, %s293
      %p300 = scmp.eq.s32.totalorder %s37, 7
      %p301 = por %p299, %p300
      %p302 = scmp.ne.s32.totalorder %s293, %s294
      %p303 = scmp.eq.s32.totalorder %s37, 0
      %p304 = por %p302, %p303
      %p305 = scmp.ne.s32.totalorder %s293, %s294
      %p306 = scmp.eq.s32.totalorder %s38, 7
      %p307 = por %p305, %p306
      %p309 = scmp.ne.s32.totalorder %s294, %s308
      %p310 = scmp.eq.s32.totalorder %s38, 0
      %p311 = por %p309, %p310
      %s313 = sadd.s32 %s312, 1
      %p316 = scmp.eq.s32.totalorder %s32, 7
      %p317 = scmp.ne.s32.totalorder %s312, %s314
      %p318 = scmp.eq.s32.totalorder %s32, 0
      %p319 = por %p317, %p318
      %p320 = scmp.ne.s32.totalorder %s312, %s314
      %p321 = scmp.eq.s32.totalorder %s37, 7
      %p322 = por %p320, %p321
      %p323 = scmp.ne.s32.totalorder %s314, %s315
      %p324 = scmp.eq.s32.totalorder %s37, 0
      %p325 = por %p323, %p324
      %p326 = scmp.ne.s32.totalorder %s314, %s315
      %p327 = scmp.eq.s32.totalorder %s38, 7
      %p328 = por %p326, %p327
      %p330 = scmp.ne.s32.totalorder %s315, %s329
      %p331 = scmp.eq.s32.totalorder %s38, 0
      %p332 = por %p330, %p331
      %s334 = sadd.s32 %s333, 1
      %p337 = scmp.eq.s32.totalorder %s32, 7
      %p338 = scmp.ne.s32.totalorder %s333, %s335
      %p339 = scmp.eq.s32.totalorder %s32, 0
      %p340 = por %p338, %p339
      %p341 = scmp.ne.s32.totalorder %s333, %s335
      %p342 = scmp.eq.s32.totalorder %s37, 7
      %p343 = por %p341, %p342
      %p344 = scmp.ne.s32.totalorder %s335, %s336
      %p345 = scmp.eq.s32.totalorder %s37, 0
      %p346 = por %p344, %p345
      %p347 = scmp.ne.s32.totalorder %s335, %s336
      %p348 = scmp.eq.s32.totalorder %s38, 7
      %p349 = por %p347, %p348
      %p351 = scmp.ne.s32.totalorder %s336, %s350
      %p352 = scmp.eq.s32.totalorder %s38, 0
      %p353 = por %p351, %p352
      %s355 = sadd.s32 %s354, 1
      %p358 = scmp.eq.s32.totalorder %s32, 7
      %p359 = scmp.ne.s32.totalorder %s354, %s356
      %p360 = scmp.eq.s32.totalorder %s32, 0
      %p361 = por %p359, %p360
      %p362 = scmp.ne.s32.totalorder %s354, %s356
      %p363 = scmp.eq.s32.totalorder %s37, 7
      %p364 = por %p362, %p363
      %p365 = scmp.ne.s32.totalorder %s356, %s357
      %p366 = scmp.eq.s32.totalorder %s37, 0
      %p367 = por %p365, %p366
      %p368 = scmp.ne.s32.totalorder %s356, %s357
      %p369 = scmp.eq.s32.totalorder %s38, 7
      %p370 = por %p368, %p369
      %p372 = scmp.ne.s32.totalorder %s357, %s371
      %p373 = scmp.eq.s32.totalorder %s38, 0
      %p374 = por %p372, %p373
      %s376 = sadd.s32 %s375, 1
      %p379 = scmp.eq.s32.totalorder %s32, 7
      %p380 = scmp.ne.s32.totalorder %s375, %s377
      %p381 = scmp.eq.s32.totalorder %s32, 0
      %p382 = por %p380, %p381
      %p383 = scmp.ne.s32.totalorder %s375, %s377
      %p384 = scmp.eq.s32.totalorder %s37, 7
      %p385 = por %p383, %p384
      %p386 = scmp.ne.s32.totalorder %s377, %s378
      %p387 = scmp.eq.s32.totalorder %s37, 0
      %p388 = por %p386, %p387
      %p389 = scmp.ne.s32.totalorder %s377, %s378
      %p390 = scmp.eq.s32.totalorder %s38, 7
      %p391 = por %p389, %p390
      %p393 = scmp.ne.s32.totalorder %s378, %s392
      %p394 = scmp.eq.s32.totalorder %s38, 0
      %p395 = por %p393, %p394
      %p396 = scmp.le.s32.totalorder 1, %s32
      %p397 = scmp.lt.s32.totalorder %s32, 9
      %p398 = pnand %p396, %p397
      %p399 = pneg %p398
      // Predicated region
      $region9: #{_navigation_policy_step.1} parent=5 // pred_check
        _
      $region10: #{_navigation_policy_step.1} parent=5 // pred_check_branch
        %401 = sbr.rel (%p398) target = $region12
      $region11: #{_navigation_policy_step.1} parent=5 // pred_region
        %s402 = ssub.s32 %s32, 1
        // Predicated region
        $region13: #{_navigation_policy_step.1} parent=11 // pred_check
          %p403 = pneg %p53
        $region14: #{_navigation_policy_step.1} parent=11 // pred_check_branch
          %405 = sbr.rel (%p403) target = $region16
        $region15: #{_navigation_policy_step.1} parent=11 // pred_region
          _
        $region16: #{_navigation_policy_step.1} parent=11 // pred_fallthru
          _
        // Predicated region
        $region17: #{_navigation_policy_step.1} parent=11 // pred_check
          %p406 = pneg %p100
        $region18: #{_navigation_policy_step.1} parent=11 // pred_check_branch
          %408 = sbr.rel (%p406) target = $region20
        $region19: #{_navigation_policy_step.1} parent=11 // pred_region
          _
        $region20: #{_navigation_policy_step.1} parent=11 // pred_fallthru
          _
        // Predicated region
        $region21: #{_navigation_policy_step.1} parent=11 // pred_check
          %p409 = pneg %p199
        $region22: #{_navigation_policy_step.1} parent=11 // pred_check_branch
          %411 = sbr.rel (%p409) target = $region24
        $region23: #{_navigation_policy_step.1} parent=11 // pred_region
          _
        $region24: #{_navigation_policy_step.1} parent=11 // pred_fallthru
          _
        // Predicated region
        $region25: #{_navigation_policy_step.1} parent=11 // pred_check
          %p412 = pneg %p220
        $region26: #{_navigation_policy_step.1} parent=11 // pred_check_branch
          %414 = sbr.rel (%p412) target = $region28
        $region27: #{_navigation_policy_step.1} parent=11 // pred_region
          _
        $region28: #{_navigation_policy_step.1} parent=11 // pred_fallthru
          _
        // Predicated region
        $region29: #{_navigation_policy_step.1} parent=11 // pred_check
          %p415 = pneg %p241
        $region30: #{_navigation_policy_step.1} parent=11 // pred_check_branch
          %417 = sbr.rel (%p415) target = $region32
        $region31: #{_navigation_policy_step.1} parent=11 // pred_region
          _
        $region32: #{_navigation_policy_step.1} parent=11 // pred_fallthru
          _
        // Predicated region
        $region33: #{_navigation_policy_step.1} parent=11 // pred_check
          %p418 = pneg %p262
        $region34: #{_navigation_policy_step.1} parent=11 // pred_check_branch
          %420 = sbr.rel (%p418) target = $region36
        $region35: #{_navigation_policy_step.1} parent=11 // pred_region
          _
        $region36: #{_navigation_policy_step.1} parent=11 // pred_fallthru
          _
        // Predicated region
        $region37: #{_navigation_policy_step.1} parent=11 // pred_check
          %p421 = pneg %p283
        $region38: #{_navigation_policy_step.1} parent=11 // pred_check_branch
          %423 = sbr.rel (%p421) target = $region40
        $region39: #{_navigation_policy_step.1} parent=11 // pred_region
          %s425 = ssub.s32 65536, 65536
          %426 = vsyncadd [#allocation10], %s425
          %s427 = sshll.u32 [#allocation11], 4
          %s428 = int_to_ptr.vmem [resolvable:$true] %s427
          %433 = dma.hbm_to_vmem [thread:$0]  %s10, 65536, %s428, [#allocation10], 1024, 1024, 64
        $region40: #{_navigation_policy_step.1} parent=11 // pred_fallthru
          _
        // Predicated region
        $region41: #{_navigation_policy_step.1} parent=11 // pred_check
          %p434 = pneg %p304
        $region42: #{_navigation_policy_step.1} parent=11 // pred_check_branch
          %436 = sbr.rel (%p434) target = $region44
        $region43: #{_navigation_policy_step.1} parent=11 // pred_region
          %s438 = ssub.s32 4096, 4096
          %439 = vsyncadd [#allocation13], %s438
          %s440 = sshll.u32 [#allocation12], 4
          %s441 = int_to_ptr.vmem [resolvable:$true] %s440
          %446 = dma.hbm_to_vmem [thread:$0]  %s11, 4096, %s441, [#allocation13], 64, 64, 4
        $region44: #{_navigation_policy_step.1} parent=11 // pred_fallthru
          _
        // Predicated region
        $region45: #{_navigation_policy_step.1} parent=11 // pred_check
          %p447 = pneg %p325
        $region46: #{_navigation_policy_step.1} parent=11 // pred_check_branch
          %449 = sbr.rel (%p447) target = $region48
        $region47: #{_navigation_policy_step.1} parent=11 // pred_region
          %s451 = ssub.s32 16, 16
          %452 = vsyncadd [#allocation13], %s451
          %s454 = sshll.u32 [#allocation14], 4
          %s455 = int_to_ptr.vmem [resolvable:$true] %s454
          %457 = dma.hbm_to_vmem [thread:$0]  %s12, 16, %s455, [#allocation13]
        $region48: #{_navigation_policy_step.1} parent=11 // pred_fallthru
          _
      $region12: #{_navigation_policy_step.1} parent=5 // pred_fallthru
        _
      %p458 = scmp.lt.s32.totalorder %s32, 8
      // Predicated region
      $region49: #{_navigation_policy_step.1} parent=5 // pred_check
        %p459 = pneg %p458
      $region50: #{_navigation_policy_step.1} parent=5 // pred_check_branch
        %461 = sbr.rel (%p459) target = $region52
      $region51: #{_navigation_policy_step.1} parent=5 // pred_region
        // Predicated region
        $region53: #{_navigation_policy_step.1} parent=51 // pred_check
          %p462 = pneg %p73
        $region54: #{_navigation_policy_step.1} parent=51 // pred_check_branch
          %464 = sbr.rel (%p462) target = $region56
        $region55: #{_navigation_policy_step.1} parent=51 // pred_region
          %s465 = sand.u32 %s63, 1
          %s466 = scalar_lea.sflag [#allocation5], %s465
          %s467 = sand.u32 %s63, 1
          %s468 = smul.addr %s467, 3712
          %s469 = scalar_lea.vmem [#allocation4], %s468
          %s470 = smul.u32 2, %s32
          %s472 = ssub.s32 59392, 59392
          %473 = vsyncadd %s466, %s472
          %s474 = smul.addr %s470, 64
          %s475 = scalar_lea.hbm %s1, %s474
          %s476 = sshll.u32 %s469, 4
          %s477 = int_to_ptr.vmem [resolvable:$true] %s476
          %482 = dma.hbm_to_vmem [thread:$0]  %s475, 59392, %s477, %s466, 1024, 128, 8
        $region56: #{_navigation_policy_step.1} parent=51 // pred_fallthru
          _
        // Predicated region
        $region57: #{_navigation_policy_step.1} parent=51 // pred_check
          %p483 = pneg %p120
        $region58: #{_navigation_policy_step.1} parent=51 // pred_check_branch
          %485 = sbr.rel (%p483) target = $region60
        $region59: #{_navigation_policy_step.1} parent=51 // pred_region
          %s486 = sand.u32 %s32, 1
          %s487 = scalar_lea.sflag [#allocation7], %s486
          %s488 = sand.u32 %s110, 1
          %s489 = smul.addr %s488, 512
          %s490 = scalar_lea.vmem [#allocation6], %s489
          %s491 = smul.u32 2, %s32
          %s493 = ssub.s32 8192, 8192
          %494 = vsyncadd %s487, %s493
          %s495 = smul.addr %s491, 64
          %s496 = scalar_lea.hbm %s3, %s495
          %s497 = sshll.u32 %s490, 4
          %s498 = int_to_ptr.vmem [resolvable:$true] %s497
          %503 = dma.hbm_to_vmem [thread:$0]  %s496, 8192, %s498, %s487, 1024, 128, 8
        $region60: #{_navigation_policy_step.1} parent=51 // pred_fallthru
          _
        // Predicated region
        $region61: #{_navigation_policy_step.1} parent=51 // pred_check
          %p504 = pneg %p146
        $region62: #{_navigation_policy_step.1} parent=51 // pred_check_branch
          %506 = sbr.rel (%p504) target = $region64
        $region63: #{_navigation_policy_step.1} parent=51 // pred_region
          %s507 = sand.u32 %s32, 1
          %s508 = scalar_lea.sflag [#allocation7], %s507
          %s509 = sand.u32 %s136, 1
          %s510 = smul.addr %s509, 2
          %s511 = scalar_lea.vmem [#allocation8], %s510
          %s512 = smul.u32 2, %s32
          %s514 = ssub.s32 32, 32
          %515 = vsyncadd %s508, %s514
          %s516 = smul.addr %s512, 16
          %s517 = scalar_lea.hbm %s4, %s516
          %s519 = sshll.u32 %s511, 4
          %s520 = int_to_ptr.vmem [resolvable:$true] %s519
          %522 = dma.hbm_to_vmem [thread:$0]  %s517, 32, %s520, %s508
        $region64: #{_navigation_policy_step.1} parent=51 // pred_fallthru
          _
        // Predicated region
        $region65: #{_navigation_policy_step.1} parent=51 // pred_check
          %p523 = pneg %p172
        $region66: #{_navigation_policy_step.1} parent=51 // pred_check_branch
          %525 = sbr.rel (%p523) target = $region68
        $region67: #{_navigation_policy_step.1} parent=51 // pred_region
          %s526 = sand.u32 %s32, 1
          %s527 = scalar_lea.sflag [#allocation10], %s526
          %s528 = sand.u32 %s162, 1
          %s529 = smul.addr %s528, 2
          %s530 = scalar_lea.vmem [#allocation9], %s529
          %s531 = smul.u32 2, %s32
          %s533 = ssub.s32 32, 32
          %534 = vsyncadd %s527, %s533
          %s535 = smul.addr %s531, 16
          %s536 = scalar_lea.hbm %s5, %s535
          %s538 = sshll.u32 %s530, 4
          %s539 = int_to_ptr.vmem [resolvable:$true] %s538
          %541 = dma.hbm_to_vmem [thread:$0]  %s536, 32, %s539, %s527
        $region68: #{_navigation_policy_step.1} parent=51 // pred_fallthru
          _
      $region52: #{_navigation_policy_step.1} parent=5 // pred_fallthru
        _
      %p542 = scmp.le.s32.totalorder 1, %s32
      %p543 = scmp.lt.s32.totalorder %s32, 9
      %p544 = pnand %p542, %p543
      %p545 = pneg %p544
      // Predicated region
      $region69: #{_navigation_policy_step.1} parent=5 // pred_check
        _
      $region70: #{_navigation_policy_step.1} parent=5 // pred_check_branch
        %547 = sbr.rel (%p544) target = $region72
      $region71: #{_navigation_policy_step.1} parent=5 // pred_region
        %s548 = ssub.s32 %s32, 1
        %s549 = sand.u32 %s66, 1
        %s550 = scalar_lea.sflag [#allocation5], %s549
        %s551 = sand.u32 %s66, 1
        %s552 = smul.addr %s551, 3712
        %s553 = scalar_lea.vmem [#allocation4], %s552
        // Predicated region
        $region73: #{_navigation_policy_step.1} parent=71 // pred_check
          %p554 = pneg %p79
        $region74: #{_navigation_policy_step.1} parent=71 // pred_check_branch
          %556 = sbr.rel (%p554) target = $region76
        $region75: #{_navigation_policy_step.1} parent=71 // pred_region
          %557 = dma.done %s550, 59392
        $region76: #{_navigation_policy_step.1} parent=71 // pred_fallthru
          _
        %s558 = sand.u32 %s37, 1
        %s559 = scalar_lea.sflag [#allocation7], %s558
        %s560 = sand.u32 %s113, 1
        %s561 = smul.addr %s560, 512
        %s562 = scalar_lea.vmem [#allocation6], %s561
        // Predicated region
        $region77: #{_navigation_policy_step.1} parent=71 // pred_check
          %p563 = pneg %p126
        $region78: #{_navigation_policy_step.1} parent=71 // pred_check_branch
          %565 = sbr.rel (%p563) target = $region80
        $region79: #{_navigation_policy_step.1} parent=71 // pred_region
          %566 = dma.done %s559, 8192
        $region80: #{_navigation_policy_step.1} parent=71 // pred_fallthru
          _
        %s567 = sand.u32 %s37, 1
        %s568 = scalar_lea.sflag [#allocation7], %s567
        %s569 = sand.u32 %s139, 1
        %s570 = smul.addr %s569, 2
        %s571 = scalar_lea.vmem [#allocation8], %s570
        // Predicated region
        $region81: #{_navigation_policy_step.1} parent=71 // pred_check
          %p572 = pneg %p152
        $region82: #{_navigation_policy_step.1} parent=71 // pred_check_branch
          %574 = sbr.rel (%p572) target = $region84
        $region83: #{_navigation_policy_step.1} parent=71 // pred_region
          %575 = dma.done %s568, 32
        $region84: #{_navigation_policy_step.1} parent=71 // pred_fallthru
          _
        %s576 = sand.u32 %s37, 1
        %s577 = scalar_lea.sflag [#allocation10], %s576
        %s578 = sand.u32 %s165, 1
        %s579 = smul.addr %s578, 2
        %s580 = scalar_lea.vmem [#allocation9], %s579
        // Predicated region
        $region85: #{_navigation_policy_step.1} parent=71 // pred_check
          %p581 = pneg %p178
        $region86: #{_navigation_policy_step.1} parent=71 // pred_check_branch
          %583 = sbr.rel (%p581) target = $region88
        $region87: #{_navigation_policy_step.1} parent=71 // pred_region
          %584 = dma.done %s577, 32
        $region88: #{_navigation_policy_step.1} parent=71 // pred_fallthru
          _
        // Predicated region
        $region89: #{_navigation_policy_step.1} parent=71 // pred_check
          %p585 = pneg %p283
        $region90: #{_navigation_policy_step.1} parent=71 // pred_check_branch
          %587 = sbr.rel (%p585) target = $region92
        $region91: #{_navigation_policy_step.1} parent=71 // pred_region
          %588 = dma.done [#allocation10], 65536
        $region92: #{_navigation_policy_step.1} parent=71 // pred_fallthru
          _
        // Predicated region
        $region93: #{_navigation_policy_step.1} parent=71 // pred_check
          %p589 = pneg %p304
        $region94: #{_navigation_policy_step.1} parent=71 // pred_check_branch
          %591 = sbr.rel (%p589) target = $region96
        $region95: #{_navigation_policy_step.1} parent=71 // pred_region
          %592 = dma.done [#allocation13], 4096
        $region96: #{_navigation_policy_step.1} parent=71 // pred_fallthru
          _
        // Predicated region
        $region97: #{_navigation_policy_step.1} parent=71 // pred_check
          %p593 = pneg %p325
        $region98: #{_navigation_policy_step.1} parent=71 // pred_check_branch
          %595 = sbr.rel (%p593) target = $region100
        $region99: #{_navigation_policy_step.1} parent=71 // pred_region
          %596 = dma.done [#allocation13], 16
        $region100: #{_navigation_policy_step.1} parent=71 // pred_fallthru
          _
        %p597 = pneg %p53
        %p598 = pneg %p50
        %s599 = sand.u32 %s66, 1
        %s600 = scalar_lea.sflag [#allocation5], %s599
        %s601 = sand.u32 %s66, 1
        %s602 = smul.addr %s601, 3712
        %s603 = scalar_lea.vmem [#allocation4], %s602
        %p604 = pneg %p79
        %p605 = pneg %p76
        %p606 = pneg %p100
        %p607 = pneg %p97
        %s608 = sand.u32 %s37, 1
        %s609 = scalar_lea.sflag [#allocation7], %s608
        %s610 = sand.u32 %s113, 1
        %s611 = smul.addr %s610, 512
        %s612 = scalar_lea.vmem [#allocation6], %s611
        %p613 = pneg %p126
        %p614 = pneg %p123
        %s615 = sand.u32 %s37, 1
        %s616 = scalar_lea.sflag [#allocation7], %s615
        %s617 = sand.u32 %s139, 1
        %s618 = smul.addr %s617, 2
        %s619 = scalar_lea.vmem [#allocation8], %s618
        %p620 = pneg %p152
        %p621 = pneg %p149
        %s622 = sand.u32 %s37, 1
        %s623 = scalar_lea.sflag [#allocation10], %s622
        %s624 = sand.u32 %s165, 1
        %s625 = smul.addr %s624, 2
        %s626 = scalar_lea.vmem [#allocation9], %s625
        %p627 = pneg %p178
        %p628 = pneg %p175
        %p629 = pneg %p199
        %p630 = pneg %p196
        %p631 = pneg %p220
        %p632 = pneg %p217
        %p633 = pneg %p241
        %p634 = pneg %p238
        %p635 = pneg %p262
        %p636 = pneg %p259
        %p637 = pneg %p283
        %p638 = pneg %p280
        %p639 = pneg %p304
        %p640 = pneg %p301
        %p641 = pneg %p325
        %p642 = pneg %p322
        %p643 = pneg %p346
        %p644 = pneg %p343
        %p645 = pneg %p367
        %p646 = pneg %p364
        %p647 = pneg %p388
        %p648 = pneg %p385
        %s649 = smul.u32 2, %s37
        %s650 = smul.u32 2, %s37
        %s651 = smul.u32 2, %s37
        %s652 = smul.u32 2, %s37
        %v654 = vld [vmem:[%s571] sm:$0x3]
        %v655 = vld [vmem:[%s0] sm:$0xff]
        %v656 = vld [vmem:[%s0 + $0x8] sm:$0xff]
        %v657 = vld [vmem:[%s0 + $0x10] sm:$0xff]
        %v658 = vld [vmem:[%s0 + $0x18] sm:$0x1f]
        %v659 = vld [vmem:[%s553] sm:$0xff]
        %v660 = vld [vmem:[%s553 + $0x8] sm:$0xff]
        %v661 = vld [vmem:[%s553 + $0x10] sm:$0xff]
        %v662 = vld [vmem:[%s553 + $0x18] sm:$0xff]
        %v663 = vld [vmem:[%s553 + $0x20] sm:$0xff]
        %v664 = vld [vmem:[%s553 + $0x28] sm:$0xff]
        %v665 = vld [vmem:[%s553 + $0x30] sm:$0xff]
        %v666 = vld [vmem:[%s553 + $0x38] sm:$0xff]
        %v667 = vld [vmem:[%s553 + $0x40] sm:$0xff]
        %v668 = vld [vmem:[%s553 + $0x48] sm:$0xff]
        %v669 = vld [vmem:[%s553 + $0x50] sm:$0xff]
        %v670 = vld [vmem:[%s553 + $0x58] sm:$0xff]
        %v671 = vld [vmem:[%s553 + $0x60] sm:$0xff]
        %v672 = vld [vmem:[%s553 + $0x68] sm:$0xff]
        %v673 = vld [vmem:[%s553 + $0x70] sm:$0xff]
        %v674 = vld [vmem:[%s553 + $0x78] sm:$0xff]
        %v675 = vld [vmem:[%s553 + $0x80] sm:$0xff]
        %v676 = vld [vmem:[%s553 + $0x88] sm:$0xff]
        %v677 = vld [vmem:[%s553 + $0x90] sm:$0xff]
        %v678 = vld [vmem:[%s553 + $0x98] sm:$0xff]
        %v679 = vld [vmem:[%s553 + $0xa0] sm:$0xff]
        %v680 = vld [vmem:[%s553 + $0xa8] sm:$0xff]
        %v681 = vld [vmem:[%s553 + $0xb0] sm:$0xff]
        %v682 = vld [vmem:[%s553 + $0xb8] sm:$0xff]
        %v683 = vld [vmem:[%s553 + $0xc0] sm:$0xff]
        %v684 = vld [vmem:[%s553 + $0xc8] sm:$0xff]
        %v685 = vld [vmem:[%s553 + $0xd0] sm:$0xff]
        %v686 = vld [vmem:[%s553 + $0xd8] sm:$0xff]
        %v687 = vld [vmem:[%s553 + $0xe0] sm:$0xff]
        %v688 = vld [vmem:[%s553 + $0xe8] sm:$0xff]
        %v689 = vld [vmem:[%s553 + $0xf0] sm:$0xff]
        %v690 = vld [vmem:[%s553 + $0xf8] sm:$0xff]
        %v691 = vld [vmem:[%s553 + $0x100] sm:$0xff]
        %v692 = vld [vmem:[%s553 + $0x108] sm:$0xff]
        %v693 = vld [vmem:[%s553 + $0x110] sm:$0xff]
        %v694 = vld [vmem:[%s553 + $0x118] sm:$0xff]
        %v695 = vld [vmem:[%s553 + $0x120] sm:$0xff]
        %v696 = vld [vmem:[%s553 + $0x128] sm:$0xff]
        %v697 = vld [vmem:[%s553 + $0x130] sm:$0xff]
        %v698 = vld [vmem:[%s553 + $0x138] sm:$0xff]
        %v699 = vld [vmem:[%s553 + $0x140] sm:$0xff]
        %v700 = vld [vmem:[%s553 + $0x148] sm:$0xff]
        %v701 = vld [vmem:[%s553 + $0x150] sm:$0xff]
        %v702 = vld [vmem:[%s553 + $0x158] sm:$0xff]
        %v703 = vld [vmem:[%s553 + $0x160] sm:$0xff]
        %v704 = vld [vmem:[%s553 + $0x168] sm:$0xff]
        %v705 = vld [vmem:[%s553 + $0x170] sm:$0xff]
        %v706 = vld [vmem:[%s553 + $0x178] sm:$0xff]
        %v707 = vld [vmem:[%s553 + $0x180] sm:$0xff]
        %v708 = vld [vmem:[%s553 + $0x188] sm:$0xff]
        %v709 = vld [vmem:[%s553 + $0x190] sm:$0xff]
        %v710 = vld [vmem:[%s553 + $0x198] sm:$0xff]
        %v711 = vld [vmem:[%s553 + $0x1a0] sm:$0xff]
        %v712 = vld [vmem:[%s553 + $0x1a8] sm:$0xff]
        %v713 = vld [vmem:[%s553 + $0x1b0] sm:$0xff]
        %v714 = vld [vmem:[%s553 + $0x1b8] sm:$0xff]
        %v715 = vld [vmem:[%s553 + $0x1c0] sm:$0xff]
        %v716 = vld [vmem:[%s553 + $0x1c8] sm:$0xff]
        %v717 = vld [vmem:[%s553 + $0x1d0] sm:$0xff]
        %v718 = vld [vmem:[%s553 + $0x1d8] sm:$0xff]
        %v719 = vld [vmem:[%s553 + $0x1e0] sm:$0xff]
        %v720 = vld [vmem:[%s553 + $0x1e8] sm:$0xff]
        %v721 = vld [vmem:[%s553 + $0x1f0] sm:$0xff]
        %v722 = vld [vmem:[%s553 + $0x1f8] sm:$0xff]
        %v723 = vld [vmem:[%s553 + $0x200] sm:$0xff]
        %v724 = vld [vmem:[%s553 + $0x208] sm:$0xff]
        %v725 = vld [vmem:[%s553 + $0x210] sm:$0xff]
        %v726 = vld [vmem:[%s553 + $0x218] sm:$0xff]
        %v727 = vld [vmem:[%s553 + $0x220] sm:$0xff]
        %v728 = vld [vmem:[%s553 + $0x228] sm:$0xff]
        %v729 = vld [vmem:[%s553 + $0x230] sm:$0xff]
        %v730 = vld [vmem:[%s553 + $0x238] sm:$0xff]
        %v731 = vld [vmem:[%s553 + $0x240] sm:$0xff]
        %v732 = vld [vmem:[%s553 + $0x248] sm:$0xff]
        %v733 = vld [vmem:[%s553 + $0x250] sm:$0xff]
        %v734 = vld [vmem:[%s553 + $0x258] sm:$0xff]
        %v735 = vld [vmem:[%s553 + $0x260] sm:$0xff]
        %v736 = vld [vmem:[%s553 + $0x268] sm:$0xff]
        %v737 = vld [vmem:[%s553 + $0x270] sm:$0xff]
        %v738 = vld [vmem:[%s553 + $0x278] sm:$0xff]
        %v739 = vld [vmem:[%s553 + $0x280] sm:$0xff]
        %v740 = vld [vmem:[%s553 + $0x288] sm:$0xff]
        %v741 = vld [vmem:[%s553 + $0x290] sm:$0xff]
        %v742 = vld [vmem:[%s553 + $0x298] sm:$0xff]
        %v743 = vld [vmem:[%s553 + $0x2a0] sm:$0xff]
        %v744 = vld [vmem:[%s553 + $0x2a8] sm:$0xff]
        %v745 = vld [vmem:[%s553 + $0x2b0] sm:$0xff]
        %v746 = vld [vmem:[%s553 + $0x2b8] sm:$0xff]
        %v747 = vld [vmem:[%s553 + $0x2c0] sm:$0xff]
        %v748 = vld [vmem:[%s553 + $0x2c8] sm:$0xff]
        %v749 = vld [vmem:[%s553 + $0x2d0] sm:$0xff]
        %v750 = vld [vmem:[%s553 + $0x2d8] sm:$0xff]
        %v751 = vld [vmem:[%s553 + $0x2e0] sm:$0xff]
        %v752 = vld [vmem:[%s553 + $0x2e8] sm:$0xff]
        %v753 = vld [vmem:[%s553 + $0x2f0] sm:$0xff]
        %v754 = vld [vmem:[%s553 + $0x2f8] sm:$0xff]
        %v755 = vld [vmem:[%s553 + $0x300] sm:$0xff]
        %v756 = vld [vmem:[%s553 + $0x308] sm:$0xff]
        %v757 = vld [vmem:[%s553 + $0x310] sm:$0xff]
        %v758 = vld [vmem:[%s553 + $0x318] sm:$0xff]
        %v759 = vld [vmem:[%s553 + $0x320] sm:$0xff]
        %v760 = vld [vmem:[%s553 + $0x328] sm:$0xff]
        %v761 = vld [vmem:[%s553 + $0x330] sm:$0xff]
        %v762 = vld [vmem:[%s553 + $0x338] sm:$0xff]
        %v763 = vld [vmem:[%s553 + $0x340] sm:$0xff]
        %v764 = vld [vmem:[%s553 + $0x348] sm:$0xff]
        %v765 = vld [vmem:[%s553 + $0x350] sm:$0xff]
        %v766 = vld [vmem:[%s553 + $0x358] sm:$0xff]
        %v767 = vld [vmem:[%s553 + $0x360] sm:$0xff]
        %v768 = vld [vmem:[%s553 + $0x368] sm:$0xff]
        %v769 = vld [vmem:[%s553 + $0x370] sm:$0xff]
        %v770 = vld [vmem:[%s553 + $0x378] sm:$0xff]
        %v771 = vld [vmem:[%s553 + $0x380] sm:$0xff]
        %v772 = vld [vmem:[%s553 + $0x388] sm:$0xff]
        %v773 = vld [vmem:[%s553 + $0x390] sm:$0xff]
        %v774 = vld [vmem:[%s553 + $0x398] sm:$0xff]
        %v775 = vld [vmem:[%s553 + $0x3a0] sm:$0xff]
        %v776 = vld [vmem:[%s553 + $0x3a8] sm:$0xff]
        %v777 = vld [vmem:[%s553 + $0x3b0] sm:$0xff]
        %v778 = vld [vmem:[%s553 + $0x3b8] sm:$0xff]
        %v779 = vld [vmem:[%s553 + $0x3c0] sm:$0xff]
        %v780 = vld [vmem:[%s553 + $0x3c8] sm:$0xff]
        %v781 = vld [vmem:[%s553 + $0x3d0] sm:$0xff]
        %v782 = vld [vmem:[%s553 + $0x3d8] sm:$0xff]
        %v783 = vld [vmem:[%s553 + $0x3e0] sm:$0xff]
        %v784 = vld [vmem:[%s553 + $0x3e8] sm:$0xff]
        %v785 = vld [vmem:[%s553 + $0x3f0] sm:$0xff]
        %v786 = vld [vmem:[%s553 + $0x3f8] sm:$0xff]
        %v787 = vld [vmem:[%s553 + $0x400] sm:$0xff]
        %v788 = vld [vmem:[%s553 + $0x408] sm:$0xff]
        %v789 = vld [vmem:[%s553 + $0x410] sm:$0xff]
        %v790 = vld [vmem:[%s553 + $0x418] sm:$0xff]
        %v791 = vld [vmem:[%s553 + $0x420] sm:$0xff]
        %v792 = vld [vmem:[%s553 + $0x428] sm:$0xff]
        %v793 = vld [vmem:[%s553 + $0x430] sm:$0xff]
        %v794 = vld [vmem:[%s553 + $0x438] sm:$0xff]
        %v795 = vld [vmem:[%s553 + $0x440] sm:$0xff]
        %v796 = vld [vmem:[%s553 + $0x448] sm:$0xff]
        %v797 = vld [vmem:[%s553 + $0x450] sm:$0xff]
        %v798 = vld [vmem:[%s553 + $0x458] sm:$0xff]
        %v799 = vld [vmem:[%s553 + $0x460] sm:$0xff]
        %v800 = vld [vmem:[%s553 + $0x468] sm:$0xff]
        %v801 = vld [vmem:[%s553 + $0x470] sm:$0xff]
        %v802 = vld [vmem:[%s553 + $0x478] sm:$0xff]
        %v803 = vld [vmem:[%s553 + $0x480] sm:$0xff]
        %v804 = vld [vmem:[%s553 + $0x488] sm:$0xff]
        %v805 = vld [vmem:[%s553 + $0x490] sm:$0xff]
        %v806 = vld [vmem:[%s553 + $0x498] sm:$0xff]
        %v807 = vld [vmem:[%s553 + $0x4a0] sm:$0xff]
        %v808 = vld [vmem:[%s553 + $0x4a8] sm:$0xff]
        %v809 = vld [vmem:[%s553 + $0x4b0] sm:$0xff]
        %v810 = vld [vmem:[%s553 + $0x4b8] sm:$0xff]
        %v811 = vld [vmem:[%s553 + $0x4c0] sm:$0xff]
        %v812 = vld [vmem:[%s553 + $0x4c8] sm:$0xff]
        %v813 = vld [vmem:[%s553 + $0x4d0] sm:$0xff]
        %v814 = vld [vmem:[%s553 + $0x4d8] sm:$0xff]
        %v815 = vld [vmem:[%s553 + $0x4e0] sm:$0xff]
        %v816 = vld [vmem:[%s553 + $0x4e8] sm:$0xff]
        %v817 = vld [vmem:[%s553 + $0x4f0] sm:$0xff]
        %v818 = vld [vmem:[%s553 + $0x4f8] sm:$0xff]
        %v819 = vld [vmem:[%s553 + $0x500] sm:$0xff]
        %v820 = vld [vmem:[%s553 + $0x508] sm:$0xff]
        %v821 = vld [vmem:[%s553 + $0x510] sm:$0xff]
        %v822 = vld [vmem:[%s553 + $0x518] sm:$0xff]
        %v823 = vld [vmem:[%s553 + $0x520] sm:$0xff]
        %v824 = vld [vmem:[%s553 + $0x528] sm:$0xff]
        %v825 = vld [vmem:[%s553 + $0x530] sm:$0xff]
        %v826 = vld [vmem:[%s553 + $0x538] sm:$0xff]
        %v827 = vld [vmem:[%s553 + $0x540] sm:$0xff]
        %v828 = vld [vmem:[%s553 + $0x548] sm:$0xff]
        %v829 = vld [vmem:[%s553 + $0x550] sm:$0xff]
        %v830 = vld [vmem:[%s553 + $0x558] sm:$0xff]
        %v831 = vld [vmem:[%s553 + $0x560] sm:$0xff]
        %v832 = vld [vmem:[%s553 + $0x568] sm:$0xff]
        %v833 = vld [vmem:[%s553 + $0x570] sm:$0xff]
        %v834 = vld [vmem:[%s553 + $0x578] sm:$0xff]
        %v835 = vld [vmem:[%s553 + $0x580] sm:$0xff]
        %v836 = vld [vmem:[%s553 + $0x588] sm:$0xff]
        %v837 = vld [vmem:[%s553 + $0x590] sm:$0xff]
        %v838 = vld [vmem:[%s553 + $0x598] sm:$0xff]
        %v839 = vld [vmem:[%s553 + $0x5a0] sm:$0xff]
        %v840 = vld [vmem:[%s553 + $0x5a8] sm:$0xff]
        %v841 = vld [vmem:[%s553 + $0x5b0] sm:$0xff]
        %v842 = vld [vmem:[%s553 + $0x5b8] sm:$0xff]
        %v843 = vld [vmem:[%s553 + $0x5c0] sm:$0xff]
        %v844 = vld [vmem:[%s553 + $0x5c8] sm:$0xff]
        %v845 = vld [vmem:[%s553 + $0x5d0] sm:$0xff]
        %v846 = vld [vmem:[%s553 + $0x5d8] sm:$0xff]
        %v847 = vld [vmem:[%s553 + $0x5e0] sm:$0xff]
        %v848 = vld [vmem:[%s553 + $0x5e8] sm:$0xff]
        %v849 = vld [vmem:[%s553 + $0x5f0] sm:$0xff]
        %v850 = vld [vmem:[%s553 + $0x5f8] sm:$0xff]
        %v851 = vld [vmem:[%s553 + $0x600] sm:$0xff]
        %v852 = vld [vmem:[%s553 + $0x608] sm:$0xff]
        %v853 = vld [vmem:[%s553 + $0x610] sm:$0xff]
        %v854 = vld [vmem:[%s553 + $0x618] sm:$0xff]
        %v855 = vld [vmem:[%s553 + $0x620] sm:$0xff]
        %v856 = vld [vmem:[%s553 + $0x628] sm:$0xff]
        %v857 = vld [vmem:[%s553 + $0x630] sm:$0xff]
        %v858 = vld [vmem:[%s553 + $0x638] sm:$0xff]
        %v859 = vld [vmem:[%s553 + $0x640] sm:$0xff]
        %v860 = vld [vmem:[%s553 + $0x648] sm:$0xff]
        %v861 = vld [vmem:[%s553 + $0x650] sm:$0xff]
        %v862 = vld [vmem:[%s553 + $0x658] sm:$0xff]
        %v863 = vld [vmem:[%s553 + $0x660] sm:$0xff]
        %v864 = vld [vmem:[%s553 + $0x668] sm:$0xff]
        %v865 = vld [vmem:[%s553 + $0x670] sm:$0xff]
        %v866 = vld [vmem:[%s553 + $0x678] sm:$0xff]
        %v867 = vld [vmem:[%s553 + $0x680] sm:$0xff]
        %v868 = vld [vmem:[%s553 + $0x688] sm:$0xff]
        %v869 = vld [vmem:[%s553 + $0x690] sm:$0xff]
        %v870 = vld [vmem:[%s553 + $0x698] sm:$0xff]
        %v871 = vld [vmem:[%s553 + $0x6a0] sm:$0xff]
        %v872 = vld [vmem:[%s553 + $0x6a8] sm:$0xff]
        %v873 = vld [vmem:[%s553 + $0x6b0] sm:$0xff]
        %v874 = vld [vmem:[%s553 + $0x6b8] sm:$0xff]
        %v875 = vld [vmem:[%s553 + $0x6c0] sm:$0xff]
        %v876 = vld [vmem:[%s553 + $0x6c8] sm:$0xff]
        %v877 = vld [vmem:[%s553 + $0x6d0] sm:$0xff]
        %v878 = vld [vmem:[%s553 + $0x6d8] sm:$0xff]
        %v879 = vld [vmem:[%s553 + $0x6e0] sm:$0xff]
        %v880 = vld [vmem:[%s553 + $0x6e8] sm:$0xff]
        %v881 = vld [vmem:[%s553 + $0x6f0] sm:$0xff]
        %v882 = vld [vmem:[%s553 + $0x6f8] sm:$0xff]
        %v883 = vld [vmem:[%s553 + $0x700] sm:$0xff]
        %v884 = vld [vmem:[%s553 + $0x708] sm:$0xff]
        %v885 = vld [vmem:[%s553 + $0x710] sm:$0xff]
        %v886 = vld [vmem:[%s553 + $0x718] sm:$0xff]
        %v887 = vld [vmem:[%s553 + $0x720] sm:$0xff]
        %v888 = vld [vmem:[%s553 + $0x728] sm:$0xff]
        %v889 = vld [vmem:[%s553 + $0x730] sm:$0xff]
        %v890 = vld [vmem:[%s553 + $0x738] sm:$0xff]
        %v891 = vld [vmem:[%s553 + $0x740] sm:$0xff]
        %v892 = vld [vmem:[%s553 + $0x748] sm:$0xff]
        %v893 = vld [vmem:[%s553 + $0x750] sm:$0xff]
        %v894 = vld [vmem:[%s553 + $0x758] sm:$0xff]
        %v895 = vld [vmem:[%s553 + $0x760] sm:$0xff]
        %v896 = vld [vmem:[%s553 + $0x768] sm:$0xff]
        %v897 = vld [vmem:[%s553 + $0x770] sm:$0xff]
        %v898 = vld [vmem:[%s553 + $0x778] sm:$0xff]
        %v899 = vld [vmem:[%s553 + $0x780] sm:$0xff]
        %v900 = vld [vmem:[%s553 + $0x788] sm:$0xff]
        %v901 = vld [vmem:[%s553 + $0x790] sm:$0xff]
        %v902 = vld [vmem:[%s553 + $0x798] sm:$0xff]
        %v903 = vld [vmem:[%s553 + $0x7a0] sm:$0xff]
        %v904 = vld [vmem:[%s553 + $0x7a8] sm:$0xff]
        %v905 = vld [vmem:[%s553 + $0x7b0] sm:$0xff]
        %v906 = vld [vmem:[%s553 + $0x7b8] sm:$0xff]
        %v907 = vld [vmem:[%s553 + $0x7c0] sm:$0xff]
        %v908 = vld [vmem:[%s553 + $0x7c8] sm:$0xff]
        %v909 = vld [vmem:[%s553 + $0x7d0] sm:$0xff]
        %v910 = vld [vmem:[%s553 + $0x7d8] sm:$0xff]
        %v911 = vld [vmem:[%s553 + $0x7e0] sm:$0xff]
        %v912 = vld [vmem:[%s553 + $0x7e8] sm:$0xff]
        %v913 = vld [vmem:[%s553 + $0x7f0] sm:$0xff]
        %v914 = vld [vmem:[%s553 + $0x7f8] sm:$0xff]
        %v915 = vld [vmem:[%s553 + $0x800] sm:$0xff]
        %v916 = vld [vmem:[%s553 + $0x808] sm:$0xff]
        %v917 = vld [vmem:[%s553 + $0x810] sm:$0xff]
        %v918 = vld [vmem:[%s553 + $0x818] sm:$0xff]
        %v919 = vld [vmem:[%s553 + $0x820] sm:$0xff]
        %v920 = vld [vmem:[%s553 + $0x828] sm:$0xff]
        %v921 = vld [vmem:[%s553 + $0x830] sm:$0xff]
        %v922 = vld [vmem:[%s553 + $0x838] sm:$0xff]
        %v923 = vld [vmem:[%s553 + $0x840] sm:$0xff]
        %v924 = vld [vmem:[%s553 + $0x848] sm:$0xff]
        %v925 = vld [vmem:[%s553 + $0x850] sm:$0xff]
        %v926 = vld [vmem:[%s553 + $0x858] sm:$0xff]
        %v927 = vld [vmem:[%s553 + $0x860] sm:$0xff]
        %v928 = vld [vmem:[%s553 + $0x868] sm:$0xff]
        %v929 = vld [vmem:[%s553 + $0x870] sm:$0xff]
        %v930 = vld [vmem:[%s553 + $0x878] sm:$0xff]
        %v931 = vld [vmem:[%s553 + $0x880] sm:$0xff]
        %v932 = vld [vmem:[%s553 + $0x888] sm:$0xff]
        %v933 = vld [vmem:[%s553 + $0x890] sm:$0xff]
        %v934 = vld [vmem:[%s553 + $0x898] sm:$0xff]
        %v935 = vld [vmem:[%s553 + $0x8a0] sm:$0xff]
        %v936 = vld [vmem:[%s553 + $0x8a8] sm:$0xff]
        %v937 = vld [vmem:[%s553 + $0x8b0] sm:$0xff]
        %v938 = vld [vmem:[%s553 + $0x8b8] sm:$0xff]
        %v939 = vld [vmem:[%s553 + $0x8c0] sm:$0xff]
        %v940 = vld [vmem:[%s553 + $0x8c8] sm:$0xff]
        %v941 = vld [vmem:[%s553 + $0x8d0] sm:$0xff]
        %v942 = vld [vmem:[%s553 + $0x8d8] sm:$0xff]
        %v943 = vld [vmem:[%s553 + $0x8e0] sm:$0xff]
        %v944 = vld [vmem:[%s553 + $0x8e8] sm:$0xff]
        %v945 = vld [vmem:[%s553 + $0x8f0] sm:$0xff]
        %v946 = vld [vmem:[%s553 + $0x8f8] sm:$0xff]
        %v947 = vld [vmem:[%s553 + $0x900] sm:$0xff]
        %v948 = vld [vmem:[%s553 + $0x908] sm:$0xff]
        %v949 = vld [vmem:[%s553 + $0x910] sm:$0xff]
        %v950 = vld [vmem:[%s553 + $0x918] sm:$0xff]
        %v951 = vld [vmem:[%s553 + $0x920] sm:$0xff]
        %v952 = vld [vmem:[%s553 + $0x928] sm:$0xff]
        %v953 = vld [vmem:[%s553 + $0x930] sm:$0xff]
        %v954 = vld [vmem:[%s553 + $0x938] sm:$0xff]
        %v955 = vld [vmem:[%s553 + $0x940] sm:$0xff]
        %v956 = vld [vmem:[%s553 + $0x948] sm:$0xff]
        %v957 = vld [vmem:[%s553 + $0x950] sm:$0xff]
        %v958 = vld [vmem:[%s553 + $0x958] sm:$0xff]
        %v959 = vld [vmem:[%s553 + $0x960] sm:$0xff]
        %v960 = vld [vmem:[%s553 + $0x968] sm:$0xff]
        %v961 = vld [vmem:[%s553 + $0x970] sm:$0xff]
        %v962 = vld [vmem:[%s553 + $0x978] sm:$0xff]
        %v963 = vld [vmem:[%s553 + $0x980] sm:$0xff]
        %v964 = vld [vmem:[%s553 + $0x988] sm:$0xff]
        %v965 = vld [vmem:[%s553 + $0x990] sm:$0xff]
        %v966 = vld [vmem:[%s553 + $0x998] sm:$0xff]
        %v967 = vld [vmem:[%s553 + $0x9a0] sm:$0xff]
        %v968 = vld [vmem:[%s553 + $0x9a8] sm:$0xff]
        %v969 = vld [vmem:[%s553 + $0x9b0] sm:$0xff]
        %v970 = vld [vmem:[%s553 + $0x9b8] sm:$0xff]
        %v971 = vld [vmem:[%s553 + $0x9c0] sm:$0xff]
        %v972 = vld [vmem:[%s553 + $0x9c8] sm:$0xff]
        %v973 = vld [vmem:[%s553 + $0x9d0] sm:$0xff]
        %v974 = vld [vmem:[%s553 + $0x9d8] sm:$0xff]
        %v975 = vld [vmem:[%s553 + $0x9e0] sm:$0xff]
        %v976 = vld [vmem:[%s553 + $0x9e8] sm:$0xff]
        %v977 = vld [vmem:[%s553 + $0x9f0] sm:$0xff]
        %v978 = vld [vmem:[%s553 + $0x9f8] sm:$0xff]
        %v979 = vld [vmem:[%s553 + $0xa00] sm:$0xff]
        %v980 = vld [vmem:[%s553 + $0xa08] sm:$0xff]
        %v981 = vld [vmem:[%s553 + $0xa10] sm:$0xff]
        %v982 = vld [vmem:[%s553 + $0xa18] sm:$0xff]
        %v983 = vld [vmem:[%s553 + $0xa20] sm:$0xff]
        %v984 = vld [vmem:[%s553 + $0xa28] sm:$0xff]
        %v985 = vld [vmem:[%s553 + $0xa30] sm:$0xff]
        %v986 = vld [vmem:[%s553 + $0xa38] sm:$0xff]
        %v987 = vld [vmem:[%s553 + $0xa40] sm:$0xff]
        %v988 = vld [vmem:[%s553 + $0xa48] sm:$0xff]
        %v989 = vld [vmem:[%s553 + $0xa50] sm:$0xff]
        %v990 = vld [vmem:[%s553 + $0xa58] sm:$0xff]
        %v991 = vld [vmem:[%s553 + $0xa60] sm:$0xff]
        %v992 = vld [vmem:[%s553 + $0xa68] sm:$0xff]
        %v993 = vld [vmem:[%s553 + $0xa70] sm:$0xff]
        %v994 = vld [vmem:[%s553 + $0xa78] sm:$0xff]
        %v995 = vld [vmem:[%s553 + $0xa80] sm:$0xff]
        %v996 = vld [vmem:[%s553 + $0xa88] sm:$0xff]
        %v997 = vld [vmem:[%s553 + $0xa90] sm:$0xff]
        %v998 = vld [vmem:[%s553 + $0xa98] sm:$0xff]
        %v999 = vld [vmem:[%s553 + $0xaa0] sm:$0xff]
        %v1000 = vld [vmem:[%s553 + $0xaa8] sm:$0xff]
        %v1001 = vld [vmem:[%s553 + $0xab0] sm:$0xff]
        %v1002 = vld [vmem:[%s553 + $0xab8] sm:$0xff]
        %v1003 = vld [vmem:[%s553 + $0xac0] sm:$0xff]
        %v1004 = vld [vmem:[%s553 + $0xac8] sm:$0xff]
        %v1005 = vld [vmem:[%s553 + $0xad0] sm:$0xff]
        %v1006 = vld [vmem:[%s553 + $0xad8] sm:$0xff]
        %v1007 = vld [vmem:[%s553 + $0xae0] sm:$0xff]
        %v1008 = vld [vmem:[%s553 + $0xae8] sm:$0xff]
        %v1009 = vld [vmem:[%s553 + $0xaf0] sm:$0xff]
        %v1010 = vld [vmem:[%s553 + $0xaf8] sm:$0xff]
        %v1011 = vld [vmem:[%s553 + $0xb00] sm:$0xff]
        %v1012 = vld [vmem:[%s553 + $0xb08] sm:$0xff]
        %v1013 = vld [vmem:[%s553 + $0xb10] sm:$0xff]
        %v1014 = vld [vmem:[%s553 + $0xb18] sm:$0xff]
        %v1015 = vld [vmem:[%s553 + $0xb20] sm:$0xff]
        %v1016 = vld [vmem:[%s553 + $0xb28] sm:$0xff]
        %v1017 = vld [vmem:[%s553 + $0xb30] sm:$0xff]
        %v1018 = vld [vmem:[%s553 + $0xb38] sm:$0xff]
        %v1019 = vld [vmem:[%s553 + $0xb40] sm:$0xff]
        %v1020 = vld [vmem:[%s553 + $0xb48] sm:$0xff]
        %v1021 = vld [vmem:[%s553 + $0xb50] sm:$0xff]
        %v1022 = vld [vmem:[%s553 + $0xb58] sm:$0xff]
        %v1023 = vld [vmem:[%s553 + $0xb60] sm:$0xff]
        %v1024 = vld [vmem:[%s553 + $0xb68] sm:$0xff]
        %v1025 = vld [vmem:[%s553 + $0xb70] sm:$0xff]
        %v1026 = vld [vmem:[%s553 + $0xb78] sm:$0xff]
        %v1027 = vld [vmem:[%s553 + $0xb80] sm:$0xff]
        %v1028 = vld [vmem:[%s553 + $0xb88] sm:$0xff]
        %v1029 = vld [vmem:[%s553 + $0xb90] sm:$0xff]
        %v1030 = vld [vmem:[%s553 + $0xb98] sm:$0xff]
        %v1031 = vld [vmem:[%s553 + $0xba0] sm:$0xff]
        %v1032 = vld [vmem:[%s553 + $0xba8] sm:$0xff]
        %v1033 = vld [vmem:[%s553 + $0xbb0] sm:$0xff]
        %v1034 = vld [vmem:[%s553 + $0xbb8] sm:$0xff]
        %v1035 = vld [vmem:[%s553 + $0xbc0] sm:$0xff]
        %v1036 = vld [vmem:[%s553 + $0xbc8] sm:$0xff]
        %v1037 = vld [vmem:[%s553 + $0xbd0] sm:$0xff]
        %v1038 = vld [vmem:[%s553 + $0xbd8] sm:$0xff]
        %v1039 = vld [vmem:[%s553 + $0xbe0] sm:$0xff]
        %v1040 = vld [vmem:[%s553 + $0xbe8] sm:$0xff]
        %v1041 = vld [vmem:[%s553 + $0xbf0] sm:$0xff]
        %v1042 = vld [vmem:[%s553 + $0xbf8] sm:$0xff]
        %v1043 = vld [vmem:[%s553 + $0xc00] sm:$0xff]
        %v1044 = vld [vmem:[%s553 + $0xc08] sm:$0xff]
        %v1045 = vld [vmem:[%s553 + $0xc10] sm:$0xff]
        %v1046 = vld [vmem:[%s553 + $0xc18] sm:$0xff]
        %v1047 = vld [vmem:[%s553 + $0xc20] sm:$0xff]
        %v1048 = vld [vmem:[%s553 + $0xc28] sm:$0xff]
        %v1049 = vld [vmem:[%s553 + $0xc30] sm:$0xff]
        %v1050 = vld [vmem:[%s553 + $0xc38] sm:$0xff]
        %v1051 = vld [vmem:[%s553 + $0xc40] sm:$0xff]
        %v1052 = vld [vmem:[%s553 + $0xc48] sm:$0xff]
        %v1053 = vld [vmem:[%s553 + $0xc50] sm:$0xff]
        %v1054 = vld [vmem:[%s553 + $0xc58] sm:$0xff]
        %v1055 = vld [vmem:[%s553 + $0xc60] sm:$0xff]
        %v1056 = vld [vmem:[%s553 + $0xc68] sm:$0xff]
        %v1057 = vld [vmem:[%s553 + $0xc70] sm:$0xff]
        %v1058 = vld [vmem:[%s553 + $0xc78] sm:$0xff]
        %v1059 = vld [vmem:[%s553 + $0xc80] sm:$0xff]
        %v1060 = vld [vmem:[%s553 + $0xc88] sm:$0xff]
        %v1061 = vld [vmem:[%s553 + $0xc90] sm:$0xff]
        %v1062 = vld [vmem:[%s553 + $0xc98] sm:$0xff]
        %v1063 = vld [vmem:[%s553 + $0xca0] sm:$0xff]
        %v1064 = vld [vmem:[%s553 + $0xca8] sm:$0xff]
        %v1065 = vld [vmem:[%s553 + $0xcb0] sm:$0xff]
        %v1066 = vld [vmem:[%s553 + $0xcb8] sm:$0xff]
        %v1067 = vld [vmem:[%s553 + $0xcc0] sm:$0xff]
        %v1068 = vld [vmem:[%s553 + $0xcc8] sm:$0xff]
        %v1069 = vld [vmem:[%s553 + $0xcd0] sm:$0xff]
        %v1070 = vld [vmem:[%s553 + $0xcd8] sm:$0xff]
        %v1071 = vld [vmem:[%s553 + $0xce0] sm:$0xff]
        %v1072 = vld [vmem:[%s553 + $0xce8] sm:$0xff]
        %v1073 = vld [vmem:[%s553 + $0xcf0] sm:$0xff]
        %v1074 = vld [vmem:[%s553 + $0xcf8] sm:$0xff]
        %v1075 = vld [vmem:[%s553 + $0xd00] sm:$0xff]
        %v1076 = vld [vmem:[%s553 + $0xd08] sm:$0xff]
        %v1077 = vld [vmem:[%s553 + $0xd10] sm:$0xff]
        %v1078 = vld [vmem:[%s553 + $0xd18] sm:$0xff]
        %v1079 = vld [vmem:[%s553 + $0xd20] sm:$0xff]
        %v1080 = vld [vmem:[%s553 + $0xd28] sm:$0xff]
        %v1081 = vld [vmem:[%s553 + $0xd30] sm:$0xff]
        %v1082 = vld [vmem:[%s553 + $0xd38] sm:$0xff]
        %v1083 = vld [vmem:[%s553 + $0xd40] sm:$0xff]
        %v1084 = vld [vmem:[%s553 + $0xd48] sm:$0xff]
        %v1085 = vld [vmem:[%s553 + $0xd50] sm:$0xff]
        %v1086 = vld [vmem:[%s553 + $0xd58] sm:$0xff]
        %v1087 = vld [vmem:[%s553 + $0xd60] sm:$0xff]
        %v1088 = vld [vmem:[%s553 + $0xd68] sm:$0xff]
        %v1089 = vld [vmem:[%s553 + $0xd70] sm:$0xff]
        %v1090 = vld [vmem:[%s553 + $0xd78] sm:$0xff]
        %v1091 = vld [vmem:[%s553 + $0xd80] sm:$0xff]
        %v1092 = vld [vmem:[%s553 + $0xd88] sm:$0xff]
        %v1093 = vld [vmem:[%s553 + $0xd90] sm:$0xff]
        %v1094 = vld [vmem:[%s553 + $0xd98] sm:$0xff]
        %v1095 = vld [vmem:[%s553 + $0xda0] sm:$0xff]
        %v1096 = vld [vmem:[%s553 + $0xda8] sm:$0xff]
        %v1097 = vld [vmem:[%s553 + $0xdb0] sm:$0xff]
        %v1098 = vld [vmem:[%s553 + $0xdb8] sm:$0xff]
        %v1099 = vld [vmem:[%s553 + $0xdc0] sm:$0xff]
        %v1100 = vld [vmem:[%s553 + $0xdc8] sm:$0xff]
        %v1101 = vld [vmem:[%s553 + $0xdd0] sm:$0xff]
        %v1102 = vld [vmem:[%s553 + $0xdd8] sm:$0xff]
        %v1103 = vld [vmem:[%s553 + $0xde0] sm:$0xff]
        %v1104 = vld [vmem:[%s553 + $0xde8] sm:$0xff]
        %v1105 = vld [vmem:[%s553 + $0xdf0] sm:$0xff]
        %v1106 = vld [vmem:[%s553 + $0xdf8] sm:$0xff]
        %v1107 = vld [vmem:[%s553 + $0xe00] sm:$0xff]
        %v1108 = vld [vmem:[%s553 + $0xe08] sm:$0xff]
        %v1109 = vld [vmem:[%s553 + $0xe10] sm:$0xff]
        %v1110 = vld [vmem:[%s553 + $0xe18] sm:$0xff]
        %v1111 = vld [vmem:[%s553 + $0xe20] sm:$0xff]
        %v1112 = vld [vmem:[%s553 + $0xe28] sm:$0xff]
        %v1113 = vld [vmem:[%s553 + $0xe30] sm:$0xff]
        %v1114 = vld [vmem:[%s553 + $0xe38] sm:$0xff]
        %v1115 = vld [vmem:[%s553 + $0xe40] sm:$0xff]
        %v1116 = vld [vmem:[%s553 + $0xe48] sm:$0xff]
        %v1117 = vld [vmem:[%s553 + $0xe50] sm:$0xff]
        %v1118 = vld [vmem:[%s553 + $0xe58] sm:$0xff]
        %v1119 = vld [vmem:[%s553 + $0xe60] sm:$0xff]
        %v1120 = vld [vmem:[%s553 + $0xe68] sm:$0xff]
        %v1121 = vld [vmem:[%s553 + $0xe70] sm:$0xff]
        %v1122 = vld [vmem:[%s553 + $0xe78] sm:$0xff]
        %v1127 = vcombine.high %v655, %v655
        %v1129 = vunpack.c.l.s4 1966171168
        %v1130 = vunpack.c.0.s8 %v1129
        %v1131 = vlaneseq
        %v1132 = vshrl.u32 %v1131, 7
        %v1133 = vsub.s32 %v1130, %v1132
        %v1134 = vrot.slane %v655, %v1133
        %v1136 = vunpack.c.l.s4 1966171168
        %v1137 = vunpack.c.0.s8 %v1136
        %v1138 = vlaneseq
        %v1139 = vshrl.u32 %v1138, 7
        %v1140 = vsub.s32 %v1137, %v1139
        %v1141 = vrot.slane %v1127, %v1140
        %v1142 = vcombine.high %v1134, %v1134
        %v1143 = vcombine.high %v1141, %v1141
        %v1145 = vunpack.c.l.s4 1966171168
        %v1146 = vunpack.c.0.s8 %v1145
        %v1147 = vlaneseq
        %v1148 = vshrl.u32 %v1147, 7
        %v1149 = vsub.s32 %v1146, %v1148
        %v1150 = vrot.slane %v1134, %v1149
        %v1152 = vunpack.c.l.s4 1966171168
        %v1153 = vunpack.c.0.s8 %v1152
        %v1154 = vlaneseq
        %v1155 = vshrl.u32 %v1154, 7
        %v1156 = vsub.s32 %v1153, %v1155
        %v1157 = vrot.slane %v1141, %v1156
        %v1159 = vunpack.c.l.s4 1966171168
        %v1160 = vunpack.c.0.s8 %v1159
        %v1161 = vlaneseq
        %v1162 = vshrl.u32 %v1161, 7
        %v1163 = vsub.s32 %v1160, %v1162
        %v1164 = vrot.slane %v1142, %v1163
        %v1166 = vunpack.c.l.s4 1966171168
        %v1167 = vunpack.c.0.s8 %v1166
        %v1168 = vlaneseq
        %v1169 = vshrl.u32 %v1168, 7
        %v1170 = vsub.s32 %v1167, %v1169
        %v1171 = vrot.slane %v1143, %v1170
        %v1172 = vcombine.high %v1150, %v1150
        %v1173 = vcombine.high %v1157, %v1157
        %v1174 = vcombine.high %v1164, %v1164
        %v1175 = vcombine.high %v1171, %v1171
        %v1176 = vcombine.high %v656, %v656
        %v1178 = vunpack.c.l.s4 1966171168
        %v1179 = vunpack.c.0.s8 %v1178
        %v1180 = vlaneseq
        %v1181 = vshrl.u32 %v1180, 7
        %v1182 = vsub.s32 %v1179, %v1181
        %v1183 = vrot.slane %v656, %v1182
        %v1185 = vunpack.c.l.s4 1966171168
        %v1186 = vunpack.c.0.s8 %v1185
        %v1187 = vlaneseq
        %v1188 = vshrl.u32 %v1187, 7
        %v1189 = vsub.s32 %v1186, %v1188
        %v1190 = vrot.slane %v1176, %v1189
        %v1191 = vcombine.high %v1183, %v1183
        %v1192 = vcombine.high %v1190, %v1190
        %v1194 = vunpack.c.l.s4 1966171168
        %v1195 = vunpack.c.0.s8 %v1194
        %v1196 = vlaneseq
        %v1197 = vshrl.u32 %v1196, 7
        %v1198 = vsub.s32 %v1195, %v1197
        %v1199 = vrot.slane %v1183, %v1198
        %v1201 = vunpack.c.l.s4 1966171168
        %v1202 = vunpack.c.0.s8 %v1201
        %v1203 = vlaneseq
        %v1204 = vshrl.u32 %v1203, 7
        %v1205 = vsub.s32 %v1202, %v1204
        %v1206 = vrot.slane %v1190, %v1205
        %v1208 = vunpack.c.l.s4 1966171168
        %v1209 = vunpack.c.0.s8 %v1208
        %v1210 = vlaneseq
        %v1211 = vshrl.u32 %v1210, 7
        %v1212 = vsub.s32 %v1209, %v1211
        %v1213 = vrot.slane %v1191, %v1212
        %v1215 = vunpack.c.l.s4 1966171168
        %v1216 = vunpack.c.0.s8 %v1215
        %v1217 = vlaneseq
        %v1218 = vshrl.u32 %v1217, 7
        %v1219 = vsub.s32 %v1216, %v1218
        %v1220 = vrot.slane %v1192, %v1219
        %v1221 = vcombine.high %v1199, %v1199
        %v1222 = vcombine.high %v1206, %v1206
        %v1223 = vcombine.high %v1213, %v1213
        %v1224 = vcombine.high %v1220, %v1220
        %v1225 = vcombine.high %v657, %v657
        %v1227 = vunpack.c.l.s4 1966171168
        %v1228 = vunpack.c.0.s8 %v1227
        %v1229 = vlaneseq
        %v1230 = vshrl.u32 %v1229, 7
        %v1231 = vsub.s32 %v1228, %v1230
        %v1232 = vrot.slane %v657, %v1231
        %v1234 = vunpack.c.l.s4 1966171168
        %v1235 = vunpack.c.0.s8 %v1234
        %v1236 = vlaneseq
        %v1237 = vshrl.u32 %v1236, 7
        %v1238 = vsub.s32 %v1235, %v1237
        %v1239 = vrot.slane %v1225, %v1238
        %v1240 = vcombine.high %v1232, %v1232
        %v1241 = vcombine.high %v1239, %v1239
        %v1243 = vunpack.c.l.s4 1966171168
        %v1244 = vunpack.c.0.s8 %v1243
        %v1245 = vlaneseq
        %v1246 = vshrl.u32 %v1245, 7
        %v1247 = vsub.s32 %v1244, %v1246
        %v1248 = vrot.slane %v1232, %v1247
        %v1250 = vunpack.c.l.s4 1966171168
        %v1251 = vunpack.c.0.s8 %v1250
        %v1252 = vlaneseq
        %v1253 = vshrl.u32 %v1252, 7
        %v1254 = vsub.s32 %v1251, %v1253
        %v1255 = vrot.slane %v1239, %v1254
        %v1257 = vunpack.c.l.s4 1966171168
        %v1258 = vunpack.c.0.s8 %v1257
        %v1259 = vlaneseq
        %v1260 = vshrl.u32 %v1259, 7
        %v1261 = vsub.s32 %v1258, %v1260
        %v1262 = vrot.slane %v1240, %v1261
        %v1264 = vunpack.c.l.s4 1966171168
        %v1265 = vunpack.c.0.s8 %v1264
        %v1266 = vlaneseq
        %v1267 = vshrl.u32 %v1266, 7
        %v1268 = vsub.s32 %v1265, %v1267
        %v1269 = vrot.slane %v1241, %v1268
        %v1270 = vcombine.high %v1248, %v1248
        %v1271 = vcombine.high %v1255, %v1255
        %v1272 = vcombine.high %v1262, %v1262
        %v1273 = vcombine.high %v1269, %v1269
        %v1274 = vcombine.high %v658, %v658
        %v1276 = vunpack.c.l.s4 1966171168
        %v1277 = vunpack.c.0.s8 %v1276
        %v1278 = vlaneseq
        %v1279 = vshrl.u32 %v1278, 7
        %v1280 = vsub.s32 %v1277, %v1279
        %v1281 = vrot.slane %v658, %v1280
        %v1283 = vunpack.c.l.s4 1966171168
        %v1284 = vunpack.c.0.s8 %v1283
        %v1285 = vlaneseq
        %v1286 = vshrl.u32 %v1285, 7
        %v1287 = vsub.s32 %v1284, %v1286
        %v1288 = vrot.slane %v1274, %v1287
        %v1289 = vcombine.high %v1281, %v1281
        %v1291 = vunpack.c.l.s4 1966171168
        %v1292 = vunpack.c.0.s8 %v1291
        %v1293 = vlaneseq
        %v1294 = vshrl.u32 %v1293, 7
        %v1295 = vsub.s32 %v1292, %v1294
        %v1296 = vrot.slane %v1281, %v1295
        %v1298 = vunpack.c.l.s4 1966171168
        %v1299 = vunpack.c.0.s8 %v1298
        %v1300 = vlaneseq
        %v1301 = vshrl.u32 %v1300, 7
        %v1302 = vsub.s32 %v1299, %v1301
        %v1303 = vrot.slane %v1288, %v1302
        %v1305 = vunpack.c.l.s4 1966171168
        %v1306 = vunpack.c.0.s8 %v1305
        %v1307 = vlaneseq
        %v1308 = vshrl.u32 %v1307, 7
        %v1309 = vsub.s32 %v1306, %v1308
        %v1310 = vrot.slane %v1289, %v1309
        %v1311 = vcombine.high %v1296, %v1296
        %v1312 = vcombine.high %v1310, %v1310
        %v1806 = vunpack.c.l.b16 %v659
        %v1807 = vunpack.c.h.b16 %v659
        %v1808 = vunpack.c.l.b16 %v660
        %v1809 = vunpack.c.h.b16 %v660
        %v1810 = vunpack.c.l.b16 %v661
        %v1811 = vunpack.c.h.b16 %v661
        %v1812 = vunpack.c.l.b16 %v662
        %v1813 = vunpack.c.h.b16 %v662
        %v1814 = vunpack.c.l.b16 %v663
        %v1815 = vunpack.c.h.b16 %v663
        %v1816 = vunpack.c.l.b16 %v664
        %v1817 = vunpack.c.h.b16 %v664
        %v1818 = vunpack.c.l.b16 %v665
        %v1819 = vunpack.c.h.b16 %v665
        %v1820 = vunpack.c.l.b16 %v666
        %v1821 = vunpack.c.h.b16 %v666
        %v1822 = vunpack.c.l.b16 %v667
        %v1823 = vunpack.c.h.b16 %v667
        %v1824 = vunpack.c.l.b16 %v668
        %v1825 = vunpack.c.h.b16 %v668
        %v1826 = vunpack.c.l.b16 %v669
        %v1827 = vunpack.c.h.b16 %v669
        %v1828 = vunpack.c.l.b16 %v670
        %v1829 = vunpack.c.h.b16 %v670
        %v1830 = vunpack.c.l.b16 %v671
        %v1831 = vunpack.c.h.b16 %v671
        %v1832 = vunpack.c.l.b16 %v672
        %v1833 = vunpack.c.h.b16 %v672
        %v1834 = vunpack.c.l.b16 %v673
        %v1835 = vunpack.c.h.b16 %v673
        %v1836 = vunpack.c.l.b16 %v674
        %v1837 = vunpack.c.h.b16 %v674
        %v1838 = vunpack.c.l.b16 %v675
        %v1839 = vunpack.c.h.b16 %v675
        %v1840 = vunpack.c.l.b16 %v676
        %v1841 = vunpack.c.h.b16 %v676
        %v1842 = vunpack.c.l.b16 %v677
        %v1843 = vunpack.c.h.b16 %v677
        %v1844 = vunpack.c.l.b16 %v678
        %v1845 = vunpack.c.h.b16 %v678
        %v1846 = vunpack.c.l.b16 %v679
        %v1847 = vunpack.c.h.b16 %v679
        %v1848 = vunpack.c.l.b16 %v680
        %v1849 = vunpack.c.h.b16 %v680
        %v1850 = vunpack.c.l.b16 %v681
        %v1851 = vunpack.c.h.b16 %v681
        %v1852 = vunpack.c.l.b16 %v682
        %v1853 = vunpack.c.h.b16 %v682
        %v1854 = vunpack.c.l.b16 %v683
        %v1855 = vunpack.c.h.b16 %v683
        %v1856 = vunpack.c.l.b16 %v684
        %v1857 = vunpack.c.h.b16 %v684
        %v1858 = vunpack.c.l.b16 %v685
        %v1859 = vunpack.c.h.b16 %v685
        %v1860 = vunpack.c.l.b16 %v686
        %v1861 = vunpack.c.h.b16 %v686
        %v1862 = vunpack.c.l.b16 %v687
        %v1863 = vunpack.c.h.b16 %v687
        %v1864 = vunpack.c.l.b16 %v688
        %v1865 = vunpack.c.h.b16 %v688
        %v1866 = vunpack.c.l.b16 %v689
        %v1867 = vunpack.c.h.b16 %v689
        %v1868 = vunpack.c.l.b16 %v690
        %v1869 = vunpack.c.h.b16 %v690
        %v1870 = vunpack.c.l.b16 %v691
        %v1871 = vunpack.c.h.b16 %v691
        %v1872 = vunpack.c.l.b16 %v692
        %v1873 = vunpack.c.h.b16 %v692
        %v1874 = vunpack.c.l.b16 %v693
        %v1875 = vunpack.c.h.b16 %v693
        %v1876 = vunpack.c.l.b16 %v694
        %v1877 = vunpack.c.h.b16 %v694
        %v1878 = vunpack.c.l.b16 %v695
        %v1879 = vunpack.c.h.b16 %v695
        %v1880 = vunpack.c.l.b16 %v696
        %v1881 = vunpack.c.h.b16 %v696
        %v1882 = vunpack.c.l.b16 %v697
        %v1883 = vunpack.c.h.b16 %v697
        %v1884 = vunpack.c.l.b16 %v698
        %v1885 = vunpack.c.h.b16 %v698
        %v1886 = vunpack.c.l.b16 %v699
        %v1887 = vunpack.c.h.b16 %v699
        %v1888 = vunpack.c.l.b16 %v700
        %v1889 = vunpack.c.h.b16 %v700
        %v1890 = vunpack.c.l.b16 %v701
        %v1891 = vunpack.c.h.b16 %v701
        %v1892 = vunpack.c.l.b16 %v702
        %v1893 = vunpack.c.h.b16 %v702
        %v1894 = vunpack.c.l.b16 %v703
        %v1895 = vunpack.c.h.b16 %v703
        %v1896 = vunpack.c.l.b16 %v704
        %v1897 = vunpack.c.h.b16 %v704
        %v1898 = vunpack.c.l.b16 %v705
        %v1899 = vunpack.c.h.b16 %v705
        %v1900 = vunpack.c.l.b16 %v706
        %v1901 = vunpack.c.h.b16 %v706
        %v1902 = vunpack.c.l.b16 %v707
        %v1903 = vunpack.c.h.b16 %v707
        %v1904 = vunpack.c.l.b16 %v708
        %v1905 = vunpack.c.h.b16 %v708
        %v1906 = vunpack.c.l.b16 %v709
        %v1907 = vunpack.c.h.b16 %v709
        %v1908 = vunpack.c.l.b16 %v710
        %v1909 = vunpack.c.h.b16 %v710
        %v1910 = vunpack.c.l.b16 %v711
        %v1911 = vunpack.c.h.b16 %v711
        %v1912 = vunpack.c.l.b16 %v712
        %v1913 = vunpack.c.h.b16 %v712
        %v1914 = vunpack.c.l.b16 %v713
        %v1915 = vunpack.c.h.b16 %v713
        %v1916 = vunpack.c.l.b16 %v714
        %v1917 = vunpack.c.h.b16 %v714
        %v1918 = vunpack.c.l.b16 %v715
        %v1919 = vunpack.c.h.b16 %v715
        %v1920 = vunpack.c.l.b16 %v716
        %v1921 = vunpack.c.h.b16 %v716
        %v1922 = vunpack.c.l.b16 %v717
        %v1923 = vunpack.c.h.b16 %v717
        %v1924 = vunpack.c.l.b16 %v718
        %v1925 = vunpack.c.h.b16 %v718
        %v1926 = vunpack.c.l.b16 %v719
        %v1927 = vunpack.c.h.b16 %v719
        %v1928 = vunpack.c.l.b16 %v720
        %v1929 = vunpack.c.h.b16 %v720
        %v1930 = vunpack.c.l.b16 %v721
        %v1931 = vunpack.c.h.b16 %v721
        %v1932 = vunpack.c.l.b16 %v722
        %v1933 = vunpack.c.h.b16 %v722
        %v1934 = vunpack.c.l.b16 %v723
        %v1935 = vunpack.c.h.b16 %v723
        %v1936 = vunpack.c.l.b16 %v724
        %v1937 = vunpack.c.h.b16 %v724
        %v1938 = vunpack.c.l.b16 %v725
        %v1939 = vunpack.c.h.b16 %v725
        %v1940 = vunpack.c.l.b16 %v726
        %v1941 = vunpack.c.h.b16 %v726
        %v1942 = vunpack.c.l.b16 %v727
        %v1943 = vunpack.c.h.b16 %v727
        %v1944 = vunpack.c.l.b16 %v728
        %v1945 = vunpack.c.h.b16 %v728
        %v1946 = vunpack.c.l.b16 %v729
        %v1947 = vunpack.c.h.b16 %v729
        %v1948 = vunpack.c.l.b16 %v730
        %v1949 = vunpack.c.h.b16 %v730
        %v1950 = vunpack.c.l.b16 %v731
        %v1951 = vunpack.c.h.b16 %v731
        %v1952 = vunpack.c.l.b16 %v732
        %v1953 = vunpack.c.h.b16 %v732
        %v1954 = vunpack.c.l.b16 %v733
        %v1955 = vunpack.c.h.b16 %v733
        %v1956 = vunpack.c.l.b16 %v734
        %v1957 = vunpack.c.h.b16 %v734
        %v1958 = vunpack.c.l.b16 %v735
        %v1959 = vunpack.c.h.b16 %v735
        %v1960 = vunpack.c.l.b16 %v736
        %v1961 = vunpack.c.h.b16 %v736
        %v1962 = vunpack.c.l.b16 %v737
        %v1963 = vunpack.c.h.b16 %v737
        %v1964 = vunpack.c.l.b16 %v738
        %v1965 = vunpack.c.h.b16 %v738
        %v1966 = vunpack.c.l.b16 %v739
        %v1967 = vunpack.c.h.b16 %v739
        %v1968 = vunpack.c.l.b16 %v740
        %v1969 = vunpack.c.h.b16 %v740
        %v1970 = vunpack.c.l.b16 %v741
        %v1971 = vunpack.c.h.b16 %v741
        %v1972 = vunpack.c.l.b16 %v742
        %v1973 = vunpack.c.h.b16 %v742
        %v1974 = vunpack.c.l.b16 %v743
        %v1975 = vunpack.c.h.b16 %v743
        %v1976 = vunpack.c.l.b16 %v744
        %v1977 = vunpack.c.h.b16 %v744
        %v1978 = vunpack.c.l.b16 %v745
        %v1979 = vunpack.c.h.b16 %v745
        %v1980 = vunpack.c.l.b16 %v746
        %v1981 = vunpack.c.h.b16 %v746
        %v1982 = vunpack.c.l.b16 %v747
        %v1983 = vunpack.c.h.b16 %v747
        %v1984 = vunpack.c.l.b16 %v748
        %v1985 = vunpack.c.h.b16 %v748
        %v1986 = vunpack.c.l.b16 %v749
        %v1987 = vunpack.c.h.b16 %v749
        %v1988 = vunpack.c.l.b16 %v750
        %v1989 = vunpack.c.h.b16 %v750
        %v1990 = vunpack.c.l.b16 %v751
        %v1991 = vunpack.c.h.b16 %v751
        %v1992 = vunpack.c.l.b16 %v752
        %v1993 = vunpack.c.h.b16 %v752
        %v1994 = vunpack.c.l.b16 %v753
        %v1995 = vunpack.c.h.b16 %v753
        %v1996 = vunpack.c.l.b16 %v754
        %v1997 = vunpack.c.h.b16 %v754
        %v1998 = vunpack.c.l.b16 %v755
        %v1999 = vunpack.c.h.b16 %v755
        %v2000 = vunpack.c.l.b16 %v756
        %v2001 = vunpack.c.h.b16 %v756
        %v2002 = vunpack.c.l.b16 %v757
        %v2003 = vunpack.c.h.b16 %v757
        %v2004 = vunpack.c.l.b16 %v758
        %v2005 = vunpack.c.h.b16 %v758
        %v2006 = vunpack.c.l.b16 %v759
        %v2007 = vunpack.c.h.b16 %v759
        %v2008 = vunpack.c.l.b16 %v760
        %v2009 = vunpack.c.h.b16 %v760
        %v2010 = vunpack.c.l.b16 %v761
        %v2011 = vunpack.c.h.b16 %v761
        %v2012 = vunpack.c.l.b16 %v762
        %v2013 = vunpack.c.h.b16 %v762
        %v2014 = vunpack.c.l.b16 %v763
        %v2015 = vunpack.c.h.b16 %v763
        %v2016 = vunpack.c.l.b16 %v764
        %v2017 = vunpack.c.h.b16 %v764
        %v2018 = vunpack.c.l.b16 %v765
        %v2019 = vunpack.c.h.b16 %v765
        %v2020 = vunpack.c.l.b16 %v766
        %v2021 = vunpack.c.h.b16 %v766
        %v2022 = vunpack.c.l.b16 %v767
        %v2023 = vunpack.c.h.b16 %v767
        %v2024 = vunpack.c.l.b16 %v768
        %v2025 = vunpack.c.h.b16 %v768
        %v2026 = vunpack.c.l.b16 %v769
        %v2027 = vunpack.c.h.b16 %v769
        %v2028 = vunpack.c.l.b16 %v770
        %v2029 = vunpack.c.h.b16 %v770
        %v2030 = vunpack.c.l.b16 %v771
        %v2031 = vunpack.c.h.b16 %v771
        %v2032 = vunpack.c.l.b16 %v772
        %v2033 = vunpack.c.h.b16 %v772
        %v2034 = vunpack.c.l.b16 %v773
        %v2035 = vunpack.c.h.b16 %v773
        %v2036 = vunpack.c.l.b16 %v774
        %v2037 = vunpack.c.h.b16 %v774
        %v2038 = vunpack.c.l.b16 %v775
        %v2039 = vunpack.c.h.b16 %v775
        %v2040 = vunpack.c.l.b16 %v776
        %v2041 = vunpack.c.h.b16 %v776
        %v2042 = vunpack.c.l.b16 %v777
        %v2043 = vunpack.c.h.b16 %v777
        %v2044 = vunpack.c.l.b16 %v778
        %v2045 = vunpack.c.h.b16 %v778
        %v2046 = vunpack.c.l.b16 %v779
        %v2047 = vunpack.c.h.b16 %v779
        %v2048 = vunpack.c.l.b16 %v780
        %v2049 = vunpack.c.h.b16 %v780
        %v2050 = vunpack.c.l.b16 %v781
        %v2051 = vunpack.c.h.b16 %v781
        %v2052 = vunpack.c.l.b16 %v782
        %v2053 = vunpack.c.h.b16 %v782
        %v2054 = vunpack.c.l.b16 %v783
        %v2055 = vunpack.c.h.b16 %v783
        %v2056 = vunpack.c.l.b16 %v784
        %v2057 = vunpack.c.h.b16 %v784
        %v2058 = vunpack.c.l.b16 %v785
        %v2059 = vunpack.c.h.b16 %v785
        %v2060 = vunpack.c.l.b16 %v786
        %v2061 = vunpack.c.h.b16 %v786
        %v2062 = vunpack.c.l.b16 %v787
        %v2063 = vunpack.c.h.b16 %v787
        %v2064 = vunpack.c.l.b16 %v788
        %v2065 = vunpack.c.h.b16 %v788
        %v2066 = vunpack.c.l.b16 %v789
        %v2067 = vunpack.c.h.b16 %v789
        %v2068 = vunpack.c.l.b16 %v790
        %v2069 = vunpack.c.h.b16 %v790
        %v2070 = vunpack.c.l.b16 %v791
        %v2071 = vunpack.c.h.b16 %v791
        %v2072 = vunpack.c.l.b16 %v792
        %v2073 = vunpack.c.h.b16 %v792
        %v2074 = vunpack.c.l.b16 %v793
        %v2075 = vunpack.c.h.b16 %v793
        %v2076 = vunpack.c.l.b16 %v794
        %v2077 = vunpack.c.h.b16 %v794
        %v2078 = vunpack.c.l.b16 %v795
        %v2079 = vunpack.c.h.b16 %v795
        %v2080 = vunpack.c.l.b16 %v796
        %v2081 = vunpack.c.h.b16 %v796
        %v2082 = vunpack.c.l.b16 %v797
        %v2083 = vunpack.c.h.b16 %v797
        %v2084 = vunpack.c.l.b16 %v798
        %v2085 = vunpack.c.h.b16 %v798
        %v2086 = vunpack.c.l.b16 %v799
        %v2087 = vunpack.c.h.b16 %v799
        %v2088 = vunpack.c.l.b16 %v800
        %v2089 = vunpack.c.h.b16 %v800
        %v2090 = vunpack.c.l.b16 %v801
        %v2091 = vunpack.c.h.b16 %v801
        %v2092 = vunpack.c.l.b16 %v802
        %v2093 = vunpack.c.h.b16 %v802
        %v2094 = vunpack.c.l.b16 %v803
        %v2095 = vunpack.c.h.b16 %v803
        %v2096 = vunpack.c.l.b16 %v804
        %v2097 = vunpack.c.h.b16 %v804
        %v2098 = vunpack.c.l.b16 %v805
        %v2099 = vunpack.c.h.b16 %v805
        %v2100 = vunpack.c.l.b16 %v806
        %v2101 = vunpack.c.h.b16 %v806
        %v2102 = vunpack.c.l.b16 %v807
        %v2103 = vunpack.c.h.b16 %v807
        %v2104 = vunpack.c.l.b16 %v808
        %v2105 = vunpack.c.h.b16 %v808
        %v2106 = vunpack.c.l.b16 %v809
        %v2107 = vunpack.c.h.b16 %v809
        %v2108 = vunpack.c.l.b16 %v810
        %v2109 = vunpack.c.h.b16 %v810
        %v2110 = vunpack.c.l.b16 %v811
        %v2111 = vunpack.c.h.b16 %v811
        %v2112 = vunpack.c.l.b16 %v812
        %v2113 = vunpack.c.h.b16 %v812
        %v2114 = vunpack.c.l.b16 %v813
        %v2115 = vunpack.c.h.b16 %v813
        %v2116 = vunpack.c.l.b16 %v814
        %v2117 = vunpack.c.h.b16 %v814
        %v2118 = vunpack.c.l.b16 %v815
        %v2119 = vunpack.c.h.b16 %v815
        %v2120 = vunpack.c.l.b16 %v816
        %v2121 = vunpack.c.h.b16 %v816
        %v2122 = vunpack.c.l.b16 %v817
        %v2123 = vunpack.c.h.b16 %v817
        %v2124 = vunpack.c.l.b16 %v818
        %v2125 = vunpack.c.h.b16 %v818
        %v2126 = vunpack.c.l.b16 %v819
        %v2127 = vunpack.c.h.b16 %v819
        %v2128 = vunpack.c.l.b16 %v820
        %v2129 = vunpack.c.h.b16 %v820
        %v2130 = vunpack.c.l.b16 %v821
        %v2131 = vunpack.c.h.b16 %v821
        %v2132 = vunpack.c.l.b16 %v822
        %v2133 = vunpack.c.h.b16 %v822
        %v2134 = vunpack.c.l.b16 %v823
        %v2135 = vunpack.c.h.b16 %v823
        %v2136 = vunpack.c.l.b16 %v824
        %v2137 = vunpack.c.h.b16 %v824
        %v2138 = vunpack.c.l.b16 %v825
        %v2139 = vunpack.c.h.b16 %v825
        %v2140 = vunpack.c.l.b16 %v826
        %v2141 = vunpack.c.h.b16 %v826
        %v2142 = vunpack.c.l.b16 %v827
        %v2143 = vunpack.c.h.b16 %v827
        %v2144 = vunpack.c.l.b16 %v828
        %v2145 = vunpack.c.h.b16 %v828
        %v2146 = vunpack.c.l.b16 %v829
        %v2147 = vunpack.c.h.b16 %v829
        %v2148 = vunpack.c.l.b16 %v830
        %v2149 = vunpack.c.h.b16 %v830
        %v2150 = vunpack.c.l.b16 %v831
        %v2151 = vunpack.c.h.b16 %v831
        %v2152 = vunpack.c.l.b16 %v832
        %v2153 = vunpack.c.h.b16 %v832
        %v2154 = vunpack.c.l.b16 %v833
        %v2155 = vunpack.c.h.b16 %v833
        %v2156 = vunpack.c.l.b16 %v834
        %v2157 = vunpack.c.h.b16 %v834
        %v2158 = vunpack.c.l.b16 %v835
        %v2159 = vunpack.c.h.b16 %v835
        %v2160 = vunpack.c.l.b16 %v836
        %v2161 = vunpack.c.h.b16 %v836
        %v2162 = vunpack.c.l.b16 %v837
        %v2163 = vunpack.c.h.b16 %v837
        %v2164 = vunpack.c.l.b16 %v838
        %v2165 = vunpack.c.h.b16 %v838
        %v2166 = vunpack.c.l.b16 %v839
        %v2167 = vunpack.c.h.b16 %v839
        %v2168 = vunpack.c.l.b16 %v840
        %v2169 = vunpack.c.h.b16 %v840
        %v2170 = vunpack.c.l.b16 %v841
        %v2171 = vunpack.c.h.b16 %v841
        %v2172 = vunpack.c.l.b16 %v842
        %v2173 = vunpack.c.h.b16 %v842
        %v2174 = vunpack.c.l.b16 %v843
        %v2175 = vunpack.c.h.b16 %v843
        %v2176 = vunpack.c.l.b16 %v844
        %v2177 = vunpack.c.h.b16 %v844
        %v2178 = vunpack.c.l.b16 %v845
        %v2179 = vunpack.c.h.b16 %v845
        %v2180 = vunpack.c.l.b16 %v846
        %v2181 = vunpack.c.h.b16 %v846
        %v2182 = vunpack.c.l.b16 %v847
        %v2183 = vunpack.c.h.b16 %v847
        %v2184 = vunpack.c.l.b16 %v848
        %v2185 = vunpack.c.h.b16 %v848
        %v2186 = vunpack.c.l.b16 %v849
        %v2187 = vunpack.c.h.b16 %v849
        %v2188 = vunpack.c.l.b16 %v850
        %v2189 = vunpack.c.h.b16 %v850
        %v2190 = vunpack.c.l.b16 %v851
        %v2191 = vunpack.c.h.b16 %v851
        %v2192 = vunpack.c.l.b16 %v852
        %v2193 = vunpack.c.h.b16 %v852
        %v2194 = vunpack.c.l.b16 %v853
        %v2195 = vunpack.c.h.b16 %v853
        %v2196 = vunpack.c.l.b16 %v854
        %v2197 = vunpack.c.h.b16 %v854
        %v2198 = vunpack.c.l.b16 %v855
        %v2199 = vunpack.c.h.b16 %v855
        %v2200 = vunpack.c.l.b16 %v856
        %v2201 = vunpack.c.h.b16 %v856
        %v2202 = vunpack.c.l.b16 %v857
        %v2203 = vunpack.c.h.b16 %v857
        %v2204 = vunpack.c.l.b16 %v858
        %v2205 = vunpack.c.h.b16 %v858
        %v2206 = vunpack.c.l.b16 %v859
        %v2207 = vunpack.c.h.b16 %v859
        %v2208 = vunpack.c.l.b16 %v860
        %v2209 = vunpack.c.h.b16 %v860
        %v2210 = vunpack.c.l.b16 %v861
        %v2211 = vunpack.c.h.b16 %v861
        %v2212 = vunpack.c.l.b16 %v862
        %v2213 = vunpack.c.h.b16 %v862
        %v2214 = vunpack.c.l.b16 %v863
        %v2215 = vunpack.c.h.b16 %v863
        %v2216 = vunpack.c.l.b16 %v864
        %v2217 = vunpack.c.h.b16 %v864
        %v2218 = vunpack.c.l.b16 %v865
        %v2219 = vunpack.c.h.b16 %v865
        %v2220 = vunpack.c.l.b16 %v866
        %v2221 = vunpack.c.h.b16 %v866
        %v2222 = vunpack.c.l.b16 %v867
        %v2223 = vunpack.c.h.b16 %v867
        %v2224 = vunpack.c.l.b16 %v868
        %v2225 = vunpack.c.h.b16 %v868
        %v2226 = vunpack.c.l.b16 %v869
        %v2227 = vunpack.c.h.b16 %v869
        %v2228 = vunpack.c.l.b16 %v870
        %v2229 = vunpack.c.h.b16 %v870
        %v2230 = vunpack.c.l.b16 %v871
        %v2231 = vunpack.c.h.b16 %v871
        %v2232 = vunpack.c.l.b16 %v872
        %v2233 = vunpack.c.h.b16 %v872
        %v2234 = vunpack.c.l.b16 %v873
        %v2235 = vunpack.c.h.b16 %v873
        %v2236 = vunpack.c.l.b16 %v874
        %v2237 = vunpack.c.h.b16 %v874
        %v2238 = vunpack.c.l.b16 %v875
        %v2239 = vunpack.c.h.b16 %v875
        %v2240 = vunpack.c.l.b16 %v876
        %v2241 = vunpack.c.h.b16 %v876
        %v2242 = vunpack.c.l.b16 %v877
        %v2243 = vunpack.c.h.b16 %v877
        %v2244 = vunpack.c.l.b16 %v878
        %v2245 = vunpack.c.h.b16 %v878
        %v2246 = vunpack.c.l.b16 %v879
        %v2247 = vunpack.c.h.b16 %v879
        %v2248 = vunpack.c.l.b16 %v880
        %v2249 = vunpack.c.h.b16 %v880
        %v2250 = vunpack.c.l.b16 %v881
        %v2251 = vunpack.c.h.b16 %v881
        %v2252 = vunpack.c.l.b16 %v882
        %v2253 = vunpack.c.h.b16 %v882
        %v2254 = vunpack.c.l.b16 %v883
        %v2255 = vunpack.c.h.b16 %v883
        %v2256 = vunpack.c.l.b16 %v884
        %v2257 = vunpack.c.h.b16 %v884
        %v2258 = vunpack.c.l.b16 %v885
        %v2259 = vunpack.c.h.b16 %v885
        %v2260 = vunpack.c.l.b16 %v886
        %v2261 = vunpack.c.h.b16 %v886
        %v2262 = vunpack.c.l.b16 %v887
        %v2263 = vunpack.c.h.b16 %v887
        %v2264 = vunpack.c.l.b16 %v888
        %v2265 = vunpack.c.h.b16 %v888
        %v2266 = vunpack.c.l.b16 %v889
        %v2267 = vunpack.c.h.b16 %v889
        %v2268 = vunpack.c.l.b16 %v890
        %v2269 = vunpack.c.h.b16 %v890
        %v2270 = vunpack.c.l.b16 %v891
        %v2271 = vunpack.c.h.b16 %v891
        %v2272 = vunpack.c.l.b16 %v892
        %v2273 = vunpack.c.h.b16 %v892
        %v2274 = vunpack.c.l.b16 %v893
        %v2275 = vunpack.c.h.b16 %v893
        %v2276 = vunpack.c.l.b16 %v894
        %v2277 = vunpack.c.h.b16 %v894
        %v2278 = vunpack.c.l.b16 %v895
        %v2279 = vunpack.c.h.b16 %v895
        %v2280 = vunpack.c.l.b16 %v896
        %v2281 = vunpack.c.h.b16 %v896
        %v2282 = vunpack.c.l.b16 %v897
        %v2283 = vunpack.c.h.b16 %v897
        %v2284 = vunpack.c.l.b16 %v898
        %v2285 = vunpack.c.h.b16 %v898
        %v2286 = vunpack.c.l.b16 %v899
        %v2287 = vunpack.c.h.b16 %v899
        %v2288 = vunpack.c.l.b16 %v900
        %v2289 = vunpack.c.h.b16 %v900
        %v2290 = vunpack.c.l.b16 %v901
        %v2291 = vunpack.c.h.b16 %v901
        %v2292 = vunpack.c.l.b16 %v902
        %v2293 = vunpack.c.h.b16 %v902
        %v2294 = vunpack.c.l.b16 %v903
        %v2295 = vunpack.c.h.b16 %v903
        %v2296 = vunpack.c.l.b16 %v904
        %v2297 = vunpack.c.h.b16 %v904
        %v2298 = vunpack.c.l.b16 %v905
        %v2299 = vunpack.c.h.b16 %v905
        %v2300 = vunpack.c.l.b16 %v906
        %v2301 = vunpack.c.h.b16 %v906
        %v2302 = vunpack.c.l.b16 %v907
        %v2303 = vunpack.c.h.b16 %v907
        %v2304 = vunpack.c.l.b16 %v908
        %v2305 = vunpack.c.h.b16 %v908
        %v2306 = vunpack.c.l.b16 %v909
        %v2307 = vunpack.c.h.b16 %v909
        %v2308 = vunpack.c.l.b16 %v910
        %v2309 = vunpack.c.h.b16 %v910
        %v2310 = vunpack.c.l.b16 %v911
        %v2311 = vunpack.c.h.b16 %v911
        %v2312 = vunpack.c.l.b16 %v912
        %v2313 = vunpack.c.h.b16 %v912
        %v2314 = vunpack.c.l.b16 %v913
        %v2315 = vunpack.c.h.b16 %v913
        %v2316 = vunpack.c.l.b16 %v914
        %v2317 = vunpack.c.h.b16 %v914
        %v2318 = vunpack.c.l.b16 %v915
        %v2319 = vunpack.c.h.b16 %v915
        %v2320 = vunpack.c.l.b16 %v916
        %v2321 = vunpack.c.h.b16 %v916
        %v2322 = vunpack.c.l.b16 %v917
        %v2323 = vunpack.c.h.b16 %v917
        %v2324 = vunpack.c.l.b16 %v918
        %v2325 = vunpack.c.h.b16 %v918
        %v2326 = vunpack.c.l.b16 %v919
        %v2327 = vunpack.c.h.b16 %v919
        %v2328 = vunpack.c.l.b16 %v920
        %v2329 = vunpack.c.h.b16 %v920
        %v2330 = vunpack.c.l.b16 %v921
        %v2331 = vunpack.c.h.b16 %v921
        %v2332 = vunpack.c.l.b16 %v922
        %v2333 = vunpack.c.h.b16 %v922
        %v2334 = vunpack.c.l.b16 %v923
        %v2335 = vunpack.c.h.b16 %v923
        %v2336 = vunpack.c.l.b16 %v924
        %v2337 = vunpack.c.h.b16 %v924
        %v2338 = vunpack.c.l.b16 %v925
        %v2339 = vunpack.c.h.b16 %v925
        %v2340 = vunpack.c.l.b16 %v926
        %v2341 = vunpack.c.h.b16 %v926
        %v2342 = vunpack.c.l.b16 %v927
        %v2343 = vunpack.c.h.b16 %v927
        %v2344 = vunpack.c.l.b16 %v928
        %v2345 = vunpack.c.h.b16 %v928
        %v2346 = vunpack.c.l.b16 %v929
        %v2347 = vunpack.c.h.b16 %v929
        %v2348 = vunpack.c.l.b16 %v930
        %v2349 = vunpack.c.h.b16 %v930
        %v2350 = vunpack.c.l.b16 %v931
        %v2351 = vunpack.c.h.b16 %v931
        %v2352 = vunpack.c.l.b16 %v932
        %v2353 = vunpack.c.h.b16 %v932
        %v2354 = vunpack.c.l.b16 %v933
        %v2355 = vunpack.c.h.b16 %v933
        %v2356 = vunpack.c.l.b16 %v934
        %v2357 = vunpack.c.h.b16 %v934
        %v2358 = vunpack.c.l.b16 %v935
        %v2359 = vunpack.c.h.b16 %v935
        %v2360 = vunpack.c.l.b16 %v936
        %v2361 = vunpack.c.h.b16 %v936
        %v2362 = vunpack.c.l.b16 %v937
        %v2363 = vunpack.c.h.b16 %v937
        %v2364 = vunpack.c.l.b16 %v938
        %v2365 = vunpack.c.h.b16 %v938
        %v2366 = vunpack.c.l.b16 %v939
        %v2367 = vunpack.c.h.b16 %v939
        %v2368 = vunpack.c.l.b16 %v940
        %v2369 = vunpack.c.h.b16 %v940
        %v2370 = vunpack.c.l.b16 %v941
        %v2371 = vunpack.c.h.b16 %v941
        %v2372 = vunpack.c.l.b16 %v942
        %v2373 = vunpack.c.h.b16 %v942
        %v2374 = vunpack.c.l.b16 %v943
        %v2375 = vunpack.c.h.b16 %v943
        %v2376 = vunpack.c.l.b16 %v944
        %v2377 = vunpack.c.h.b16 %v944
        %v2378 = vunpack.c.l.b16 %v945
        %v2379 = vunpack.c.h.b16 %v945
        %v2380 = vunpack.c.l.b16 %v946
        %v2381 = vunpack.c.h.b16 %v946
        %v2382 = vunpack.c.l.b16 %v947
        %v2383 = vunpack.c.h.b16 %v947
        %v2384 = vunpack.c.l.b16 %v948
        %v2385 = vunpack.c.h.b16 %v948
        %v2386 = vunpack.c.l.b16 %v949
        %v2387 = vunpack.c.h.b16 %v949
        %v2388 = vunpack.c.l.b16 %v950
        %v2389 = vunpack.c.h.b16 %v950
        %v2390 = vunpack.c.l.b16 %v951
        %v2391 = vunpack.c.h.b16 %v951
        %v2392 = vunpack.c.l.b16 %v952
        %v2393 = vunpack.c.h.b16 %v952
        %v2394 = vunpack.c.l.b16 %v953
        %v2395 = vunpack.c.h.b16 %v953
        %v2396 = vunpack.c.l.b16 %v954
        %v2397 = vunpack.c.h.b16 %v954
        %v2398 = vunpack.c.l.b16 %v955
        %v2399 = vunpack.c.h.b16 %v955
        %v2400 = vunpack.c.l.b16 %v956
        %v2401 = vunpack.c.h.b16 %v956
        %v2402 = vunpack.c.l.b16 %v957
        %v2403 = vunpack.c.h.b16 %v957
        %v2404 = vunpack.c.l.b16 %v958
        %v2405 = vunpack.c.h.b16 %v958
        %v2406 = vunpack.c.l.b16 %v959
        %v2407 = vunpack.c.h.b16 %v959
        %v2408 = vunpack.c.l.b16 %v960
        %v2409 = vunpack.c.h.b16 %v960
        %v2410 = vunpack.c.l.b16 %v961
        %v2411 = vunpack.c.h.b16 %v961
        %v2412 = vunpack.c.l.b16 %v962
        %v2413 = vunpack.c.h.b16 %v962
        %v2414 = vunpack.c.l.b16 %v963
        %v2415 = vunpack.c.h.b16 %v963
        %v2416 = vunpack.c.l.b16 %v964
        %v2417 = vunpack.c.h.b16 %v964
        %v2418 = vunpack.c.l.b16 %v965
        %v2419 = vunpack.c.h.b16 %v965
        %v2420 = vunpack.c.l.b16 %v966
        %v2421 = vunpack.c.h.b16 %v966
        %v2422 = vunpack.c.l.b16 %v967
        %v2423 = vunpack.c.h.b16 %v967
        %v2424 = vunpack.c.l.b16 %v968
        %v2425 = vunpack.c.h.b16 %v968
        %v2426 = vunpack.c.l.b16 %v969
        %v2427 = vunpack.c.h.b16 %v969
        %v2428 = vunpack.c.l.b16 %v970
        %v2429 = vunpack.c.h.b16 %v970
        %v2430 = vunpack.c.l.b16 %v971
        %v2431 = vunpack.c.h.b16 %v971
        %v2432 = vunpack.c.l.b16 %v972
        %v2433 = vunpack.c.h.b16 %v972
        %v2434 = vunpack.c.l.b16 %v973
        %v2435 = vunpack.c.h.b16 %v973
        %v2436 = vunpack.c.l.b16 %v974
        %v2437 = vunpack.c.h.b16 %v974
        %v2438 = vunpack.c.l.b16 %v975
        %v2439 = vunpack.c.h.b16 %v975
        %v2440 = vunpack.c.l.b16 %v976
        %v2441 = vunpack.c.h.b16 %v976
        %v2442 = vunpack.c.l.b16 %v977
        %v2443 = vunpack.c.h.b16 %v977
        %v2444 = vunpack.c.l.b16 %v978
        %v2445 = vunpack.c.h.b16 %v978
        %v2446 = vunpack.c.l.b16 %v979
        %v2447 = vunpack.c.h.b16 %v979
        %v2448 = vunpack.c.l.b16 %v980
        %v2449 = vunpack.c.h.b16 %v980
        %v2450 = vunpack.c.l.b16 %v981
        %v2451 = vunpack.c.h.b16 %v981
        %v2452 = vunpack.c.l.b16 %v982
        %v2453 = vunpack.c.h.b16 %v982
        %v2454 = vunpack.c.l.b16 %v983
        %v2455 = vunpack.c.h.b16 %v983
        %v2456 = vunpack.c.l.b16 %v984
        %v2457 = vunpack.c.h.b16 %v984
        %v2458 = vunpack.c.l.b16 %v985
        %v2459 = vunpack.c.h.b16 %v985
        %v2460 = vunpack.c.l.b16 %v986
        %v2461 = vunpack.c.h.b16 %v986
        %v2462 = vunpack.c.l.b16 %v987
        %v2463 = vunpack.c.h.b16 %v987
        %v2464 = vunpack.c.l.b16 %v988
        %v2465 = vunpack.c.h.b16 %v988
        %v2466 = vunpack.c.l.b16 %v989
        %v2467 = vunpack.c.h.b16 %v989
        %v2468 = vunpack.c.l.b16 %v990
        %v2469 = vunpack.c.h.b16 %v990
        %v2470 = vunpack.c.l.b16 %v991
        %v2471 = vunpack.c.h.b16 %v991
        %v2472 = vunpack.c.l.b16 %v992
        %v2473 = vunpack.c.h.b16 %v992
        %v2474 = vunpack.c.l.b16 %v993
        %v2475 = vunpack.c.h.b16 %v993
        %v2476 = vunpack.c.l.b16 %v994
        %v2477 = vunpack.c.h.b16 %v994
        %v2478 = vunpack.c.l.b16 %v995
        %v2479 = vunpack.c.h.b16 %v995
        %v2480 = vunpack.c.l.b16 %v996
        %v2481 = vunpack.c.h.b16 %v996
        %v2482 = vunpack.c.l.b16 %v997
        %v2483 = vunpack.c.h.b16 %v997
        %v2484 = vunpack.c.l.b16 %v998
        %v2485 = vunpack.c.h.b16 %v998
        %v2486 = vunpack.c.l.b16 %v999
        %v2487 = vunpack.c.h.b16 %v999
        %v2488 = vunpack.c.l.b16 %v1000
        %v2489 = vunpack.c.h.b16 %v1000
        %v2490 = vunpack.c.l.b16 %v1001
        %v2491 = vunpack.c.h.b16 %v1001
        %v2492 = vunpack.c.l.b16 %v1002
        %v2493 = vunpack.c.h.b16 %v1002
        %v2494 = vunpack.c.l.b16 %v1003
        %v2495 = vunpack.c.h.b16 %v1003
        %v2496 = vunpack.c.l.b16 %v1004
        %v2497 = vunpack.c.h.b16 %v1004
        %v2498 = vunpack.c.l.b16 %v1005
        %v2499 = vunpack.c.h.b16 %v1005
        %v2500 = vunpack.c.l.b16 %v1006
        %v2501 = vunpack.c.h.b16 %v1006
        %v2502 = vunpack.c.l.b16 %v1007
        %v2503 = vunpack.c.h.b16 %v1007
        %v2504 = vunpack.c.l.b16 %v1008
        %v2505 = vunpack.c.h.b16 %v1008
        %v2506 = vunpack.c.l.b16 %v1009
        %v2507 = vunpack.c.h.b16 %v1009
        %v2508 = vunpack.c.l.b16 %v1010
        %v2509 = vunpack.c.h.b16 %v1010
        %v2510 = vunpack.c.l.b16 %v1011
        %v2511 = vunpack.c.h.b16 %v1011
        %v2512 = vunpack.c.l.b16 %v1012
        %v2513 = vunpack.c.h.b16 %v1012
        %v2514 = vunpack.c.l.b16 %v1013
        %v2515 = vunpack.c.h.b16 %v1013
        %v2516 = vunpack.c.l.b16 %v1014
        %v2517 = vunpack.c.h.b16 %v1014
        %v2518 = vunpack.c.l.b16 %v1015
        %v2519 = vunpack.c.h.b16 %v1015
        %v2520 = vunpack.c.l.b16 %v1016
        %v2521 = vunpack.c.h.b16 %v1016
        %v2522 = vunpack.c.l.b16 %v1017
        %v2523 = vunpack.c.h.b16 %v1017
        %v2524 = vunpack.c.l.b16 %v1018
        %v2525 = vunpack.c.h.b16 %v1018
        %v2526 = vunpack.c.l.b16 %v1019
        %v2527 = vunpack.c.h.b16 %v1019
        %v2528 = vunpack.c.l.b16 %v1020
        %v2529 = vunpack.c.h.b16 %v1020
        %v2530 = vunpack.c.l.b16 %v1021
        %v2531 = vunpack.c.h.b16 %v1021
        %v2532 = vunpack.c.l.b16 %v1022
        %v2533 = vunpack.c.h.b16 %v1022
        %v2534 = vunpack.c.l.b16 %v1023
        %v2535 = vunpack.c.h.b16 %v1023
        %v2536 = vunpack.c.l.b16 %v1024
        %v2537 = vunpack.c.h.b16 %v1024
        %v2538 = vunpack.c.l.b16 %v1025
        %v2539 = vunpack.c.h.b16 %v1025
        %v2540 = vunpack.c.l.b16 %v1026
        %v2541 = vunpack.c.h.b16 %v1026
        %v2542 = vunpack.c.l.b16 %v1027
        %v2543 = vunpack.c.h.b16 %v1027
        %v2544 = vunpack.c.l.b16 %v1028
        %v2545 = vunpack.c.h.b16 %v1028
        %v2546 = vunpack.c.l.b16 %v1029
        %v2547 = vunpack.c.h.b16 %v1029
        %v2548 = vunpack.c.l.b16 %v1030
        %v2549 = vunpack.c.h.b16 %v1030
        %v2550 = vunpack.c.l.b16 %v1031
        %v2551 = vunpack.c.h.b16 %v1031
        %v2552 = vunpack.c.l.b16 %v1032
        %v2553 = vunpack.c.h.b16 %v1032
        %v2554 = vunpack.c.l.b16 %v1033
        %v2555 = vunpack.c.h.b16 %v1033
        %v2556 = vunpack.c.l.b16 %v1034
        %v2557 = vunpack.c.h.b16 %v1034
        %v2558 = vunpack.c.l.b16 %v1035
        %v2559 = vunpack.c.h.b16 %v1035
        %v2560 = vunpack.c.l.b16 %v1036
        %v2561 = vunpack.c.h.b16 %v1036
        %v2562 = vunpack.c.l.b16 %v1037
        %v2563 = vunpack.c.h.b16 %v1037
        %v2564 = vunpack.c.l.b16 %v1038
        %v2565 = vunpack.c.h.b16 %v1038
        %v2566 = vunpack.c.l.b16 %v1039
        %v2567 = vunpack.c.h.b16 %v1039
        %v2568 = vunpack.c.l.b16 %v1040
        %v2569 = vunpack.c.h.b16 %v1040
        %v2570 = vunpack.c.l.b16 %v1041
        %v2571 = vunpack.c.h.b16 %v1041
        %v2572 = vunpack.c.l.b16 %v1042
        %v2573 = vunpack.c.h.b16 %v1042
        %v2574 = vunpack.c.l.b16 %v1043
        %v2575 = vunpack.c.h.b16 %v1043
        %v2576 = vunpack.c.l.b16 %v1044
        %v2577 = vunpack.c.h.b16 %v1044
        %v2578 = vunpack.c.l.b16 %v1045
        %v2579 = vunpack.c.h.b16 %v1045
        %v2580 = vunpack.c.l.b16 %v1046
        %v2581 = vunpack.c.h.b16 %v1046
        %v2582 = vunpack.c.l.b16 %v1047
        %v2583 = vunpack.c.h.b16 %v1047
        %v2584 = vunpack.c.l.b16 %v1048
        %v2585 = vunpack.c.h.b16 %v1048
        %v2586 = vunpack.c.l.b16 %v1049
        %v2587 = vunpack.c.h.b16 %v1049
        %v2588 = vunpack.c.l.b16 %v1050
        %v2589 = vunpack.c.h.b16 %v1050
        %v2590 = vunpack.c.l.b16 %v1051
        %v2591 = vunpack.c.h.b16 %v1051
        %v2592 = vunpack.c.l.b16 %v1052
        %v2593 = vunpack.c.h.b16 %v1052
        %v2594 = vunpack.c.l.b16 %v1053
        %v2595 = vunpack.c.h.b16 %v1053
        %v2596 = vunpack.c.l.b16 %v1054
        %v2597 = vunpack.c.h.b16 %v1054
        %v2598 = vunpack.c.l.b16 %v1055
        %v2599 = vunpack.c.h.b16 %v1055
        %v2600 = vunpack.c.l.b16 %v1056
        %v2601 = vunpack.c.h.b16 %v1056
        %v2602 = vunpack.c.l.b16 %v1057
        %v2603 = vunpack.c.h.b16 %v1057
        %v2604 = vunpack.c.l.b16 %v1058
        %v2605 = vunpack.c.h.b16 %v1058
        %v2606 = vunpack.c.l.b16 %v1059
        %v2607 = vunpack.c.h.b16 %v1059
        %v2608 = vunpack.c.l.b16 %v1060
        %v2609 = vunpack.c.h.b16 %v1060
        %v2610 = vunpack.c.l.b16 %v1061
        %v2611 = vunpack.c.h.b16 %v1061
        %v2612 = vunpack.c.l.b16 %v1062
        %v2613 = vunpack.c.h.b16 %v1062
        %v2614 = vunpack.c.l.b16 %v1063
        %v2615 = vunpack.c.h.b16 %v1063
        %v2616 = vunpack.c.l.b16 %v1064
        %v2617 = vunpack.c.h.b16 %v1064
        %v2618 = vunpack.c.l.b16 %v1065
        %v2619 = vunpack.c.h.b16 %v1065
        %v2620 = vunpack.c.l.b16 %v1066
        %v2621 = vunpack.c.h.b16 %v1066
        %v2622 = vunpack.c.l.b16 %v1067
        %v2623 = vunpack.c.h.b16 %v1067
        %v2624 = vunpack.c.l.b16 %v1068
        %v2625 = vunpack.c.h.b16 %v1068
        %v2626 = vunpack.c.l.b16 %v1069
        %v2627 = vunpack.c.h.b16 %v1069
        %v2628 = vunpack.c.l.b16 %v1070
        %v2629 = vunpack.c.h.b16 %v1070
        %v2630 = vunpack.c.l.b16 %v1071
        %v2631 = vunpack.c.h.b16 %v1071
        %v2632 = vunpack.c.l.b16 %v1072
        %v2633 = vunpack.c.h.b16 %v1072
        %v2634 = vunpack.c.l.b16 %v1073
        %v2635 = vunpack.c.h.b16 %v1073
        %v2636 = vunpack.c.l.b16 %v1074
        %v2637 = vunpack.c.h.b16 %v1074
        %v2638 = vunpack.c.l.b16 %v1075
        %v2639 = vunpack.c.h.b16 %v1075
        %v2640 = vunpack.c.l.b16 %v1076
        %v2641 = vunpack.c.h.b16 %v1076
        %v2642 = vunpack.c.l.b16 %v1077
        %v2643 = vunpack.c.h.b16 %v1077
        %v2644 = vunpack.c.l.b16 %v1078
        %v2645 = vunpack.c.h.b16 %v1078
        %v2646 = vunpack.c.l.b16 %v1079
        %v2647 = vunpack.c.h.b16 %v1079
        %v2648 = vunpack.c.l.b16 %v1080
        %v2649 = vunpack.c.h.b16 %v1080
        %v2650 = vunpack.c.l.b16 %v1081
        %v2651 = vunpack.c.h.b16 %v1081
        %v2652 = vunpack.c.l.b16 %v1082
        %v2653 = vunpack.c.h.b16 %v1082
        %v2654 = vunpack.c.l.b16 %v1083
        %v2655 = vunpack.c.h.b16 %v1083
        %v2656 = vunpack.c.l.b16 %v1084
        %v2657 = vunpack.c.h.b16 %v1084
        %v2658 = vunpack.c.l.b16 %v1085
        %v2659 = vunpack.c.h.b16 %v1085
        %v2660 = vunpack.c.l.b16 %v1086
        %v2661 = vunpack.c.h.b16 %v1086
        %v2662 = vunpack.c.l.b16 %v1087
        %v2663 = vunpack.c.h.b16 %v1087
        %v2664 = vunpack.c.l.b16 %v1088
        %v2665 = vunpack.c.h.b16 %v1088
        %v2666 = vunpack.c.l.b16 %v1089
        %v2667 = vunpack.c.h.b16 %v1089
        %v2668 = vunpack.c.l.b16 %v1090
        %v2669 = vunpack.c.h.b16 %v1090
        %v2670 = vunpack.c.l.b16 %v1091
        %v2671 = vunpack.c.h.b16 %v1091
        %v2672 = vunpack.c.l.b16 %v1092
        %v2673 = vunpack.c.h.b16 %v1092
        %v2674 = vunpack.c.l.b16 %v1093
        %v2675 = vunpack.c.h.b16 %v1093
        %v2676 = vunpack.c.l.b16 %v1094
        %v2677 = vunpack.c.h.b16 %v1094
        %v2678 = vunpack.c.l.b16 %v1095
        %v2679 = vunpack.c.h.b16 %v1095
        %v2680 = vunpack.c.l.b16 %v1096
        %v2681 = vunpack.c.h.b16 %v1096
        %v2682 = vunpack.c.l.b16 %v1097
        %v2683 = vunpack.c.h.b16 %v1097
        %v2684 = vunpack.c.l.b16 %v1098
        %v2685 = vunpack.c.h.b16 %v1098
        %v2686 = vunpack.c.l.b16 %v1099
        %v2687 = vunpack.c.h.b16 %v1099
        %v2688 = vunpack.c.l.b16 %v1100
        %v2689 = vunpack.c.h.b16 %v1100
        %v2690 = vunpack.c.l.b16 %v1101
        %v2691 = vunpack.c.h.b16 %v1101
        %v2692 = vunpack.c.l.b16 %v1102
        %v2693 = vunpack.c.h.b16 %v1102
        %v2694 = vunpack.c.l.b16 %v1103
        %v2695 = vunpack.c.h.b16 %v1103
        %v2696 = vunpack.c.l.b16 %v1104
        %v2697 = vunpack.c.h.b16 %v1104
        %v2698 = vunpack.c.l.b16 %v1105
        %v2699 = vunpack.c.h.b16 %v1105
        %v2700 = vunpack.c.l.b16 %v1106
        %v2701 = vunpack.c.h.b16 %v1106
        %v2702 = vunpack.c.l.b16 %v1107
        %v2703 = vunpack.c.h.b16 %v1107
        %v2704 = vunpack.c.l.b16 %v1108
        %v2705 = vunpack.c.h.b16 %v1108
        %v2706 = vunpack.c.l.b16 %v1109
        %v2707 = vunpack.c.h.b16 %v1109
        %v2708 = vunpack.c.l.b16 %v1110
        %v2709 = vunpack.c.h.b16 %v1110
        %v2710 = vunpack.c.l.b16 %v1111
        %v2711 = vunpack.c.h.b16 %v1111
        %v2712 = vunpack.c.l.b16 %v1112
        %v2713 = vunpack.c.h.b16 %v1112
        %v2714 = vunpack.c.l.b16 %v1113
        %v2715 = vunpack.c.h.b16 %v1113
        %v2716 = vunpack.c.l.b16 %v1114
        %v2717 = vunpack.c.h.b16 %v1114
        %v2718 = vunpack.c.l.b16 %v1115
        %v2719 = vunpack.c.h.b16 %v1115
        %v2720 = vunpack.c.l.b16 %v1116
        %v2721 = vunpack.c.h.b16 %v1116
        %v2722 = vunpack.c.l.b16 %v1117
        %v2723 = vunpack.c.h.b16 %v1117
        %v2724 = vunpack.c.l.b16 %v1118
        %v2725 = vunpack.c.h.b16 %v1118
        %v2726 = vunpack.c.l.b16 %v1119
        %v2727 = vunpack.c.h.b16 %v1119
        %v2728 = vunpack.c.l.b16 %v1120
        %v2729 = vunpack.c.h.b16 %v1120
        %v2730 = vunpack.c.l.b16 %v1121
        %v2731 = vunpack.c.h.b16 %v1121
        %v2732 = vunpack.c.l.b16 %v1122
        %v2733 = vunpack.c.h.b16 %v1122
        %v2734 = vpack.c.b16 %v1808, %v1806
        %v2735 = vpack.c.b16 %v1809, %v1807
        %v2736 = vpack.c.b16 %v1812, %v1810
        %v2737 = vpack.c.b16 %v1813, %v1811
        %v2738 = vpack.c.b16 %v1816, %v1814
        %v2739 = vpack.c.b16 %v1817, %v1815
        %v2740 = vpack.c.b16 %v1820, %v1818
        %v2741 = vpack.c.b16 %v1821, %v1819
        %v2742 = vpack.c.b16 %v1824, %v1822
        %v2743 = vpack.c.b16 %v1825, %v1823
        %v2744 = vpack.c.b16 %v1828, %v1826
        %v2745 = vpack.c.b16 %v1829, %v1827
        %v2746 = vpack.c.b16 %v1832, %v1830
        %v2747 = vpack.c.b16 %v1833, %v1831
        %v2748 = vpack.c.b16 %v1836, %v1834
        %v2749 = vpack.c.b16 %v1837, %v1835
        %v2750 = vpack.c.b16 %v1840, %v1838
        %v2751 = vpack.c.b16 %v1841, %v1839
        %v2752 = vpack.c.b16 %v1844, %v1842
        %v2753 = vpack.c.b16 %v1845, %v1843
        %v2754 = vpack.c.b16 %v1848, %v1846
        %v2755 = vpack.c.b16 %v1849, %v1847
        %v2756 = vpack.c.b16 %v1852, %v1850
        %v2757 = vpack.c.b16 %v1853, %v1851
        %v2758 = vpack.c.b16 %v1856, %v1854
        %v2759 = vpack.c.b16 %v1857, %v1855
        %v2760 = vpack.c.b16 %v1860, %v1858
        %v2761 = vpack.c.b16 %v1861, %v1859
        %v2762 = vpack.c.b16 %v1864, %v1862
        %v2763 = vpack.c.b16 %v1865, %v1863
        %v2764 = vpack.c.b16 %v1868, %v1866
        %v2765 = vpack.c.b16 %v1869, %v1867
        %v2766 = vpack.c.b16 %v1872, %v1870
        %v2767 = vpack.c.b16 %v1873, %v1871
        %v2768 = vpack.c.b16 %v1876, %v1874
        %v2769 = vpack.c.b16 %v1877, %v1875
        %v2770 = vpack.c.b16 %v1880, %v1878
        %v2771 = vpack.c.b16 %v1881, %v1879
        %v2772 = vpack.c.b16 %v1884, %v1882
        %v2773 = vpack.c.b16 %v1885, %v1883
        %v2774 = vpack.c.b16 %v1888, %v1886
        %v2775 = vpack.c.b16 %v1889, %v1887
        %v2776 = vpack.c.b16 %v1892, %v1890
        %v2777 = vpack.c.b16 %v1893, %v1891
        %v2778 = vpack.c.b16 %v1896, %v1894
        %v2779 = vpack.c.b16 %v1897, %v1895
        %v2780 = vpack.c.b16 %v1900, %v1898
        %v2781 = vpack.c.b16 %v1901, %v1899
        %v2782 = vpack.c.b16 %v1904, %v1902
        %v2783 = vpack.c.b16 %v1905, %v1903
        %v2784 = vpack.c.b16 %v1908, %v1906
        %v2785 = vpack.c.b16 %v1909, %v1907
        %v2786 = vpack.c.b16 %v1912, %v1910
        %v2787 = vpack.c.b16 %v1913, %v1911
        %v2788 = vpack.c.b16 %v1916, %v1914
        %v2789 = vpack.c.b16 %v1917, %v1915
        %v2790 = vpack.c.b16 %v1920, %v1918
        %v2791 = vpack.c.b16 %v1921, %v1919
        %v2792 = vpack.c.b16 %v1924, %v1922
        %v2793 = vpack.c.b16 %v1925, %v1923
        %v2794 = vpack.c.b16 %v1928, %v1926
        %v2795 = vpack.c.b16 %v1929, %v1927
        %v2796 = vpack.c.b16 %v1932, %v1930
        %v2797 = vpack.c.b16 %v1933, %v1931
        %v2798 = vpack.c.b16 %v1936, %v1934
        %v2799 = vpack.c.b16 %v1937, %v1935
        %v2800 = vpack.c.b16 %v1940, %v1938
        %v2801 = vpack.c.b16 %v1941, %v1939
        %v2802 = vpack.c.b16 %v1944, %v1942
        %v2803 = vpack.c.b16 %v1945, %v1943
        %v2804 = vpack.c.b16 %v1948, %v1946
        %v2805 = vpack.c.b16 %v1949, %v1947
        %v2806 = vpack.c.b16 %v1952, %v1950
        %v2807 = vpack.c.b16 %v1953, %v1951
        %v2808 = vpack.c.b16 %v1956, %v1954
        %v2809 = vpack.c.b16 %v1957, %v1955
        %v2810 = vpack.c.b16 %v1960, %v1958
        %v2811 = vpack.c.b16 %v1961, %v1959
        %v2812 = vpack.c.b16 %v1964, %v1962
        %v2813 = vpack.c.b16 %v1965, %v1963
        %v2814 = vpack.c.b16 %v1968, %v1966
        %v2815 = vpack.c.b16 %v1969, %v1967
        %v2816 = vpack.c.b16 %v1972, %v1970
        %v2817 = vpack.c.b16 %v1973, %v1971
        %v2818 = vpack.c.b16 %v1976, %v1974
        %v2819 = vpack.c.b16 %v1977, %v1975
        %v2820 = vpack.c.b16 %v1980, %v1978
        %v2821 = vpack.c.b16 %v1981, %v1979
        %v2822 = vpack.c.b16 %v1984, %v1982
        %v2823 = vpack.c.b16 %v1985, %v1983
        %v2824 = vpack.c.b16 %v1988, %v1986
        %v2825 = vpack.c.b16 %v1989, %v1987
        %v2826 = vpack.c.b16 %v1992, %v1990
        %v2827 = vpack.c.b16 %v1993, %v1991
        %v2828 = vpack.c.b16 %v1996, %v1994
        %v2829 = vpack.c.b16 %v1997, %v1995
        %v2830 = vpack.c.b16 %v2000, %v1998
        %v2831 = vpack.c.b16 %v2001, %v1999
        %v2832 = vpack.c.b16 %v2004, %v2002
        %v2833 = vpack.c.b16 %v2005, %v2003
        %v2834 = vpack.c.b16 %v2008, %v2006
        %v2835 = vpack.c.b16 %v2009, %v2007
        %v2836 = vpack.c.b16 %v2012, %v2010
        %v2837 = vpack.c.b16 %v2013, %v2011
        %v2838 = vpack.c.b16 %v2016, %v2014
        %v2839 = vpack.c.b16 %v2017, %v2015
        %v2840 = vpack.c.b16 %v2020, %v2018
        %v2841 = vpack.c.b16 %v2021, %v2019
        %v2842 = vpack.c.b16 %v2024, %v2022
        %v2843 = vpack.c.b16 %v2025, %v2023
        %v2844 = vpack.c.b16 %v2028, %v2026
        %v2845 = vpack.c.b16 %v2029, %v2027
        %v2846 = vpack.c.b16 %v2032, %v2030
        %v2847 = vpack.c.b16 %v2033, %v2031
        %v2848 = vpack.c.b16 %v2036, %v2034
        %v2849 = vpack.c.b16 %v2037, %v2035
        %v2850 = vpack.c.b16 %v2040, %v2038
        %v2851 = vpack.c.b16 %v2041, %v2039
        %v2852 = vpack.c.b16 %v2044, %v2042
        %v2853 = vpack.c.b16 %v2045, %v2043
        %v2854 = vpack.c.b16 %v2048, %v2046
        %v2855 = vpack.c.b16 %v2049, %v2047
        %v2856 = vpack.c.b16 %v2052, %v2050
        %v2857 = vpack.c.b16 %v2053, %v2051
        %v2858 = vpack.c.b16 %v2056, %v2054
        %v2859 = vpack.c.b16 %v2057, %v2055
        %v2860 = vpack.c.b16 %v2060, %v2058
        %v2861 = vpack.c.b16 %v2061, %v2059
        %v2862 = vpack.c.b16 %v2064, %v2062
        %v2863 = vpack.c.b16 %v2065, %v2063
        %v2864 = vpack.c.b16 %v2068, %v2066
        %v2865 = vpack.c.b16 %v2069, %v2067
        %v2866 = vpack.c.b16 %v2072, %v2070
        %v2867 = vpack.c.b16 %v2073, %v2071
        %v2868 = vpack.c.b16 %v2076, %v2074
        %v2869 = vpack.c.b16 %v2077, %v2075
        %v2870 = vpack.c.b16 %v2080, %v2078
        %v2871 = vpack.c.b16 %v2081, %v2079
        %v2872 = vpack.c.b16 %v2084, %v2082
        %v2873 = vpack.c.b16 %v2085, %v2083
        %v2874 = vpack.c.b16 %v2088, %v2086
        %v2875 = vpack.c.b16 %v2089, %v2087
        %v2876 = vpack.c.b16 %v2092, %v2090
        %v2877 = vpack.c.b16 %v2093, %v2091
        %v2878 = vpack.c.b16 %v2096, %v2094
        %v2879 = vpack.c.b16 %v2097, %v2095
        %v2880 = vpack.c.b16 %v2100, %v2098
        %v2881 = vpack.c.b16 %v2101, %v2099
        %v2882 = vpack.c.b16 %v2104, %v2102
        %v2883 = vpack.c.b16 %v2105, %v2103
        %v2884 = vpack.c.b16 %v2108, %v2106
        %v2885 = vpack.c.b16 %v2109, %v2107
        %v2886 = vpack.c.b16 %v2112, %v2110
        %v2887 = vpack.c.b16 %v2113, %v2111
        %v2888 = vpack.c.b16 %v2116, %v2114
        %v2889 = vpack.c.b16 %v2117, %v2115
        %v2890 = vpack.c.b16 %v2120, %v2118
        %v2891 = vpack.c.b16 %v2121, %v2119
        %v2892 = vpack.c.b16 %v2124, %v2122
        %v2893 = vpack.c.b16 %v2125, %v2123
        %v2894 = vpack.c.b16 %v2128, %v2126
        %v2895 = vpack.c.b16 %v2129, %v2127
        %v2896 = vpack.c.b16 %v2132, %v2130
        %v2897 = vpack.c.b16 %v2133, %v2131
        %v2898 = vpack.c.b16 %v2136, %v2134
        %v2899 = vpack.c.b16 %v2137, %v2135
        %v2900 = vpack.c.b16 %v2140, %v2138
        %v2901 = vpack.c.b16 %v2141, %v2139
        %v2902 = vpack.c.b16 %v2144, %v2142
        %v2903 = vpack.c.b16 %v2145, %v2143
        %v2904 = vpack.c.b16 %v2148, %v2146
        %v2905 = vpack.c.b16 %v2149, %v2147
        %v2906 = vpack.c.b16 %v2152, %v2150
        %v2907 = vpack.c.b16 %v2153, %v2151
        %v2908 = vpack.c.b16 %v2156, %v2154
        %v2909 = vpack.c.b16 %v2157, %v2155
        %v2910 = vpack.c.b16 %v2160, %v2158
        %v2911 = vpack.c.b16 %v2161, %v2159
        %v2912 = vpack.c.b16 %v2164, %v2162
        %v2913 = vpack.c.b16 %v2165, %v2163
        %v2914 = vpack.c.b16 %v2168, %v2166
        %v2915 = vpack.c.b16 %v2169, %v2167
        %v2916 = vpack.c.b16 %v2172, %v2170
        %v2917 = vpack.c.b16 %v2173, %v2171
        %v2918 = vpack.c.b16 %v2176, %v2174
        %v2919 = vpack.c.b16 %v2177, %v2175
        %v2920 = vpack.c.b16 %v2180, %v2178
        %v2921 = vpack.c.b16 %v2181, %v2179
        %v2922 = vpack.c.b16 %v2184, %v2182
        %v2923 = vpack.c.b16 %v2185, %v2183
        %v2924 = vpack.c.b16 %v2188, %v2186
        %v2925 = vpack.c.b16 %v2189, %v2187
        %v2926 = vpack.c.b16 %v2192, %v2190
        %v2927 = vpack.c.b16 %v2193, %v2191
        %v2928 = vpack.c.b16 %v2196, %v2194
        %v2929 = vpack.c.b16 %v2197, %v2195
        %v2930 = vpack.c.b16 %v2200, %v2198
        %v2931 = vpack.c.b16 %v2201, %v2199
        %v2932 = vpack.c.b16 %v2204, %v2202
        %v2933 = vpack.c.b16 %v2205, %v2203
        %v2934 = vpack.c.b16 %v2208, %v2206
        %v2935 = vpack.c.b16 %v2209, %v2207
        %v2936 = vpack.c.b16 %v2212, %v2210
        %v2937 = vpack.c.b16 %v2213, %v2211
        %v2938 = vpack.c.b16 %v2216, %v2214
        %v2939 = vpack.c.b16 %v2217, %v2215
        %v2940 = vpack.c.b16 %v2220, %v2218
        %v2941 = vpack.c.b16 %v2221, %v2219
        %v2942 = vpack.c.b16 %v2224, %v2222
        %v2943 = vpack.c.b16 %v2225, %v2223
        %v2944 = vpack.c.b16 %v2228, %v2226
        %v2945 = vpack.c.b16 %v2229, %v2227
        %v2946 = vpack.c.b16 %v2232, %v2230
        %v2947 = vpack.c.b16 %v2233, %v2231
        %v2948 = vpack.c.b16 %v2236, %v2234
        %v2949 = vpack.c.b16 %v2237, %v2235
        %v2950 = vpack.c.b16 %v2240, %v2238
        %v2951 = vpack.c.b16 %v2241, %v2239
        %v2952 = vpack.c.b16 %v2244, %v2242
        %v2953 = vpack.c.b16 %v2245, %v2243
        %v2954 = vpack.c.b16 %v2248, %v2246
        %v2955 = vpack.c.b16 %v2249, %v2247
        %v2956 = vpack.c.b16 %v2252, %v2250
        %v2957 = vpack.c.b16 %v2253, %v2251
        %v2958 = vpack.c.b16 %v2256, %v2254
        %v2959 = vpack.c.b16 %v2257, %v2255
        %v2960 = vpack.c.b16 %v2260, %v2258
        %v2961 = vpack.c.b16 %v2261, %v2259
        %v2962 = vpack.c.b16 %v2264, %v2262
        %v2963 = vpack.c.b16 %v2265, %v2263
        %v2964 = vpack.c.b16 %v2268, %v2266
        %v2965 = vpack.c.b16 %v2269, %v2267
        %v2966 = vpack.c.b16 %v2272, %v2270
        %v2967 = vpack.c.b16 %v2273, %v2271
        %v2968 = vpack.c.b16 %v2276, %v2274
        %v2969 = vpack.c.b16 %v2277, %v2275
        %v2970 = vpack.c.b16 %v2280, %v2278
        %v2971 = vpack.c.b16 %v2281, %v2279
        %v2972 = vpack.c.b16 %v2284, %v2282
        %v2973 = vpack.c.b16 %v2285, %v2283
        %v2974 = vpack.c.b16 %v2288, %v2286
        %v2975 = vpack.c.b16 %v2289, %v2287
        %v2976 = vpack.c.b16 %v2292, %v2290
        %v2977 = vpack.c.b16 %v2293, %v2291
        %v2978 = vpack.c.b16 %v2296, %v2294
        %v2979 = vpack.c.b16 %v2297, %v2295
        %v2980 = vpack.c.b16 %v2300, %v2298
        %v2981 = vpack.c.b16 %v2301, %v2299
        %v2982 = vpack.c.b16 %v2304, %v2302
        %v2983 = vpack.c.b16 %v2305, %v2303
        %v2984 = vpack.c.b16 %v2308, %v2306
        %v2985 = vpack.c.b16 %v2309, %v2307
        %v2986 = vpack.c.b16 %v2312, %v2310
        %v2987 = vpack.c.b16 %v2313, %v2311
        %v2988 = vpack.c.b16 %v2316, %v2314
        %v2989 = vpack.c.b16 %v2317, %v2315
        %v2990 = vpack.c.b16 %v2320, %v2318
        %v2991 = vpack.c.b16 %v2321, %v2319
        %v2992 = vpack.c.b16 %v2324, %v2322
        %v2993 = vpack.c.b16 %v2325, %v2323
        %v2994 = vpack.c.b16 %v2328, %v2326
        %v2995 = vpack.c.b16 %v2329, %v2327
        %v2996 = vpack.c.b16 %v2332, %v2330
        %v2997 = vpack.c.b16 %v2333, %v2331
        %v2998 = vpack.c.b16 %v2336, %v2334
        %v2999 = vpack.c.b16 %v2337, %v2335
        %v3000 = vpack.c.b16 %v2340, %v2338
        %v3001 = vpack.c.b16 %v2341, %v2339
        %v3002 = vpack.c.b16 %v2344, %v2342
        %v3003 = vpack.c.b16 %v2345, %v2343
        %v3004 = vpack.c.b16 %v2348, %v2346
        %v3005 = vpack.c.b16 %v2349, %v2347
        %v3006 = vpack.c.b16 %v2352, %v2350
        %v3007 = vpack.c.b16 %v2353, %v2351
        %v3008 = vpack.c.b16 %v2356, %v2354
        %v3009 = vpack.c.b16 %v2357, %v2355
        %v3010 = vpack.c.b16 %v2360, %v2358
        %v3011 = vpack.c.b16 %v2361, %v2359
        %v3012 = vpack.c.b16 %v2364, %v2362
        %v3013 = vpack.c.b16 %v2365, %v2363
        %v3014 = vpack.c.b16 %v2368, %v2366
        %v3015 = vpack.c.b16 %v2369, %v2367
        %v3016 = vpack.c.b16 %v2372, %v2370
        %v3017 = vpack.c.b16 %v2373, %v2371
        %v3018 = vpack.c.b16 %v2376, %v2374
        %v3019 = vpack.c.b16 %v2377, %v2375
        %v3020 = vpack.c.b16 %v2380, %v2378
        %v3021 = vpack.c.b16 %v2381, %v2379
        %v3022 = vpack.c.b16 %v2384, %v2382
        %v3023 = vpack.c.b16 %v2385, %v2383
        %v3024 = vpack.c.b16 %v2388, %v2386
        %v3025 = vpack.c.b16 %v2389, %v2387
        %v3026 = vpack.c.b16 %v2392, %v2390
        %v3027 = vpack.c.b16 %v2393, %v2391
        %v3028 = vpack.c.b16 %v2396, %v2394
        %v3029 = vpack.c.b16 %v2397, %v2395
        %v3030 = vpack.c.b16 %v2400, %v2398
        %v3031 = vpack.c.b16 %v2401, %v2399
        %v3032 = vpack.c.b16 %v2404, %v2402
        %v3033 = vpack.c.b16 %v2405, %v2403
        %v3034 = vpack.c.b16 %v2408, %v2406
        %v3035 = vpack.c.b16 %v2409, %v2407
        %v3036 = vpack.c.b16 %v2412, %v2410
        %v3037 = vpack.c.b16 %v2413, %v2411
        %v3038 = vpack.c.b16 %v2416, %v2414
        %v3039 = vpack.c.b16 %v2417, %v2415
        %v3040 = vpack.c.b16 %v2420, %v2418
        %v3041 = vpack.c.b16 %v2421, %v2419
        %v3042 = vpack.c.b16 %v2424, %v2422
        %v3043 = vpack.c.b16 %v2425, %v2423
        %v3044 = vpack.c.b16 %v2428, %v2426
        %v3045 = vpack.c.b16 %v2429, %v2427
        %v3046 = vpack.c.b16 %v2432, %v2430
        %v3047 = vpack.c.b16 %v2433, %v2431
        %v3048 = vpack.c.b16 %v2436, %v2434
        %v3049 = vpack.c.b16 %v2437, %v2435
        %v3050 = vpack.c.b16 %v2440, %v2438
        %v3051 = vpack.c.b16 %v2441, %v2439
        %v3052 = vpack.c.b16 %v2444, %v2442
        %v3053 = vpack.c.b16 %v2445, %v2443
        %v3054 = vpack.c.b16 %v2448, %v2446
        %v3055 = vpack.c.b16 %v2449, %v2447
        %v3056 = vpack.c.b16 %v2452, %v2450
        %v3057 = vpack.c.b16 %v2453, %v2451
        %v3058 = vpack.c.b16 %v2456, %v2454
        %v3059 = vpack.c.b16 %v2457, %v2455
        %v3060 = vpack.c.b16 %v2460, %v2458
        %v3061 = vpack.c.b16 %v2461, %v2459
        %v3062 = vpack.c.b16 %v2464, %v2462
        %v3063 = vpack.c.b16 %v2465, %v2463
        %v3064 = vpack.c.b16 %v2468, %v2466
        %v3065 = vpack.c.b16 %v2469, %v2467
        %v3066 = vpack.c.b16 %v2472, %v2470
        %v3067 = vpack.c.b16 %v2473, %v2471
        %v3068 = vpack.c.b16 %v2476, %v2474
        %v3069 = vpack.c.b16 %v2477, %v2475
        %v3070 = vpack.c.b16 %v2480, %v2478
        %v3071 = vpack.c.b16 %v2481, %v2479
        %v3072 = vpack.c.b16 %v2484, %v2482
        %v3073 = vpack.c.b16 %v2485, %v2483
        %v3074 = vpack.c.b16 %v2488, %v2486
        %v3075 = vpack.c.b16 %v2489, %v2487
        %v3076 = vpack.c.b16 %v2492, %v2490
        %v3077 = vpack.c.b16 %v2493, %v2491
        %v3078 = vpack.c.b16 %v2496, %v2494
        %v3079 = vpack.c.b16 %v2497, %v2495
        %v3080 = vpack.c.b16 %v2500, %v2498
        %v3081 = vpack.c.b16 %v2501, %v2499
        %v3082 = vpack.c.b16 %v2504, %v2502
        %v3083 = vpack.c.b16 %v2505, %v2503
        %v3084 = vpack.c.b16 %v2508, %v2506
        %v3085 = vpack.c.b16 %v2509, %v2507
        %v3086 = vpack.c.b16 %v2512, %v2510
        %v3087 = vpack.c.b16 %v2513, %v2511
        %v3088 = vpack.c.b16 %v2516, %v2514
        %v3089 = vpack.c.b16 %v2517, %v2515
        %v3090 = vpack.c.b16 %v2520, %v2518
        %v3091 = vpack.c.b16 %v2521, %v2519
        %v3092 = vpack.c.b16 %v2524, %v2522
        %v3093 = vpack.c.b16 %v2525, %v2523
        %v3094 = vpack.c.b16 %v2528, %v2526
        %v3095 = vpack.c.b16 %v2529, %v2527
        %v3096 = vpack.c.b16 %v2532, %v2530
        %v3097 = vpack.c.b16 %v2533, %v2531
        %v3098 = vpack.c.b16 %v2536, %v2534
        %v3099 = vpack.c.b16 %v2537, %v2535
        %v3100 = vpack.c.b16 %v2540, %v2538
        %v3101 = vpack.c.b16 %v2541, %v2539
        %v3102 = vpack.c.b16 %v2544, %v2542
        %v3103 = vpack.c.b16 %v2545, %v2543
        %v3104 = vpack.c.b16 %v2548, %v2546
        %v3105 = vpack.c.b16 %v2549, %v2547
        %v3106 = vpack.c.b16 %v2552, %v2550
        %v3107 = vpack.c.b16 %v2553, %v2551
        %v3108 = vpack.c.b16 %v2556, %v2554
        %v3109 = vpack.c.b16 %v2557, %v2555
        %v3110 = vpack.c.b16 %v2560, %v2558
        %v3111 = vpack.c.b16 %v2561, %v2559
        %v3112 = vpack.c.b16 %v2564, %v2562
        %v3113 = vpack.c.b16 %v2565, %v2563
        %v3114 = vpack.c.b16 %v2568, %v2566
        %v3115 = vpack.c.b16 %v2569, %v2567
        %v3116 = vpack.c.b16 %v2572, %v2570
        %v3117 = vpack.c.b16 %v2573, %v2571
        %v3118 = vpack.c.b16 %v2576, %v2574
        %v3119 = vpack.c.b16 %v2577, %v2575
        %v3120 = vpack.c.b16 %v2580, %v2578
        %v3121 = vpack.c.b16 %v2581, %v2579
        %v3122 = vpack.c.b16 %v2584, %v2582
        %v3123 = vpack.c.b16 %v2585, %v2583
        %v3124 = vpack.c.b16 %v2588, %v2586
        %v3125 = vpack.c.b16 %v2589, %v2587
        %v3126 = vpack.c.b16 %v2592, %v2590
        %v3127 = vpack.c.b16 %v2593, %v2591
        %v3128 = vpack.c.b16 %v2596, %v2594
        %v3129 = vpack.c.b16 %v2597, %v2595
        %v3130 = vpack.c.b16 %v2600, %v2598
        %v3131 = vpack.c.b16 %v2601, %v2599
        %v3132 = vpack.c.b16 %v2604, %v2602
        %v3133 = vpack.c.b16 %v2605, %v2603
        %v3134 = vpack.c.b16 %v2608, %v2606
        %v3135 = vpack.c.b16 %v2609, %v2607
        %v3136 = vpack.c.b16 %v2612, %v2610
        %v3137 = vpack.c.b16 %v2613, %v2611
        %v3138 = vpack.c.b16 %v2616, %v2614
        %v3139 = vpack.c.b16 %v2617, %v2615
        %v3140 = vpack.c.b16 %v2620, %v2618
        %v3141 = vpack.c.b16 %v2621, %v2619
        %v3142 = vpack.c.b16 %v2624, %v2622
        %v3143 = vpack.c.b16 %v2625, %v2623
        %v3144 = vpack.c.b16 %v2628, %v2626
        %v3145 = vpack.c.b16 %v2629, %v2627
        %v3146 = vpack.c.b16 %v2632, %v2630
        %v3147 = vpack.c.b16 %v2633, %v2631
        %v3148 = vpack.c.b16 %v2636, %v2634
        %v3149 = vpack.c.b16 %v2637, %v2635
        %v3150 = vpack.c.b16 %v2640, %v2638
        %v3151 = vpack.c.b16 %v2641, %v2639
        %v3152 = vpack.c.b16 %v2644, %v2642
        %v3153 = vpack.c.b16 %v2645, %v2643
        %v3154 = vpack.c.b16 %v2648, %v2646
        %v3155 = vpack.c.b16 %v2649, %v2647
        %v3156 = vpack.c.b16 %v2652, %v2650
        %v3157 = vpack.c.b16 %v2653, %v2651
        %v3158 = vpack.c.b16 %v2656, %v2654
        %v3159 = vpack.c.b16 %v2657, %v2655
        %v3160 = vpack.c.b16 %v2660, %v2658
        %v3161 = vpack.c.b16 %v2661, %v2659
        %v3162 = vpack.c.b16 %v2664, %v2662
        %v3163 = vpack.c.b16 %v2665, %v2663
        %v3164 = vpack.c.b16 %v2668, %v2666
        %v3165 = vpack.c.b16 %v2669, %v2667
        %v3166 = vpack.c.b16 %v2672, %v2670
        %v3167 = vpack.c.b16 %v2673, %v2671
        %v3168 = vpack.c.b16 %v2676, %v2674
        %v3169 = vpack.c.b16 %v2677, %v2675
        %v3170 = vpack.c.b16 %v2680, %v2678
        %v3171 = vpack.c.b16 %v2681, %v2679
        %v3172 = vpack.c.b16 %v2684, %v2682
        %v3173 = vpack.c.b16 %v2685, %v2683
        %v3174 = vpack.c.b16 %v2688, %v2686
        %v3175 = vpack.c.b16 %v2689, %v2687
        %v3176 = vpack.c.b16 %v2692, %v2690
        %v3177 = vpack.c.b16 %v2693, %v2691
        %v3178 = vpack.c.b16 %v2696, %v2694
        %v3179 = vpack.c.b16 %v2697, %v2695
        %v3180 = vpack.c.b16 %v2700, %v2698
        %v3181 = vpack.c.b16 %v2701, %v2699
        %v3182 = vpack.c.b16 %v2704, %v2702
        %v3183 = vpack.c.b16 %v2705, %v2703
        %v3184 = vpack.c.b16 %v2708, %v2706
        %v3185 = vpack.c.b16 %v2709, %v2707
        %v3186 = vpack.c.b16 %v2712, %v2710
        %v3187 = vpack.c.b16 %v2713, %v2711
        %v3188 = vpack.c.b16 %v2716, %v2714
        %v3189 = vpack.c.b16 %v2717, %v2715
        %v3190 = vpack.c.b16 %v2720, %v2718
        %v3191 = vpack.c.b16 %v2721, %v2719
        %v3192 = vpack.c.b16 %v2724, %v2722
        %v3193 = vpack.c.b16 %v2725, %v2723
        %v3194 = vpack.c.b16 %v2728, %v2726
        %v3195 = vpack.c.b16 %v2729, %v2727
        %v3196 = vpack.c.b16 %v2732, %v2730
        %v3197 = vpack.c.b16 %v2733, %v2731
        %3662 = vmatprep.subr.bf16.mxu0 %v2749
        %3663 = vmatpush1.bf16.msra.mxu0 %v2748
        %3664 = vmatprep.subr.bf16.mxu0 %v2747
        %3665 = vmatpush1.bf16.msra.mxu0 %v2746
        %3666 = vmatprep.subr.bf16.mxu0 %v2745
        %3667 = vmatpush1.bf16.msra.mxu0 %v2744
        %3668 = vmatprep.subr.bf16.mxu0 %v2743
        %3669 = vmatpush1.bf16.msra.mxu0 %v2742
        %3670 = vmatprep.subr.bf16.mxu0 %v2741
        %3671 = vmatpush1.bf16.msra.mxu0 %v2740
        %3672 = vmatprep.subr.bf16.mxu0 %v2739
        %3673 = vmatpush1.bf16.msra.mxu0 %v2738
        %3674 = vmatprep.subr.bf16.mxu0 %v2737
        %3675 = vmatpush1.bf16.msra.mxu0 %v2736
        %3676 = vmatprep.subr.bf16.mxu0 %v2735
        %3677 = vmatpush1.bf16.msra.mxu0 %v2734
        %3678 = vmatprep.subr.bf16.mxu0 %v2765
        %3679 = vmatpush2.bf16.msra.mxu0 %v2764
        %3680 = vmatprep.subr.bf16.mxu0 %v2763
        %3681 = vmatpush2.bf16.msra.mxu0 %v2762
        %3682 = vmatprep.subr.bf16.mxu0 %v2761
        %3683 = vmatpush2.bf16.msra.mxu0 %v2760
        %3684 = vmatprep.subr.bf16.mxu0 %v2759
        %3685 = vmatpush2.bf16.msra.mxu0 %v2758
        %3686 = vmatprep.subr.bf16.mxu0 %v2757
        %3687 = vmatpush2.bf16.msra.mxu0 %v2756
        %3688 = vmatprep.subr.bf16.mxu0 %v2755
        %3689 = vmatpush2.bf16.msra.mxu0 %v2754
        %3690 = vmatprep.subr.bf16.mxu0 %v2753
        %3691 = vmatpush2.bf16.msra.mxu0 %v2752
        %3692 = vmatprep.subr.bf16.mxu0 %v2751
        %3693 = vmatpush2.bf16.msra.mxu0 %v2750
        %3694 = vmatprep.mubr.bf16.mxu0 %v1164
        %3695 = vmatmul.mubr.bf16.gmra.mxu0 %v1150
        %v3696 = vpop.f32.mrf.mxu0
        %v3697 = vadd.f32 0.0, %v3696
        %v3698 = vpop.f32.mrf.mxu0
        %v3699 = vadd.f32 0.0, %v3698
        %v3700 = vpop.f32.mrf.mxu0
        %v3701 = vpop.f32.mrf.mxu0
        %3702 = vdwg.mxu0
        %3703 = vmatprep.subr.bf16.mxu0 %v2781
        %3704 = vmatpush1.bf16.msra.mxu0 %v2780
        %3705 = vmatprep.subr.bf16.mxu0 %v2779
        %3706 = vmatpush1.bf16.msra.mxu0 %v2778
        %3707 = vmatprep.subr.bf16.mxu0 %v2777
        %3708 = vmatpush1.bf16.msra.mxu0 %v2776
        %3709 = vmatprep.subr.bf16.mxu0 %v2775
        %3710 = vmatpush1.bf16.msra.mxu0 %v2774
        %3711 = vmatprep.subr.bf16.mxu0 %v2773
        %3712 = vmatpush1.bf16.msra.mxu0 %v2772
        %3713 = vmatprep.subr.bf16.mxu0 %v2771
        %3714 = vmatpush1.bf16.msra.mxu0 %v2770
        %3715 = vmatprep.subr.bf16.mxu0 %v2769
        %3716 = vmatpush1.bf16.msra.mxu0 %v2768
        %3717 = vmatprep.subr.bf16.mxu0 %v2767
        %3718 = vmatpush1.bf16.msra.mxu0 %v2766
        %3719 = vmatprep.subr.bf16.mxu0 %v2797
        %3720 = vmatpush2.bf16.msra.mxu0 %v2796
        %3721 = vmatprep.subr.bf16.mxu0 %v2795
        %3722 = vmatpush2.bf16.msra.mxu0 %v2794
        %3723 = vmatprep.subr.bf16.mxu0 %v2793
        %3724 = vmatpush2.bf16.msra.mxu0 %v2792
        %3725 = vmatprep.subr.bf16.mxu0 %v2791
        %3726 = vmatpush2.bf16.msra.mxu0 %v2790
        %3727 = vmatprep.subr.bf16.mxu0 %v2789
        %3728 = vmatpush2.bf16.msra.mxu0 %v2788
        %3729 = vmatprep.subr.bf16.mxu0 %v2787
        %3730 = vmatpush2.bf16.msra.mxu0 %v2786
        %3731 = vmatprep.subr.bf16.mxu0 %v2785
        %3732 = vmatpush2.bf16.msra.mxu0 %v2784
        %3733 = vmatprep.subr.bf16.mxu0 %v2783
        %3734 = vmatpush2.bf16.msra.mxu0 %v2782
        %3735 = vmatprep.mubr.bf16.mxu0 %v1174
        %3736 = vmatmul.mubr.bf16.gmra.mxu0 %v1172
        %v3737 = vpop.f32.mrf.mxu0
        %v3738 = vadd.f32 %v3697, %v3737
        %v3739 = vpop.f32.mrf.mxu0
        %v3740 = vadd.f32 %v3699, %v3739
        %v3741 = vpop.f32.mrf.mxu0
        %v3742 = vpop.f32.mrf.mxu0
        %3743 = vdwg.mxu0
        %3744 = vmatprep.subr.bf16.mxu0 %v2813
        %3745 = vmatpush1.bf16.msra.mxu0 %v2812
        %3746 = vmatprep.subr.bf16.mxu0 %v2811
        %3747 = vmatpush1.bf16.msra.mxu0 %v2810
        %3748 = vmatprep.subr.bf16.mxu0 %v2809
        %3749 = vmatpush1.bf16.msra.mxu0 %v2808
        %3750 = vmatprep.subr.bf16.mxu0 %v2807
        %3751 = vmatpush1.bf16.msra.mxu0 %v2806
        %3752 = vmatprep.subr.bf16.mxu0 %v2805
        %3753 = vmatpush1.bf16.msra.mxu0 %v2804
        %3754 = vmatprep.subr.bf16.mxu0 %v2803
        %3755 = vmatpush1.bf16.msra.mxu0 %v2802
        %3756 = vmatprep.subr.bf16.mxu0 %v2801
        %3757 = vmatpush1.bf16.msra.mxu0 %v2800
        %3758 = vmatprep.subr.bf16.mxu0 %v2799
        %3759 = vmatpush1.bf16.msra.mxu0 %v2798
        %3760 = vmatprep.subr.bf16.mxu0 %v2829
        %3761 = vmatpush2.bf16.msra.mxu0 %v2828
        %3762 = vmatprep.subr.bf16.mxu0 %v2827
        %3763 = vmatpush2.bf16.msra.mxu0 %v2826
        %3764 = vmatprep.subr.bf16.mxu0 %v2825
        %3765 = vmatpush2.bf16.msra.mxu0 %v2824
        %3766 = vmatprep.subr.bf16.mxu0 %v2823
        %3767 = vmatpush2.bf16.msra.mxu0 %v2822
        %3768 = vmatprep.subr.bf16.mxu0 %v2821
        %3769 = vmatpush2.bf16.msra.mxu0 %v2820
        %3770 = vmatprep.subr.bf16.mxu0 %v2819
        %3771 = vmatpush2.bf16.msra.mxu0 %v2818
        %3772 = vmatprep.subr.bf16.mxu0 %v2817
        %3773 = vmatpush2.bf16.msra.mxu0 %v2816
        %3774 = vmatprep.subr.bf16.mxu0 %v2815
        %3775 = vmatpush2.bf16.msra.mxu0 %v2814
        %3776 = vmatprep.mubr.bf16.mxu0 %v1171
        %3777 = vmatmul.mubr.bf16.gmra.mxu0 %v1157
        %v3778 = vpop.f32.mrf.mxu0
        %v3779 = vadd.f32 %v3738, %v3778
        %v3780 = vpop.f32.mrf.mxu0
        %v3781 = vadd.f32 %v3740, %v3780
        %v3782 = vpop.f32.mrf.mxu0
        %v3783 = vpop.f32.mrf.mxu0
        %3784 = vdwg.mxu0
        %3785 = vmatprep.subr.bf16.mxu0 %v2845
        %3786 = vmatpush1.bf16.msra.mxu0 %v2844
        %3787 = vmatprep.subr.bf16.mxu0 %v2843
        %3788 = vmatpush1.bf16.msra.mxu0 %v2842
        %3789 = vmatprep.subr.bf16.mxu0 %v2841
        %3790 = vmatpush1.bf16.msra.mxu0 %v2840
        %3791 = vmatprep.subr.bf16.mxu0 %v2839
        %3792 = vmatpush1.bf16.msra.mxu0 %v2838
        %3793 = vmatprep.subr.bf16.mxu0 %v2837
        %3794 = vmatpush1.bf16.msra.mxu0 %v2836
        %3795 = vmatprep.subr.bf16.mxu0 %v2835
        %3796 = vmatpush1.bf16.msra.mxu0 %v2834
        %3797 = vmatprep.subr.bf16.mxu0 %v2833
        %3798 = vmatpush1.bf16.msra.mxu0 %v2832
        %3799 = vmatprep.subr.bf16.mxu0 %v2831
        %3800 = vmatpush1.bf16.msra.mxu0 %v2830
        %3801 = vmatprep.subr.bf16.mxu0 %v2861
        %3802 = vmatpush2.bf16.msra.mxu0 %v2860
        %3803 = vmatprep.subr.bf16.mxu0 %v2859
        %3804 = vmatpush2.bf16.msra.mxu0 %v2858
        %3805 = vmatprep.subr.bf16.mxu0 %v2857
        %3806 = vmatpush2.bf16.msra.mxu0 %v2856
        %3807 = vmatprep.subr.bf16.mxu0 %v2855
        %3808 = vmatpush2.bf16.msra.mxu0 %v2854
        %3809 = vmatprep.subr.bf16.mxu0 %v2853
        %3810 = vmatpush2.bf16.msra.mxu0 %v2852
        %3811 = vmatprep.subr.bf16.mxu0 %v2851
        %3812 = vmatpush2.bf16.msra.mxu0 %v2850
        %3813 = vmatprep.subr.bf16.mxu0 %v2849
        %3814 = vmatpush2.bf16.msra.mxu0 %v2848
        %3815 = vmatprep.subr.bf16.mxu0 %v2847
        %3816 = vmatpush2.bf16.msra.mxu0 %v2846
        %3817 = vmatprep.mubr.bf16.mxu0 %v1175
        %3818 = vmatmul.mubr.bf16.gmra.mxu0 %v1173
        %v3819 = vpop.f32.mrf.mxu0
        %v3820 = vadd.f32 %v3779, %v3819
        %v3821 = vpop.f32.mrf.mxu0
        %v3822 = vadd.f32 %v3781, %v3821
        %v3823 = vpop.f32.mrf.mxu0
        %v3824 = vpop.f32.mrf.mxu0
        %3825 = vdwg.mxu0
        %3826 = vmatprep.subr.bf16.mxu0 %v2877
        %3827 = vmatpush1.bf16.msra.mxu0 %v2876
        %3828 = vmatprep.subr.bf16.mxu0 %v2875
        %3829 = vmatpush1.bf16.msra.mxu0 %v2874
        %3830 = vmatprep.subr.bf16.mxu0 %v2873
        %3831 = vmatpush1.bf16.msra.mxu0 %v2872
        %3832 = vmatprep.subr.bf16.mxu0 %v2871
        %3833 = vmatpush1.bf16.msra.mxu0 %v2870
        %3834 = vmatprep.subr.bf16.mxu0 %v2869
        %3835 = vmatpush1.bf16.msra.mxu0 %v2868
        %3836 = vmatprep.subr.bf16.mxu0 %v2867
        %3837 = vmatpush1.bf16.msra.mxu0 %v2866
        %3838 = vmatprep.subr.bf16.mxu0 %v2865
        %3839 = vmatpush1.bf16.msra.mxu0 %v2864
        %3840 = vmatprep.subr.bf16.mxu0 %v2863
        %3841 = vmatpush1.bf16.msra.mxu0 %v2862
        %3842 = vmatprep.subr.bf16.mxu0 %v2893
        %3843 = vmatpush2.bf16.msra.mxu0 %v2892
        %3844 = vmatprep.subr.bf16.mxu0 %v2891
        %3845 = vmatpush2.bf16.msra.mxu0 %v2890
        %3846 = vmatprep.subr.bf16.mxu0 %v2889
        %3847 = vmatpush2.bf16.msra.mxu0 %v2888
        %3848 = vmatprep.subr.bf16.mxu0 %v2887
        %3849 = vmatpush2.bf16.msra.mxu0 %v2886
        %3850 = vmatprep.subr.bf16.mxu0 %v2885
        %3851 = vmatpush2.bf16.msra.mxu0 %v2884
        %3852 = vmatprep.subr.bf16.mxu0 %v2883
        %3853 = vmatpush2.bf16.msra.mxu0 %v2882
        %3854 = vmatprep.subr.bf16.mxu0 %v2881
        %3855 = vmatpush2.bf16.msra.mxu0 %v2880
        %3856 = vmatprep.subr.bf16.mxu0 %v2879
        %3857 = vmatpush2.bf16.msra.mxu0 %v2878
        %3858 = vmatprep.mubr.bf16.mxu0 %v1213
        %3859 = vmatmul.mubr.bf16.gmra.mxu0 %v1199
        %v3860 = vpop.f32.mrf.mxu0
        %v3861 = vadd.f32 %v3820, %v3860
        %v3862 = vpop.f32.mrf.mxu0
        %v3863 = vadd.f32 %v3822, %v3862
        %v3864 = vpop.f32.mrf.mxu0
        %v3865 = vpop.f32.mrf.mxu0
        %3866 = vdwg.mxu0
        %3867 = vmatprep.subr.bf16.mxu0 %v2909
        %3868 = vmatpush1.bf16.msra.mxu0 %v2908
        %3869 = vmatprep.subr.bf16.mxu0 %v2907
        %3870 = vmatpush1.bf16.msra.mxu0 %v2906
        %3871 = vmatprep.subr.bf16.mxu0 %v2905
        %3872 = vmatpush1.bf16.msra.mxu0 %v2904
        %3873 = vmatprep.subr.bf16.mxu0 %v2903
        %3874 = vmatpush1.bf16.msra.mxu0 %v2902
        %3875 = vmatprep.subr.bf16.mxu0 %v2901
        %3876 = vmatpush1.bf16.msra.mxu0 %v2900
        %3877 = vmatprep.subr.bf16.mxu0 %v2899
        %3878 = vmatpush1.bf16.msra.mxu0 %v2898
        %3879 = vmatprep.subr.bf16.mxu0 %v2897
        %3880 = vmatpush1.bf16.msra.mxu0 %v2896
        %3881 = vmatprep.subr.bf16.mxu0 %v2895
        %3882 = vmatpush1.bf16.msra.mxu0 %v2894
        %3883 = vmatprep.subr.bf16.mxu0 %v2925
        %3884 = vmatpush2.bf16.msra.mxu0 %v2924
        %3885 = vmatprep.subr.bf16.mxu0 %v2923
        %3886 = vmatpush2.bf16.msra.mxu0 %v2922
        %3887 = vmatprep.subr.bf16.mxu0 %v2921
        %3888 = vmatpush2.bf16.msra.mxu0 %v2920
        %3889 = vmatprep.subr.bf16.mxu0 %v2919
        %3890 = vmatpush2.bf16.msra.mxu0 %v2918
        %3891 = vmatprep.subr.bf16.mxu0 %v2917
        %3892 = vmatpush2.bf16.msra.mxu0 %v2916
        %3893 = vmatprep.subr.bf16.mxu0 %v2915
        %3894 = vmatpush2.bf16.msra.mxu0 %v2914
        %3895 = vmatprep.subr.bf16.mxu0 %v2913
        %3896 = vmatpush2.bf16.msra.mxu0 %v2912
        %3897 = vmatprep.subr.bf16.mxu0 %v2911
        %3898 = vmatpush2.bf16.msra.mxu0 %v2910
        %3899 = vmatprep.mubr.bf16.mxu0 %v1223
        %3900 = vmatmul.mubr.bf16.gmra.mxu0 %v1221
        %v3901 = vpop.f32.mrf.mxu0
        %v3902 = vadd.f32 %v3861, %v3901
        %v3903 = vpop.f32.mrf.mxu0
        %v3904 = vadd.f32 %v3863, %v3903
        %v3905 = vpop.f32.mrf.mxu0
        %v3906 = vpop.f32.mrf.mxu0
        %3907 = vdwg.mxu0
        %3908 = vmatprep.subr.bf16.mxu0 %v2941
        %3909 = vmatpush1.bf16.msra.mxu0 %v2940
        %3910 = vmatprep.subr.bf16.mxu0 %v2939
        %3911 = vmatpush1.bf16.msra.mxu0 %v2938
        %3912 = vmatprep.subr.bf16.mxu0 %v2937
        %3913 = vmatpush1.bf16.msra.mxu0 %v2936
        %3914 = vmatprep.subr.bf16.mxu0 %v2935
        %3915 = vmatpush1.bf16.msra.mxu0 %v2934
        %3916 = vmatprep.subr.bf16.mxu0 %v2933
        %3917 = vmatpush1.bf16.msra.mxu0 %v2932
        %3918 = vmatprep.subr.bf16.mxu0 %v2931
        %3919 = vmatpush1.bf16.msra.mxu0 %v2930
        %3920 = vmatprep.subr.bf16.mxu0 %v2929
        %3921 = vmatpush1.bf16.msra.mxu0 %v2928
        %3922 = vmatprep.subr.bf16.mxu0 %v2927
        %3923 = vmatpush1.bf16.msra.mxu0 %v2926
        %3924 = vmatprep.subr.bf16.mxu0 %v2957
        %3925 = vmatpush2.bf16.msra.mxu0 %v2956
        %3926 = vmatprep.subr.bf16.mxu0 %v2955
        %3927 = vmatpush2.bf16.msra.mxu0 %v2954
        %3928 = vmatprep.subr.bf16.mxu0 %v2953
        %3929 = vmatpush2.bf16.msra.mxu0 %v2952
        %3930 = vmatprep.subr.bf16.mxu0 %v2951
        %3931 = vmatpush2.bf16.msra.mxu0 %v2950
        %3932 = vmatprep.subr.bf16.mxu0 %v2949
        %3933 = vmatpush2.bf16.msra.mxu0 %v2948
        %3934 = vmatprep.subr.bf16.mxu0 %v2947
        %3935 = vmatpush2.bf16.msra.mxu0 %v2946
        %3936 = vmatprep.subr.bf16.mxu0 %v2945
        %3937 = vmatpush2.bf16.msra.mxu0 %v2944
        %3938 = vmatprep.subr.bf16.mxu0 %v2943
        %3939 = vmatpush2.bf16.msra.mxu0 %v2942
        %3940 = vmatprep.mubr.bf16.mxu0 %v1220
        %3941 = vmatmul.mubr.bf16.gmra.mxu0 %v1206
        %v3942 = vpop.f32.mrf.mxu0
        %v3943 = vadd.f32 %v3902, %v3942
        %v3944 = vpop.f32.mrf.mxu0
        %v3945 = vadd.f32 %v3904, %v3944
        %v3946 = vpop.f32.mrf.mxu0
        %v3947 = vpop.f32.mrf.mxu0
        %3948 = vdwg.mxu0
        %3949 = vmatprep.subr.bf16.mxu0 %v2973
        %3950 = vmatpush1.bf16.msra.mxu0 %v2972
        %3951 = vmatprep.subr.bf16.mxu0 %v2971
        %3952 = vmatpush1.bf16.msra.mxu0 %v2970
        %3953 = vmatprep.subr.bf16.mxu0 %v2969
        %3954 = vmatpush1.bf16.msra.mxu0 %v2968
        %3955 = vmatprep.subr.bf16.mxu0 %v2967
        %3956 = vmatpush1.bf16.msra.mxu0 %v2966
        %3957 = vmatprep.subr.bf16.mxu0 %v2965
        %3958 = vmatpush1.bf16.msra.mxu0 %v2964
        %3959 = vmatprep.subr.bf16.mxu0 %v2963
        %3960 = vmatpush1.bf16.msra.mxu0 %v2962
        %3961 = vmatprep.subr.bf16.mxu0 %v2961
        %3962 = vmatpush1.bf16.msra.mxu0 %v2960
        %3963 = vmatprep.subr.bf16.mxu0 %v2959
        %3964 = vmatpush1.bf16.msra.mxu0 %v2958
        %3965 = vmatprep.subr.bf16.mxu0 %v2989
        %3966 = vmatpush2.bf16.msra.mxu0 %v2988
        %3967 = vmatprep.subr.bf16.mxu0 %v2987
        %3968 = vmatpush2.bf16.msra.mxu0 %v2986
        %3969 = vmatprep.subr.bf16.mxu0 %v2985
        %3970 = vmatpush2.bf16.msra.mxu0 %v2984
        %3971 = vmatprep.subr.bf16.mxu0 %v2983
        %3972 = vmatpush2.bf16.msra.mxu0 %v2982
        %3973 = vmatprep.subr.bf16.mxu0 %v2981
        %3974 = vmatpush2.bf16.msra.mxu0 %v2980
        %3975 = vmatprep.subr.bf16.mxu0 %v2979
        %3976 = vmatpush2.bf16.msra.mxu0 %v2978
        %3977 = vmatprep.subr.bf16.mxu0 %v2977
        %3978 = vmatpush2.bf16.msra.mxu0 %v2976
        %3979 = vmatprep.subr.bf16.mxu0 %v2975
        %3980 = vmatpush2.bf16.msra.mxu0 %v2974
        %3981 = vmatprep.mubr.bf16.mxu0 %v1224
        %3982 = vmatmul.mubr.bf16.gmra.mxu0 %v1222
        %v3983 = vpop.f32.mrf.mxu0
        %v3984 = vadd.f32 %v3943, %v3983
        %v3985 = vpop.f32.mrf.mxu0
        %v3986 = vadd.f32 %v3945, %v3985
        %v3987 = vpop.f32.mrf.mxu0
        %v3988 = vpop.f32.mrf.mxu0
        %3989 = vdwg.mxu0
        %3990 = vmatprep.subr.bf16.mxu0 %v3005
        %3991 = vmatpush1.bf16.msra.mxu0 %v3004
        %3992 = vmatprep.subr.bf16.mxu0 %v3003
        %3993 = vmatpush1.bf16.msra.mxu0 %v3002
        %3994 = vmatprep.subr.bf16.mxu0 %v3001
        %3995 = vmatpush1.bf16.msra.mxu0 %v3000
        %3996 = vmatprep.subr.bf16.mxu0 %v2999
        %3997 = vmatpush1.bf16.msra.mxu0 %v2998
        %3998 = vmatprep.subr.bf16.mxu0 %v2997
        %3999 = vmatpush1.bf16.msra.mxu0 %v2996
        %4000 = vmatprep.subr.bf16.mxu0 %v2995
        %4001 = vmatpush1.bf16.msra.mxu0 %v2994
        %4002 = vmatprep.subr.bf16.mxu0 %v2993
        %4003 = vmatpush1.bf16.msra.mxu0 %v2992
        %4004 = vmatprep.subr.bf16.mxu0 %v2991
        %4005 = vmatpush1.bf16.msra.mxu0 %v2990
        %4006 = vmatprep.subr.bf16.mxu0 %v3021
        %4007 = vmatpush2.bf16.msra.mxu0 %v3020
        %4008 = vmatprep.subr.bf16.mxu0 %v3019
        %4009 = vmatpush2.bf16.msra.mxu0 %v3018
        %4010 = vmatprep.subr.bf16.mxu0 %v3017
        %4011 = vmatpush2.bf16.msra.mxu0 %v3016
        %4012 = vmatprep.subr.bf16.mxu0 %v3015
        %4013 = vmatpush2.bf16.msra.mxu0 %v3014
        %4014 = vmatprep.subr.bf16.mxu0 %v3013
        %4015 = vmatpush2.bf16.msra.mxu0 %v3012
        %4016 = vmatprep.subr.bf16.mxu0 %v3011
        %4017 = vmatpush2.bf16.msra.mxu0 %v3010
        %4018 = vmatprep.subr.bf16.mxu0 %v3009
        %4019 = vmatpush2.bf16.msra.mxu0 %v3008
        %4020 = vmatprep.subr.bf16.mxu0 %v3007
        %4021 = vmatpush2.bf16.msra.mxu0 %v3006
        %4022 = vmatprep.mubr.bf16.mxu0 %v1262
        %4023 = vmatmul.mubr.bf16.gmra.mxu0 %v1248
        %v4024 = vpop.f32.mrf.mxu0
        %v4025 = vadd.f32 %v3984, %v4024
        %v4026 = vpop.f32.mrf.mxu0
        %v4027 = vadd.f32 %v3986, %v4026
        %v4028 = vpop.f32.mrf.mxu0
        %v4029 = vpop.f32.mrf.mxu0
        %4030 = vdwg.mxu0
        %4031 = vmatprep.subr.bf16.mxu0 %v3037
        %4032 = vmatpush1.bf16.msra.mxu0 %v3036
        %4033 = vmatprep.subr.bf16.mxu0 %v3035
        %4034 = vmatpush1.bf16.msra.mxu0 %v3034
        %4035 = vmatprep.subr.bf16.mxu0 %v3033
        %4036 = vmatpush1.bf16.msra.mxu0 %v3032
        %4037 = vmatprep.subr.bf16.mxu0 %v3031
        %4038 = vmatpush1.bf16.msra.mxu0 %v3030
        %4039 = vmatprep.subr.bf16.mxu0 %v3029
        %4040 = vmatpush1.bf16.msra.mxu0 %v3028
        %4041 = vmatprep.subr.bf16.mxu0 %v3027
        %4042 = vmatpush1.bf16.msra.mxu0 %v3026
        %4043 = vmatprep.subr.bf16.mxu0 %v3025
        %4044 = vmatpush1.bf16.msra.mxu0 %v3024
        %4045 = vmatprep.subr.bf16.mxu0 %v3023
        %4046 = vmatpush1.bf16.msra.mxu0 %v3022
        %4047 = vmatprep.subr.bf16.mxu0 %v3053
        %4048 = vmatpush2.bf16.msra.mxu0 %v3052
        %4049 = vmatprep.subr.bf16.mxu0 %v3051
        %4050 = vmatpush2.bf16.msra.mxu0 %v3050
        %4051 = vmatprep.subr.bf16.mxu0 %v3049
        %4052 = vmatpush2.bf16.msra.mxu0 %v3048
        %4053 = vmatprep.subr.bf16.mxu0 %v3047
        %4054 = vmatpush2.bf16.msra.mxu0 %v3046
        %4055 = vmatprep.subr.bf16.mxu0 %v3045
        %4056 = vmatpush2.bf16.msra.mxu0 %v3044
        %4057 = vmatprep.subr.bf16.mxu0 %v3043
        %4058 = vmatpush2.bf16.msra.mxu0 %v3042
        %4059 = vmatprep.subr.bf16.mxu0 %v3041
        %4060 = vmatpush2.bf16.msra.mxu0 %v3040
        %4061 = vmatprep.subr.bf16.mxu0 %v3039
        %4062 = vmatpush2.bf16.msra.mxu0 %v3038
        %4063 = vmatprep.mubr.bf16.mxu0 %v1272
        %4064 = vmatmul.mubr.bf16.gmra.mxu0 %v1270
        %v4065 = vpop.f32.mrf.mxu0
        %v4066 = vadd.f32 %v4025, %v4065
        %v4067 = vpop.f32.mrf.mxu0
        %v4068 = vadd.f32 %v4027, %v4067
        %v4069 = vpop.f32.mrf.mxu0
        %v4070 = vpop.f32.mrf.mxu0
        %4071 = vdwg.mxu0
        %4072 = vmatprep.subr.bf16.mxu0 %v3069
        %4073 = vmatpush1.bf16.msra.mxu0 %v3068
        %4074 = vmatprep.subr.bf16.mxu0 %v3067
        %4075 = vmatpush1.bf16.msra.mxu0 %v3066
        %4076 = vmatprep.subr.bf16.mxu0 %v3065
        %4077 = vmatpush1.bf16.msra.mxu0 %v3064
        %4078 = vmatprep.subr.bf16.mxu0 %v3063
        %4079 = vmatpush1.bf16.msra.mxu0 %v3062
        %4080 = vmatprep.subr.bf16.mxu0 %v3061
        %4081 = vmatpush1.bf16.msra.mxu0 %v3060
        %4082 = vmatprep.subr.bf16.mxu0 %v3059
        %4083 = vmatpush1.bf16.msra.mxu0 %v3058
        %4084 = vmatprep.subr.bf16.mxu0 %v3057
        %4085 = vmatpush1.bf16.msra.mxu0 %v3056
        %4086 = vmatprep.subr.bf16.mxu0 %v3055
        %4087 = vmatpush1.bf16.msra.mxu0 %v3054
        %4088 = vmatprep.subr.bf16.mxu0 %v3085
        %4089 = vmatpush2.bf16.msra.mxu0 %v3084
        %4090 = vmatprep.subr.bf16.mxu0 %v3083
        %4091 = vmatpush2.bf16.msra.mxu0 %v3082
        %4092 = vmatprep.subr.bf16.mxu0 %v3081
        %4093 = vmatpush2.bf16.msra.mxu0 %v3080
        %4094 = vmatprep.subr.bf16.mxu0 %v3079
        %4095 = vmatpush2.bf16.msra.mxu0 %v3078
        %4096 = vmatprep.subr.bf16.mxu0 %v3077
        %4097 = vmatpush2.bf16.msra.mxu0 %v3076
        %4098 = vmatprep.subr.bf16.mxu0 %v3075
        %4099 = vmatpush2.bf16.msra.mxu0 %v3074
        %4100 = vmatprep.subr.bf16.mxu0 %v3073
        %4101 = vmatpush2.bf16.msra.mxu0 %v3072
        %4102 = vmatprep.subr.bf16.mxu0 %v3071
        %4103 = vmatpush2.bf16.msra.mxu0 %v3070
        %4104 = vmatprep.mubr.bf16.mxu0 %v1269
        %4105 = vmatmul.mubr.bf16.gmra.mxu0 %v1255
        %v4106 = vpop.f32.mrf.mxu0
        %v4107 = vadd.f32 %v4066, %v4106
        %v4108 = vpop.f32.mrf.mxu0
        %v4109 = vadd.f32 %v4068, %v4108
        %v4110 = vpop.f32.mrf.mxu0
        %v4111 = vpop.f32.mrf.mxu0
        %4112 = vdwg.mxu0
        %4113 = vmatprep.subr.bf16.mxu0 %v3101
        %4114 = vmatpush1.bf16.msra.mxu0 %v3100
        %4115 = vmatprep.subr.bf16.mxu0 %v3099
        %4116 = vmatpush1.bf16.msra.mxu0 %v3098
        %4117 = vmatprep.subr.bf16.mxu0 %v3097
        %4118 = vmatpush1.bf16.msra.mxu0 %v3096
        %4119 = vmatprep.subr.bf16.mxu0 %v3095
        %4120 = vmatpush1.bf16.msra.mxu0 %v3094
        %4121 = vmatprep.subr.bf16.mxu0 %v3093
        %4122 = vmatpush1.bf16.msra.mxu0 %v3092
        %4123 = vmatprep.subr.bf16.mxu0 %v3091
        %4124 = vmatpush1.bf16.msra.mxu0 %v3090
        %4125 = vmatprep.subr.bf16.mxu0 %v3089
        %4126 = vmatpush1.bf16.msra.mxu0 %v3088
        %4127 = vmatprep.subr.bf16.mxu0 %v3087
        %4128 = vmatpush1.bf16.msra.mxu0 %v3086
        %4129 = vmatprep.subr.bf16.mxu0 %v3117
        %4130 = vmatpush2.bf16.msra.mxu0 %v3116
        %4131 = vmatprep.subr.bf16.mxu0 %v3115
        %4132 = vmatpush2.bf16.msra.mxu0 %v3114
        %4133 = vmatprep.subr.bf16.mxu0 %v3113
        %4134 = vmatpush2.bf16.msra.mxu0 %v3112
        %4135 = vmatprep.subr.bf16.mxu0 %v3111
        %4136 = vmatpush2.bf16.msra.mxu0 %v3110
        %4137 = vmatprep.subr.bf16.mxu0 %v3109
        %4138 = vmatpush2.bf16.msra.mxu0 %v3108
        %4139 = vmatprep.subr.bf16.mxu0 %v3107
        %4140 = vmatpush2.bf16.msra.mxu0 %v3106
        %4141 = vmatprep.subr.bf16.mxu0 %v3105
        %4142 = vmatpush2.bf16.msra.mxu0 %v3104
        %4143 = vmatprep.subr.bf16.mxu0 %v3103
        %4144 = vmatpush2.bf16.msra.mxu0 %v3102
        %4145 = vmatprep.mubr.bf16.mxu0 %v1273
        %4146 = vmatmul.mubr.bf16.gmra.mxu0 %v1271
        %v4147 = vpop.f32.mrf.mxu0
        %v4148 = vadd.f32 %v4107, %v4147
        %v4149 = vpop.f32.mrf.mxu0
        %v4150 = vadd.f32 %v4109, %v4149
        %v4151 = vpop.f32.mrf.mxu0
        %v4152 = vpop.f32.mrf.mxu0
        %4153 = vdwg.mxu0
        %4154 = vmatprep.subr.bf16.mxu0 %v3133
        %4155 = vmatpush1.bf16.msra.mxu0 %v3132
        %4156 = vmatprep.subr.bf16.mxu0 %v3131
        %4157 = vmatpush1.bf16.msra.mxu0 %v3130
        %4158 = vmatprep.subr.bf16.mxu0 %v3129
        %4159 = vmatpush1.bf16.msra.mxu0 %v3128
        %4160 = vmatprep.subr.bf16.mxu0 %v3127
        %4161 = vmatpush1.bf16.msra.mxu0 %v3126
        %4162 = vmatprep.subr.bf16.mxu0 %v3125
        %4163 = vmatpush1.bf16.msra.mxu0 %v3124
        %4164 = vmatprep.subr.bf16.mxu0 %v3123
        %4165 = vmatpush1.bf16.msra.mxu0 %v3122
        %4166 = vmatprep.subr.bf16.mxu0 %v3121
        %4167 = vmatpush1.bf16.msra.mxu0 %v3120
        %4168 = vmatprep.subr.bf16.mxu0 %v3119
        %4169 = vmatpush1.bf16.msra.mxu0 %v3118
        %4170 = vmatprep.subr.bf16.mxu0 %v3149
        %4171 = vmatpush2.bf16.msra.mxu0 %v3148
        %4172 = vmatprep.subr.bf16.mxu0 %v3147
        %4173 = vmatpush2.bf16.msra.mxu0 %v3146
        %4174 = vmatprep.subr.bf16.mxu0 %v3145
        %4175 = vmatpush2.bf16.msra.mxu0 %v3144
        %4176 = vmatprep.subr.bf16.mxu0 %v3143
        %4177 = vmatpush2.bf16.msra.mxu0 %v3142
        %4178 = vmatprep.subr.bf16.mxu0 %v3141
        %4179 = vmatpush2.bf16.msra.mxu0 %v3140
        %4180 = vmatprep.subr.bf16.mxu0 %v3139
        %4181 = vmatpush2.bf16.msra.mxu0 %v3138
        %4182 = vmatprep.subr.bf16.mxu0 %v3137
        %4183 = vmatpush2.bf16.msra.mxu0 %v3136
        %4184 = vmatprep.subr.bf16.mxu0 %v3135
        %4185 = vmatpush2.bf16.msra.mxu0 %v3134
        %4186 = vmatprep.mubr.bf16.mxu0 %v1310
        %4187 = vmatmul.mubr.bf16.gmra.mxu0 %v1296
        %v4188 = vpop.f32.mrf.mxu0
        %v4189 = vadd.f32 %v4148, %v4188
        %v4190 = vpop.f32.mrf.mxu0
        %v4191 = vadd.f32 %v4150, %v4190
        %v4192 = vpop.f32.mrf.mxu0
        %v4193 = vpop.f32.mrf.mxu0
        %4194 = vdwg.mxu0
        %4195 = vmatprep.subr.bf16.mxu0 %v3165
        %4196 = vmatpush1.bf16.msra.mxu0 %v3164
        %4197 = vmatprep.subr.bf16.mxu0 %v3163
        %4198 = vmatpush1.bf16.msra.mxu0 %v3162
        %4199 = vmatprep.subr.bf16.mxu0 %v3161
        %4200 = vmatpush1.bf16.msra.mxu0 %v3160
        %4201 = vmatprep.subr.bf16.mxu0 %v3159
        %4202 = vmatpush1.bf16.msra.mxu0 %v3158
        %4203 = vmatprep.subr.bf16.mxu0 %v3157
        %4204 = vmatpush1.bf16.msra.mxu0 %v3156
        %4205 = vmatprep.subr.bf16.mxu0 %v3155
        %4206 = vmatpush1.bf16.msra.mxu0 %v3154
        %4207 = vmatprep.subr.bf16.mxu0 %v3153
        %4208 = vmatpush1.bf16.msra.mxu0 %v3152
        %4209 = vmatprep.subr.bf16.mxu0 %v3151
        %4210 = vmatpush1.bf16.msra.mxu0 %v3150
        %4211 = vmatprep.subr.bf16.mxu0 %v3181
        %4212 = vmatpush2.bf16.msra.mxu0 %v3180
        %4213 = vmatprep.subr.bf16.mxu0 %v3179
        %4214 = vmatpush2.bf16.msra.mxu0 %v3178
        %4215 = vmatprep.subr.bf16.mxu0 %v3177
        %4216 = vmatpush2.bf16.msra.mxu0 %v3176
        %4217 = vmatprep.subr.bf16.mxu0 %v3175
        %4218 = vmatpush2.bf16.msra.mxu0 %v3174
        %4219 = vmatprep.subr.bf16.mxu0 %v3173
        %4220 = vmatpush2.bf16.msra.mxu0 %v3172
        %4221 = vmatprep.subr.bf16.mxu0 %v3171
        %4222 = vmatpush2.bf16.msra.mxu0 %v3170
        %4223 = vmatprep.subr.bf16.mxu0 %v3169
        %4224 = vmatpush2.bf16.msra.mxu0 %v3168
        %4225 = vmatprep.subr.bf16.mxu0 %v3167
        %4226 = vmatpush2.bf16.msra.mxu0 %v3166
        %4227 = vmatprep.mubr.bf16.mxu0 %v1312
        %4228 = vmatmul.mubr.bf16.gmra.mxu0 %v1311
        %v4229 = vpop.f32.mrf.mxu0
        %v4230 = vadd.f32 %v4189, %v4229
        %v4231 = vpop.f32.mrf.mxu0
        %v4232 = vadd.f32 %v4191, %v4231
        %v4233 = vpop.f32.mrf.mxu0
        %v4234 = vpop.f32.mrf.mxu0
        %4235 = vdwg.mxu0
        %4236 = vmatprep.subr.bf16.mxu0 %v3197
        %4237 = vmatpush1.bf16.msra.mxu0 %v3196
        %4238 = vmatprep.subr.bf16.mxu0 %v3195
        %4239 = vmatpush1.bf16.msra.mxu0 %v3194
        %4240 = vmatprep.subr.bf16.mxu0 %v3193
        %4241 = vmatpush1.bf16.msra.mxu0 %v3192
        %4242 = vmatprep.subr.bf16.mxu0 %v3191
        %4243 = vmatpush1.bf16.msra.mxu0 %v3190
        %4244 = vmatprep.subr.bf16.mxu0 %v3189
        %4245 = vmatpush1.bf16.msra.mxu0 %v3188
        %4246 = vmatprep.subr.bf16.mxu0 %v3187
        %4247 = vmatpush1.bf16.msra.mxu0 %v3186
        %4248 = vmatprep.subr.bf16.mxu0 %v3185
        %4249 = vmatpush1.bf16.msra.mxu0 %v3184
        %4250 = vmatprep.subr.bf16.mxu0 %v3183
        %4251 = vmatpush1.bf16.msra.mxu0 %v3182
        %4252 = vmatprep.subr.bf16.mxu0 0
        %4253 = vmatpush2.bf16.msra.mxu0 0
        %4254 = vmatprep.subr.bf16.mxu0 0
        %4255 = vmatpush2.bf16.msra.mxu0 0
        %4256 = vmatprep.subr.bf16.mxu0 0
        %4257 = vmatpush2.bf16.msra.mxu0 0
        %4258 = vmatprep.subr.bf16.mxu0 0
        %4259 = vmatpush2.bf16.msra.mxu0 0
        %4260 = vmatprep.subr.bf16.mxu0 0
        %4261 = vmatpush2.bf16.msra.mxu0 0
        %4262 = vmatprep.subr.bf16.mxu0 0
        %4263 = vmatpush2.bf16.msra.mxu0 0
        %4264 = vmatprep.subr.bf16.mxu0 0
        %4265 = vmatpush2.bf16.msra.mxu0 0
        %4266 = vmatprep.subr.bf16.mxu0 0
        %4267 = vmatpush2.bf16.msra.mxu0 0
        %4268 = vmatprep.mubr.bf16.mxu0 0
        %4269 = vmatmul.mubr.bf16.gmra.mxu0 %v1303
        %v4270 = vpop.f32.mrf.mxu0
        %v4271 = vadd.f32 %v4230, %v4270
        %v4272 = vpop.f32.mrf.mxu0
        %v4273 = vadd.f32 %v4232, %v4272
        %v4274 = vpop.f32.mrf.mxu0
        %v4275 = vpop.f32.mrf.mxu0
        %4276 = vdwg.mxu0
        %v4279 = vcombine.low %v4271, %v4273
        %v4281 = vunpack.c.l.s4 1966171168
        %v4282 = vunpack.c.0.s8 %v4281
        %v4283 = vlaneseq
        %v4284 = vshrl.u32 %v4283, 7
        %v4285 = vsub.s32 %v4282, %v4284
        %v4286 = vrot.slane %v4279, %v4285
        %v4288 = vunpack.c.l.s4 1966171168
        %v4289 = vunpack.c.0.s8 %v4288
        %v4290 = vlaneseq
        %v4291 = vshrl.u32 %v4290, 7
        %v4292 = vsub.s32 %v4289, %v4291
        %v4293 = vrot.slane %v4286, %v4292
        %v4295 = vadd.f32 %v654, %v4293
        %v4296 = vld [vmem:[%s580] sm:$0x3]
        %v4297 = vld [vmem:[%s2] sm:$0xf]
        %v4298 = vld [vmem:[%s562] sm:$0xff]
        %v4299 = vld [vmem:[%s562 + $0x8] sm:$0xff]
        %v4300 = vld [vmem:[%s562 + $0x10] sm:$0xff]
        %v4301 = vld [vmem:[%s562 + $0x18] sm:$0xff]
        %v4302 = vld [vmem:[%s562 + $0x20] sm:$0xff]
        %v4303 = vld [vmem:[%s562 + $0x28] sm:$0xff]
        %v4304 = vld [vmem:[%s562 + $0x30] sm:$0xff]
        %v4305 = vld [vmem:[%s562 + $0x38] sm:$0xff]
        %v4306 = vld [vmem:[%s562 + $0x40] sm:$0xff]
        %v4307 = vld [vmem:[%s562 + $0x48] sm:$0xff]
        %v4308 = vld [vmem:[%s562 + $0x50] sm:$0xff]
        %v4309 = vld [vmem:[%s562 + $0x58] sm:$0xff]
        %v4310 = vld [vmem:[%s562 + $0x60] sm:$0xff]
        %v4311 = vld [vmem:[%s562 + $0x68] sm:$0xff]
        %v4312 = vld [vmem:[%s562 + $0x70] sm:$0xff]
        %v4313 = vld [vmem:[%s562 + $0x78] sm:$0xff]
        %v4314 = vld [vmem:[%s562 + $0x80] sm:$0xff]
        %v4315 = vld [vmem:[%s562 + $0x88] sm:$0xff]
        %v4316 = vld [vmem:[%s562 + $0x90] sm:$0xff]
        %v4317 = vld [vmem:[%s562 + $0x98] sm:$0xff]
        %v4318 = vld [vmem:[%s562 + $0xa0] sm:$0xff]
        %v4319 = vld [vmem:[%s562 + $0xa8] sm:$0xff]
        %v4320 = vld [vmem:[%s562 + $0xb0] sm:$0xff]
        %v4321 = vld [vmem:[%s562 + $0xb8] sm:$0xff]
        %v4322 = vld [vmem:[%s562 + $0xc0] sm:$0xff]
        %v4323 = vld [vmem:[%s562 + $0xc8] sm:$0xff]
        %v4324 = vld [vmem:[%s562 + $0xd0] sm:$0xff]
        %v4325 = vld [vmem:[%s562 + $0xd8] sm:$0xff]
        %v4326 = vld [vmem:[%s562 + $0xe0] sm:$0xff]
        %v4327 = vld [vmem:[%s562 + $0xe8] sm:$0xff]
        %v4328 = vld [vmem:[%s562 + $0xf0] sm:$0xff]
        %v4329 = vld [vmem:[%s562 + $0xf8] sm:$0xff]
        %v4330 = vld [vmem:[%s562 + $0x100] sm:$0xff]
        %v4331 = vld [vmem:[%s562 + $0x108] sm:$0xff]
        %v4332 = vld [vmem:[%s562 + $0x110] sm:$0xff]
        %v4333 = vld [vmem:[%s562 + $0x118] sm:$0xff]
        %v4334 = vld [vmem:[%s562 + $0x120] sm:$0xff]
        %v4335 = vld [vmem:[%s562 + $0x128] sm:$0xff]
        %v4336 = vld [vmem:[%s562 + $0x130] sm:$0xff]
        %v4337 = vld [vmem:[%s562 + $0x138] sm:$0xff]
        %v4338 = vld [vmem:[%s562 + $0x140] sm:$0xff]
        %v4339 = vld [vmem:[%s562 + $0x148] sm:$0xff]
        %v4340 = vld [vmem:[%s562 + $0x150] sm:$0xff]
        %v4341 = vld [vmem:[%s562 + $0x158] sm:$0xff]
        %v4342 = vld [vmem:[%s562 + $0x160] sm:$0xff]
        %v4343 = vld [vmem:[%s562 + $0x168] sm:$0xff]
        %v4344 = vld [vmem:[%s562 + $0x170] sm:$0xff]
        %v4345 = vld [vmem:[%s562 + $0x178] sm:$0xff]
        %v4346 = vld [vmem:[%s562 + $0x180] sm:$0xff]
        %v4347 = vld [vmem:[%s562 + $0x188] sm:$0xff]
        %v4348 = vld [vmem:[%s562 + $0x190] sm:$0xff]
        %v4349 = vld [vmem:[%s562 + $0x198] sm:$0xff]
        %v4350 = vld [vmem:[%s562 + $0x1a0] sm:$0xff]
        %v4351 = vld [vmem:[%s562 + $0x1a8] sm:$0xff]
        %v4352 = vld [vmem:[%s562 + $0x1b0] sm:$0xff]
        %v4353 = vld [vmem:[%s562 + $0x1b8] sm:$0xff]
        %v4354 = vld [vmem:[%s562 + $0x1c0] sm:$0xff]
        %v4355 = vld [vmem:[%s562 + $0x1c8] sm:$0xff]
        %v4356 = vld [vmem:[%s562 + $0x1d0] sm:$0xff]
        %v4357 = vld [vmem:[%s562 + $0x1d8] sm:$0xff]
        %v4358 = vld [vmem:[%s562 + $0x1e0] sm:$0xff]
        %v4359 = vld [vmem:[%s562 + $0x1e8] sm:$0xff]
        %v4360 = vld [vmem:[%s562 + $0x1f0] sm:$0xff]
        %v4361 = vld [vmem:[%s562 + $0x1f8] sm:$0xff]
        %v4364 = vunpack.c.l.s4 1966171168
        %v4365 = vunpack.c.0.s8 %v4364
        %v4366 = vlaneseq
        %v4367 = vshrl.u32 %v4366, 7
        %v4368 = vsub.s32 %v4365, %v4367
        %v4369 = vrot.slane %v4297, %v4368
        %v4370 = vcombine.high %v4369, %v4369
        %v4372 = vunpack.c.l.s4 1966171168
        %v4373 = vunpack.c.0.s8 %v4372
        %v4374 = vlaneseq
        %v4375 = vshrl.u32 %v4374, 7
        %v4376 = vsub.s32 %v4373, %v4375
        %v4377 = vrot.slane %v4369, %v4376
        %v4379 = vunpack.c.l.s4 1966171168
        %v4380 = vunpack.c.0.s8 %v4379
        %v4381 = vlaneseq
        %v4382 = vshrl.u32 %v4381, 7
        %v4383 = vsub.s32 %v4380, %v4382
        %v4384 = vrot.slane %v4370, %v4383
        %v4385 = vcombine.high %v4377, %v4377
        %v4386 = vcombine.high %v4384, %v4384
        %v4455 = vunpack.c.l.b16 %v4298
        %v4456 = vunpack.c.h.b16 %v4298
        %v4457 = vunpack.c.l.b16 %v4299
        %v4458 = vunpack.c.h.b16 %v4299
        %v4459 = vunpack.c.l.b16 %v4300
        %v4460 = vunpack.c.h.b16 %v4300
        %v4461 = vunpack.c.l.b16 %v4301
        %v4462 = vunpack.c.h.b16 %v4301
        %v4463 = vunpack.c.l.b16 %v4302
        %v4464 = vunpack.c.h.b16 %v4302
        %v4465 = vunpack.c.l.b16 %v4303
        %v4466 = vunpack.c.h.b16 %v4303
        %v4467 = vunpack.c.l.b16 %v4304
        %v4468 = vunpack.c.h.b16 %v4304
        %v4469 = vunpack.c.l.b16 %v4305
        %v4470 = vunpack.c.h.b16 %v4305
        %v4471 = vunpack.c.l.b16 %v4306
        %v4472 = vunpack.c.h.b16 %v4306
        %v4473 = vunpack.c.l.b16 %v4307
        %v4474 = vunpack.c.h.b16 %v4307
        %v4475 = vunpack.c.l.b16 %v4308
        %v4476 = vunpack.c.h.b16 %v4308
        %v4477 = vunpack.c.l.b16 %v4309
        %v4478 = vunpack.c.h.b16 %v4309
        %v4479 = vunpack.c.l.b16 %v4310
        %v4480 = vunpack.c.h.b16 %v4310
        %v4481 = vunpack.c.l.b16 %v4311
        %v4482 = vunpack.c.h.b16 %v4311
        %v4483 = vunpack.c.l.b16 %v4312
        %v4484 = vunpack.c.h.b16 %v4312
        %v4485 = vunpack.c.l.b16 %v4313
        %v4486 = vunpack.c.h.b16 %v4313
        %v4487 = vunpack.c.l.b16 %v4314
        %v4488 = vunpack.c.h.b16 %v4314
        %v4489 = vunpack.c.l.b16 %v4315
        %v4490 = vunpack.c.h.b16 %v4315
        %v4491 = vunpack.c.l.b16 %v4316
        %v4492 = vunpack.c.h.b16 %v4316
        %v4493 = vunpack.c.l.b16 %v4317
        %v4494 = vunpack.c.h.b16 %v4317
        %v4495 = vunpack.c.l.b16 %v4318
        %v4496 = vunpack.c.h.b16 %v4318
        %v4497 = vunpack.c.l.b16 %v4319
        %v4498 = vunpack.c.h.b16 %v4319
        %v4499 = vunpack.c.l.b16 %v4320
        %v4500 = vunpack.c.h.b16 %v4320
        %v4501 = vunpack.c.l.b16 %v4321
        %v4502 = vunpack.c.h.b16 %v4321
        %v4503 = vunpack.c.l.b16 %v4322
        %v4504 = vunpack.c.h.b16 %v4322
        %v4505 = vunpack.c.l.b16 %v4323
        %v4506 = vunpack.c.h.b16 %v4323
        %v4507 = vunpack.c.l.b16 %v4324
        %v4508 = vunpack.c.h.b16 %v4324
        %v4509 = vunpack.c.l.b16 %v4325
        %v4510 = vunpack.c.h.b16 %v4325
        %v4511 = vunpack.c.l.b16 %v4326
        %v4512 = vunpack.c.h.b16 %v4326
        %v4513 = vunpack.c.l.b16 %v4327
        %v4514 = vunpack.c.h.b16 %v4327
        %v4515 = vunpack.c.l.b16 %v4328
        %v4516 = vunpack.c.h.b16 %v4328
        %v4517 = vunpack.c.l.b16 %v4329
        %v4518 = vunpack.c.h.b16 %v4329
        %v4519 = vunpack.c.l.b16 %v4330
        %v4520 = vunpack.c.h.b16 %v4330
        %v4521 = vunpack.c.l.b16 %v4331
        %v4522 = vunpack.c.h.b16 %v4331
        %v4523 = vunpack.c.l.b16 %v4332
        %v4524 = vunpack.c.h.b16 %v4332
        %v4525 = vunpack.c.l.b16 %v4333
        %v4526 = vunpack.c.h.b16 %v4333
        %v4527 = vunpack.c.l.b16 %v4334
        %v4528 = vunpack.c.h.b16 %v4334
        %v4529 = vunpack.c.l.b16 %v4335
        %v4530 = vunpack.c.h.b16 %v4335
        %v4531 = vunpack.c.l.b16 %v4336
        %v4532 = vunpack.c.h.b16 %v4336
        %v4533 = vunpack.c.l.b16 %v4337
        %v4534 = vunpack.c.h.b16 %v4337
        %v4535 = vunpack.c.l.b16 %v4338
        %v4536 = vunpack.c.h.b16 %v4338
        %v4537 = vunpack.c.l.b16 %v4339
        %v4538 = vunpack.c.h.b16 %v4339
        %v4539 = vunpack.c.l.b16 %v4340
        %v4540 = vunpack.c.h.b16 %v4340
        %v4541 = vunpack.c.l.b16 %v4341
        %v4542 = vunpack.c.h.b16 %v4341
        %v4543 = vunpack.c.l.b16 %v4342
        %v4544 = vunpack.c.h.b16 %v4342
        %v4545 = vunpack.c.l.b16 %v4343
        %v4546 = vunpack.c.h.b16 %v4343
        %v4547 = vunpack.c.l.b16 %v4344
        %v4548 = vunpack.c.h.b16 %v4344
        %v4549 = vunpack.c.l.b16 %v4345
        %v4550 = vunpack.c.h.b16 %v4345
        %v4551 = vunpack.c.l.b16 %v4346
        %v4552 = vunpack.c.h.b16 %v4346
        %v4553 = vunpack.c.l.b16 %v4347
        %v4554 = vunpack.c.h.b16 %v4347
        %v4555 = vunpack.c.l.b16 %v4348
        %v4556 = vunpack.c.h.b16 %v4348
        %v4557 = vunpack.c.l.b16 %v4349
        %v4558 = vunpack.c.h.b16 %v4349
        %v4559 = vunpack.c.l.b16 %v4350
        %v4560 = vunpack.c.h.b16 %v4350
        %v4561 = vunpack.c.l.b16 %v4351
        %v4562 = vunpack.c.h.b16 %v4351
        %v4563 = vunpack.c.l.b16 %v4352
        %v4564 = vunpack.c.h.b16 %v4352
        %v4565 = vunpack.c.l.b16 %v4353
        %v4566 = vunpack.c.h.b16 %v4353
        %v4567 = vunpack.c.l.b16 %v4354
        %v4568 = vunpack.c.h.b16 %v4354
        %v4569 = vunpack.c.l.b16 %v4355
        %v4570 = vunpack.c.h.b16 %v4355
        %v4571 = vunpack.c.l.b16 %v4356
        %v4572 = vunpack.c.h.b16 %v4356
        %v4573 = vunpack.c.l.b16 %v4357
        %v4574 = vunpack.c.h.b16 %v4357
        %v4575 = vunpack.c.l.b16 %v4358
        %v4576 = vunpack.c.h.b16 %v4358
        %v4577 = vunpack.c.l.b16 %v4359
        %v4578 = vunpack.c.h.b16 %v4359
        %v4579 = vunpack.c.l.b16 %v4360
        %v4580 = vunpack.c.h.b16 %v4360
        %v4581 = vunpack.c.l.b16 %v4361
        %v4582 = vunpack.c.h.b16 %v4361
        %v4583 = vpack.c.b16 %v4457, %v4455
        %v4584 = vpack.c.b16 %v4458, %v4456
        %v4585 = vpack.c.b16 %v4461, %v4459
        %v4586 = vpack.c.b16 %v4462, %v4460
        %v4587 = vpack.c.b16 %v4465, %v4463
        %v4588 = vpack.c.b16 %v4466, %v4464
        %v4589 = vpack.c.b16 %v4469, %v4467
        %v4590 = vpack.c.b16 %v4470, %v4468
        %v4591 = vpack.c.b16 %v4473, %v4471
        %v4592 = vpack.c.b16 %v4474, %v4472
        %v4593 = vpack.c.b16 %v4477, %v4475
        %v4594 = vpack.c.b16 %v4478, %v4476
        %v4595 = vpack.c.b16 %v4481, %v4479
        %v4596 = vpack.c.b16 %v4482, %v4480
        %v4597 = vpack.c.b16 %v4485, %v4483
        %v4598 = vpack.c.b16 %v4486, %v4484
        %v4599 = vpack.c.b16 %v4489, %v4487
        %v4600 = vpack.c.b16 %v4490, %v4488
        %v4601 = vpack.c.b16 %v4493, %v4491
        %v4602 = vpack.c.b16 %v4494, %v4492
        %v4603 = vpack.c.b16 %v4497, %v4495
        %v4604 = vpack.c.b16 %v4498, %v4496
        %v4605 = vpack.c.b16 %v4501, %v4499
        %v4606 = vpack.c.b16 %v4502, %v4500
        %v4607 = vpack.c.b16 %v4505, %v4503
        %v4608 = vpack.c.b16 %v4506, %v4504
        %v4609 = vpack.c.b16 %v4509, %v4507
        %v4610 = vpack.c.b16 %v4510, %v4508
        %v4611 = vpack.c.b16 %v4513, %v4511
        %v4612 = vpack.c.b16 %v4514, %v4512
        %v4613 = vpack.c.b16 %v4517, %v4515
        %v4614 = vpack.c.b16 %v4518, %v4516
        %v4615 = vpack.c.b16 %v4521, %v4519
        %v4616 = vpack.c.b16 %v4522, %v4520
        %v4617 = vpack.c.b16 %v4525, %v4523
        %v4618 = vpack.c.b16 %v4526, %v4524
        %v4619 = vpack.c.b16 %v4529, %v4527
        %v4620 = vpack.c.b16 %v4530, %v4528
        %v4621 = vpack.c.b16 %v4533, %v4531
        %v4622 = vpack.c.b16 %v4534, %v4532
        %v4623 = vpack.c.b16 %v4537, %v4535
        %v4624 = vpack.c.b16 %v4538, %v4536
        %v4625 = vpack.c.b16 %v4541, %v4539
        %v4626 = vpack.c.b16 %v4542, %v4540
        %v4627 = vpack.c.b16 %v4545, %v4543
        %v4628 = vpack.c.b16 %v4546, %v4544
        %v4629 = vpack.c.b16 %v4549, %v4547
        %v4630 = vpack.c.b16 %v4550, %v4548
        %v4631 = vpack.c.b16 %v4553, %v4551
        %v4632 = vpack.c.b16 %v4554, %v4552
        %v4633 = vpack.c.b16 %v4557, %v4555
        %v4634 = vpack.c.b16 %v4558, %v4556
        %v4635 = vpack.c.b16 %v4561, %v4559
        %v4636 = vpack.c.b16 %v4562, %v4560
        %v4637 = vpack.c.b16 %v4565, %v4563
        %v4638 = vpack.c.b16 %v4566, %v4564
        %v4639 = vpack.c.b16 %v4569, %v4567
        %v4640 = vpack.c.b16 %v4570, %v4568
        %v4641 = vpack.c.b16 %v4573, %v4571
        %v4642 = vpack.c.b16 %v4574, %v4572
        %v4643 = vpack.c.b16 %v4577, %v4575
        %v4644 = vpack.c.b16 %v4578, %v4576
        %v4645 = vpack.c.b16 %v4581, %v4579
        %v4646 = vpack.c.b16 %v4582, %v4580
        %4711 = vmatprep.subr.bf16.mxu0 %v4598
        %4712 = vmatpush1.bf16.msra.mxu0 %v4597
        %4713 = vmatprep.subr.bf16.mxu0 %v4596
        %4714 = vmatpush1.bf16.msra.mxu0 %v4595
        %4715 = vmatprep.subr.bf16.mxu0 %v4594
        %4716 = vmatpush1.bf16.msra.mxu0 %v4593
        %4717 = vmatprep.subr.bf16.mxu0 %v4592
        %4718 = vmatpush1.bf16.msra.mxu0 %v4591
        %4719 = vmatprep.subr.bf16.mxu0 %v4590
        %4720 = vmatpush1.bf16.msra.mxu0 %v4589
        %4721 = vmatprep.subr.bf16.mxu0 %v4588
        %4722 = vmatpush1.bf16.msra.mxu0 %v4587
        %4723 = vmatprep.subr.bf16.mxu0 %v4586
        %4724 = vmatpush1.bf16.msra.mxu0 %v4585
        %4725 = vmatprep.subr.bf16.mxu0 %v4584
        %4726 = vmatpush1.bf16.msra.mxu0 %v4583
        %4727 = vmatprep.subr.bf16.mxu0 %v4614
        %4728 = vmatpush2.bf16.msra.mxu0 %v4613
        %4729 = vmatprep.subr.bf16.mxu0 %v4612
        %4730 = vmatpush2.bf16.msra.mxu0 %v4611
        %4731 = vmatprep.subr.bf16.mxu0 %v4610
        %4732 = vmatpush2.bf16.msra.mxu0 %v4609
        %4733 = vmatprep.subr.bf16.mxu0 %v4608
        %4734 = vmatpush2.bf16.msra.mxu0 %v4607
        %4735 = vmatprep.subr.bf16.mxu0 %v4606
        %4736 = vmatpush2.bf16.msra.mxu0 %v4605
        %4737 = vmatprep.subr.bf16.mxu0 %v4604
        %4738 = vmatpush2.bf16.msra.mxu0 %v4603
        %4739 = vmatprep.subr.bf16.mxu0 %v4602
        %4740 = vmatpush2.bf16.msra.mxu0 %v4601
        %4741 = vmatprep.subr.bf16.mxu0 %v4600
        %4742 = vmatpush2.bf16.msra.mxu0 %v4599
        %4743 = vmatprep.mubr.bf16.mxu0 %v4384
        %4744 = vmatmul.mubr.bf16.gmra.mxu0 %v4377
        %v4745 = vpop.f32.mrf.mxu0
        %v4746 = vadd.f32 0.0, %v4745
        %v4747 = vpop.f32.mrf.mxu0
        %v4748 = vadd.f32 0.0, %v4747
        %v4749 = vpop.f32.mrf.mxu0
        %v4750 = vpop.f32.mrf.mxu0
        %4751 = vdwg.mxu0
        %4752 = vmatprep.subr.bf16.mxu0 %v4630
        %4753 = vmatpush1.bf16.msra.mxu0 %v4629
        %4754 = vmatprep.subr.bf16.mxu0 %v4628
        %4755 = vmatpush1.bf16.msra.mxu0 %v4627
        %4756 = vmatprep.subr.bf16.mxu0 %v4626
        %4757 = vmatpush1.bf16.msra.mxu0 %v4625
        %4758 = vmatprep.subr.bf16.mxu0 %v4624
        %4759 = vmatpush1.bf16.msra.mxu0 %v4623
        %4760 = vmatprep.subr.bf16.mxu0 %v4622
        %4761 = vmatpush1.bf16.msra.mxu0 %v4621
        %4762 = vmatprep.subr.bf16.mxu0 %v4620
        %4763 = vmatpush1.bf16.msra.mxu0 %v4619
        %4764 = vmatprep.subr.bf16.mxu0 %v4618
        %4765 = vmatpush1.bf16.msra.mxu0 %v4617
        %4766 = vmatprep.subr.bf16.mxu0 %v4616
        %4767 = vmatpush1.bf16.msra.mxu0 %v4615
        %4768 = vmatprep.subr.bf16.mxu0 %v4646
        %4769 = vmatpush2.bf16.msra.mxu0 %v4645
        %4770 = vmatprep.subr.bf16.mxu0 %v4644
        %4771 = vmatpush2.bf16.msra.mxu0 %v4643
        %4772 = vmatprep.subr.bf16.mxu0 %v4642
        %4773 = vmatpush2.bf16.msra.mxu0 %v4641
        %4774 = vmatprep.subr.bf16.mxu0 %v4640
        %4775 = vmatpush2.bf16.msra.mxu0 %v4639
        %4776 = vmatprep.subr.bf16.mxu0 %v4638
        %4777 = vmatpush2.bf16.msra.mxu0 %v4637
        %4778 = vmatprep.subr.bf16.mxu0 %v4636
        %4779 = vmatpush2.bf16.msra.mxu0 %v4635
        %4780 = vmatprep.subr.bf16.mxu0 %v4634
        %4781 = vmatpush2.bf16.msra.mxu0 %v4633
        %4782 = vmatprep.subr.bf16.mxu0 %v4632
        %4783 = vmatpush2.bf16.msra.mxu0 %v4631
        %4784 = vmatprep.mubr.bf16.mxu0 %v4386
        %4785 = vmatmul.mubr.bf16.gmra.mxu0 %v4385
        %v4786 = vpop.f32.mrf.mxu0
        %v4787 = vadd.f32 %v4746, %v4786
        %v4788 = vpop.f32.mrf.mxu0
        %v4789 = vadd.f32 %v4748, %v4788
        %v4790 = vpop.f32.mrf.mxu0
        %v4791 = vpop.f32.mrf.mxu0
        %4792 = vdwg.mxu0
        %v4795 = vcombine.low %v4787, %v4789
        %v4797 = vunpack.c.l.s4 1966171168
        %v4798 = vunpack.c.0.s8 %v4797
        %v4799 = vlaneseq
        %v4800 = vshrl.u32 %v4799, 7
        %v4801 = vsub.s32 %v4798, %v4800
        %v4802 = vrot.slane %v4795, %v4801
        %v4804 = vunpack.c.l.s4 1966171168
        %v4805 = vunpack.c.0.s8 %v4804
        %v4806 = vlaneseq
        %v4807 = vshrl.u32 %v4806, 7
        %v4808 = vsub.s32 %v4805, %v4807
        %v4809 = vrot.slane %v4802, %v4808
        %v4811 = vadd.f32 %v4296, %v4809
        %p4812 = scmp.eq.s32.totalorder %s37, 0
        // Predicated region
        $region101: #{_navigation_policy_step.1} parent=71 // pred_check
          %p4813 = pneg %p4812
        $region102: #{_navigation_policy_step.1} parent=71 // pred_check_branch
          %4815 = sbr.rel (%p4813) target = $region104
        $region103: #{_navigation_policy_step.1} parent=71 // pred_region
          %v4816 = vlaneseq
          %vm4817 = vcmp.ge.s32.totalorder %v4816, 0
          %vm4818 = vcmp.lt.s32.totalorder %v4816, 256
          %vm4819 = vmand %vm4817, %vm4818
          %4820 = vst.msk [vmem:[#allocation2] sm:$0x3] %vm4819, %v4295
          %4821 = vst.msk [vmem:[#allocation3] sm:$0x3] %vm4819, %v4811
        $region104: #{_navigation_policy_step.1} parent=71 // pred_fallthru
          _
        %p4822 = scmp.eq.s32.totalorder %s37, 1
        // Predicated region
        $region105: #{_navigation_policy_step.1} parent=71 // pred_check
          %p4823 = pneg %p4822
        $region106: #{_navigation_policy_step.1} parent=71 // pred_check_branch
          %4825 = sbr.rel (%p4823) target = $region108
        $region107: #{_navigation_policy_step.1} parent=71 // pred_region
          %v4826 = vlaneseq
          %vm4827 = vcmp.ge.s32.totalorder %v4826, 0
          %vm4828 = vcmp.lt.s32.totalorder %v4826, 256
          %vm4829 = vmand %vm4827, %vm4828
          %4830 = vst.msk [vmem:[#allocation2 + $0x2] sm:$0x3] %vm4829, %v4295
          %4831 = vst.msk [vmem:[#allocation3 + $0x2] sm:$0x3] %vm4829, %v4811
        $region108: #{_navigation_policy_step.1} parent=71 // pred_fallthru
          _
        %p4832 = scmp.eq.s32.totalorder %s37, 2
        // Predicated region
        $region109: #{_navigation_policy_step.1} parent=71 // pred_check
          %p4833 = pneg %p4832
        $region110: #{_navigation_policy_step.1} parent=71 // pred_check_branch
          %4835 = sbr.rel (%p4833) target = $region112
        $region111: #{_navigation_policy_step.1} parent=71 // pred_region
          %v4836 = vlaneseq
          %vm4837 = vcmp.ge.s32.totalorder %v4836, 0
          %vm4838 = vcmp.lt.s32.totalorder %v4836, 256
          %vm4839 = vmand %vm4837, %vm4838
          %4840 = vst.msk [vmem:[#allocation2 + $0x4] sm:$0x3] %vm4839, %v4295
          %4841 = vst.msk [vmem:[#allocation3 + $0x4] sm:$0x3] %vm4839, %v4811
        $region112: #{_navigation_policy_step.1} parent=71 // pred_fallthru
          _
        %p4842 = scmp.eq.s32.totalorder %s37, 3
        // Predicated region
        $region113: #{_navigation_policy_step.1} parent=71 // pred_check
          %p4843 = pneg %p4842
        $region114: #{_navigation_policy_step.1} parent=71 // pred_check_branch
          %4845 = sbr.rel (%p4843) target = $region116
        $region115: #{_navigation_policy_step.1} parent=71 // pred_region
          %v4846 = vlaneseq
          %vm4847 = vcmp.ge.s32.totalorder %v4846, 0
          %vm4848 = vcmp.lt.s32.totalorder %v4846, 256
          %vm4849 = vmand %vm4847, %vm4848
          %4850 = vst.msk [vmem:[#allocation2 + $0x6] sm:$0x3] %vm4849, %v4295
          %4851 = vst.msk [vmem:[#allocation3 + $0x6] sm:$0x3] %vm4849, %v4811
        $region116: #{_navigation_policy_step.1} parent=71 // pred_fallthru
          _
        %p4852 = scmp.eq.s32.totalorder %s37, 4
        // Predicated region
        $region117: #{_navigation_policy_step.1} parent=71 // pred_check
          %p4853 = pneg %p4852
        $region118: #{_navigation_policy_step.1} parent=71 // pred_check_branch
          %4855 = sbr.rel (%p4853) target = $region120
        $region119: #{_navigation_policy_step.1} parent=71 // pred_region
          %v4856 = vlaneseq
          %vm4857 = vcmp.ge.s32.totalorder %v4856, 0
          %vm4858 = vcmp.lt.s32.totalorder %v4856, 256
          %vm4859 = vmand %vm4857, %vm4858
          %4860 = vst.msk [vmem:[#allocation2 + $0x8] sm:$0x3] %vm4859, %v4295
          %4861 = vst.msk [vmem:[#allocation3 + $0x8] sm:$0x3] %vm4859, %v4811
        $region120: #{_navigation_policy_step.1} parent=71 // pred_fallthru
          _
        %p4862 = scmp.eq.s32.totalorder %s37, 5
        // Predicated region
        $region121: #{_navigation_policy_step.1} parent=71 // pred_check
          %p4863 = pneg %p4862
        $region122: #{_navigation_policy_step.1} parent=71 // pred_check_branch
          %4865 = sbr.rel (%p4863) target = $region124
        $region123: #{_navigation_policy_step.1} parent=71 // pred_region
          %v4866 = vlaneseq
          %vm4867 = vcmp.ge.s32.totalorder %v4866, 0
          %vm4868 = vcmp.lt.s32.totalorder %v4866, 256
          %vm4869 = vmand %vm4867, %vm4868
          %4870 = vst.msk [vmem:[#allocation2 + $0xa] sm:$0x3] %vm4869, %v4295
          %4871 = vst.msk [vmem:[#allocation3 + $0xa] sm:$0x3] %vm4869, %v4811
        $region124: #{_navigation_policy_step.1} parent=71 // pred_fallthru
          _
        %p4872 = scmp.eq.s32.totalorder %s37, 6
        // Predicated region
        $region125: #{_navigation_policy_step.1} parent=71 // pred_check
          %p4873 = pneg %p4872
        $region126: #{_navigation_policy_step.1} parent=71 // pred_check_branch
          %4875 = sbr.rel (%p4873) target = $region128
        $region127: #{_navigation_policy_step.1} parent=71 // pred_region
          %v4876 = vlaneseq
          %vm4877 = vcmp.ge.s32.totalorder %v4876, 0
          %vm4878 = vcmp.lt.s32.totalorder %v4876, 256
          %vm4879 = vmand %vm4877, %vm4878
          %4880 = vst.msk [vmem:[#allocation2 + $0xc] sm:$0x3] %vm4879, %v4295
          %4881 = vst.msk [vmem:[#allocation3 + $0xc] sm:$0x3] %vm4879, %v4811
        $region128: #{_navigation_policy_step.1} parent=71 // pred_fallthru
          _
        %p4882 = scmp.eq.s32.totalorder %s37, 7
        // Predicated region
        $region129: #{_navigation_policy_step.1} parent=71 // pred_check
          %p4883 = pneg %p4882
        $region130: #{_navigation_policy_step.1} parent=71 // pred_check_branch
          %4885 = sbr.rel (%p4883) target = $region132
        $region131: #{_navigation_policy_step.1} parent=71 // pred_region
          %v4886 = vlaneseq
          %vm4887 = vcmp.ge.s32.totalorder %v4886, 0
          %vm4888 = vcmp.lt.s32.totalorder %v4886, 256
          %vm4889 = vmand %vm4887, %vm4888
          %4890 = vst.msk [vmem:[#allocation2 + $0xe] sm:$0x3] %vm4889, %v4295
          %4891 = vst.msk [vmem:[#allocation3 + $0xe] sm:$0x3] %vm4889, %v4811
          %v4892 = vld [vmem:[%s9] sm:$0x1f]
          %v4893 = vld [vmem:[%s9 + $0x8] sm:$0x1f]
          %v4894 = vld [vmem:[%s9 + $0x10] sm:$0x1f]
          %v4895 = vld [vmem:[%s9 + $0x18] sm:$0x1f]
          %v4896 = vld [vmem:[%s6] ss:$2 sm:$0xf]
          %v4897 = vld [vmem:[%s7] ss:$2 sm:$0xf]
          %v4898 = vld [vmem:[#allocation2] sm:$0xff]
          %v4899 = vld [vmem:[#allocation2 + $0x8] sm:$0xff]
          %v4900 = vld [vmem:[%s8] sm:$0x1f]
          %v4901 = vld [vmem:[%s8 + $0x8] sm:$0x1f]
          %v4902 = vld [vmem:[%s8 + $0x10] sm:$0x1f]
          %v4903 = vld [vmem:[%s8 + $0x18] sm:$0x1f]
          %v4904 = vadd.f32 %v4900, %v4892
          %v4905 = vadd.f32 %v4901, %v4893
          %v4906 = vadd.f32 %v4902, %v4894
          %v4907 = vadd.f32 %v4903, %v4895
          %v4908 = vxor.u32 %v4898, 2147483648
          %v4909 = vmul.f32 %v4908, 1.442695
          %v4910 = vpow.pop %v4909
          %v4911 = vadd.f32 %v4910, 1.0
          %v4912 = vrcp.pop %v4911
          %v4913 = vmul.f32 1.0, %v4912
          %v4915 = vrot.slane %v4898, 4
          %v4917 = vxor.u32 %v4915, 2147483648
          %v4918 = vmul.f32 %v4917, 1.442695
          %v4919 = vpow.pop %v4918
          %v4920 = vadd.f32 %v4919, 1.0
          %v4921 = vrcp.pop %v4920
          %v4922 = vmul.f32 1.0, %v4921
          %v4923 = vtanh.pop %v4899
          %v4925 = vrot.slane %v4899, 4
          %v4927 = vxor.u32 %v4925, 2147483648
          %v4928 = vmul.f32 %v4927, 1.442695
          %v4929 = vpow.pop %v4928
          %v4930 = vadd.f32 %v4929, 1.0
          %v4931 = vrcp.pop %v4930
          %v4932 = vmul.f32 1.0, %v4931
          %v4934 = vlaneseq
          %v4935 = vshrl.u32 %v4934, 7
          %v4936 = vsub.s32 0, %v4935
          %v4937 = vrot.slane %v4896, %v4936
          %v4938 = vlaneseq
          %v4939 = vshrl.u32 %v4938, 7
          %v4940 = vsub.s32 1, %v4939
          %v4941 = vrot.slane %v4896, %v4940
          %v4942 = vlaneseq
          %v4943 = vshrl.u32 %v4942, 7
          %v4944 = vsub.s32 2, %v4943
          %v4945 = vrot.slane %v4896, %v4944
          %v4946 = vlaneseq
          %v4947 = vshrl.u32 %v4946, 7
          %v4948 = vsub.s32 3, %v4947
          %v4949 = vrot.slane %v4896, %v4948
          %4954 = vmatprep.subr.mxu0 0.0
          %4955 = vmatpush1.xpose.msra.mxu0 0.0
          %4956 = vmatprep.subr.mxu0 0.0
          %4957 = vmatpush1.xpose.msra.mxu0 0.0
          %4958 = vmatprep.subr.mxu0 0.0
          %4959 = vmatpush1.xpose.msra.mxu0 0.0
          %4960 = vmatprep.subr.mxu0 0.0
          %4961 = vmatpush1.xpose.msra.mxu0 0.0
          %4962 = vmatprep.subr.mxu0 0.0
          %4963 = vmatpush1.xpose.msra.mxu0 0.0
          %4964 = vmatprep.subr.mxu0 0.0
          %4965 = vmatpush1.xpose.msra.mxu0 0.0
          %4966 = vmatprep.subr.mxu0 0.0
          %4967 = vmatpush1.xpose.msra.mxu0 0.0
          %4968 = vmatprep.subr.mxu0 0.0
          %4969 = vmatpush1.xpose.msra.mxu0 0.0
          %4970 = vmatprep.subr.mxu0 0.0
          %4971 = vmatpush1.xpose.msra.mxu0 0.0
          %4972 = vmatprep.subr.mxu0 0.0
          %4973 = vmatpush1.xpose.msra.mxu0 0.0
          %4974 = vmatprep.subr.mxu0 0.0
          %4975 = vmatpush1.xpose.msra.mxu0 0.0
          %4976 = vmatprep.subr.mxu0 0.0
          %4977 = vmatpush1.xpose.msra.mxu0 0.0
          %4978 = vmatprep.subr.mxu0 0.0
          %4979 = vmatpush1.xpose.msra.mxu0 0.0
          %4980 = vmatprep.subr.mxu0 0.0
          %4981 = vmatpush1.xpose.msra.mxu0 0.0
          %4982 = vmatprep.subr.mxu0 0.0
          %4983 = vmatpush1.xpose.msra.mxu0 0.0
          %4984 = vmatprep.subr.mxu0 %v4905
          %4985 = vmatpush1.xpose.msra.mxu0 %v4904
          %4986 = vmatprep.subr.mxu0 0.0
          %4987 = vmatpush2.xpose.msra.mxu0 0.0
          %4988 = vmatprep.subr.mxu0 0.0
          %4989 = vmatpush2.xpose.msra.mxu0 0.0
          %4990 = vmatprep.subr.mxu0 0.0
          %4991 = vmatpush2.xpose.msra.mxu0 0.0
          %4992 = vmatprep.subr.mxu0 0.0
          %4993 = vmatpush2.xpose.msra.mxu0 0.0
          %4994 = vmatprep.subr.mxu0 0.0
          %4995 = vmatpush2.xpose.msra.mxu0 0.0
          %4996 = vmatprep.subr.mxu0 0.0
          %4997 = vmatpush2.xpose.msra.mxu0 0.0
          %4998 = vmatprep.subr.mxu0 0.0
          %4999 = vmatpush2.xpose.msra.mxu0 0.0
          %5000 = vmatprep.subr.mxu0 0.0
          %5001 = vmatpush2.xpose.msra.mxu0 0.0
          %5002 = vmatprep.subr.mxu0 0.0
          %5003 = vmatpush2.xpose.msra.mxu0 0.0
          %5004 = vmatprep.subr.mxu0 0.0
          %5005 = vmatpush2.xpose.msra.mxu0 0.0
          %5006 = vmatprep.subr.mxu0 0.0
          %5007 = vmatpush2.xpose.msra.mxu0 0.0
          %5008 = vmatprep.subr.mxu0 0.0
          %5009 = vmatpush2.xpose.msra.mxu0 0.0
          %5010 = vmatprep.subr.mxu0 0.0
          %5011 = vmatpush2.xpose.msra.mxu0 0.0
          %5012 = vmatprep.subr.mxu0 0.0
          %5013 = vmatpush2.xpose.msra.mxu0 0.0
          %5014 = vmatprep.subr.mxu0 0.0
          %5015 = vmatpush2.xpose.msra.mxu0 0.0
          %5016 = vmatprep.subr.mxu0 0.0
          %5017 = vmatpush2.xpose.msra.mxu0 0.0
          %5018 = vmatprep.mubr.f32.mxu0 %v4941
          %5019 = vmatmul.mubr.f32.gmra.mxu0 %v4937
          %v5020 = vpop.f32.mrf.mxu0
          %v5021 = vadd.f32 0.0, %v5020
          %v5022 = vpop.f32.mrf.mxu0
          %5023 = vdwg.mxu0
          %5024 = vmatprep.subr.mxu0 0.0
          %5025 = vmatpush1.xpose.msra.mxu0 0.0
          %5026 = vmatprep.subr.mxu0 0.0
          %5027 = vmatpush1.xpose.msra.mxu0 0.0
          %5028 = vmatprep.subr.mxu0 0.0
          %5029 = vmatpush1.xpose.msra.mxu0 0.0
          %5030 = vmatprep.subr.mxu0 0.0
          %5031 = vmatpush1.xpose.msra.mxu0 0.0
          %5032 = vmatprep.subr.mxu0 0.0
          %5033 = vmatpush1.xpose.msra.mxu0 0.0
          %5034 = vmatprep.subr.mxu0 0.0
          %5035 = vmatpush1.xpose.msra.mxu0 0.0
          %5036 = vmatprep.subr.mxu0 0.0
          %5037 = vmatpush1.xpose.msra.mxu0 0.0
          %5038 = vmatprep.subr.mxu0 0.0
          %5039 = vmatpush1.xpose.msra.mxu0 0.0
          %5040 = vmatprep.subr.mxu0 0.0
          %5041 = vmatpush1.xpose.msra.mxu0 0.0
          %5042 = vmatprep.subr.mxu0 0.0
          %5043 = vmatpush1.xpose.msra.mxu0 0.0
          %5044 = vmatprep.subr.mxu0 0.0
          %5045 = vmatpush1.xpose.msra.mxu0 0.0
          %5046 = vmatprep.subr.mxu0 0.0
          %5047 = vmatpush1.xpose.msra.mxu0 0.0
          %5048 = vmatprep.subr.mxu0 0.0
          %5049 = vmatpush1.xpose.msra.mxu0 0.0
          %5050 = vmatprep.subr.mxu0 0.0
          %5051 = vmatpush1.xpose.msra.mxu0 0.0
          %5052 = vmatprep.subr.mxu0 0.0
          %5053 = vmatpush1.xpose.msra.mxu0 0.0
          %5054 = vmatprep.subr.mxu0 %v4907
          %5055 = vmatpush1.xpose.msra.mxu0 %v4906
          %5056 = vmatprep.subr.mxu0 0.0
          %5057 = vmatpush2.xpose.msra.mxu0 0.0
          %5058 = vmatprep.subr.mxu0 0.0
          %5059 = vmatpush2.xpose.msra.mxu0 0.0
          %5060 = vmatprep.subr.mxu0 0.0
          %5061 = vmatpush2.xpose.msra.mxu0 0.0
          %5062 = vmatprep.subr.mxu0 0.0
          %5063 = vmatpush2.xpose.msra.mxu0 0.0
          %5064 = vmatprep.subr.mxu0 0.0
          %5065 = vmatpush2.xpose.msra.mxu0 0.0
          %5066 = vmatprep.subr.mxu0 0.0
          %5067 = vmatpush2.xpose.msra.mxu0 0.0
          %5068 = vmatprep.subr.mxu0 0.0
          %5069 = vmatpush2.xpose.msra.mxu0 0.0
          %5070 = vmatprep.subr.mxu0 0.0
          %5071 = vmatpush2.xpose.msra.mxu0 0.0
          %5072 = vmatprep.subr.mxu0 0.0
          %5073 = vmatpush2.xpose.msra.mxu0 0.0
          %5074 = vmatprep.subr.mxu0 0.0
          %5075 = vmatpush2.xpose.msra.mxu0 0.0
          %5076 = vmatprep.subr.mxu0 0.0
          %5077 = vmatpush2.xpose.msra.mxu0 0.0
          %5078 = vmatprep.subr.mxu0 0.0
          %5079 = vmatpush2.xpose.msra.mxu0 0.0
          %5080 = vmatprep.subr.mxu0 0.0
          %5081 = vmatpush2.xpose.msra.mxu0 0.0
          %5082 = vmatprep.subr.mxu0 0.0
          %5083 = vmatpush2.xpose.msra.mxu0 0.0
          %5084 = vmatprep.subr.mxu0 0.0
          %5085 = vmatpush2.xpose.msra.mxu0 0.0
          %5086 = vmatprep.subr.mxu0 0.0
          %5087 = vmatpush2.xpose.msra.mxu0 0.0
          %5088 = vmatprep.mubr.f32.mxu0 %v4949
          %5089 = vmatmul.mubr.f32.gmra.mxu0 %v4945
          %v5090 = vpop.f32.mrf.mxu0
          %v5091 = vadd.f32 %v5021, %v5090
          %v5092 = vpop.f32.mrf.mxu0
          %5093 = vdwg.mxu0
          %v5094 = vmul.f32 %v5091, 0.044194173
          %vm5095 = vcmask 32768
          %v5096 = vsel %vm5095, %v5094, -inf
          %5097 = vmax.xlane.f32.xlu0 %v5096
          %v5098 = vpop.xlane.xlu0 %5097
          %v5099 = vsub.f32 %v5094, %v5098
          %v5100 = vmul.f32 %v5099, 1.442695
          %v5101 = vpow.pop %v5100
          %v5102 = vsel %vm5095, %v5101, 0.0
          %5103 = vadd.xlane.f32.xlu0 %v5102
          %v5104 = vpop.xlane.xlu0 %5103
          %v5105 = vrcp.pop %v5104
          %v5106 = vmul.f32 %v5101, %v5105
          %vm5107 = vcmask 39936
          %v5109 = vsel %vm5107, %v5106, 0
          %vm5111 = vcmask 1044480
          %v5113 = vsel %vm5111, %v4904, 0
          %v5116 = vsel %vm5111, %v4905, 0
          %v5119 = vsel %vm5111, %v4906, 0
          %v5122 = vsel %vm5111, %v4907, 0
          %5124 = vmatprep.subr.mxu0 0.0
          %5125 = vmatpush1.msra.mxu0 0.0
          %5126 = vmatprep.subr.mxu0 0.0
          %5127 = vmatpush1.msra.mxu0 0.0
          %5128 = vmatprep.subr.mxu0 0.0
          %5129 = vmatpush1.msra.mxu0 0.0
          %5130 = vmatprep.subr.mxu0 0.0
          %5131 = vmatpush1.msra.mxu0 0.0
          %5132 = vmatprep.subr.mxu0 0.0
          %5133 = vmatpush1.msra.mxu0 0.0
          %5134 = vmatprep.subr.mxu0 0.0
          %5135 = vmatpush1.msra.mxu0 0.0
          %5136 = vmatprep.subr.mxu0 0.0
          %5137 = vmatpush1.msra.mxu0 0.0
          %5138 = vmatprep.subr.mxu0 0.0
          %5139 = vmatpush1.msra.mxu0 0.0
          %5140 = vmatprep.subr.mxu0 0.0
          %5141 = vmatpush1.msra.mxu0 0.0
          %5142 = vmatprep.subr.mxu0 0.0
          %5143 = vmatpush1.msra.mxu0 0.0
          %5144 = vmatprep.subr.mxu0 0.0
          %5145 = vmatpush1.msra.mxu0 0.0
          %5146 = vmatprep.subr.mxu0 0.0
          %5147 = vmatpush1.msra.mxu0 0.0
          %5148 = vmatprep.subr.mxu0 0.0
          %5149 = vmatpush1.msra.mxu0 0.0
          %5150 = vmatprep.subr.mxu0 0.0
          %5151 = vmatpush1.msra.mxu0 0.0
          %5152 = vmatprep.subr.mxu0 0.0
          %5153 = vmatpush1.msra.mxu0 0.0
          %5154 = vmatprep.subr.mxu0 %v5116
          %5155 = vmatpush1.msra.mxu0 %v5113
          %5156 = vmatprep.subr.mxu0 0.0
          %5157 = vmatpush2.msra.mxu0 0.0
          %5158 = vmatprep.subr.mxu0 0.0
          %5159 = vmatpush2.msra.mxu0 0.0
          %5160 = vmatprep.subr.mxu0 0.0
          %5161 = vmatpush2.msra.mxu0 0.0
          %5162 = vmatprep.subr.mxu0 0.0
          %5163 = vmatpush2.msra.mxu0 0.0
          %5164 = vmatprep.subr.mxu0 0.0
          %5165 = vmatpush2.msra.mxu0 0.0
          %5166 = vmatprep.subr.mxu0 0.0
          %5167 = vmatpush2.msra.mxu0 0.0
          %5168 = vmatprep.subr.mxu0 0.0
          %5169 = vmatpush2.msra.mxu0 0.0
          %5170 = vmatprep.subr.mxu0 0.0
          %5171 = vmatpush2.msra.mxu0 0.0
          %5172 = vmatprep.subr.mxu0 0.0
          %5173 = vmatpush2.msra.mxu0 0.0
          %5174 = vmatprep.subr.mxu0 0.0
          %5175 = vmatpush2.msra.mxu0 0.0
          %5176 = vmatprep.subr.mxu0 0.0
          %5177 = vmatpush2.msra.mxu0 0.0
          %5178 = vmatprep.subr.mxu0 0.0
          %5179 = vmatpush2.msra.mxu0 0.0
          %5180 = vmatprep.subr.mxu0 0.0
          %5181 = vmatpush2.msra.mxu0 0.0
          %5182 = vmatprep.subr.mxu0 0.0
          %5183 = vmatpush2.msra.mxu0 0.0
          %5184 = vmatprep.subr.mxu0 0.0
          %5185 = vmatpush2.msra.mxu0 0.0
          %5186 = vmatprep.subr.mxu0 0.0
          %5187 = vmatpush2.msra.mxu0 0.0
          %5188 = vmatprep.mubr.f32.mxu0 0.0
          %5189 = vmatmul.mubr.f32.gmra.mxu0 %v5109
          %v5190 = vpop.f32.mrf.mxu0
          %v5191 = vadd.f32 0.0, %v5190
          %v5192 = vpop.f32.mrf.mxu0
          %v5193 = vadd.f32 0.0, %v5192
          %5194 = vdwg.mxu0
          %5195 = vmatprep.subr.mxu0 0.0
          %5196 = vmatpush1.msra.mxu0 0.0
          %5197 = vmatprep.subr.mxu0 0.0
          %5198 = vmatpush1.msra.mxu0 0.0
          %5199 = vmatprep.subr.mxu0 0.0
          %5200 = vmatpush1.msra.mxu0 0.0
          %5201 = vmatprep.subr.mxu0 0.0
          %5202 = vmatpush1.msra.mxu0 0.0
          %5203 = vmatprep.subr.mxu0 0.0
          %5204 = vmatpush1.msra.mxu0 0.0
          %5205 = vmatprep.subr.mxu0 0.0
          %5206 = vmatpush1.msra.mxu0 0.0
          %5207 = vmatprep.subr.mxu0 0.0
          %5208 = vmatpush1.msra.mxu0 0.0
          %5209 = vmatprep.subr.mxu0 0.0
          %5210 = vmatpush1.msra.mxu0 0.0
          %5211 = vmatprep.subr.mxu0 0.0
          %5212 = vmatpush1.msra.mxu0 0.0
          %5213 = vmatprep.subr.mxu0 0.0
          %5214 = vmatpush1.msra.mxu0 0.0
          %5215 = vmatprep.subr.mxu0 0.0
          %5216 = vmatpush1.msra.mxu0 0.0
          %5217 = vmatprep.subr.mxu0 0.0
          %5218 = vmatpush1.msra.mxu0 0.0
          %5219 = vmatprep.subr.mxu0 0.0
          %5220 = vmatpush1.msra.mxu0 0.0
          %5221 = vmatprep.subr.mxu0 0.0
          %5222 = vmatpush1.msra.mxu0 0.0
          %5223 = vmatprep.subr.mxu0 0.0
          %5224 = vmatpush1.msra.mxu0 0.0
          %5225 = vmatprep.subr.mxu0 %v5122
          %5226 = vmatpush1.msra.mxu0 %v5119
          %5227 = vmatprep.subr.mxu0 0.0
          %5228 = vmatpush2.msra.mxu0 0.0
          %5229 = vmatprep.subr.mxu0 0.0
          %5230 = vmatpush2.msra.mxu0 0.0
          %5231 = vmatprep.subr.mxu0 0.0
          %5232 = vmatpush2.msra.mxu0 0.0
          %5233 = vmatprep.subr.mxu0 0.0
          %5234 = vmatpush2.msra.mxu0 0.0
          %5235 = vmatprep.subr.mxu0 0.0
          %5236 = vmatpush2.msra.mxu0 0.0
          %5237 = vmatprep.subr.mxu0 0.0
          %5238 = vmatpush2.msra.mxu0 0.0
          %5239 = vmatprep.subr.mxu0 0.0
          %5240 = vmatpush2.msra.mxu0 0.0
          %5241 = vmatprep.subr.mxu0 0.0
          %5242 = vmatpush2.msra.mxu0 0.0
          %5243 = vmatprep.subr.mxu0 0.0
          %5244 = vmatpush2.msra.mxu0 0.0
          %5245 = vmatprep.subr.mxu0 0.0
          %5246 = vmatpush2.msra.mxu0 0.0
          %5247 = vmatprep.subr.mxu0 0.0
          %5248 = vmatpush2.msra.mxu0 0.0
          %5249 = vmatprep.subr.mxu0 0.0
          %5250 = vmatpush2.msra.mxu0 0.0
          %5251 = vmatprep.subr.mxu0 0.0
          %5252 = vmatpush2.msra.mxu0 0.0
          %5253 = vmatprep.subr.mxu0 0.0
          %5254 = vmatpush2.msra.mxu0 0.0
          %5255 = vmatprep.subr.mxu0 0.0
          %5256 = vmatpush2.msra.mxu0 0.0
          %5257 = vmatprep.subr.mxu0 0.0
          %5258 = vmatpush2.msra.mxu0 0.0
          %5259 = vmatprep.mubr.f32.mxu0 0.0
          %5260 = vmatmul.mubr.f32.gmra.mxu0 %v5109
          %v5261 = vpop.f32.mrf.mxu0
          %v5262 = vadd.f32 0.0, %v5261
          %v5263 = vpop.f32.mrf.mxu0
          %v5264 = vadd.f32 0.0, %v5263
          %5265 = vdwg.mxu0
          %v5270 = vcombine.low %v5191, %v5193
          %v5271 = vcombine.low %v5262, %v5264
          %v5273 = vunpack.c.l.s4 1966171168
          %v5274 = vunpack.c.0.s8 %v5273
          %v5275 = vlaneseq
          %v5276 = vshrl.u32 %v5275, 7
          %v5277 = vsub.s32 %v5274, %v5276
          %v5278 = vrot.slane %v5270, %v5277
          %v5280 = vunpack.c.l.s4 1966171168
          %v5281 = vunpack.c.0.s8 %v5280
          %v5282 = vlaneseq
          %v5283 = vshrl.u32 %v5282, 7
          %v5284 = vsub.s32 %v5281, %v5283
          %v5285 = vrot.slane %v5271, %v5284
          %v5286 = vcombine.low %v5278, %v5285
          %v5288 = vunpack.c.l.s4 1966171168
          %v5289 = vunpack.c.0.s8 %v5288
          %v5290 = vlaneseq
          %v5291 = vshrl.u32 %v5290, 7
          %v5292 = vsub.s32 %v5289, %v5291
          %v5293 = vrot.slane %v5286, %v5292
          %v5295 = vadd.f32 %v4897, %v5293
          %v5296 = vmul.f32 %v4922, %v5295
          %v5297 = vmul.f32 %v4913, %v4923
          %v5298 = vadd.f32 %v5296, %v5297
          %v5299 = vtanh.pop %v5298
          %v5300 = vmul.f32 %v4932, %v5299
          %v5301 = vld [vmem:[#allocation3] sm:$0xff]
          %v5302 = vld [vmem:[#allocation3 + $0x8] sm:$0xff]
          %v5304 = vlaneseq
          %v5305 = vshrl.u32 %v5304, 7
          %v5306 = vsub.s32 0, %v5305
          %v5307 = vrot.slane %v5300, %v5306
          %v5308 = vlaneseq
          %v5309 = vshrl.u32 %v5308, 7
          %v5310 = vsub.s32 1, %v5309
          %v5311 = vrot.slane %v5300, %v5310
          %v5312 = vlaneseq
          %v5313 = vshrl.u32 %v5312, 7
          %v5314 = vsub.s32 2, %v5313
          %v5315 = vrot.slane %v5300, %v5314
          %v5316 = vlaneseq
          %v5317 = vshrl.u32 %v5316, 7
          %v5318 = vsub.s32 3, %v5317
          %v5319 = vrot.slane %v5300, %v5318
          %v5324 = vpack.c.bf16 %v5307, %v5307
          %v5325 = vpack.c.bf16 %v5311, %v5311
          %v5326 = vpack.c.bf16 %v5315, %v5315
          %v5327 = vpack.c.bf16 %v5319, %v5319
          %v5328 = vld [vmem:[#allocation11] sm:$0xff]
          %v5329 = vld [vmem:[#allocation11 + $0x8] sm:$0xff]
          %v5330 = vld [vmem:[#allocation11 + $0x10] sm:$0xff]
          %v5331 = vld [vmem:[#allocation11 + $0x18] sm:$0xff]
          %v5332 = vld [vmem:[#allocation11 + $0x20] sm:$0xff]
          %v5333 = vld [vmem:[#allocation11 + $0x28] sm:$0xff]
          %v5334 = vld [vmem:[#allocation11 + $0x30] sm:$0xff]
          %v5335 = vld [vmem:[#allocation11 + $0x38] sm:$0xff]
          %v5336 = vld [vmem:[#allocation11 + $0x40] sm:$0xff]
          %v5337 = vld [vmem:[#allocation11 + $0x48] sm:$0xff]
          %v5338 = vld [vmem:[#allocation11 + $0x50] sm:$0xff]
          %v5339 = vld [vmem:[#allocation11 + $0x58] sm:$0xff]
          %v5340 = vld [vmem:[#allocation11 + $0x60] sm:$0xff]
          %v5341 = vld [vmem:[#allocation11 + $0x68] sm:$0xff]
          %v5342 = vld [vmem:[#allocation11 + $0x70] sm:$0xff]
          %v5343 = vld [vmem:[#allocation11 + $0x78] sm:$0xff]
          %v5344 = vld [vmem:[#allocation11 + $0x80] sm:$0xff]
          %v5345 = vld [vmem:[#allocation11 + $0x88] sm:$0xff]
          %v5346 = vld [vmem:[#allocation11 + $0x90] sm:$0xff]
          %v5347 = vld [vmem:[#allocation11 + $0x98] sm:$0xff]
          %v5348 = vld [vmem:[#allocation11 + $0xa0] sm:$0xff]
          %v5349 = vld [vmem:[#allocation11 + $0xa8] sm:$0xff]
          %v5350 = vld [vmem:[#allocation11 + $0xb0] sm:$0xff]
          %v5351 = vld [vmem:[#allocation11 + $0xb8] sm:$0xff]
          %v5352 = vld [vmem:[#allocation11 + $0xc0] sm:$0xff]
          %v5353 = vld [vmem:[#allocation11 + $0xc8] sm:$0xff]
          %v5354 = vld [vmem:[#allocation11 + $0xd0] sm:$0xff]
          %v5355 = vld [vmem:[#allocation11 + $0xd8] sm:$0xff]
          %v5356 = vld [vmem:[#allocation11 + $0xe0] sm:$0xff]
          %v5357 = vld [vmem:[#allocation11 + $0xe8] sm:$0xff]
          %v5358 = vld [vmem:[#allocation11 + $0xf0] sm:$0xff]
          %v5359 = vld [vmem:[#allocation11 + $0xf8] sm:$0xff]
          %v5360 = vld [vmem:[#allocation11 + $0x100] sm:$0xff]
          %v5361 = vld [vmem:[#allocation11 + $0x108] sm:$0xff]
          %v5362 = vld [vmem:[#allocation11 + $0x110] sm:$0xff]
          %v5363 = vld [vmem:[#allocation11 + $0x118] sm:$0xff]
          %v5364 = vld [vmem:[#allocation11 + $0x120] sm:$0xff]
          %v5365 = vld [vmem:[#allocation11 + $0x128] sm:$0xff]
          %v5366 = vld [vmem:[#allocation11 + $0x130] sm:$0xff]
          %v5367 = vld [vmem:[#allocation11 + $0x138] sm:$0xff]
          %v5368 = vld [vmem:[#allocation11 + $0x140] sm:$0xff]
          %v5369 = vld [vmem:[#allocation11 + $0x148] sm:$0xff]
          %v5370 = vld [vmem:[#allocation11 + $0x150] sm:$0xff]
          %v5371 = vld [vmem:[#allocation11 + $0x158] sm:$0xff]
          %v5372 = vld [vmem:[#allocation11 + $0x160] sm:$0xff]
          %v5373 = vld [vmem:[#allocation11 + $0x168] sm:$0xff]
          %v5374 = vld [vmem:[#allocation11 + $0x170] sm:$0xff]
          %v5375 = vld [vmem:[#allocation11 + $0x178] sm:$0xff]
          %v5376 = vld [vmem:[#allocation11 + $0x180] sm:$0xff]
          %v5377 = vld [vmem:[#allocation11 + $0x188] sm:$0xff]
          %v5378 = vld [vmem:[#allocation11 + $0x190] sm:$0xff]
          %v5379 = vld [vmem:[#allocation11 + $0x198] sm:$0xff]
          %v5380 = vld [vmem:[#allocation11 + $0x1a0] sm:$0xff]
          %v5381 = vld [vmem:[#allocation11 + $0x1a8] sm:$0xff]
          %v5382 = vld [vmem:[#allocation11 + $0x1b0] sm:$0xff]
          %v5383 = vld [vmem:[#allocation11 + $0x1b8] sm:$0xff]
          %v5384 = vld [vmem:[#allocation11 + $0x1c0] sm:$0xff]
          %v5385 = vld [vmem:[#allocation11 + $0x1c8] sm:$0xff]
          %v5386 = vld [vmem:[#allocation11 + $0x1d0] sm:$0xff]
          %v5387 = vld [vmem:[#allocation11 + $0x1d8] sm:$0xff]
          %v5388 = vld [vmem:[#allocation11 + $0x1e0] sm:$0xff]
          %v5389 = vld [vmem:[#allocation11 + $0x1e8] sm:$0xff]
          %v5390 = vld [vmem:[#allocation11 + $0x1f0] sm:$0xff]
          %v5391 = vld [vmem:[#allocation11 + $0x1f8] sm:$0xff]
          %v5392 = vld [vmem:[#allocation11 + $0x200] sm:$0xff]
          %v5393 = vld [vmem:[#allocation11 + $0x208] sm:$0xff]
          %v5394 = vld [vmem:[#allocation11 + $0x210] sm:$0xff]
          %v5395 = vld [vmem:[#allocation11 + $0x218] sm:$0xff]
          %v5396 = vld [vmem:[#allocation11 + $0x220] sm:$0xff]
          %v5397 = vld [vmem:[#allocation11 + $0x228] sm:$0xff]
          %v5398 = vld [vmem:[#allocation11 + $0x230] sm:$0xff]
          %v5399 = vld [vmem:[#allocation11 + $0x238] sm:$0xff]
          %v5400 = vld [vmem:[#allocation11 + $0x240] sm:$0xff]
          %v5401 = vld [vmem:[#allocation11 + $0x248] sm:$0xff]
          %v5402 = vld [vmem:[#allocation11 + $0x250] sm:$0xff]
          %v5403 = vld [vmem:[#allocation11 + $0x258] sm:$0xff]
          %v5404 = vld [vmem:[#allocation11 + $0x260] sm:$0xff]
          %v5405 = vld [vmem:[#allocation11 + $0x268] sm:$0xff]
          %v5406 = vld [vmem:[#allocation11 + $0x270] sm:$0xff]
          %v5407 = vld [vmem:[#allocation11 + $0x278] sm:$0xff]
          %v5408 = vld [vmem:[#allocation11 + $0x280] sm:$0xff]
          %v5409 = vld [vmem:[#allocation11 + $0x288] sm:$0xff]
          %v5410 = vld [vmem:[#allocation11 + $0x290] sm:$0xff]
          %v5411 = vld [vmem:[#allocation11 + $0x298] sm:$0xff]
          %v5412 = vld [vmem:[#allocation11 + $0x2a0] sm:$0xff]
          %v5413 = vld [vmem:[#allocation11 + $0x2a8] sm:$0xff]
          %v5414 = vld [vmem:[#allocation11 + $0x2b0] sm:$0xff]
          %v5415 = vld [vmem:[#allocation11 + $0x2b8] sm:$0xff]
          %v5416 = vld [vmem:[#allocation11 + $0x2c0] sm:$0xff]
          %v5417 = vld [vmem:[#allocation11 + $0x2c8] sm:$0xff]
          %v5418 = vld [vmem:[#allocation11 + $0x2d0] sm:$0xff]
          %v5419 = vld [vmem:[#allocation11 + $0x2d8] sm:$0xff]
          %v5420 = vld [vmem:[#allocation11 + $0x2e0] sm:$0xff]
          %v5421 = vld [vmem:[#allocation11 + $0x2e8] sm:$0xff]
          %v5422 = vld [vmem:[#allocation11 + $0x2f0] sm:$0xff]
          %v5423 = vld [vmem:[#allocation11 + $0x2f8] sm:$0xff]
          %v5424 = vld [vmem:[#allocation11 + $0x300] sm:$0xff]
          %v5425 = vld [vmem:[#allocation11 + $0x308] sm:$0xff]
          %v5426 = vld [vmem:[#allocation11 + $0x310] sm:$0xff]
          %v5427 = vld [vmem:[#allocation11 + $0x318] sm:$0xff]
          %v5428 = vld [vmem:[#allocation11 + $0x320] sm:$0xff]
          %v5429 = vld [vmem:[#allocation11 + $0x328] sm:$0xff]
          %v5430 = vld [vmem:[#allocation11 + $0x330] sm:$0xff]
          %v5431 = vld [vmem:[#allocation11 + $0x338] sm:$0xff]
          %v5432 = vld [vmem:[#allocation11 + $0x340] sm:$0xff]
          %v5433 = vld [vmem:[#allocation11 + $0x348] sm:$0xff]
          %v5434 = vld [vmem:[#allocation11 + $0x350] sm:$0xff]
          %v5435 = vld [vmem:[#allocation11 + $0x358] sm:$0xff]
          %v5436 = vld [vmem:[#allocation11 + $0x360] sm:$0xff]
          %v5437 = vld [vmem:[#allocation11 + $0x368] sm:$0xff]
          %v5438 = vld [vmem:[#allocation11 + $0x370] sm:$0xff]
          %v5439 = vld [vmem:[#allocation11 + $0x378] sm:$0xff]
          %v5440 = vld [vmem:[#allocation11 + $0x380] sm:$0xff]
          %v5441 = vld [vmem:[#allocation11 + $0x388] sm:$0xff]
          %v5442 = vld [vmem:[#allocation11 + $0x390] sm:$0xff]
          %v5443 = vld [vmem:[#allocation11 + $0x398] sm:$0xff]
          %v5444 = vld [vmem:[#allocation11 + $0x3a0] sm:$0xff]
          %v5445 = vld [vmem:[#allocation11 + $0x3a8] sm:$0xff]
          %v5446 = vld [vmem:[#allocation11 + $0x3b0] sm:$0xff]
          %v5447 = vld [vmem:[#allocation11 + $0x3b8] sm:$0xff]
          %v5448 = vld [vmem:[#allocation11 + $0x3c0] sm:$0xff]
          %v5449 = vld [vmem:[#allocation11 + $0x3c8] sm:$0xff]
          %v5450 = vld [vmem:[#allocation11 + $0x3d0] sm:$0xff]
          %v5451 = vld [vmem:[#allocation11 + $0x3d8] sm:$0xff]
          %v5452 = vld [vmem:[#allocation11 + $0x3e0] sm:$0xff]
          %v5453 = vld [vmem:[#allocation11 + $0x3e8] sm:$0xff]
          %v5454 = vld [vmem:[#allocation11 + $0x3f0] sm:$0xff]
          %v5455 = vld [vmem:[#allocation11 + $0x3f8] sm:$0xff]
          %v5456 = vld [vmem:[#allocation11 + $0x400] sm:$0xff]
          %v5457 = vld [vmem:[#allocation11 + $0x408] sm:$0xff]
          %v5458 = vld [vmem:[#allocation11 + $0x410] sm:$0xff]
          %v5459 = vld [vmem:[#allocation11 + $0x418] sm:$0xff]
          %v5460 = vld [vmem:[#allocation11 + $0x420] sm:$0xff]
          %v5461 = vld [vmem:[#allocation11 + $0x428] sm:$0xff]
          %v5462 = vld [vmem:[#allocation11 + $0x430] sm:$0xff]
          %v5463 = vld [vmem:[#allocation11 + $0x438] sm:$0xff]
          %v5464 = vld [vmem:[#allocation11 + $0x440] sm:$0xff]
          %v5465 = vld [vmem:[#allocation11 + $0x448] sm:$0xff]
          %v5466 = vld [vmem:[#allocation11 + $0x450] sm:$0xff]
          %v5467 = vld [vmem:[#allocation11 + $0x458] sm:$0xff]
          %v5468 = vld [vmem:[#allocation11 + $0x460] sm:$0xff]
          %v5469 = vld [vmem:[#allocation11 + $0x468] sm:$0xff]
          %v5470 = vld [vmem:[#allocation11 + $0x470] sm:$0xff]
          %v5471 = vld [vmem:[#allocation11 + $0x478] sm:$0xff]
          %v5472 = vld [vmem:[#allocation11 + $0x480] sm:$0xff]
          %v5473 = vld [vmem:[#allocation11 + $0x488] sm:$0xff]
          %v5474 = vld [vmem:[#allocation11 + $0x490] sm:$0xff]
          %v5475 = vld [vmem:[#allocation11 + $0x498] sm:$0xff]
          %v5476 = vld [vmem:[#allocation11 + $0x4a0] sm:$0xff]
          %v5477 = vld [vmem:[#allocation11 + $0x4a8] sm:$0xff]
          %v5478 = vld [vmem:[#allocation11 + $0x4b0] sm:$0xff]
          %v5479 = vld [vmem:[#allocation11 + $0x4b8] sm:$0xff]
          %v5480 = vld [vmem:[#allocation11 + $0x4c0] sm:$0xff]
          %v5481 = vld [vmem:[#allocation11 + $0x4c8] sm:$0xff]
          %v5482 = vld [vmem:[#allocation11 + $0x4d0] sm:$0xff]
          %v5483 = vld [vmem:[#allocation11 + $0x4d8] sm:$0xff]
          %v5484 = vld [vmem:[#allocation11 + $0x4e0] sm:$0xff]
          %v5485 = vld [vmem:[#allocation11 + $0x4e8] sm:$0xff]
          %v5486 = vld [vmem:[#allocation11 + $0x4f0] sm:$0xff]
          %v5487 = vld [vmem:[#allocation11 + $0x4f8] sm:$0xff]
          %v5488 = vld [vmem:[#allocation11 + $0x500] sm:$0xff]
          %v5489 = vld [vmem:[#allocation11 + $0x508] sm:$0xff]
          %v5490 = vld [vmem:[#allocation11 + $0x510] sm:$0xff]
          %v5491 = vld [vmem:[#allocation11 + $0x518] sm:$0xff]
          %v5492 = vld [vmem:[#allocation11 + $0x520] sm:$0xff]
          %v5493 = vld [vmem:[#allocation11 + $0x528] sm:$0xff]
          %v5494 = vld [vmem:[#allocation11 + $0x530] sm:$0xff]
          %v5495 = vld [vmem:[#allocation11 + $0x538] sm:$0xff]
          %v5496 = vld [vmem:[#allocation11 + $0x540] sm:$0xff]
          %v5497 = vld [vmem:[#allocation11 + $0x548] sm:$0xff]
          %v5498 = vld [vmem:[#allocation11 + $0x550] sm:$0xff]
          %v5499 = vld [vmem:[#allocation11 + $0x558] sm:$0xff]
          %v5500 = vld [vmem:[#allocation11 + $0x560] sm:$0xff]
          %v5501 = vld [vmem:[#allocation11 + $0x568] sm:$0xff]
          %v5502 = vld [vmem:[#allocation11 + $0x570] sm:$0xff]
          %v5503 = vld [vmem:[#allocation11 + $0x578] sm:$0xff]
          %v5504 = vld [vmem:[#allocation11 + $0x580] sm:$0xff]
          %v5505 = vld [vmem:[#allocation11 + $0x588] sm:$0xff]
          %v5506 = vld [vmem:[#allocation11 + $0x590] sm:$0xff]
          %v5507 = vld [vmem:[#allocation11 + $0x598] sm:$0xff]
          %v5508 = vld [vmem:[#allocation11 + $0x5a0] sm:$0xff]
          %v5509 = vld [vmem:[#allocation11 + $0x5a8] sm:$0xff]
          %v5510 = vld [vmem:[#allocation11 + $0x5b0] sm:$0xff]
          %v5511 = vld [vmem:[#allocation11 + $0x5b8] sm:$0xff]
          %v5512 = vld [vmem:[#allocation11 + $0x5c0] sm:$0xff]
          %v5513 = vld [vmem:[#allocation11 + $0x5c8] sm:$0xff]
          %v5514 = vld [vmem:[#allocation11 + $0x5d0] sm:$0xff]
          %v5515 = vld [vmem:[#allocation11 + $0x5d8] sm:$0xff]
          %v5516 = vld [vmem:[#allocation11 + $0x5e0] sm:$0xff]
          %v5517 = vld [vmem:[#allocation11 + $0x5e8] sm:$0xff]
          %v5518 = vld [vmem:[#allocation11 + $0x5f0] sm:$0xff]
          %v5519 = vld [vmem:[#allocation11 + $0x5f8] sm:$0xff]
          %v5520 = vld [vmem:[#allocation11 + $0x600] sm:$0xff]
          %v5521 = vld [vmem:[#allocation11 + $0x608] sm:$0xff]
          %v5522 = vld [vmem:[#allocation11 + $0x610] sm:$0xff]
          %v5523 = vld [vmem:[#allocation11 + $0x618] sm:$0xff]
          %v5524 = vld [vmem:[#allocation11 + $0x620] sm:$0xff]
          %v5525 = vld [vmem:[#allocation11 + $0x628] sm:$0xff]
          %v5526 = vld [vmem:[#allocation11 + $0x630] sm:$0xff]
          %v5527 = vld [vmem:[#allocation11 + $0x638] sm:$0xff]
          %v5528 = vld [vmem:[#allocation11 + $0x640] sm:$0xff]
          %v5529 = vld [vmem:[#allocation11 + $0x648] sm:$0xff]
          %v5530 = vld [vmem:[#allocation11 + $0x650] sm:$0xff]
          %v5531 = vld [vmem:[#allocation11 + $0x658] sm:$0xff]
          %v5532 = vld [vmem:[#allocation11 + $0x660] sm:$0xff]
          %v5533 = vld [vmem:[#allocation11 + $0x668] sm:$0xff]
          %v5534 = vld [vmem:[#allocation11 + $0x670] sm:$0xff]
          %v5535 = vld [vmem:[#allocation11 + $0x678] sm:$0xff]
          %v5536 = vld [vmem:[#allocation11 + $0x680] sm:$0xff]
          %v5537 = vld [vmem:[#allocation11 + $0x688] sm:$0xff]
          %v5538 = vld [vmem:[#allocation11 + $0x690] sm:$0xff]
          %v5539 = vld [vmem:[#allocation11 + $0x698] sm:$0xff]
          %v5540 = vld [vmem:[#allocation11 + $0x6a0] sm:$0xff]
          %v5541 = vld [vmem:[#allocation11 + $0x6a8] sm:$0xff]
          %v5542 = vld [vmem:[#allocation11 + $0x6b0] sm:$0xff]
          %v5543 = vld [vmem:[#allocation11 + $0x6b8] sm:$0xff]
          %v5544 = vld [vmem:[#allocation11 + $0x6c0] sm:$0xff]
          %v5545 = vld [vmem:[#allocation11 + $0x6c8] sm:$0xff]
          %v5546 = vld [vmem:[#allocation11 + $0x6d0] sm:$0xff]
          %v5547 = vld [vmem:[#allocation11 + $0x6d8] sm:$0xff]
          %v5548 = vld [vmem:[#allocation11 + $0x6e0] sm:$0xff]
          %v5549 = vld [vmem:[#allocation11 + $0x6e8] sm:$0xff]
          %v5550 = vld [vmem:[#allocation11 + $0x6f0] sm:$0xff]
          %v5551 = vld [vmem:[#allocation11 + $0x6f8] sm:$0xff]
          %v5552 = vld [vmem:[#allocation11 + $0x700] sm:$0xff]
          %v5553 = vld [vmem:[#allocation11 + $0x708] sm:$0xff]
          %v5554 = vld [vmem:[#allocation11 + $0x710] sm:$0xff]
          %v5555 = vld [vmem:[#allocation11 + $0x718] sm:$0xff]
          %v5556 = vld [vmem:[#allocation11 + $0x720] sm:$0xff]
          %v5557 = vld [vmem:[#allocation11 + $0x728] sm:$0xff]
          %v5558 = vld [vmem:[#allocation11 + $0x730] sm:$0xff]
          %v5559 = vld [vmem:[#allocation11 + $0x738] sm:$0xff]
          %v5560 = vld [vmem:[#allocation11 + $0x740] sm:$0xff]
          %v5561 = vld [vmem:[#allocation11 + $0x748] sm:$0xff]
          %v5562 = vld [vmem:[#allocation11 + $0x750] sm:$0xff]
          %v5563 = vld [vmem:[#allocation11 + $0x758] sm:$0xff]
          %v5564 = vld [vmem:[#allocation11 + $0x760] sm:$0xff]
          %v5565 = vld [vmem:[#allocation11 + $0x768] sm:$0xff]
          %v5566 = vld [vmem:[#allocation11 + $0x770] sm:$0xff]
          %v5567 = vld [vmem:[#allocation11 + $0x778] sm:$0xff]
          %v5568 = vld [vmem:[#allocation11 + $0x780] sm:$0xff]
          %v5569 = vld [vmem:[#allocation11 + $0x788] sm:$0xff]
          %v5570 = vld [vmem:[#allocation11 + $0x790] sm:$0xff]
          %v5571 = vld [vmem:[#allocation11 + $0x798] sm:$0xff]
          %v5572 = vld [vmem:[#allocation11 + $0x7a0] sm:$0xff]
          %v5573 = vld [vmem:[#allocation11 + $0x7a8] sm:$0xff]
          %v5574 = vld [vmem:[#allocation11 + $0x7b0] sm:$0xff]
          %v5575 = vld [vmem:[#allocation11 + $0x7b8] sm:$0xff]
          %v5576 = vld [vmem:[#allocation11 + $0x7c0] sm:$0xff]
          %v5577 = vld [vmem:[#allocation11 + $0x7c8] sm:$0xff]
          %v5578 = vld [vmem:[#allocation11 + $0x7d0] sm:$0xff]
          %v5579 = vld [vmem:[#allocation11 + $0x7d8] sm:$0xff]
          %v5580 = vld [vmem:[#allocation11 + $0x7e0] sm:$0xff]
          %v5581 = vld [vmem:[#allocation11 + $0x7e8] sm:$0xff]
          %v5582 = vld [vmem:[#allocation11 + $0x7f0] sm:$0xff]
          %v5583 = vld [vmem:[#allocation11 + $0x7f8] sm:$0xff]
          %v5584 = vld [vmem:[#allocation11 + $0x800] sm:$0xff]
          %v5585 = vld [vmem:[#allocation11 + $0x808] sm:$0xff]
          %v5586 = vld [vmem:[#allocation11 + $0x810] sm:$0xff]
          %v5587 = vld [vmem:[#allocation11 + $0x818] sm:$0xff]
          %v5588 = vld [vmem:[#allocation11 + $0x820] sm:$0xff]
          %v5589 = vld [vmem:[#allocation11 + $0x828] sm:$0xff]
          %v5590 = vld [vmem:[#allocation11 + $0x830] sm:$0xff]
          %v5591 = vld [vmem:[#allocation11 + $0x838] sm:$0xff]
          %v5592 = vld [vmem:[#allocation11 + $0x840] sm:$0xff]
          %v5593 = vld [vmem:[#allocation11 + $0x848] sm:$0xff]
          %v5594 = vld [vmem:[#allocation11 + $0x850] sm:$0xff]
          %v5595 = vld [vmem:[#allocation11 + $0x858] sm:$0xff]
          %v5596 = vld [vmem:[#allocation11 + $0x860] sm:$0xff]
          %v5597 = vld [vmem:[#allocation11 + $0x868] sm:$0xff]
          %v5598 = vld [vmem:[#allocation11 + $0x870] sm:$0xff]
          %v5599 = vld [vmem:[#allocation11 + $0x878] sm:$0xff]
          %v5600 = vld [vmem:[#allocation11 + $0x880] sm:$0xff]
          %v5601 = vld [vmem:[#allocation11 + $0x888] sm:$0xff]
          %v5602 = vld [vmem:[#allocation11 + $0x890] sm:$0xff]
          %v5603 = vld [vmem:[#allocation11 + $0x898] sm:$0xff]
          %v5604 = vld [vmem:[#allocation11 + $0x8a0] sm:$0xff]
          %v5605 = vld [vmem:[#allocation11 + $0x8a8] sm:$0xff]
          %v5606 = vld [vmem:[#allocation11 + $0x8b0] sm:$0xff]
          %v5607 = vld [vmem:[#allocation11 + $0x8b8] sm:$0xff]
          %v5608 = vld [vmem:[#allocation11 + $0x8c0] sm:$0xff]
          %v5609 = vld [vmem:[#allocation11 + $0x8c8] sm:$0xff]
          %v5610 = vld [vmem:[#allocation11 + $0x8d0] sm:$0xff]
          %v5611 = vld [vmem:[#allocation11 + $0x8d8] sm:$0xff]
          %v5612 = vld [vmem:[#allocation11 + $0x8e0] sm:$0xff]
          %v5613 = vld [vmem:[#allocation11 + $0x8e8] sm:$0xff]
          %v5614 = vld [vmem:[#allocation11 + $0x8f0] sm:$0xff]
          %v5615 = vld [vmem:[#allocation11 + $0x8f8] sm:$0xff]
          %v5616 = vld [vmem:[#allocation11 + $0x900] sm:$0xff]
          %v5617 = vld [vmem:[#allocation11 + $0x908] sm:$0xff]
          %v5618 = vld [vmem:[#allocation11 + $0x910] sm:$0xff]
          %v5619 = vld [vmem:[#allocation11 + $0x918] sm:$0xff]
          %v5620 = vld [vmem:[#allocation11 + $0x920] sm:$0xff]
          %v5621 = vld [vmem:[#allocation11 + $0x928] sm:$0xff]
          %v5622 = vld [vmem:[#allocation11 + $0x930] sm:$0xff]
          %v5623 = vld [vmem:[#allocation11 + $0x938] sm:$0xff]
          %v5624 = vld [vmem:[#allocation11 + $0x940] sm:$0xff]
          %v5625 = vld [vmem:[#allocation11 + $0x948] sm:$0xff]
          %v5626 = vld [vmem:[#allocation11 + $0x950] sm:$0xff]
          %v5627 = vld [vmem:[#allocation11 + $0x958] sm:$0xff]
          %v5628 = vld [vmem:[#allocation11 + $0x960] sm:$0xff]
          %v5629 = vld [vmem:[#allocation11 + $0x968] sm:$0xff]
          %v5630 = vld [vmem:[#allocation11 + $0x970] sm:$0xff]
          %v5631 = vld [vmem:[#allocation11 + $0x978] sm:$0xff]
          %v5632 = vld [vmem:[#allocation11 + $0x980] sm:$0xff]
          %v5633 = vld [vmem:[#allocation11 + $0x988] sm:$0xff]
          %v5634 = vld [vmem:[#allocation11 + $0x990] sm:$0xff]
          %v5635 = vld [vmem:[#allocation11 + $0x998] sm:$0xff]
          %v5636 = vld [vmem:[#allocation11 + $0x9a0] sm:$0xff]
          %v5637 = vld [vmem:[#allocation11 + $0x9a8] sm:$0xff]
          %v5638 = vld [vmem:[#allocation11 + $0x9b0] sm:$0xff]
          %v5639 = vld [vmem:[#allocation11 + $0x9b8] sm:$0xff]
          %v5640 = vld [vmem:[#allocation11 + $0x9c0] sm:$0xff]
          %v5641 = vld [vmem:[#allocation11 + $0x9c8] sm:$0xff]
          %v5642 = vld [vmem:[#allocation11 + $0x9d0] sm:$0xff]
          %v5643 = vld [vmem:[#allocation11 + $0x9d8] sm:$0xff]
          %v5644 = vld [vmem:[#allocation11 + $0x9e0] sm:$0xff]
          %v5645 = vld [vmem:[#allocation11 + $0x9e8] sm:$0xff]
          %v5646 = vld [vmem:[#allocation11 + $0x9f0] sm:$0xff]
          %v5647 = vld [vmem:[#allocation11 + $0x9f8] sm:$0xff]
          %v5648 = vld [vmem:[#allocation11 + $0xa00] sm:$0xff]
          %v5649 = vld [vmem:[#allocation11 + $0xa08] sm:$0xff]
          %v5650 = vld [vmem:[#allocation11 + $0xa10] sm:$0xff]
          %v5651 = vld [vmem:[#allocation11 + $0xa18] sm:$0xff]
          %v5652 = vld [vmem:[#allocation11 + $0xa20] sm:$0xff]
          %v5653 = vld [vmem:[#allocation11 + $0xa28] sm:$0xff]
          %v5654 = vld [vmem:[#allocation11 + $0xa30] sm:$0xff]
          %v5655 = vld [vmem:[#allocation11 + $0xa38] sm:$0xff]
          %v5656 = vld [vmem:[#allocation11 + $0xa40] sm:$0xff]
          %v5657 = vld [vmem:[#allocation11 + $0xa48] sm:$0xff]
          %v5658 = vld [vmem:[#allocation11 + $0xa50] sm:$0xff]
          %v5659 = vld [vmem:[#allocation11 + $0xa58] sm:$0xff]
          %v5660 = vld [vmem:[#allocation11 + $0xa60] sm:$0xff]
          %v5661 = vld [vmem:[#allocation11 + $0xa68] sm:$0xff]
          %v5662 = vld [vmem:[#allocation11 + $0xa70] sm:$0xff]
          %v5663 = vld [vmem:[#allocation11 + $0xa78] sm:$0xff]
          %v5664 = vld [vmem:[#allocation11 + $0xa80] sm:$0xff]
          %v5665 = vld [vmem:[#allocation11 + $0xa88] sm:$0xff]
          %v5666 = vld [vmem:[#allocation11 + $0xa90] sm:$0xff]
          %v5667 = vld [vmem:[#allocation11 + $0xa98] sm:$0xff]
          %v5668 = vld [vmem:[#allocation11 + $0xaa0] sm:$0xff]
          %v5669 = vld [vmem:[#allocation11 + $0xaa8] sm:$0xff]
          %v5670 = vld [vmem:[#allocation11 + $0xab0] sm:$0xff]
          %v5671 = vld [vmem:[#allocation11 + $0xab8] sm:$0xff]
          %v5672 = vld [vmem:[#allocation11 + $0xac0] sm:$0xff]
          %v5673 = vld [vmem:[#allocation11 + $0xac8] sm:$0xff]
          %v5674 = vld [vmem:[#allocation11 + $0xad0] sm:$0xff]
          %v5675 = vld [vmem:[#allocation11 + $0xad8] sm:$0xff]
          %v5676 = vld [vmem:[#allocation11 + $0xae0] sm:$0xff]
          %v5677 = vld [vmem:[#allocation11 + $0xae8] sm:$0xff]
          %v5678 = vld [vmem:[#allocation11 + $0xaf0] sm:$0xff]
          %v5679 = vld [vmem:[#allocation11 + $0xaf8] sm:$0xff]
          %v5680 = vld [vmem:[#allocation11 + $0xb00] sm:$0xff]
          %v5681 = vld [vmem:[#allocation11 + $0xb08] sm:$0xff]
          %v5682 = vld [vmem:[#allocation11 + $0xb10] sm:$0xff]
          %v5683 = vld [vmem:[#allocation11 + $0xb18] sm:$0xff]
          %v5684 = vld [vmem:[#allocation11 + $0xb20] sm:$0xff]
          %v5685 = vld [vmem:[#allocation11 + $0xb28] sm:$0xff]
          %v5686 = vld [vmem:[#allocation11 + $0xb30] sm:$0xff]
          %v5687 = vld [vmem:[#allocation11 + $0xb38] sm:$0xff]
          %v5688 = vld [vmem:[#allocation11 + $0xb40] sm:$0xff]
          %v5689 = vld [vmem:[#allocation11 + $0xb48] sm:$0xff]
          %v5690 = vld [vmem:[#allocation11 + $0xb50] sm:$0xff]
          %v5691 = vld [vmem:[#allocation11 + $0xb58] sm:$0xff]
          %v5692 = vld [vmem:[#allocation11 + $0xb60] sm:$0xff]
          %v5693 = vld [vmem:[#allocation11 + $0xb68] sm:$0xff]
          %v5694 = vld [vmem:[#allocation11 + $0xb70] sm:$0xff]
          %v5695 = vld [vmem:[#allocation11 + $0xb78] sm:$0xff]
          %v5696 = vld [vmem:[#allocation11 + $0xb80] sm:$0xff]
          %v5697 = vld [vmem:[#allocation11 + $0xb88] sm:$0xff]
          %v5698 = vld [vmem:[#allocation11 + $0xb90] sm:$0xff]
          %v5699 = vld [vmem:[#allocation11 + $0xb98] sm:$0xff]
          %v5700 = vld [vmem:[#allocation11 + $0xba0] sm:$0xff]
          %v5701 = vld [vmem:[#allocation11 + $0xba8] sm:$0xff]
          %v5702 = vld [vmem:[#allocation11 + $0xbb0] sm:$0xff]
          %v5703 = vld [vmem:[#allocation11 + $0xbb8] sm:$0xff]
          %v5704 = vld [vmem:[#allocation11 + $0xbc0] sm:$0xff]
          %v5705 = vld [vmem:[#allocation11 + $0xbc8] sm:$0xff]
          %v5706 = vld [vmem:[#allocation11 + $0xbd0] sm:$0xff]
          %v5707 = vld [vmem:[#allocation11 + $0xbd8] sm:$0xff]
          %v5708 = vld [vmem:[#allocation11 + $0xbe0] sm:$0xff]
          %v5709 = vld [vmem:[#allocation11 + $0xbe8] sm:$0xff]
          %v5710 = vld [vmem:[#allocation11 + $0xbf0] sm:$0xff]
          %v5711 = vld [vmem:[#allocation11 + $0xbf8] sm:$0xff]
          %v5712 = vld [vmem:[#allocation11 + $0xc00] sm:$0xff]
          %v5713 = vld [vmem:[#allocation11 + $0xc08] sm:$0xff]
          %v5714 = vld [vmem:[#allocation11 + $0xc10] sm:$0xff]
          %v5715 = vld [vmem:[#allocation11 + $0xc18] sm:$0xff]
          %v5716 = vld [vmem:[#allocation11 + $0xc20] sm:$0xff]
          %v5717 = vld [vmem:[#allocation11 + $0xc28] sm:$0xff]
          %v5718 = vld [vmem:[#allocation11 + $0xc30] sm:$0xff]
          %v5719 = vld [vmem:[#allocation11 + $0xc38] sm:$0xff]
          %v5720 = vld [vmem:[#allocation11 + $0xc40] sm:$0xff]
          %v5721 = vld [vmem:[#allocation11 + $0xc48] sm:$0xff]
          %v5722 = vld [vmem:[#allocation11 + $0xc50] sm:$0xff]
          %v5723 = vld [vmem:[#allocation11 + $0xc58] sm:$0xff]
          %v5724 = vld [vmem:[#allocation11 + $0xc60] sm:$0xff]
          %v5725 = vld [vmem:[#allocation11 + $0xc68] sm:$0xff]
          %v5726 = vld [vmem:[#allocation11 + $0xc70] sm:$0xff]
          %v5727 = vld [vmem:[#allocation11 + $0xc78] sm:$0xff]
          %v5728 = vld [vmem:[#allocation11 + $0xc80] sm:$0xff]
          %v5729 = vld [vmem:[#allocation11 + $0xc88] sm:$0xff]
          %v5730 = vld [vmem:[#allocation11 + $0xc90] sm:$0xff]
          %v5731 = vld [vmem:[#allocation11 + $0xc98] sm:$0xff]
          %v5732 = vld [vmem:[#allocation11 + $0xca0] sm:$0xff]
          %v5733 = vld [vmem:[#allocation11 + $0xca8] sm:$0xff]
          %v5734 = vld [vmem:[#allocation11 + $0xcb0] sm:$0xff]
          %v5735 = vld [vmem:[#allocation11 + $0xcb8] sm:$0xff]
          %v5736 = vld [vmem:[#allocation11 + $0xcc0] sm:$0xff]
          %v5737 = vld [vmem:[#allocation11 + $0xcc8] sm:$0xff]
          %v5738 = vld [vmem:[#allocation11 + $0xcd0] sm:$0xff]
          %v5739 = vld [vmem:[#allocation11 + $0xcd8] sm:$0xff]
          %v5740 = vld [vmem:[#allocation11 + $0xce0] sm:$0xff]
          %v5741 = vld [vmem:[#allocation11 + $0xce8] sm:$0xff]
          %v5742 = vld [vmem:[#allocation11 + $0xcf0] sm:$0xff]
          %v5743 = vld [vmem:[#allocation11 + $0xcf8] sm:$0xff]
          %v5744 = vld [vmem:[#allocation11 + $0xd00] sm:$0xff]
          %v5745 = vld [vmem:[#allocation11 + $0xd08] sm:$0xff]
          %v5746 = vld [vmem:[#allocation11 + $0xd10] sm:$0xff]
          %v5747 = vld [vmem:[#allocation11 + $0xd18] sm:$0xff]
          %v5748 = vld [vmem:[#allocation11 + $0xd20] sm:$0xff]
          %v5749 = vld [vmem:[#allocation11 + $0xd28] sm:$0xff]
          %v5750 = vld [vmem:[#allocation11 + $0xd30] sm:$0xff]
          %v5751 = vld [vmem:[#allocation11 + $0xd38] sm:$0xff]
          %v5752 = vld [vmem:[#allocation11 + $0xd40] sm:$0xff]
          %v5753 = vld [vmem:[#allocation11 + $0xd48] sm:$0xff]
          %v5754 = vld [vmem:[#allocation11 + $0xd50] sm:$0xff]
          %v5755 = vld [vmem:[#allocation11 + $0xd58] sm:$0xff]
          %v5756 = vld [vmem:[#allocation11 + $0xd60] sm:$0xff]
          %v5757 = vld [vmem:[#allocation11 + $0xd68] sm:$0xff]
          %v5758 = vld [vmem:[#allocation11 + $0xd70] sm:$0xff]
          %v5759 = vld [vmem:[#allocation11 + $0xd78] sm:$0xff]
          %v5760 = vld [vmem:[#allocation11 + $0xd80] sm:$0xff]
          %v5761 = vld [vmem:[#allocation11 + $0xd88] sm:$0xff]
          %v5762 = vld [vmem:[#allocation11 + $0xd90] sm:$0xff]
          %v5763 = vld [vmem:[#allocation11 + $0xd98] sm:$0xff]
          %v5764 = vld [vmem:[#allocation11 + $0xda0] sm:$0xff]
          %v5765 = vld [vmem:[#allocation11 + $0xda8] sm:$0xff]
          %v5766 = vld [vmem:[#allocation11 + $0xdb0] sm:$0xff]
          %v5767 = vld [vmem:[#allocation11 + $0xdb8] sm:$0xff]
          %v5768 = vld [vmem:[#allocation11 + $0xdc0] sm:$0xff]
          %v5769 = vld [vmem:[#allocation11 + $0xdc8] sm:$0xff]
          %v5770 = vld [vmem:[#allocation11 + $0xdd0] sm:$0xff]
          %v5771 = vld [vmem:[#allocation11 + $0xdd8] sm:$0xff]
          %v5772 = vld [vmem:[#allocation11 + $0xde0] sm:$0xff]
          %v5773 = vld [vmem:[#allocation11 + $0xde8] sm:$0xff]
          %v5774 = vld [vmem:[#allocation11 + $0xdf0] sm:$0xff]
          %v5775 = vld [vmem:[#allocation11 + $0xdf8] sm:$0xff]
          %v5776 = vld [vmem:[#allocation11 + $0xe00] sm:$0xff]
          %v5777 = vld [vmem:[#allocation11 + $0xe08] sm:$0xff]
          %v5778 = vld [vmem:[#allocation11 + $0xe10] sm:$0xff]
          %v5779 = vld [vmem:[#allocation11 + $0xe18] sm:$0xff]
          %v5780 = vld [vmem:[#allocation11 + $0xe20] sm:$0xff]
          %v5781 = vld [vmem:[#allocation11 + $0xe28] sm:$0xff]
          %v5782 = vld [vmem:[#allocation11 + $0xe30] sm:$0xff]
          %v5783 = vld [vmem:[#allocation11 + $0xe38] sm:$0xff]
          %v5784 = vld [vmem:[#allocation11 + $0xe40] sm:$0xff]
          %v5785 = vld [vmem:[#allocation11 + $0xe48] sm:$0xff]
          %v5786 = vld [vmem:[#allocation11 + $0xe50] sm:$0xff]
          %v5787 = vld [vmem:[#allocation11 + $0xe58] sm:$0xff]
          %v5788 = vld [vmem:[#allocation11 + $0xe60] sm:$0xff]
          %v5789 = vld [vmem:[#allocation11 + $0xe68] sm:$0xff]
          %v5790 = vld [vmem:[#allocation11 + $0xe70] sm:$0xff]
          %v5791 = vld [vmem:[#allocation11 + $0xe78] sm:$0xff]
          %v5792 = vld [vmem:[#allocation11 + $0xe80] sm:$0xff]
          %v5793 = vld [vmem:[#allocation11 + $0xe88] sm:$0xff]
          %v5794 = vld [vmem:[#allocation11 + $0xe90] sm:$0xff]
          %v5795 = vld [vmem:[#allocation11 + $0xe98] sm:$0xff]
          %v5796 = vld [vmem:[#allocation11 + $0xea0] sm:$0xff]
          %v5797 = vld [vmem:[#allocation11 + $0xea8] sm:$0xff]
          %v5798 = vld [vmem:[#allocation11 + $0xeb0] sm:$0xff]
          %v5799 = vld [vmem:[#allocation11 + $0xeb8] sm:$0xff]
          %v5800 = vld [vmem:[#allocation11 + $0xec0] sm:$0xff]
          %v5801 = vld [vmem:[#allocation11 + $0xec8] sm:$0xff]
          %v5802 = vld [vmem:[#allocation11 + $0xed0] sm:$0xff]
          %v5803 = vld [vmem:[#allocation11 + $0xed8] sm:$0xff]
          %v5804 = vld [vmem:[#allocation11 + $0xee0] sm:$0xff]
          %v5805 = vld [vmem:[#allocation11 + $0xee8] sm:$0xff]
          %v5806 = vld [vmem:[#allocation11 + $0xef0] sm:$0xff]
          %v5807 = vld [vmem:[#allocation11 + $0xef8] sm:$0xff]
          %v5808 = vld [vmem:[#allocation11 + $0xf00] sm:$0xff]
          %v5809 = vld [vmem:[#allocation11 + $0xf08] sm:$0xff]
          %v5810 = vld [vmem:[#allocation11 + $0xf10] sm:$0xff]
          %v5811 = vld [vmem:[#allocation11 + $0xf18] sm:$0xff]
          %v5812 = vld [vmem:[#allocation11 + $0xf20] sm:$0xff]
          %v5813 = vld [vmem:[#allocation11 + $0xf28] sm:$0xff]
          %v5814 = vld [vmem:[#allocation11 + $0xf30] sm:$0xff]
          %v5815 = vld [vmem:[#allocation11 + $0xf38] sm:$0xff]
          %v5816 = vld [vmem:[#allocation11 + $0xf40] sm:$0xff]
          %v5817 = vld [vmem:[#allocation11 + $0xf48] sm:$0xff]
          %v5818 = vld [vmem:[#allocation11 + $0xf50] sm:$0xff]
          %v5819 = vld [vmem:[#allocation11 + $0xf58] sm:$0xff]
          %v5820 = vld [vmem:[#allocation11 + $0xf60] sm:$0xff]
          %v5821 = vld [vmem:[#allocation11 + $0xf68] sm:$0xff]
          %v5822 = vld [vmem:[#allocation11 + $0xf70] sm:$0xff]
          %v5823 = vld [vmem:[#allocation11 + $0xf78] sm:$0xff]
          %v5824 = vld [vmem:[#allocation11 + $0xf80] sm:$0xff]
          %v5825 = vld [vmem:[#allocation11 + $0xf88] sm:$0xff]
          %v5826 = vld [vmem:[#allocation11 + $0xf90] sm:$0xff]
          %v5827 = vld [vmem:[#allocation11 + $0xf98] sm:$0xff]
          %v5828 = vld [vmem:[#allocation11 + $0xfa0] sm:$0xff]
          %v5829 = vld [vmem:[#allocation11 + $0xfa8] sm:$0xff]
          %v5830 = vld [vmem:[#allocation11 + $0xfb0] sm:$0xff]
          %v5831 = vld [vmem:[#allocation11 + $0xfb8] sm:$0xff]
          %v5832 = vld [vmem:[#allocation11 + $0xfc0] sm:$0xff]
          %v5833 = vld [vmem:[#allocation11 + $0xfc8] sm:$0xff]
          %v5834 = vld [vmem:[#allocation11 + $0xfd0] sm:$0xff]
          %v5835 = vld [vmem:[#allocation11 + $0xfd8] sm:$0xff]
          %v5836 = vld [vmem:[#allocation11 + $0xfe0] sm:$0xff]
          %v5837 = vld [vmem:[#allocation11 + $0xfe8] sm:$0xff]
          %v5838 = vld [vmem:[#allocation11 + $0xff0] sm:$0xff]
          %v5839 = vld [vmem:[#allocation11 + $0xff8] sm:$0xff]
          %v6352 = vunpack.c.l.b16 %v5328
          %v6353 = vunpack.c.h.b16 %v5328
          %v6354 = vunpack.c.l.b16 %v5329
          %v6355 = vunpack.c.h.b16 %v5329
          %v6356 = vunpack.c.l.b16 %v5330
          %v6357 = vunpack.c.h.b16 %v5330
          %v6358 = vunpack.c.l.b16 %v5331
          %v6359 = vunpack.c.h.b16 %v5331
          %v6360 = vunpack.c.l.b16 %v5332
          %v6361 = vunpack.c.h.b16 %v5332
          %v6362 = vunpack.c.l.b16 %v5333
          %v6363 = vunpack.c.h.b16 %v5333
          %v6364 = vunpack.c.l.b16 %v5334
          %v6365 = vunpack.c.h.b16 %v5334
          %v6366 = vunpack.c.l.b16 %v5335
          %v6367 = vunpack.c.h.b16 %v5335
          %v6368 = vunpack.c.l.b16 %v5336
          %v6369 = vunpack.c.h.b16 %v5336
          %v6370 = vunpack.c.l.b16 %v5337
          %v6371 = vunpack.c.h.b16 %v5337
          %v6372 = vunpack.c.l.b16 %v5338
          %v6373 = vunpack.c.h.b16 %v5338
          %v6374 = vunpack.c.l.b16 %v5339
          %v6375 = vunpack.c.h.b16 %v5339
          %v6376 = vunpack.c.l.b16 %v5340
          %v6377 = vunpack.c.h.b16 %v5340
          %v6378 = vunpack.c.l.b16 %v5341
          %v6379 = vunpack.c.h.b16 %v5341
          %v6380 = vunpack.c.l.b16 %v5342
          %v6381 = vunpack.c.h.b16 %v5342
          %v6382 = vunpack.c.l.b16 %v5343
          %v6383 = vunpack.c.h.b16 %v5343
          %v6384 = vunpack.c.l.b16 %v5344
          %v6385 = vunpack.c.h.b16 %v5344
          %v6386 = vunpack.c.l.b16 %v5345
          %v6387 = vunpack.c.h.b16 %v5345
          %v6388 = vunpack.c.l.b16 %v5346
          %v6389 = vunpack.c.h.b16 %v5346
          %v6390 = vunpack.c.l.b16 %v5347
          %v6391 = vunpack.c.h.b16 %v5347
          %v6392 = vunpack.c.l.b16 %v5348
          %v6393 = vunpack.c.h.b16 %v5348
          %v6394 = vunpack.c.l.b16 %v5349
          %v6395 = vunpack.c.h.b16 %v5349
          %v6396 = vunpack.c.l.b16 %v5350
          %v6397 = vunpack.c.h.b16 %v5350
          %v6398 = vunpack.c.l.b16 %v5351
          %v6399 = vunpack.c.h.b16 %v5351
          %v6400 = vunpack.c.l.b16 %v5352
          %v6401 = vunpack.c.h.b16 %v5352
          %v6402 = vunpack.c.l.b16 %v5353
          %v6403 = vunpack.c.h.b16 %v5353
          %v6404 = vunpack.c.l.b16 %v5354
          %v6405 = vunpack.c.h.b16 %v5354
          %v6406 = vunpack.c.l.b16 %v5355
          %v6407 = vunpack.c.h.b16 %v5355
          %v6408 = vunpack.c.l.b16 %v5356
          %v6409 = vunpack.c.h.b16 %v5356
          %v6410 = vunpack.c.l.b16 %v5357
          %v6411 = vunpack.c.h.b16 %v5357
          %v6412 = vunpack.c.l.b16 %v5358
          %v6413 = vunpack.c.h.b16 %v5358
          %v6414 = vunpack.c.l.b16 %v5359
          %v6415 = vunpack.c.h.b16 %v5359
          %v6416 = vunpack.c.l.b16 %v5360
          %v6417 = vunpack.c.h.b16 %v5360
          %v6418 = vunpack.c.l.b16 %v5361
          %v6419 = vunpack.c.h.b16 %v5361
          %v6420 = vunpack.c.l.b16 %v5362
          %v6421 = vunpack.c.h.b16 %v5362
          %v6422 = vunpack.c.l.b16 %v5363
          %v6423 = vunpack.c.h.b16 %v5363
          %v6424 = vunpack.c.l.b16 %v5364
          %v6425 = vunpack.c.h.b16 %v5364
          %v6426 = vunpack.c.l.b16 %v5365
          %v6427 = vunpack.c.h.b16 %v5365
          %v6428 = vunpack.c.l.b16 %v5366
          %v6429 = vunpack.c.h.b16 %v5366
          %v6430 = vunpack.c.l.b16 %v5367
          %v6431 = vunpack.c.h.b16 %v5367
          %v6432 = vunpack.c.l.b16 %v5368
          %v6433 = vunpack.c.h.b16 %v5368
          %v6434 = vunpack.c.l.b16 %v5369
          %v6435 = vunpack.c.h.b16 %v5369
          %v6436 = vunpack.c.l.b16 %v5370
          %v6437 = vunpack.c.h.b16 %v5370
          %v6438 = vunpack.c.l.b16 %v5371
          %v6439 = vunpack.c.h.b16 %v5371
          %v6440 = vunpack.c.l.b16 %v5372
          %v6441 = vunpack.c.h.b16 %v5372
          %v6442 = vunpack.c.l.b16 %v5373
          %v6443 = vunpack.c.h.b16 %v5373
          %v6444 = vunpack.c.l.b16 %v5374
          %v6445 = vunpack.c.h.b16 %v5374
          %v6446 = vunpack.c.l.b16 %v5375
          %v6447 = vunpack.c.h.b16 %v5375
          %v6448 = vunpack.c.l.b16 %v5376
          %v6449 = vunpack.c.h.b16 %v5376
          %v6450 = vunpack.c.l.b16 %v5377
          %v6451 = vunpack.c.h.b16 %v5377
          %v6452 = vunpack.c.l.b16 %v5378
          %v6453 = vunpack.c.h.b16 %v5378
          %v6454 = vunpack.c.l.b16 %v5379
          %v6455 = vunpack.c.h.b16 %v5379
          %v6456 = vunpack.c.l.b16 %v5380
          %v6457 = vunpack.c.h.b16 %v5380
          %v6458 = vunpack.c.l.b16 %v5381
          %v6459 = vunpack.c.h.b16 %v5381
          %v6460 = vunpack.c.l.b16 %v5382
          %v6461 = vunpack.c.h.b16 %v5382
          %v6462 = vunpack.c.l.b16 %v5383
          %v6463 = vunpack.c.h.b16 %v5383
          %v6464 = vunpack.c.l.b16 %v5384
          %v6465 = vunpack.c.h.b16 %v5384
          %v6466 = vunpack.c.l.b16 %v5385
          %v6467 = vunpack.c.h.b16 %v5385
          %v6468 = vunpack.c.l.b16 %v5386
          %v6469 = vunpack.c.h.b16 %v5386
          %v6470 = vunpack.c.l.b16 %v5387
          %v6471 = vunpack.c.h.b16 %v5387
          %v6472 = vunpack.c.l.b16 %v5388
          %v6473 = vunpack.c.h.b16 %v5388
          %v6474 = vunpack.c.l.b16 %v5389
          %v6475 = vunpack.c.h.b16 %v5389
          %v6476 = vunpack.c.l.b16 %v5390
          %v6477 = vunpack.c.h.b16 %v5390
          %v6478 = vunpack.c.l.b16 %v5391
          %v6479 = vunpack.c.h.b16 %v5391
          %v6480 = vunpack.c.l.b16 %v5392
          %v6481 = vunpack.c.h.b16 %v5392
          %v6482 = vunpack.c.l.b16 %v5393
          %v6483 = vunpack.c.h.b16 %v5393
          %v6484 = vunpack.c.l.b16 %v5394
          %v6485 = vunpack.c.h.b16 %v5394
          %v6486 = vunpack.c.l.b16 %v5395
          %v6487 = vunpack.c.h.b16 %v5395
          %v6488 = vunpack.c.l.b16 %v5396
          %v6489 = vunpack.c.h.b16 %v5396
          %v6490 = vunpack.c.l.b16 %v5397
          %v6491 = vunpack.c.h.b16 %v5397
          %v6492 = vunpack.c.l.b16 %v5398
          %v6493 = vunpack.c.h.b16 %v5398
          %v6494 = vunpack.c.l.b16 %v5399
          %v6495 = vunpack.c.h.b16 %v5399
          %v6496 = vunpack.c.l.b16 %v5400
          %v6497 = vunpack.c.h.b16 %v5400
          %v6498 = vunpack.c.l.b16 %v5401
          %v6499 = vunpack.c.h.b16 %v5401
          %v6500 = vunpack.c.l.b16 %v5402
          %v6501 = vunpack.c.h.b16 %v5402
          %v6502 = vunpack.c.l.b16 %v5403
          %v6503 = vunpack.c.h.b16 %v5403
          %v6504 = vunpack.c.l.b16 %v5404
          %v6505 = vunpack.c.h.b16 %v5404
          %v6506 = vunpack.c.l.b16 %v5405
          %v6507 = vunpack.c.h.b16 %v5405
          %v6508 = vunpack.c.l.b16 %v5406
          %v6509 = vunpack.c.h.b16 %v5406
          %v6510 = vunpack.c.l.b16 %v5407
          %v6511 = vunpack.c.h.b16 %v5407
          %v6512 = vunpack.c.l.b16 %v5408
          %v6513 = vunpack.c.h.b16 %v5408
          %v6514 = vunpack.c.l.b16 %v5409
          %v6515 = vunpack.c.h.b16 %v5409
          %v6516 = vunpack.c.l.b16 %v5410
          %v6517 = vunpack.c.h.b16 %v5410
          %v6518 = vunpack.c.l.b16 %v5411
          %v6519 = vunpack.c.h.b16 %v5411
          %v6520 = vunpack.c.l.b16 %v5412
          %v6521 = vunpack.c.h.b16 %v5412
          %v6522 = vunpack.c.l.b16 %v5413
          %v6523 = vunpack.c.h.b16 %v5413
          %v6524 = vunpack.c.l.b16 %v5414
          %v6525 = vunpack.c.h.b16 %v5414
          %v6526 = vunpack.c.l.b16 %v5415
          %v6527 = vunpack.c.h.b16 %v5415
          %v6528 = vunpack.c.l.b16 %v5416
          %v6529 = vunpack.c.h.b16 %v5416
          %v6530 = vunpack.c.l.b16 %v5417
          %v6531 = vunpack.c.h.b16 %v5417
          %v6532 = vunpack.c.l.b16 %v5418
          %v6533 = vunpack.c.h.b16 %v5418
          %v6534 = vunpack.c.l.b16 %v5419
          %v6535 = vunpack.c.h.b16 %v5419
          %v6536 = vunpack.c.l.b16 %v5420
          %v6537 = vunpack.c.h.b16 %v5420
          %v6538 = vunpack.c.l.b16 %v5421
          %v6539 = vunpack.c.h.b16 %v5421
          %v6540 = vunpack.c.l.b16 %v5422
          %v6541 = vunpack.c.h.b16 %v5422
          %v6542 = vunpack.c.l.b16 %v5423
          %v6543 = vunpack.c.h.b16 %v5423
          %v6544 = vunpack.c.l.b16 %v5424
          %v6545 = vunpack.c.h.b16 %v5424
          %v6546 = vunpack.c.l.b16 %v5425
          %v6547 = vunpack.c.h.b16 %v5425
          %v6548 = vunpack.c.l.b16 %v5426
          %v6549 = vunpack.c.h.b16 %v5426
          %v6550 = vunpack.c.l.b16 %v5427
          %v6551 = vunpack.c.h.b16 %v5427
          %v6552 = vunpack.c.l.b16 %v5428
          %v6553 = vunpack.c.h.b16 %v5428
          %v6554 = vunpack.c.l.b16 %v5429
          %v6555 = vunpack.c.h.b16 %v5429
          %v6556 = vunpack.c.l.b16 %v5430
          %v6557 = vunpack.c.h.b16 %v5430
          %v6558 = vunpack.c.l.b16 %v5431
          %v6559 = vunpack.c.h.b16 %v5431
          %v6560 = vunpack.c.l.b16 %v5432
          %v6561 = vunpack.c.h.b16 %v5432
          %v6562 = vunpack.c.l.b16 %v5433
          %v6563 = vunpack.c.h.b16 %v5433
          %v6564 = vunpack.c.l.b16 %v5434
          %v6565 = vunpack.c.h.b16 %v5434
          %v6566 = vunpack.c.l.b16 %v5435
          %v6567 = vunpack.c.h.b16 %v5435
          %v6568 = vunpack.c.l.b16 %v5436
          %v6569 = vunpack.c.h.b16 %v5436
          %v6570 = vunpack.c.l.b16 %v5437
          %v6571 = vunpack.c.h.b16 %v5437
          %v6572 = vunpack.c.l.b16 %v5438
          %v6573 = vunpack.c.h.b16 %v5438
          %v6574 = vunpack.c.l.b16 %v5439
          %v6575 = vunpack.c.h.b16 %v5439
          %v6576 = vunpack.c.l.b16 %v5440
          %v6577 = vunpack.c.h.b16 %v5440
          %v6578 = vunpack.c.l.b16 %v5441
          %v6579 = vunpack.c.h.b16 %v5441
          %v6580 = vunpack.c.l.b16 %v5442
          %v6581 = vunpack.c.h.b16 %v5442
          %v6582 = vunpack.c.l.b16 %v5443
          %v6583 = vunpack.c.h.b16 %v5443
          %v6584 = vunpack.c.l.b16 %v5444
          %v6585 = vunpack.c.h.b16 %v5444
          %v6586 = vunpack.c.l.b16 %v5445
          %v6587 = vunpack.c.h.b16 %v5445
          %v6588 = vunpack.c.l.b16 %v5446
          %v6589 = vunpack.c.h.b16 %v5446
          %v6590 = vunpack.c.l.b16 %v5447
          %v6591 = vunpack.c.h.b16 %v5447
          %v6592 = vunpack.c.l.b16 %v5448
          %v6593 = vunpack.c.h.b16 %v5448
          %v6594 = vunpack.c.l.b16 %v5449
          %v6595 = vunpack.c.h.b16 %v5449
          %v6596 = vunpack.c.l.b16 %v5450
          %v6597 = vunpack.c.h.b16 %v5450
          %v6598 = vunpack.c.l.b16 %v5451
          %v6599 = vunpack.c.h.b16 %v5451
          %v6600 = vunpack.c.l.b16 %v5452
          %v6601 = vunpack.c.h.b16 %v5452
          %v6602 = vunpack.c.l.b16 %v5453
          %v6603 = vunpack.c.h.b16 %v5453
          %v6604 = vunpack.c.l.b16 %v5454
          %v6605 = vunpack.c.h.b16 %v5454
          %v6606 = vunpack.c.l.b16 %v5455
          %v6607 = vunpack.c.h.b16 %v5455
          %v6608 = vunpack.c.l.b16 %v5456
          %v6609 = vunpack.c.h.b16 %v5456
          %v6610 = vunpack.c.l.b16 %v5457
          %v6611 = vunpack.c.h.b16 %v5457
          %v6612 = vunpack.c.l.b16 %v5458
          %v6613 = vunpack.c.h.b16 %v5458
          %v6614 = vunpack.c.l.b16 %v5459
          %v6615 = vunpack.c.h.b16 %v5459
          %v6616 = vunpack.c.l.b16 %v5460
          %v6617 = vunpack.c.h.b16 %v5460
          %v6618 = vunpack.c.l.b16 %v5461
          %v6619 = vunpack.c.h.b16 %v5461
          %v6620 = vunpack.c.l.b16 %v5462
          %v6621 = vunpack.c.h.b16 %v5462
          %v6622 = vunpack.c.l.b16 %v5463
          %v6623 = vunpack.c.h.b16 %v5463
          %v6624 = vunpack.c.l.b16 %v5464
          %v6625 = vunpack.c.h.b16 %v5464
          %v6626 = vunpack.c.l.b16 %v5465
          %v6627 = vunpack.c.h.b16 %v5465
          %v6628 = vunpack.c.l.b16 %v5466
          %v6629 = vunpack.c.h.b16 %v5466
          %v6630 = vunpack.c.l.b16 %v5467
          %v6631 = vunpack.c.h.b16 %v5467
          %v6632 = vunpack.c.l.b16 %v5468
          %v6633 = vunpack.c.h.b16 %v5468
          %v6634 = vunpack.c.l.b16 %v5469
          %v6635 = vunpack.c.h.b16 %v5469
          %v6636 = vunpack.c.l.b16 %v5470
          %v6637 = vunpack.c.h.b16 %v5470
          %v6638 = vunpack.c.l.b16 %v5471
          %v6639 = vunpack.c.h.b16 %v5471
          %v6640 = vunpack.c.l.b16 %v5472
          %v6641 = vunpack.c.h.b16 %v5472
          %v6642 = vunpack.c.l.b16 %v5473
          %v6643 = vunpack.c.h.b16 %v5473
          %v6644 = vunpack.c.l.b16 %v5474
          %v6645 = vunpack.c.h.b16 %v5474
          %v6646 = vunpack.c.l.b16 %v5475
          %v6647 = vunpack.c.h.b16 %v5475
          %v6648 = vunpack.c.l.b16 %v5476
          %v6649 = vunpack.c.h.b16 %v5476
          %v6650 = vunpack.c.l.b16 %v5477
          %v6651 = vunpack.c.h.b16 %v5477
          %v6652 = vunpack.c.l.b16 %v5478
          %v6653 = vunpack.c.h.b16 %v5478
          %v6654 = vunpack.c.l.b16 %v5479
          %v6655 = vunpack.c.h.b16 %v5479
          %v6656 = vunpack.c.l.b16 %v5480
          %v6657 = vunpack.c.h.b16 %v5480
          %v6658 = vunpack.c.l.b16 %v5481
          %v6659 = vunpack.c.h.b16 %v5481
          %v6660 = vunpack.c.l.b16 %v5482
          %v6661 = vunpack.c.h.b16 %v5482
          %v6662 = vunpack.c.l.b16 %v5483
          %v6663 = vunpack.c.h.b16 %v5483
          %v6664 = vunpack.c.l.b16 %v5484
          %v6665 = vunpack.c.h.b16 %v5484
          %v6666 = vunpack.c.l.b16 %v5485
          %v6667 = vunpack.c.h.b16 %v5485
          %v6668 = vunpack.c.l.b16 %v5486
          %v6669 = vunpack.c.h.b16 %v5486
          %v6670 = vunpack.c.l.b16 %v5487
          %v6671 = vunpack.c.h.b16 %v5487
          %v6672 = vunpack.c.l.b16 %v5488
          %v6673 = vunpack.c.h.b16 %v5488
          %v6674 = vunpack.c.l.b16 %v5489
          %v6675 = vunpack.c.h.b16 %v5489
          %v6676 = vunpack.c.l.b16 %v5490
          %v6677 = vunpack.c.h.b16 %v5490
          %v6678 = vunpack.c.l.b16 %v5491
          %v6679 = vunpack.c.h.b16 %v5491
          %v6680 = vunpack.c.l.b16 %v5492
          %v6681 = vunpack.c.h.b16 %v5492
          %v6682 = vunpack.c.l.b16 %v5493
          %v6683 = vunpack.c.h.b16 %v5493
          %v6684 = vunpack.c.l.b16 %v5494
          %v6685 = vunpack.c.h.b16 %v5494
          %v6686 = vunpack.c.l.b16 %v5495
          %v6687 = vunpack.c.h.b16 %v5495
          %v6688 = vunpack.c.l.b16 %v5496
          %v6689 = vunpack.c.h.b16 %v5496
          %v6690 = vunpack.c.l.b16 %v5497
          %v6691 = vunpack.c.h.b16 %v5497
          %v6692 = vunpack.c.l.b16 %v5498
          %v6693 = vunpack.c.h.b16 %v5498
          %v6694 = vunpack.c.l.b16 %v5499
          %v6695 = vunpack.c.h.b16 %v5499
          %v6696 = vunpack.c.l.b16 %v5500
          %v6697 = vunpack.c.h.b16 %v5500
          %v6698 = vunpack.c.l.b16 %v5501
          %v6699 = vunpack.c.h.b16 %v5501
          %v6700 = vunpack.c.l.b16 %v5502
          %v6701 = vunpack.c.h.b16 %v5502
          %v6702 = vunpack.c.l.b16 %v5503
          %v6703 = vunpack.c.h.b16 %v5503
          %v6704 = vunpack.c.l.b16 %v5504
          %v6705 = vunpack.c.h.b16 %v5504
          %v6706 = vunpack.c.l.b16 %v5505
          %v6707 = vunpack.c.h.b16 %v5505
          %v6708 = vunpack.c.l.b16 %v5506
          %v6709 = vunpack.c.h.b16 %v5506
          %v6710 = vunpack.c.l.b16 %v5507
          %v6711 = vunpack.c.h.b16 %v5507
          %v6712 = vunpack.c.l.b16 %v5508
          %v6713 = vunpack.c.h.b16 %v5508
          %v6714 = vunpack.c.l.b16 %v5509
          %v6715 = vunpack.c.h.b16 %v5509
          %v6716 = vunpack.c.l.b16 %v5510
          %v6717 = vunpack.c.h.b16 %v5510
          %v6718 = vunpack.c.l.b16 %v5511
          %v6719 = vunpack.c.h.b16 %v5511
          %v6720 = vunpack.c.l.b16 %v5512
          %v6721 = vunpack.c.h.b16 %v5512
          %v6722 = vunpack.c.l.b16 %v5513
          %v6723 = vunpack.c.h.b16 %v5513
          %v6724 = vunpack.c.l.b16 %v5514
          %v6725 = vunpack.c.h.b16 %v5514
          %v6726 = vunpack.c.l.b16 %v5515
          %v6727 = vunpack.c.h.b16 %v5515
          %v6728 = vunpack.c.l.b16 %v5516
          %v6729 = vunpack.c.h.b16 %v5516
          %v6730 = vunpack.c.l.b16 %v5517
          %v6731 = vunpack.c.h.b16 %v5517
          %v6732 = vunpack.c.l.b16 %v5518
          %v6733 = vunpack.c.h.b16 %v5518
          %v6734 = vunpack.c.l.b16 %v5519
          %v6735 = vunpack.c.h.b16 %v5519
          %v6736 = vunpack.c.l.b16 %v5520
          %v6737 = vunpack.c.h.b16 %v5520
          %v6738 = vunpack.c.l.b16 %v5521
          %v6739 = vunpack.c.h.b16 %v5521
          %v6740 = vunpack.c.l.b16 %v5522
          %v6741 = vunpack.c.h.b16 %v5522
          %v6742 = vunpack.c.l.b16 %v5523
          %v6743 = vunpack.c.h.b16 %v5523
          %v6744 = vunpack.c.l.b16 %v5524
          %v6745 = vunpack.c.h.b16 %v5524
          %v6746 = vunpack.c.l.b16 %v5525
          %v6747 = vunpack.c.h.b16 %v5525
          %v6748 = vunpack.c.l.b16 %v5526
          %v6749 = vunpack.c.h.b16 %v5526
          %v6750 = vunpack.c.l.b16 %v5527
          %v6751 = vunpack.c.h.b16 %v5527
          %v6752 = vunpack.c.l.b16 %v5528
          %v6753 = vunpack.c.h.b16 %v5528
          %v6754 = vunpack.c.l.b16 %v5529
          %v6755 = vunpack.c.h.b16 %v5529
          %v6756 = vunpack.c.l.b16 %v5530
          %v6757 = vunpack.c.h.b16 %v5530
          %v6758 = vunpack.c.l.b16 %v5531
          %v6759 = vunpack.c.h.b16 %v5531
          %v6760 = vunpack.c.l.b16 %v5532
          %v6761 = vunpack.c.h.b16 %v5532
          %v6762 = vunpack.c.l.b16 %v5533
          %v6763 = vunpack.c.h.b16 %v5533
          %v6764 = vunpack.c.l.b16 %v5534
          %v6765 = vunpack.c.h.b16 %v5534
          %v6766 = vunpack.c.l.b16 %v5535
          %v6767 = vunpack.c.h.b16 %v5535
          %v6768 = vunpack.c.l.b16 %v5536
          %v6769 = vunpack.c.h.b16 %v5536
          %v6770 = vunpack.c.l.b16 %v5537
          %v6771 = vunpack.c.h.b16 %v5537
          %v6772 = vunpack.c.l.b16 %v5538
          %v6773 = vunpack.c.h.b16 %v5538
          %v6774 = vunpack.c.l.b16 %v5539
          %v6775 = vunpack.c.h.b16 %v5539
          %v6776 = vunpack.c.l.b16 %v5540
          %v6777 = vunpack.c.h.b16 %v5540
          %v6778 = vunpack.c.l.b16 %v5541
          %v6779 = vunpack.c.h.b16 %v5541
          %v6780 = vunpack.c.l.b16 %v5542
          %v6781 = vunpack.c.h.b16 %v5542
          %v6782 = vunpack.c.l.b16 %v5543
          %v6783 = vunpack.c.h.b16 %v5543
          %v6784 = vunpack.c.l.b16 %v5544
          %v6785 = vunpack.c.h.b16 %v5544
          %v6786 = vunpack.c.l.b16 %v5545
          %v6787 = vunpack.c.h.b16 %v5545
          %v6788 = vunpack.c.l.b16 %v5546
          %v6789 = vunpack.c.h.b16 %v5546
          %v6790 = vunpack.c.l.b16 %v5547
          %v6791 = vunpack.c.h.b16 %v5547
          %v6792 = vunpack.c.l.b16 %v5548
          %v6793 = vunpack.c.h.b16 %v5548
          %v6794 = vunpack.c.l.b16 %v5549
          %v6795 = vunpack.c.h.b16 %v5549
          %v6796 = vunpack.c.l.b16 %v5550
          %v6797 = vunpack.c.h.b16 %v5550
          %v6798 = vunpack.c.l.b16 %v5551
          %v6799 = vunpack.c.h.b16 %v5551
          %v6800 = vunpack.c.l.b16 %v5552
          %v6801 = vunpack.c.h.b16 %v5552
          %v6802 = vunpack.c.l.b16 %v5553
          %v6803 = vunpack.c.h.b16 %v5553
          %v6804 = vunpack.c.l.b16 %v5554
          %v6805 = vunpack.c.h.b16 %v5554
          %v6806 = vunpack.c.l.b16 %v5555
          %v6807 = vunpack.c.h.b16 %v5555
          %v6808 = vunpack.c.l.b16 %v5556
          %v6809 = vunpack.c.h.b16 %v5556
          %v6810 = vunpack.c.l.b16 %v5557
          %v6811 = vunpack.c.h.b16 %v5557
          %v6812 = vunpack.c.l.b16 %v5558
          %v6813 = vunpack.c.h.b16 %v5558
          %v6814 = vunpack.c.l.b16 %v5559
          %v6815 = vunpack.c.h.b16 %v5559
          %v6816 = vunpack.c.l.b16 %v5560
          %v6817 = vunpack.c.h.b16 %v5560
          %v6818 = vunpack.c.l.b16 %v5561
          %v6819 = vunpack.c.h.b16 %v5561
          %v6820 = vunpack.c.l.b16 %v5562
          %v6821 = vunpack.c.h.b16 %v5562
          %v6822 = vunpack.c.l.b16 %v5563
          %v6823 = vunpack.c.h.b16 %v5563
          %v6824 = vunpack.c.l.b16 %v5564
          %v6825 = vunpack.c.h.b16 %v5564
          %v6826 = vunpack.c.l.b16 %v5565
          %v6827 = vunpack.c.h.b16 %v5565
          %v6828 = vunpack.c.l.b16 %v5566
          %v6829 = vunpack.c.h.b16 %v5566
          %v6830 = vunpack.c.l.b16 %v5567
          %v6831 = vunpack.c.h.b16 %v5567
          %v6832 = vunpack.c.l.b16 %v5568
          %v6833 = vunpack.c.h.b16 %v5568
          %v6834 = vunpack.c.l.b16 %v5569
          %v6835 = vunpack.c.h.b16 %v5569
          %v6836 = vunpack.c.l.b16 %v5570
          %v6837 = vunpack.c.h.b16 %v5570
          %v6838 = vunpack.c.l.b16 %v5571
          %v6839 = vunpack.c.h.b16 %v5571
          %v6840 = vunpack.c.l.b16 %v5572
          %v6841 = vunpack.c.h.b16 %v5572
          %v6842 = vunpack.c.l.b16 %v5573
          %v6843 = vunpack.c.h.b16 %v5573
          %v6844 = vunpack.c.l.b16 %v5574
          %v6845 = vunpack.c.h.b16 %v5574
          %v6846 = vunpack.c.l.b16 %v5575
          %v6847 = vunpack.c.h.b16 %v5575
          %v6848 = vunpack.c.l.b16 %v5576
          %v6849 = vunpack.c.h.b16 %v5576
          %v6850 = vunpack.c.l.b16 %v5577
          %v6851 = vunpack.c.h.b16 %v5577
          %v6852 = vunpack.c.l.b16 %v5578
          %v6853 = vunpack.c.h.b16 %v5578
          %v6854 = vunpack.c.l.b16 %v5579
          %v6855 = vunpack.c.h.b16 %v5579
          %v6856 = vunpack.c.l.b16 %v5580
          %v6857 = vunpack.c.h.b16 %v5580
          %v6858 = vunpack.c.l.b16 %v5581
          %v6859 = vunpack.c.h.b16 %v5581
          %v6860 = vunpack.c.l.b16 %v5582
          %v6861 = vunpack.c.h.b16 %v5582
          %v6862 = vunpack.c.l.b16 %v5583
          %v6863 = vunpack.c.h.b16 %v5583
          %v6864 = vunpack.c.l.b16 %v5584
          %v6865 = vunpack.c.h.b16 %v5584
          %v6866 = vunpack.c.l.b16 %v5585
          %v6867 = vunpack.c.h.b16 %v5585
          %v6868 = vunpack.c.l.b16 %v5586
          %v6869 = vunpack.c.h.b16 %v5586
          %v6870 = vunpack.c.l.b16 %v5587
          %v6871 = vunpack.c.h.b16 %v5587
          %v6872 = vunpack.c.l.b16 %v5588
          %v6873 = vunpack.c.h.b16 %v5588
          %v6874 = vunpack.c.l.b16 %v5589
          %v6875 = vunpack.c.h.b16 %v5589
          %v6876 = vunpack.c.l.b16 %v5590
          %v6877 = vunpack.c.h.b16 %v5590
          %v6878 = vunpack.c.l.b16 %v5591
          %v6879 = vunpack.c.h.b16 %v5591
          %v6880 = vunpack.c.l.b16 %v5592
          %v6881 = vunpack.c.h.b16 %v5592
          %v6882 = vunpack.c.l.b16 %v5593
          %v6883 = vunpack.c.h.b16 %v5593
          %v6884 = vunpack.c.l.b16 %v5594
          %v6885 = vunpack.c.h.b16 %v5594
          %v6886 = vunpack.c.l.b16 %v5595
          %v6887 = vunpack.c.h.b16 %v5595
          %v6888 = vunpack.c.l.b16 %v5596
          %v6889 = vunpack.c.h.b16 %v5596
          %v6890 = vunpack.c.l.b16 %v5597
          %v6891 = vunpack.c.h.b16 %v5597
          %v6892 = vunpack.c.l.b16 %v5598
          %v6893 = vunpack.c.h.b16 %v5598
          %v6894 = vunpack.c.l.b16 %v5599
          %v6895 = vunpack.c.h.b16 %v5599
          %v6896 = vunpack.c.l.b16 %v5600
          %v6897 = vunpack.c.h.b16 %v5600
          %v6898 = vunpack.c.l.b16 %v5601
          %v6899 = vunpack.c.h.b16 %v5601
          %v6900 = vunpack.c.l.b16 %v5602
          %v6901 = vunpack.c.h.b16 %v5602
          %v6902 = vunpack.c.l.b16 %v5603
          %v6903 = vunpack.c.h.b16 %v5603
          %v6904 = vunpack.c.l.b16 %v5604
          %v6905 = vunpack.c.h.b16 %v5604
          %v6906 = vunpack.c.l.b16 %v5605
          %v6907 = vunpack.c.h.b16 %v5605
          %v6908 = vunpack.c.l.b16 %v5606
          %v6909 = vunpack.c.h.b16 %v5606
          %v6910 = vunpack.c.l.b16 %v5607
          %v6911 = vunpack.c.h.b16 %v5607
          %v6912 = vunpack.c.l.b16 %v5608
          %v6913 = vunpack.c.h.b16 %v5608
          %v6914 = vunpack.c.l.b16 %v5609
          %v6915 = vunpack.c.h.b16 %v5609
          %v6916 = vunpack.c.l.b16 %v5610
          %v6917 = vunpack.c.h.b16 %v5610
          %v6918 = vunpack.c.l.b16 %v5611
          %v6919 = vunpack.c.h.b16 %v5611
          %v6920 = vunpack.c.l.b16 %v5612
          %v6921 = vunpack.c.h.b16 %v5612
          %v6922 = vunpack.c.l.b16 %v5613
          %v6923 = vunpack.c.h.b16 %v5613
          %v6924 = vunpack.c.l.b16 %v5614
          %v6925 = vunpack.c.h.b16 %v5614
          %v6926 = vunpack.c.l.b16 %v5615
          %v6927 = vunpack.c.h.b16 %v5615
          %v6928 = vunpack.c.l.b16 %v5616
          %v6929 = vunpack.c.h.b16 %v5616
          %v6930 = vunpack.c.l.b16 %v5617
          %v6931 = vunpack.c.h.b16 %v5617
          %v6932 = vunpack.c.l.b16 %v5618
          %v6933 = vunpack.c.h.b16 %v5618
          %v6934 = vunpack.c.l.b16 %v5619
          %v6935 = vunpack.c.h.b16 %v5619
          %v6936 = vunpack.c.l.b16 %v5620
          %v6937 = vunpack.c.h.b16 %v5620
          %v6938 = vunpack.c.l.b16 %v5621
          %v6939 = vunpack.c.h.b16 %v5621
          %v6940 = vunpack.c.l.b16 %v5622
          %v6941 = vunpack.c.h.b16 %v5622
          %v6942 = vunpack.c.l.b16 %v5623
          %v6943 = vunpack.c.h.b16 %v5623
          %v6944 = vunpack.c.l.b16 %v5624
          %v6945 = vunpack.c.h.b16 %v5624
          %v6946 = vunpack.c.l.b16 %v5625
          %v6947 = vunpack.c.h.b16 %v5625
          %v6948 = vunpack.c.l.b16 %v5626
          %v6949 = vunpack.c.h.b16 %v5626
          %v6950 = vunpack.c.l.b16 %v5627
          %v6951 = vunpack.c.h.b16 %v5627
          %v6952 = vunpack.c.l.b16 %v5628
          %v6953 = vunpack.c.h.b16 %v5628
          %v6954 = vunpack.c.l.b16 %v5629
          %v6955 = vunpack.c.h.b16 %v5629
          %v6956 = vunpack.c.l.b16 %v5630
          %v6957 = vunpack.c.h.b16 %v5630
          %v6958 = vunpack.c.l.b16 %v5631
          %v6959 = vunpack.c.h.b16 %v5631
          %v6960 = vunpack.c.l.b16 %v5632
          %v6961 = vunpack.c.h.b16 %v5632
          %v6962 = vunpack.c.l.b16 %v5633
          %v6963 = vunpack.c.h.b16 %v5633
          %v6964 = vunpack.c.l.b16 %v5634
          %v6965 = vunpack.c.h.b16 %v5634
          %v6966 = vunpack.c.l.b16 %v5635
          %v6967 = vunpack.c.h.b16 %v5635
          %v6968 = vunpack.c.l.b16 %v5636
          %v6969 = vunpack.c.h.b16 %v5636
          %v6970 = vunpack.c.l.b16 %v5637
          %v6971 = vunpack.c.h.b16 %v5637
          %v6972 = vunpack.c.l.b16 %v5638
          %v6973 = vunpack.c.h.b16 %v5638
          %v6974 = vunpack.c.l.b16 %v5639
          %v6975 = vunpack.c.h.b16 %v5639
          %v6976 = vunpack.c.l.b16 %v5640
          %v6977 = vunpack.c.h.b16 %v5640
          %v6978 = vunpack.c.l.b16 %v5641
          %v6979 = vunpack.c.h.b16 %v5641
          %v6980 = vunpack.c.l.b16 %v5642
          %v6981 = vunpack.c.h.b16 %v5642
          %v6982 = vunpack.c.l.b16 %v5643
          %v6983 = vunpack.c.h.b16 %v5643
          %v6984 = vunpack.c.l.b16 %v5644
          %v6985 = vunpack.c.h.b16 %v5644
          %v6986 = vunpack.c.l.b16 %v5645
          %v6987 = vunpack.c.h.b16 %v5645
          %v6988 = vunpack.c.l.b16 %v5646
          %v6989 = vunpack.c.h.b16 %v5646
          %v6990 = vunpack.c.l.b16 %v5647
          %v6991 = vunpack.c.h.b16 %v5647
          %v6992 = vunpack.c.l.b16 %v5648
          %v6993 = vunpack.c.h.b16 %v5648
          %v6994 = vunpack.c.l.b16 %v5649
          %v6995 = vunpack.c.h.b16 %v5649
          %v6996 = vunpack.c.l.b16 %v5650
          %v6997 = vunpack.c.h.b16 %v5650
          %v6998 = vunpack.c.l.b16 %v5651
          %v6999 = vunpack.c.h.b16 %v5651
          %v7000 = vunpack.c.l.b16 %v5652
          %v7001 = vunpack.c.h.b16 %v5652
          %v7002 = vunpack.c.l.b16 %v5653
          %v7003 = vunpack.c.h.b16 %v5653
          %v7004 = vunpack.c.l.b16 %v5654
          %v7005 = vunpack.c.h.b16 %v5654
          %v7006 = vunpack.c.l.b16 %v5655
          %v7007 = vunpack.c.h.b16 %v5655
          %v7008 = vunpack.c.l.b16 %v5656
          %v7009 = vunpack.c.h.b16 %v5656
          %v7010 = vunpack.c.l.b16 %v5657
          %v7011 = vunpack.c.h.b16 %v5657
          %v7012 = vunpack.c.l.b16 %v5658
          %v7013 = vunpack.c.h.b16 %v5658
          %v7014 = vunpack.c.l.b16 %v5659
          %v7015 = vunpack.c.h.b16 %v5659
          %v7016 = vunpack.c.l.b16 %v5660
          %v7017 = vunpack.c.h.b16 %v5660
          %v7018 = vunpack.c.l.b16 %v5661
          %v7019 = vunpack.c.h.b16 %v5661
          %v7020 = vunpack.c.l.b16 %v5662
          %v7021 = vunpack.c.h.b16 %v5662
          %v7022 = vunpack.c.l.b16 %v5663
          %v7023 = vunpack.c.h.b16 %v5663
          %v7024 = vunpack.c.l.b16 %v5664
          %v7025 = vunpack.c.h.b16 %v5664
          %v7026 = vunpack.c.l.b16 %v5665
          %v7027 = vunpack.c.h.b16 %v5665
          %v7028 = vunpack.c.l.b16 %v5666
          %v7029 = vunpack.c.h.b16 %v5666
          %v7030 = vunpack.c.l.b16 %v5667
          %v7031 = vunpack.c.h.b16 %v5667
          %v7032 = vunpack.c.l.b16 %v5668
          %v7033 = vunpack.c.h.b16 %v5668
          %v7034 = vunpack.c.l.b16 %v5669
          %v7035 = vunpack.c.h.b16 %v5669
          %v7036 = vunpack.c.l.b16 %v5670
          %v7037 = vunpack.c.h.b16 %v5670
          %v7038 = vunpack.c.l.b16 %v5671
          %v7039 = vunpack.c.h.b16 %v5671
          %v7040 = vunpack.c.l.b16 %v5672
          %v7041 = vunpack.c.h.b16 %v5672
          %v7042 = vunpack.c.l.b16 %v5673
          %v7043 = vunpack.c.h.b16 %v5673
          %v7044 = vunpack.c.l.b16 %v5674
          %v7045 = vunpack.c.h.b16 %v5674
          %v7046 = vunpack.c.l.b16 %v5675
          %v7047 = vunpack.c.h.b16 %v5675
          %v7048 = vunpack.c.l.b16 %v5676
          %v7049 = vunpack.c.h.b16 %v5676
          %v7050 = vunpack.c.l.b16 %v5677
          %v7051 = vunpack.c.h.b16 %v5677
          %v7052 = vunpack.c.l.b16 %v5678
          %v7053 = vunpack.c.h.b16 %v5678
          %v7054 = vunpack.c.l.b16 %v5679
          %v7055 = vunpack.c.h.b16 %v5679
          %v7056 = vunpack.c.l.b16 %v5680
          %v7057 = vunpack.c.h.b16 %v5680
          %v7058 = vunpack.c.l.b16 %v5681
          %v7059 = vunpack.c.h.b16 %v5681
          %v7060 = vunpack.c.l.b16 %v5682
          %v7061 = vunpack.c.h.b16 %v5682
          %v7062 = vunpack.c.l.b16 %v5683
          %v7063 = vunpack.c.h.b16 %v5683
          %v7064 = vunpack.c.l.b16 %v5684
          %v7065 = vunpack.c.h.b16 %v5684
          %v7066 = vunpack.c.l.b16 %v5685
          %v7067 = vunpack.c.h.b16 %v5685
          %v7068 = vunpack.c.l.b16 %v5686
          %v7069 = vunpack.c.h.b16 %v5686
          %v7070 = vunpack.c.l.b16 %v5687
          %v7071 = vunpack.c.h.b16 %v5687
          %v7072 = vunpack.c.l.b16 %v5688
          %v7073 = vunpack.c.h.b16 %v5688
          %v7074 = vunpack.c.l.b16 %v5689
          %v7075 = vunpack.c.h.b16 %v5689
          %v7076 = vunpack.c.l.b16 %v5690
          %v7077 = vunpack.c.h.b16 %v5690
          %v7078 = vunpack.c.l.b16 %v5691
          %v7079 = vunpack.c.h.b16 %v5691
          %v7080 = vunpack.c.l.b16 %v5692
          %v7081 = vunpack.c.h.b16 %v5692
          %v7082 = vunpack.c.l.b16 %v5693
          %v7083 = vunpack.c.h.b16 %v5693
          %v7084 = vunpack.c.l.b16 %v5694
          %v7085 = vunpack.c.h.b16 %v5694
          %v7086 = vunpack.c.l.b16 %v5695
          %v7087 = vunpack.c.h.b16 %v5695
          %v7088 = vunpack.c.l.b16 %v5696
          %v7089 = vunpack.c.h.b16 %v5696
          %v7090 = vunpack.c.l.b16 %v5697
          %v7091 = vunpack.c.h.b16 %v5697
          %v7092 = vunpack.c.l.b16 %v5698
          %v7093 = vunpack.c.h.b16 %v5698
          %v7094 = vunpack.c.l.b16 %v5699
          %v7095 = vunpack.c.h.b16 %v5699
          %v7096 = vunpack.c.l.b16 %v5700
          %v7097 = vunpack.c.h.b16 %v5700
          %v7098 = vunpack.c.l.b16 %v5701
          %v7099 = vunpack.c.h.b16 %v5701
          %v7100 = vunpack.c.l.b16 %v5702
          %v7101 = vunpack.c.h.b16 %v5702
          %v7102 = vunpack.c.l.b16 %v5703
          %v7103 = vunpack.c.h.b16 %v5703
          %v7104 = vunpack.c.l.b16 %v5704
          %v7105 = vunpack.c.h.b16 %v5704
          %v7106 = vunpack.c.l.b16 %v5705
          %v7107 = vunpack.c.h.b16 %v5705
          %v7108 = vunpack.c.l.b16 %v5706
          %v7109 = vunpack.c.h.b16 %v5706
          %v7110 = vunpack.c.l.b16 %v5707
          %v7111 = vunpack.c.h.b16 %v5707
          %v7112 = vunpack.c.l.b16 %v5708
          %v7113 = vunpack.c.h.b16 %v5708
          %v7114 = vunpack.c.l.b16 %v5709
          %v7115 = vunpack.c.h.b16 %v5709
          %v7116 = vunpack.c.l.b16 %v5710
          %v7117 = vunpack.c.h.b16 %v5710
          %v7118 = vunpack.c.l.b16 %v5711
          %v7119 = vunpack.c.h.b16 %v5711
          %v7120 = vunpack.c.l.b16 %v5712
          %v7121 = vunpack.c.h.b16 %v5712
          %v7122 = vunpack.c.l.b16 %v5713
          %v7123 = vunpack.c.h.b16 %v5713
          %v7124 = vunpack.c.l.b16 %v5714
          %v7125 = vunpack.c.h.b16 %v5714
          %v7126 = vunpack.c.l.b16 %v5715
          %v7127 = vunpack.c.h.b16 %v5715
          %v7128 = vunpack.c.l.b16 %v5716
          %v7129 = vunpack.c.h.b16 %v5716
          %v7130 = vunpack.c.l.b16 %v5717
          %v7131 = vunpack.c.h.b16 %v5717
          %v7132 = vunpack.c.l.b16 %v5718
          %v7133 = vunpack.c.h.b16 %v5718
          %v7134 = vunpack.c.l.b16 %v5719
          %v7135 = vunpack.c.h.b16 %v5719
          %v7136 = vunpack.c.l.b16 %v5720
          %v7137 = vunpack.c.h.b16 %v5720
          %v7138 = vunpack.c.l.b16 %v5721
          %v7139 = vunpack.c.h.b16 %v5721
          %v7140 = vunpack.c.l.b16 %v5722
          %v7141 = vunpack.c.h.b16 %v5722
          %v7142 = vunpack.c.l.b16 %v5723
          %v7143 = vunpack.c.h.b16 %v5723
          %v7144 = vunpack.c.l.b16 %v5724
          %v7145 = vunpack.c.h.b16 %v5724
          %v7146 = vunpack.c.l.b16 %v5725
          %v7147 = vunpack.c.h.b16 %v5725
          %v7148 = vunpack.c.l.b16 %v5726
          %v7149 = vunpack.c.h.b16 %v5726
          %v7150 = vunpack.c.l.b16 %v5727
          %v7151 = vunpack.c.h.b16 %v5727
          %v7152 = vunpack.c.l.b16 %v5728
          %v7153 = vunpack.c.h.b16 %v5728
          %v7154 = vunpack.c.l.b16 %v5729
          %v7155 = vunpack.c.h.b16 %v5729
          %v7156 = vunpack.c.l.b16 %v5730
          %v7157 = vunpack.c.h.b16 %v5730
          %v7158 = vunpack.c.l.b16 %v5731
          %v7159 = vunpack.c.h.b16 %v5731
          %v7160 = vunpack.c.l.b16 %v5732
          %v7161 = vunpack.c.h.b16 %v5732
          %v7162 = vunpack.c.l.b16 %v5733
          %v7163 = vunpack.c.h.b16 %v5733
          %v7164 = vunpack.c.l.b16 %v5734
          %v7165 = vunpack.c.h.b16 %v5734
          %v7166 = vunpack.c.l.b16 %v5735
          %v7167 = vunpack.c.h.b16 %v5735
          %v7168 = vunpack.c.l.b16 %v5736
          %v7169 = vunpack.c.h.b16 %v5736
          %v7170 = vunpack.c.l.b16 %v5737
          %v7171 = vunpack.c.h.b16 %v5737
          %v7172 = vunpack.c.l.b16 %v5738
          %v7173 = vunpack.c.h.b16 %v5738
          %v7174 = vunpack.c.l.b16 %v5739
          %v7175 = vunpack.c.h.b16 %v5739
          %v7176 = vunpack.c.l.b16 %v5740
          %v7177 = vunpack.c.h.b16 %v5740
          %v7178 = vunpack.c.l.b16 %v5741
          %v7179 = vunpack.c.h.b16 %v5741
          %v7180 = vunpack.c.l.b16 %v5742
          %v7181 = vunpack.c.h.b16 %v5742
          %v7182 = vunpack.c.l.b16 %v5743
          %v7183 = vunpack.c.h.b16 %v5743
          %v7184 = vunpack.c.l.b16 %v5744
          %v7185 = vunpack.c.h.b16 %v5744
          %v7186 = vunpack.c.l.b16 %v5745
          %v7187 = vunpack.c.h.b16 %v5745
          %v7188 = vunpack.c.l.b16 %v5746
          %v7189 = vunpack.c.h.b16 %v5746
          %v7190 = vunpack.c.l.b16 %v5747
          %v7191 = vunpack.c.h.b16 %v5747
          %v7192 = vunpack.c.l.b16 %v5748
          %v7193 = vunpack.c.h.b16 %v5748
          %v7194 = vunpack.c.l.b16 %v5749
          %v7195 = vunpack.c.h.b16 %v5749
          %v7196 = vunpack.c.l.b16 %v5750
          %v7197 = vunpack.c.h.b16 %v5750
          %v7198 = vunpack.c.l.b16 %v5751
          %v7199 = vunpack.c.h.b16 %v5751
          %v7200 = vunpack.c.l.b16 %v5752
          %v7201 = vunpack.c.h.b16 %v5752
          %v7202 = vunpack.c.l.b16 %v5753
          %v7203 = vunpack.c.h.b16 %v5753
          %v7204 = vunpack.c.l.b16 %v5754
          %v7205 = vunpack.c.h.b16 %v5754
          %v7206 = vunpack.c.l.b16 %v5755
          %v7207 = vunpack.c.h.b16 %v5755
          %v7208 = vunpack.c.l.b16 %v5756
          %v7209 = vunpack.c.h.b16 %v5756
          %v7210 = vunpack.c.l.b16 %v5757
          %v7211 = vunpack.c.h.b16 %v5757
          %v7212 = vunpack.c.l.b16 %v5758
          %v7213 = vunpack.c.h.b16 %v5758
          %v7214 = vunpack.c.l.b16 %v5759
          %v7215 = vunpack.c.h.b16 %v5759
          %v7216 = vunpack.c.l.b16 %v5760
          %v7217 = vunpack.c.h.b16 %v5760
          %v7218 = vunpack.c.l.b16 %v5761
          %v7219 = vunpack.c.h.b16 %v5761
          %v7220 = vunpack.c.l.b16 %v5762
          %v7221 = vunpack.c.h.b16 %v5762
          %v7222 = vunpack.c.l.b16 %v5763
          %v7223 = vunpack.c.h.b16 %v5763
          %v7224 = vunpack.c.l.b16 %v5764
          %v7225 = vunpack.c.h.b16 %v5764
          %v7226 = vunpack.c.l.b16 %v5765
          %v7227 = vunpack.c.h.b16 %v5765
          %v7228 = vunpack.c.l.b16 %v5766
          %v7229 = vunpack.c.h.b16 %v5766
          %v7230 = vunpack.c.l.b16 %v5767
          %v7231 = vunpack.c.h.b16 %v5767
          %v7232 = vunpack.c.l.b16 %v5768
          %v7233 = vunpack.c.h.b16 %v5768
          %v7234 = vunpack.c.l.b16 %v5769
          %v7235 = vunpack.c.h.b16 %v5769
          %v7236 = vunpack.c.l.b16 %v5770
          %v7237 = vunpack.c.h.b16 %v5770
          %v7238 = vunpack.c.l.b16 %v5771
          %v7239 = vunpack.c.h.b16 %v5771
          %v7240 = vunpack.c.l.b16 %v5772
          %v7241 = vunpack.c.h.b16 %v5772
          %v7242 = vunpack.c.l.b16 %v5773
          %v7243 = vunpack.c.h.b16 %v5773
          %v7244 = vunpack.c.l.b16 %v5774
          %v7245 = vunpack.c.h.b16 %v5774
          %v7246 = vunpack.c.l.b16 %v5775
          %v7247 = vunpack.c.h.b16 %v5775
          %v7248 = vunpack.c.l.b16 %v5776
          %v7249 = vunpack.c.h.b16 %v5776
          %v7250 = vunpack.c.l.b16 %v5777
          %v7251 = vunpack.c.h.b16 %v5777
          %v7252 = vunpack.c.l.b16 %v5778
          %v7253 = vunpack.c.h.b16 %v5778
          %v7254 = vunpack.c.l.b16 %v5779
          %v7255 = vunpack.c.h.b16 %v5779
          %v7256 = vunpack.c.l.b16 %v5780
          %v7257 = vunpack.c.h.b16 %v5780
          %v7258 = vunpack.c.l.b16 %v5781
          %v7259 = vunpack.c.h.b16 %v5781
          %v7260 = vunpack.c.l.b16 %v5782
          %v7261 = vunpack.c.h.b16 %v5782
          %v7262 = vunpack.c.l.b16 %v5783
          %v7263 = vunpack.c.h.b16 %v5783
          %v7264 = vunpack.c.l.b16 %v5784
          %v7265 = vunpack.c.h.b16 %v5784
          %v7266 = vunpack.c.l.b16 %v5785
          %v7267 = vunpack.c.h.b16 %v5785
          %v7268 = vunpack.c.l.b16 %v5786
          %v7269 = vunpack.c.h.b16 %v5786
          %v7270 = vunpack.c.l.b16 %v5787
          %v7271 = vunpack.c.h.b16 %v5787
          %v7272 = vunpack.c.l.b16 %v5788
          %v7273 = vunpack.c.h.b16 %v5788
          %v7274 = vunpack.c.l.b16 %v5789
          %v7275 = vunpack.c.h.b16 %v5789
          %v7276 = vunpack.c.l.b16 %v5790
          %v7277 = vunpack.c.h.b16 %v5790
          %v7278 = vunpack.c.l.b16 %v5791
          %v7279 = vunpack.c.h.b16 %v5791
          %v7280 = vunpack.c.l.b16 %v5792
          %v7281 = vunpack.c.h.b16 %v5792
          %v7282 = vunpack.c.l.b16 %v5793
          %v7283 = vunpack.c.h.b16 %v5793
          %v7284 = vunpack.c.l.b16 %v5794
          %v7285 = vunpack.c.h.b16 %v5794
          %v7286 = vunpack.c.l.b16 %v5795
          %v7287 = vunpack.c.h.b16 %v5795
          %v7288 = vunpack.c.l.b16 %v5796
          %v7289 = vunpack.c.h.b16 %v5796
          %v7290 = vunpack.c.l.b16 %v5797
          %v7291 = vunpack.c.h.b16 %v5797
          %v7292 = vunpack.c.l.b16 %v5798
          %v7293 = vunpack.c.h.b16 %v5798
          %v7294 = vunpack.c.l.b16 %v5799
          %v7295 = vunpack.c.h.b16 %v5799
          %v7296 = vunpack.c.l.b16 %v5800
          %v7297 = vunpack.c.h.b16 %v5800
          %v7298 = vunpack.c.l.b16 %v5801
          %v7299 = vunpack.c.h.b16 %v5801
          %v7300 = vunpack.c.l.b16 %v5802
          %v7301 = vunpack.c.h.b16 %v5802
          %v7302 = vunpack.c.l.b16 %v5803
          %v7303 = vunpack.c.h.b16 %v5803
          %v7304 = vunpack.c.l.b16 %v5804
          %v7305 = vunpack.c.h.b16 %v5804
          %v7306 = vunpack.c.l.b16 %v5805
          %v7307 = vunpack.c.h.b16 %v5805
          %v7308 = vunpack.c.l.b16 %v5806
          %v7309 = vunpack.c.h.b16 %v5806
          %v7310 = vunpack.c.l.b16 %v5807
          %v7311 = vunpack.c.h.b16 %v5807
          %v7312 = vunpack.c.l.b16 %v5808
          %v7313 = vunpack.c.h.b16 %v5808
          %v7314 = vunpack.c.l.b16 %v5809
          %v7315 = vunpack.c.h.b16 %v5809
          %v7316 = vunpack.c.l.b16 %v5810
          %v7317 = vunpack.c.h.b16 %v5810
          %v7318 = vunpack.c.l.b16 %v5811
          %v7319 = vunpack.c.h.b16 %v5811
          %v7320 = vunpack.c.l.b16 %v5812
          %v7321 = vunpack.c.h.b16 %v5812
          %v7322 = vunpack.c.l.b16 %v5813
          %v7323 = vunpack.c.h.b16 %v5813
          %v7324 = vunpack.c.l.b16 %v5814
          %v7325 = vunpack.c.h.b16 %v5814
          %v7326 = vunpack.c.l.b16 %v5815
          %v7327 = vunpack.c.h.b16 %v5815
          %v7328 = vunpack.c.l.b16 %v5816
          %v7329 = vunpack.c.h.b16 %v5816
          %v7330 = vunpack.c.l.b16 %v5817
          %v7331 = vunpack.c.h.b16 %v5817
          %v7332 = vunpack.c.l.b16 %v5818
          %v7333 = vunpack.c.h.b16 %v5818
          %v7334 = vunpack.c.l.b16 %v5819
          %v7335 = vunpack.c.h.b16 %v5819
          %v7336 = vunpack.c.l.b16 %v5820
          %v7337 = vunpack.c.h.b16 %v5820
          %v7338 = vunpack.c.l.b16 %v5821
          %v7339 = vunpack.c.h.b16 %v5821
          %v7340 = vunpack.c.l.b16 %v5822
          %v7341 = vunpack.c.h.b16 %v5822
          %v7342 = vunpack.c.l.b16 %v5823
          %v7343 = vunpack.c.h.b16 %v5823
          %v7344 = vunpack.c.l.b16 %v5824
          %v7345 = vunpack.c.h.b16 %v5824
          %v7346 = vunpack.c.l.b16 %v5825
          %v7347 = vunpack.c.h.b16 %v5825
          %v7348 = vunpack.c.l.b16 %v5826
          %v7349 = vunpack.c.h.b16 %v5826
          %v7350 = vunpack.c.l.b16 %v5827
          %v7351 = vunpack.c.h.b16 %v5827
          %v7352 = vunpack.c.l.b16 %v5828
          %v7353 = vunpack.c.h.b16 %v5828
          %v7354 = vunpack.c.l.b16 %v5829
          %v7355 = vunpack.c.h.b16 %v5829
          %v7356 = vunpack.c.l.b16 %v5830
          %v7357 = vunpack.c.h.b16 %v5830
          %v7358 = vunpack.c.l.b16 %v5831
          %v7359 = vunpack.c.h.b16 %v5831
          %v7360 = vunpack.c.l.b16 %v5832
          %v7361 = vunpack.c.h.b16 %v5832
          %v7362 = vunpack.c.l.b16 %v5833
          %v7363 = vunpack.c.h.b16 %v5833
          %v7364 = vunpack.c.l.b16 %v5834
          %v7365 = vunpack.c.h.b16 %v5834
          %v7366 = vunpack.c.l.b16 %v5835
          %v7367 = vunpack.c.h.b16 %v5835
          %v7368 = vunpack.c.l.b16 %v5836
          %v7369 = vunpack.c.h.b16 %v5836
          %v7370 = vunpack.c.l.b16 %v5837
          %v7371 = vunpack.c.h.b16 %v5837
          %v7372 = vunpack.c.l.b16 %v5838
          %v7373 = vunpack.c.h.b16 %v5838
          %v7374 = vunpack.c.l.b16 %v5839
          %v7375 = vunpack.c.h.b16 %v5839
          %v7376 = vpack.c.b16 %v6368, %v6352
          %v7377 = vpack.c.b16 %v6369, %v6353
          %v7378 = vpack.c.b16 %v6370, %v6354
          %v7379 = vpack.c.b16 %v6371, %v6355
          %v7380 = vpack.c.b16 %v6372, %v6356
          %v7381 = vpack.c.b16 %v6373, %v6357
          %v7382 = vpack.c.b16 %v6374, %v6358
          %v7383 = vpack.c.b16 %v6375, %v6359
          %v7384 = vpack.c.b16 %v6376, %v6360
          %v7385 = vpack.c.b16 %v6377, %v6361
          %v7386 = vpack.c.b16 %v6378, %v6362
          %v7387 = vpack.c.b16 %v6379, %v6363
          %v7388 = vpack.c.b16 %v6380, %v6364
          %v7389 = vpack.c.b16 %v6381, %v6365
          %v7390 = vpack.c.b16 %v6382, %v6366
          %v7391 = vpack.c.b16 %v6383, %v6367
          %v7392 = vpack.c.b16 %v6400, %v6384
          %v7393 = vpack.c.b16 %v6401, %v6385
          %v7394 = vpack.c.b16 %v6402, %v6386
          %v7395 = vpack.c.b16 %v6403, %v6387
          %v7396 = vpack.c.b16 %v6404, %v6388
          %v7397 = vpack.c.b16 %v6405, %v6389
          %v7398 = vpack.c.b16 %v6406, %v6390
          %v7399 = vpack.c.b16 %v6407, %v6391
          %v7400 = vpack.c.b16 %v6408, %v6392
          %v7401 = vpack.c.b16 %v6409, %v6393
          %v7402 = vpack.c.b16 %v6410, %v6394
          %v7403 = vpack.c.b16 %v6411, %v6395
          %v7404 = vpack.c.b16 %v6412, %v6396
          %v7405 = vpack.c.b16 %v6413, %v6397
          %v7406 = vpack.c.b16 %v6414, %v6398
          %v7407 = vpack.c.b16 %v6415, %v6399
          %v7408 = vpack.c.b16 %v6432, %v6416
          %v7409 = vpack.c.b16 %v6433, %v6417
          %v7410 = vpack.c.b16 %v6434, %v6418
          %v7411 = vpack.c.b16 %v6435, %v6419
          %v7412 = vpack.c.b16 %v6436, %v6420
          %v7413 = vpack.c.b16 %v6437, %v6421
          %v7414 = vpack.c.b16 %v6438, %v6422
          %v7415 = vpack.c.b16 %v6439, %v6423
          %v7416 = vpack.c.b16 %v6440, %v6424
          %v7417 = vpack.c.b16 %v6441, %v6425
          %v7418 = vpack.c.b16 %v6442, %v6426
          %v7419 = vpack.c.b16 %v6443, %v6427
          %v7420 = vpack.c.b16 %v6444, %v6428
          %v7421 = vpack.c.b16 %v6445, %v6429
          %v7422 = vpack.c.b16 %v6446, %v6430
          %v7423 = vpack.c.b16 %v6447, %v6431
          %v7424 = vpack.c.b16 %v6464, %v6448
          %v7425 = vpack.c.b16 %v6465, %v6449
          %v7426 = vpack.c.b16 %v6466, %v6450
          %v7427 = vpack.c.b16 %v6467, %v6451
          %v7428 = vpack.c.b16 %v6468, %v6452
          %v7429 = vpack.c.b16 %v6469, %v6453
          %v7430 = vpack.c.b16 %v6470, %v6454
          %v7431 = vpack.c.b16 %v6471, %v6455
          %v7432 = vpack.c.b16 %v6472, %v6456
          %v7433 = vpack.c.b16 %v6473, %v6457
          %v7434 = vpack.c.b16 %v6474, %v6458
          %v7435 = vpack.c.b16 %v6475, %v6459
          %v7436 = vpack.c.b16 %v6476, %v6460
          %v7437 = vpack.c.b16 %v6477, %v6461
          %v7438 = vpack.c.b16 %v6478, %v6462
          %v7439 = vpack.c.b16 %v6479, %v6463
          %v7440 = vpack.c.b16 %v6496, %v6480
          %v7441 = vpack.c.b16 %v6497, %v6481
          %v7442 = vpack.c.b16 %v6498, %v6482
          %v7443 = vpack.c.b16 %v6499, %v6483
          %v7444 = vpack.c.b16 %v6500, %v6484
          %v7445 = vpack.c.b16 %v6501, %v6485
          %v7446 = vpack.c.b16 %v6502, %v6486
          %v7447 = vpack.c.b16 %v6503, %v6487
          %v7448 = vpack.c.b16 %v6504, %v6488
          %v7449 = vpack.c.b16 %v6505, %v6489
          %v7450 = vpack.c.b16 %v6506, %v6490
          %v7451 = vpack.c.b16 %v6507, %v6491
          %v7452 = vpack.c.b16 %v6508, %v6492
          %v7453 = vpack.c.b16 %v6509, %v6493
          %v7454 = vpack.c.b16 %v6510, %v6494
          %v7455 = vpack.c.b16 %v6511, %v6495
          %v7456 = vpack.c.b16 %v6528, %v6512
          %v7457 = vpack.c.b16 %v6529, %v6513
          %v7458 = vpack.c.b16 %v6530, %v6514
          %v7459 = vpack.c.b16 %v6531, %v6515
          %v7460 = vpack.c.b16 %v6532, %v6516
          %v7461 = vpack.c.b16 %v6533, %v6517
          %v7462 = vpack.c.b16 %v6534, %v6518
          %v7463 = vpack.c.b16 %v6535, %v6519
          %v7464 = vpack.c.b16 %v6536, %v6520
          %v7465 = vpack.c.b16 %v6537, %v6521
          %v7466 = vpack.c.b16 %v6538, %v6522
          %v7467 = vpack.c.b16 %v6539, %v6523
          %v7468 = vpack.c.b16 %v6540, %v6524
          %v7469 = vpack.c.b16 %v6541, %v6525
          %v7470 = vpack.c.b16 %v6542, %v6526
          %v7471 = vpack.c.b16 %v6543, %v6527
          %v7472 = vpack.c.b16 %v6560, %v6544
          %v7473 = vpack.c.b16 %v6561, %v6545
          %v7474 = vpack.c.b16 %v6562, %v6546
          %v7475 = vpack.c.b16 %v6563, %v6547
          %v7476 = vpack.c.b16 %v6564, %v6548
          %v7477 = vpack.c.b16 %v6565, %v6549
          %v7478 = vpack.c.b16 %v6566, %v6550
          %v7479 = vpack.c.b16 %v6567, %v6551
          %v7480 = vpack.c.b16 %v6568, %v6552
          %v7481 = vpack.c.b16 %v6569, %v6553
          %v7482 = vpack.c.b16 %v6570, %v6554
          %v7483 = vpack.c.b16 %v6571, %v6555
          %v7484 = vpack.c.b16 %v6572, %v6556
          %v7485 = vpack.c.b16 %v6573, %v6557
          %v7486 = vpack.c.b16 %v6574, %v6558
          %v7487 = vpack.c.b16 %v6575, %v6559
          %v7488 = vpack.c.b16 %v6592, %v6576
          %v7489 = vpack.c.b16 %v6593, %v6577
          %v7490 = vpack.c.b16 %v6594, %v6578
          %v7491 = vpack.c.b16 %v6595, %v6579
          %v7492 = vpack.c.b16 %v6596, %v6580
          %v7493 = vpack.c.b16 %v6597, %v6581
          %v7494 = vpack.c.b16 %v6598, %v6582
          %v7495 = vpack.c.b16 %v6599, %v6583
          %v7496 = vpack.c.b16 %v6600, %v6584
          %v7497 = vpack.c.b16 %v6601, %v6585
          %v7498 = vpack.c.b16 %v6602, %v6586
          %v7499 = vpack.c.b16 %v6603, %v6587
          %v7500 = vpack.c.b16 %v6604, %v6588
          %v7501 = vpack.c.b16 %v6605, %v6589
          %v7502 = vpack.c.b16 %v6606, %v6590
          %v7503 = vpack.c.b16 %v6607, %v6591
          %v7504 = vpack.c.b16 %v6624, %v6608
          %v7505 = vpack.c.b16 %v6625, %v6609
          %v7506 = vpack.c.b16 %v6626, %v6610
          %v7507 = vpack.c.b16 %v6627, %v6611
          %v7508 = vpack.c.b16 %v6628, %v6612
          %v7509 = vpack.c.b16 %v6629, %v6613
          %v7510 = vpack.c.b16 %v6630, %v6614
          %v7511 = vpack.c.b16 %v6631, %v6615
          %v7512 = vpack.c.b16 %v6632, %v6616
          %v7513 = vpack.c.b16 %v6633, %v6617
          %v7514 = vpack.c.b16 %v6634, %v6618
          %v7515 = vpack.c.b16 %v6635, %v6619
          %v7516 = vpack.c.b16 %v6636, %v6620
          %v7517 = vpack.c.b16 %v6637, %v6621
          %v7518 = vpack.c.b16 %v6638, %v6622
          %v7519 = vpack.c.b16 %v6639, %v6623
          %v7520 = vpack.c.b16 %v6656, %v6640
          %v7521 = vpack.c.b16 %v6657, %v6641
          %v7522 = vpack.c.b16 %v6658, %v6642
          %v7523 = vpack.c.b16 %v6659, %v6643
          %v7524 = vpack.c.b16 %v6660, %v6644
          %v7525 = vpack.c.b16 %v6661, %v6645
          %v7526 = vpack.c.b16 %v6662, %v6646
          %v7527 = vpack.c.b16 %v6663, %v6647
          %v7528 = vpack.c.b16 %v6664, %v6648
          %v7529 = vpack.c.b16 %v6665, %v6649
          %v7530 = vpack.c.b16 %v6666, %v6650
          %v7531 = vpack.c.b16 %v6667, %v6651
          %v7532 = vpack.c.b16 %v6668, %v6652
          %v7533 = vpack.c.b16 %v6669, %v6653
          %v7534 = vpack.c.b16 %v6670, %v6654
          %v7535 = vpack.c.b16 %v6671, %v6655
          %v7536 = vpack.c.b16 %v6688, %v6672
          %v7537 = vpack.c.b16 %v6689, %v6673
          %v7538 = vpack.c.b16 %v6690, %v6674
          %v7539 = vpack.c.b16 %v6691, %v6675
          %v7540 = vpack.c.b16 %v6692, %v6676
          %v7541 = vpack.c.b16 %v6693, %v6677
          %v7542 = vpack.c.b16 %v6694, %v6678
          %v7543 = vpack.c.b16 %v6695, %v6679
          %v7544 = vpack.c.b16 %v6696, %v6680
          %v7545 = vpack.c.b16 %v6697, %v6681
          %v7546 = vpack.c.b16 %v6698, %v6682
          %v7547 = vpack.c.b16 %v6699, %v6683
          %v7548 = vpack.c.b16 %v6700, %v6684
          %v7549 = vpack.c.b16 %v6701, %v6685
          %v7550 = vpack.c.b16 %v6702, %v6686
          %v7551 = vpack.c.b16 %v6703, %v6687
          %v7552 = vpack.c.b16 %v6720, %v6704
          %v7553 = vpack.c.b16 %v6721, %v6705
          %v7554 = vpack.c.b16 %v6722, %v6706
          %v7555 = vpack.c.b16 %v6723, %v6707
          %v7556 = vpack.c.b16 %v6724, %v6708
          %v7557 = vpack.c.b16 %v6725, %v6709
          %v7558 = vpack.c.b16 %v6726, %v6710
          %v7559 = vpack.c.b16 %v6727, %v6711
          %v7560 = vpack.c.b16 %v6728, %v6712
          %v7561 = vpack.c.b16 %v6729, %v6713
          %v7562 = vpack.c.b16 %v6730, %v6714
          %v7563 = vpack.c.b16 %v6731, %v6715
          %v7564 = vpack.c.b16 %v6732, %v6716
          %v7565 = vpack.c.b16 %v6733, %v6717
          %v7566 = vpack.c.b16 %v6734, %v6718
          %v7567 = vpack.c.b16 %v6735, %v6719
          %v7568 = vpack.c.b16 %v6752, %v6736
          %v7569 = vpack.c.b16 %v6753, %v6737
          %v7570 = vpack.c.b16 %v6754, %v6738
          %v7571 = vpack.c.b16 %v6755, %v6739
          %v7572 = vpack.c.b16 %v6756, %v6740
          %v7573 = vpack.c.b16 %v6757, %v6741
          %v7574 = vpack.c.b16 %v6758, %v6742
          %v7575 = vpack.c.b16 %v6759, %v6743
          %v7576 = vpack.c.b16 %v6760, %v6744
          %v7577 = vpack.c.b16 %v6761, %v6745
          %v7578 = vpack.c.b16 %v6762, %v6746
          %v7579 = vpack.c.b16 %v6763, %v6747
          %v7580 = vpack.c.b16 %v6764, %v6748
          %v7581 = vpack.c.b16 %v6765, %v6749
          %v7582 = vpack.c.b16 %v6766, %v6750
          %v7583 = vpack.c.b16 %v6767, %v6751
          %v7584 = vpack.c.b16 %v6784, %v6768
          %v7585 = vpack.c.b16 %v6785, %v6769
          %v7586 = vpack.c.b16 %v6786, %v6770
          %v7587 = vpack.c.b16 %v6787, %v6771
          %v7588 = vpack.c.b16 %v6788, %v6772
          %v7589 = vpack.c.b16 %v6789, %v6773
          %v7590 = vpack.c.b16 %v6790, %v6774
          %v7591 = vpack.c.b16 %v6791, %v6775
          %v7592 = vpack.c.b16 %v6792, %v6776
          %v7593 = vpack.c.b16 %v6793, %v6777
          %v7594 = vpack.c.b16 %v6794, %v6778
          %v7595 = vpack.c.b16 %v6795, %v6779
          %v7596 = vpack.c.b16 %v6796, %v6780
          %v7597 = vpack.c.b16 %v6797, %v6781
          %v7598 = vpack.c.b16 %v6798, %v6782
          %v7599 = vpack.c.b16 %v6799, %v6783
          %v7600 = vpack.c.b16 %v6816, %v6800
          %v7601 = vpack.c.b16 %v6817, %v6801
          %v7602 = vpack.c.b16 %v6818, %v6802
          %v7603 = vpack.c.b16 %v6819, %v6803
          %v7604 = vpack.c.b16 %v6820, %v6804
          %v7605 = vpack.c.b16 %v6821, %v6805
          %v7606 = vpack.c.b16 %v6822, %v6806
          %v7607 = vpack.c.b16 %v6823, %v6807
          %v7608 = vpack.c.b16 %v6824, %v6808
          %v7609 = vpack.c.b16 %v6825, %v6809
          %v7610 = vpack.c.b16 %v6826, %v6810
          %v7611 = vpack.c.b16 %v6827, %v6811
          %v7612 = vpack.c.b16 %v6828, %v6812
          %v7613 = vpack.c.b16 %v6829, %v6813
          %v7614 = vpack.c.b16 %v6830, %v6814
          %v7615 = vpack.c.b16 %v6831, %v6815
          %v7616 = vpack.c.b16 %v6848, %v6832
          %v7617 = vpack.c.b16 %v6849, %v6833
          %v7618 = vpack.c.b16 %v6850, %v6834
          %v7619 = vpack.c.b16 %v6851, %v6835
          %v7620 = vpack.c.b16 %v6852, %v6836
          %v7621 = vpack.c.b16 %v6853, %v6837
          %v7622 = vpack.c.b16 %v6854, %v6838
          %v7623 = vpack.c.b16 %v6855, %v6839
          %v7624 = vpack.c.b16 %v6856, %v6840
          %v7625 = vpack.c.b16 %v6857, %v6841
          %v7626 = vpack.c.b16 %v6858, %v6842
          %v7627 = vpack.c.b16 %v6859, %v6843
          %v7628 = vpack.c.b16 %v6860, %v6844
          %v7629 = vpack.c.b16 %v6861, %v6845
          %v7630 = vpack.c.b16 %v6862, %v6846
          %v7631 = vpack.c.b16 %v6863, %v6847
          %v7632 = vpack.c.b16 %v6880, %v6864
          %v7633 = vpack.c.b16 %v6881, %v6865
          %v7634 = vpack.c.b16 %v6882, %v6866
          %v7635 = vpack.c.b16 %v6883, %v6867
          %v7636 = vpack.c.b16 %v6884, %v6868
          %v7637 = vpack.c.b16 %v6885, %v6869
          %v7638 = vpack.c.b16 %v6886, %v6870
          %v7639 = vpack.c.b16 %v6887, %v6871
          %v7640 = vpack.c.b16 %v6888, %v6872
          %v7641 = vpack.c.b16 %v6889, %v6873
          %v7642 = vpack.c.b16 %v6890, %v6874
          %v7643 = vpack.c.b16 %v6891, %v6875
          %v7644 = vpack.c.b16 %v6892, %v6876
          %v7645 = vpack.c.b16 %v6893, %v6877
          %v7646 = vpack.c.b16 %v6894, %v6878
          %v7647 = vpack.c.b16 %v6895, %v6879
          %v7648 = vpack.c.b16 %v6912, %v6896
          %v7649 = vpack.c.b16 %v6913, %v6897
          %v7650 = vpack.c.b16 %v6914, %v6898
          %v7651 = vpack.c.b16 %v6915, %v6899
          %v7652 = vpack.c.b16 %v6916, %v6900
          %v7653 = vpack.c.b16 %v6917, %v6901
          %v7654 = vpack.c.b16 %v6918, %v6902
          %v7655 = vpack.c.b16 %v6919, %v6903
          %v7656 = vpack.c.b16 %v6920, %v6904
          %v7657 = vpack.c.b16 %v6921, %v6905
          %v7658 = vpack.c.b16 %v6922, %v6906
          %v7659 = vpack.c.b16 %v6923, %v6907
          %v7660 = vpack.c.b16 %v6924, %v6908
          %v7661 = vpack.c.b16 %v6925, %v6909
          %v7662 = vpack.c.b16 %v6926, %v6910
          %v7663 = vpack.c.b16 %v6927, %v6911
          %v7664 = vpack.c.b16 %v6944, %v6928
          %v7665 = vpack.c.b16 %v6945, %v6929
          %v7666 = vpack.c.b16 %v6946, %v6930
          %v7667 = vpack.c.b16 %v6947, %v6931
          %v7668 = vpack.c.b16 %v6948, %v6932
          %v7669 = vpack.c.b16 %v6949, %v6933
          %v7670 = vpack.c.b16 %v6950, %v6934
          %v7671 = vpack.c.b16 %v6951, %v6935
          %v7672 = vpack.c.b16 %v6952, %v6936
          %v7673 = vpack.c.b16 %v6953, %v6937
          %v7674 = vpack.c.b16 %v6954, %v6938
          %v7675 = vpack.c.b16 %v6955, %v6939
          %v7676 = vpack.c.b16 %v6956, %v6940
          %v7677 = vpack.c.b16 %v6957, %v6941
          %v7678 = vpack.c.b16 %v6958, %v6942
          %v7679 = vpack.c.b16 %v6959, %v6943
          %v7680 = vpack.c.b16 %v6976, %v6960
          %v7681 = vpack.c.b16 %v6977, %v6961
          %v7682 = vpack.c.b16 %v6978, %v6962
          %v7683 = vpack.c.b16 %v6979, %v6963
          %v7684 = vpack.c.b16 %v6980, %v6964
          %v7685 = vpack.c.b16 %v6981, %v6965
          %v7686 = vpack.c.b16 %v6982, %v6966
          %v7687 = vpack.c.b16 %v6983, %v6967
          %v7688 = vpack.c.b16 %v6984, %v6968
          %v7689 = vpack.c.b16 %v6985, %v6969
          %v7690 = vpack.c.b16 %v6986, %v6970
          %v7691 = vpack.c.b16 %v6987, %v6971
          %v7692 = vpack.c.b16 %v6988, %v6972
          %v7693 = vpack.c.b16 %v6989, %v6973
          %v7694 = vpack.c.b16 %v6990, %v6974
          %v7695 = vpack.c.b16 %v6991, %v6975
          %v7696 = vpack.c.b16 %v7008, %v6992
          %v7697 = vpack.c.b16 %v7009, %v6993
          %v7698 = vpack.c.b16 %v7010, %v6994
          %v7699 = vpack.c.b16 %v7011, %v6995
          %v7700 = vpack.c.b16 %v7012, %v6996
          %v7701 = vpack.c.b16 %v7013, %v6997
          %v7702 = vpack.c.b16 %v7014, %v6998
          %v7703 = vpack.c.b16 %v7015, %v6999
          %v7704 = vpack.c.b16 %v7016, %v7000
          %v7705 = vpack.c.b16 %v7017, %v7001
          %v7706 = vpack.c.b16 %v7018, %v7002
          %v7707 = vpack.c.b16 %v7019, %v7003
          %v7708 = vpack.c.b16 %v7020, %v7004
          %v7709 = vpack.c.b16 %v7021, %v7005
          %v7710 = vpack.c.b16 %v7022, %v7006
          %v7711 = vpack.c.b16 %v7023, %v7007
          %v7712 = vpack.c.b16 %v7040, %v7024
          %v7713 = vpack.c.b16 %v7041, %v7025
          %v7714 = vpack.c.b16 %v7042, %v7026
          %v7715 = vpack.c.b16 %v7043, %v7027
          %v7716 = vpack.c.b16 %v7044, %v7028
          %v7717 = vpack.c.b16 %v7045, %v7029
          %v7718 = vpack.c.b16 %v7046, %v7030
          %v7719 = vpack.c.b16 %v7047, %v7031
          %v7720 = vpack.c.b16 %v7048, %v7032
          %v7721 = vpack.c.b16 %v7049, %v7033
          %v7722 = vpack.c.b16 %v7050, %v7034
          %v7723 = vpack.c.b16 %v7051, %v7035
          %v7724 = vpack.c.b16 %v7052, %v7036
          %v7725 = vpack.c.b16 %v7053, %v7037
          %v7726 = vpack.c.b16 %v7054, %v7038
          %v7727 = vpack.c.b16 %v7055, %v7039
          %v7728 = vpack.c.b16 %v7072, %v7056
          %v7729 = vpack.c.b16 %v7073, %v7057
          %v7730 = vpack.c.b16 %v7074, %v7058
          %v7731 = vpack.c.b16 %v7075, %v7059
          %v7732 = vpack.c.b16 %v7076, %v7060
          %v7733 = vpack.c.b16 %v7077, %v7061
          %v7734 = vpack.c.b16 %v7078, %v7062
          %v7735 = vpack.c.b16 %v7079, %v7063
          %v7736 = vpack.c.b16 %v7080, %v7064
          %v7737 = vpack.c.b16 %v7081, %v7065
          %v7738 = vpack.c.b16 %v7082, %v7066
          %v7739 = vpack.c.b16 %v7083, %v7067
          %v7740 = vpack.c.b16 %v7084, %v7068
          %v7741 = vpack.c.b16 %v7085, %v7069
          %v7742 = vpack.c.b16 %v7086, %v7070
          %v7743 = vpack.c.b16 %v7087, %v7071
          %v7744 = vpack.c.b16 %v7104, %v7088
          %v7745 = vpack.c.b16 %v7105, %v7089
          %v7746 = vpack.c.b16 %v7106, %v7090
          %v7747 = vpack.c.b16 %v7107, %v7091
          %v7748 = vpack.c.b16 %v7108, %v7092
          %v7749 = vpack.c.b16 %v7109, %v7093
          %v7750 = vpack.c.b16 %v7110, %v7094
          %v7751 = vpack.c.b16 %v7111, %v7095
          %v7752 = vpack.c.b16 %v7112, %v7096
          %v7753 = vpack.c.b16 %v7113, %v7097
          %v7754 = vpack.c.b16 %v7114, %v7098
          %v7755 = vpack.c.b16 %v7115, %v7099
          %v7756 = vpack.c.b16 %v7116, %v7100
          %v7757 = vpack.c.b16 %v7117, %v7101
          %v7758 = vpack.c.b16 %v7118, %v7102
          %v7759 = vpack.c.b16 %v7119, %v7103
          %v7760 = vpack.c.b16 %v7136, %v7120
          %v7761 = vpack.c.b16 %v7137, %v7121
          %v7762 = vpack.c.b16 %v7138, %v7122
          %v7763 = vpack.c.b16 %v7139, %v7123
          %v7764 = vpack.c.b16 %v7140, %v7124
          %v7765 = vpack.c.b16 %v7141, %v7125
          %v7766 = vpack.c.b16 %v7142, %v7126
          %v7767 = vpack.c.b16 %v7143, %v7127
          %v7768 = vpack.c.b16 %v7144, %v7128
          %v7769 = vpack.c.b16 %v7145, %v7129
          %v7770 = vpack.c.b16 %v7146, %v7130
          %v7771 = vpack.c.b16 %v7147, %v7131
          %v7772 = vpack.c.b16 %v7148, %v7132
          %v7773 = vpack.c.b16 %v7149, %v7133
          %v7774 = vpack.c.b16 %v7150, %v7134
          %v7775 = vpack.c.b16 %v7151, %v7135
          %v7776 = vpack.c.b16 %v7168, %v7152
          %v7777 = vpack.c.b16 %v7169, %v7153
          %v7778 = vpack.c.b16 %v7170, %v7154
          %v7779 = vpack.c.b16 %v7171, %v7155
          %v7780 = vpack.c.b16 %v7172, %v7156
          %v7781 = vpack.c.b16 %v7173, %v7157
          %v7782 = vpack.c.b16 %v7174, %v7158
          %v7783 = vpack.c.b16 %v7175, %v7159
          %v7784 = vpack.c.b16 %v7176, %v7160
          %v7785 = vpack.c.b16 %v7177, %v7161
          %v7786 = vpack.c.b16 %v7178, %v7162
          %v7787 = vpack.c.b16 %v7179, %v7163
          %v7788 = vpack.c.b16 %v7180, %v7164
          %v7789 = vpack.c.b16 %v7181, %v7165
          %v7790 = vpack.c.b16 %v7182, %v7166
          %v7791 = vpack.c.b16 %v7183, %v7167
          %v7792 = vpack.c.b16 %v7200, %v7184
          %v7793 = vpack.c.b16 %v7201, %v7185
          %v7794 = vpack.c.b16 %v7202, %v7186
          %v7795 = vpack.c.b16 %v7203, %v7187
          %v7796 = vpack.c.b16 %v7204, %v7188
          %v7797 = vpack.c.b16 %v7205, %v7189
          %v7798 = vpack.c.b16 %v7206, %v7190
          %v7799 = vpack.c.b16 %v7207, %v7191
          %v7800 = vpack.c.b16 %v7208, %v7192
          %v7801 = vpack.c.b16 %v7209, %v7193
          %v7802 = vpack.c.b16 %v7210, %v7194
          %v7803 = vpack.c.b16 %v7211, %v7195
          %v7804 = vpack.c.b16 %v7212, %v7196
          %v7805 = vpack.c.b16 %v7213, %v7197
          %v7806 = vpack.c.b16 %v7214, %v7198
          %v7807 = vpack.c.b16 %v7215, %v7199
          %v7808 = vpack.c.b16 %v7232, %v7216
          %v7809 = vpack.c.b16 %v7233, %v7217
          %v7810 = vpack.c.b16 %v7234, %v7218
          %v7811 = vpack.c.b16 %v7235, %v7219
          %v7812 = vpack.c.b16 %v7236, %v7220
          %v7813 = vpack.c.b16 %v7237, %v7221
          %v7814 = vpack.c.b16 %v7238, %v7222
          %v7815 = vpack.c.b16 %v7239, %v7223
          %v7816 = vpack.c.b16 %v7240, %v7224
          %v7817 = vpack.c.b16 %v7241, %v7225
          %v7818 = vpack.c.b16 %v7242, %v7226
          %v7819 = vpack.c.b16 %v7243, %v7227
          %v7820 = vpack.c.b16 %v7244, %v7228
          %v7821 = vpack.c.b16 %v7245, %v7229
          %v7822 = vpack.c.b16 %v7246, %v7230
          %v7823 = vpack.c.b16 %v7247, %v7231
          %v7824 = vpack.c.b16 %v7264, %v7248
          %v7825 = vpack.c.b16 %v7265, %v7249
          %v7826 = vpack.c.b16 %v7266, %v7250
          %v7827 = vpack.c.b16 %v7267, %v7251
          %v7828 = vpack.c.b16 %v7268, %v7252
          %v7829 = vpack.c.b16 %v7269, %v7253
          %v7830 = vpack.c.b16 %v7270, %v7254
          %v7831 = vpack.c.b16 %v7271, %v7255
          %v7832 = vpack.c.b16 %v7272, %v7256
          %v7833 = vpack.c.b16 %v7273, %v7257
          %v7834 = vpack.c.b16 %v7274, %v7258
          %v7835 = vpack.c.b16 %v7275, %v7259
          %v7836 = vpack.c.b16 %v7276, %v7260
          %v7837 = vpack.c.b16 %v7277, %v7261
          %v7838 = vpack.c.b16 %v7278, %v7262
          %v7839 = vpack.c.b16 %v7279, %v7263
          %v7840 = vpack.c.b16 %v7296, %v7280
          %v7841 = vpack.c.b16 %v7297, %v7281
          %v7842 = vpack.c.b16 %v7298, %v7282
          %v7843 = vpack.c.b16 %v7299, %v7283
          %v7844 = vpack.c.b16 %v7300, %v7284
          %v7845 = vpack.c.b16 %v7301, %v7285
          %v7846 = vpack.c.b16 %v7302, %v7286
          %v7847 = vpack.c.b16 %v7303, %v7287
          %v7848 = vpack.c.b16 %v7304, %v7288
          %v7849 = vpack.c.b16 %v7305, %v7289
          %v7850 = vpack.c.b16 %v7306, %v7290
          %v7851 = vpack.c.b16 %v7307, %v7291
          %v7852 = vpack.c.b16 %v7308, %v7292
          %v7853 = vpack.c.b16 %v7309, %v7293
          %v7854 = vpack.c.b16 %v7310, %v7294
          %v7855 = vpack.c.b16 %v7311, %v7295
          %v7856 = vpack.c.b16 %v7328, %v7312
          %v7857 = vpack.c.b16 %v7329, %v7313
          %v7858 = vpack.c.b16 %v7330, %v7314
          %v7859 = vpack.c.b16 %v7331, %v7315
          %v7860 = vpack.c.b16 %v7332, %v7316
          %v7861 = vpack.c.b16 %v7333, %v7317
          %v7862 = vpack.c.b16 %v7334, %v7318
          %v7863 = vpack.c.b16 %v7335, %v7319
          %v7864 = vpack.c.b16 %v7336, %v7320
          %v7865 = vpack.c.b16 %v7337, %v7321
          %v7866 = vpack.c.b16 %v7338, %v7322
          %v7867 = vpack.c.b16 %v7339, %v7323
          %v7868 = vpack.c.b16 %v7340, %v7324
          %v7869 = vpack.c.b16 %v7341, %v7325
          %v7870 = vpack.c.b16 %v7342, %v7326
          %v7871 = vpack.c.b16 %v7343, %v7327
          %v7872 = vpack.c.b16 %v7360, %v7344
          %v7873 = vpack.c.b16 %v7361, %v7345
          %v7874 = vpack.c.b16 %v7362, %v7346
          %v7875 = vpack.c.b16 %v7363, %v7347
          %v7876 = vpack.c.b16 %v7364, %v7348
          %v7877 = vpack.c.b16 %v7365, %v7349
          %v7878 = vpack.c.b16 %v7366, %v7350
          %v7879 = vpack.c.b16 %v7367, %v7351
          %v7880 = vpack.c.b16 %v7368, %v7352
          %v7881 = vpack.c.b16 %v7369, %v7353
          %v7882 = vpack.c.b16 %v7370, %v7354
          %v7883 = vpack.c.b16 %v7371, %v7355
          %v7884 = vpack.c.b16 %v7372, %v7356
          %v7885 = vpack.c.b16 %v7373, %v7357
          %v7886 = vpack.c.b16 %v7374, %v7358
          %v7887 = vpack.c.b16 %v7375, %v7359
          %8400 = vmatprep.subr.bf16.mxu0 %v7489
          %8401 = vmatpush1.bf16.msra.mxu0 %v7488
          %8402 = vmatprep.subr.bf16.mxu0 %v7473
          %8403 = vmatpush1.bf16.msra.mxu0 %v7472
          %8404 = vmatprep.subr.bf16.mxu0 %v7457
          %8405 = vmatpush1.bf16.msra.mxu0 %v7456
          %8406 = vmatprep.subr.bf16.mxu0 %v7441
          %8407 = vmatpush1.bf16.msra.mxu0 %v7440
          %8408 = vmatprep.subr.bf16.mxu0 %v7425
          %8409 = vmatpush1.bf16.msra.mxu0 %v7424
          %8410 = vmatprep.subr.bf16.mxu0 %v7409
          %8411 = vmatpush1.bf16.msra.mxu0 %v7408
          %8412 = vmatprep.subr.bf16.mxu0 %v7393
          %8413 = vmatpush1.bf16.msra.mxu0 %v7392
          %8414 = vmatprep.subr.bf16.mxu0 %v7377
          %8415 = vmatpush1.bf16.msra.mxu0 %v7376
          %8416 = vmatprep.subr.bf16.mxu0 %v7617
          %8417 = vmatpush2.bf16.msra.mxu0 %v7616
          %8418 = vmatprep.subr.bf16.mxu0 %v7601
          %8419 = vmatpush2.bf16.msra.mxu0 %v7600
          %8420 = vmatprep.subr.bf16.mxu0 %v7585
          %8421 = vmatpush2.bf16.msra.mxu0 %v7584
          %8422 = vmatprep.subr.bf16.mxu0 %v7569
          %8423 = vmatpush2.bf16.msra.mxu0 %v7568
          %8424 = vmatprep.subr.bf16.mxu0 %v7553
          %8425 = vmatpush2.bf16.msra.mxu0 %v7552
          %8426 = vmatprep.subr.bf16.mxu0 %v7537
          %8427 = vmatpush2.bf16.msra.mxu0 %v7536
          %8428 = vmatprep.subr.bf16.mxu0 %v7521
          %8429 = vmatpush2.bf16.msra.mxu0 %v7520
          %8430 = vmatprep.subr.bf16.mxu0 %v7505
          %8431 = vmatpush2.bf16.msra.mxu0 %v7504
          %8432 = vmatprep.mubr.bf16.mxu0 %v5325
          %8433 = vmatmul.mubr.bf16.gmra.mxu0 %v5324
          %v8434 = vpop.f32.mrf.mxu0
          %v8435 = vadd.f32 0.0, %v8434
          %v8436 = vpop.f32.mrf.mxu0
          %v8437 = vadd.f32 0.0, %v8436
          %v8438 = vpop.f32.mrf.mxu0
          %v8439 = vpop.f32.mrf.mxu0
          %8440 = vdwg.mxu0
          %8441 = vmatprep.subr.bf16.mxu0 %v7745
          %8442 = vmatpush1.bf16.msra.mxu0 %v7744
          %8443 = vmatprep.subr.bf16.mxu0 %v7729
          %8444 = vmatpush1.bf16.msra.mxu0 %v7728
          %8445 = vmatprep.subr.bf16.mxu0 %v7713
          %8446 = vmatpush1.bf16.msra.mxu0 %v7712
          %8447 = vmatprep.subr.bf16.mxu0 %v7697
          %8448 = vmatpush1.bf16.msra.mxu0 %v7696
          %8449 = vmatprep.subr.bf16.mxu0 %v7681
          %8450 = vmatpush1.bf16.msra.mxu0 %v7680
          %8451 = vmatprep.subr.bf16.mxu0 %v7665
          %8452 = vmatpush1.bf16.msra.mxu0 %v7664
          %8453 = vmatprep.subr.bf16.mxu0 %v7649
          %8454 = vmatpush1.bf16.msra.mxu0 %v7648
          %8455 = vmatprep.subr.bf16.mxu0 %v7633
          %8456 = vmatpush1.bf16.msra.mxu0 %v7632
          %8457 = vmatprep.subr.bf16.mxu0 %v7873
          %8458 = vmatpush2.bf16.msra.mxu0 %v7872
          %8459 = vmatprep.subr.bf16.mxu0 %v7857
          %8460 = vmatpush2.bf16.msra.mxu0 %v7856
          %8461 = vmatprep.subr.bf16.mxu0 %v7841
          %8462 = vmatpush2.bf16.msra.mxu0 %v7840
          %8463 = vmatprep.subr.bf16.mxu0 %v7825
          %8464 = vmatpush2.bf16.msra.mxu0 %v7824
          %8465 = vmatprep.subr.bf16.mxu0 %v7809
          %8466 = vmatpush2.bf16.msra.mxu0 %v7808
          %8467 = vmatprep.subr.bf16.mxu0 %v7793
          %8468 = vmatpush2.bf16.msra.mxu0 %v7792
          %8469 = vmatprep.subr.bf16.mxu0 %v7777
          %8470 = vmatpush2.bf16.msra.mxu0 %v7776
          %8471 = vmatprep.subr.bf16.mxu0 %v7761
          %8472 = vmatpush2.bf16.msra.mxu0 %v7760
          %8473 = vmatprep.mubr.bf16.mxu0 %v5327
          %8474 = vmatmul.mubr.bf16.gmra.mxu0 %v5326
          %v8475 = vpop.f32.mrf.mxu0
          %v8476 = vadd.f32 %v8435, %v8475
          %v8477 = vpop.f32.mrf.mxu0
          %v8478 = vadd.f32 %v8437, %v8477
          %v8479 = vpop.f32.mrf.mxu0
          %v8480 = vpop.f32.mrf.mxu0
          %8481 = vdwg.mxu0
          %8482 = vmatprep.subr.bf16.mxu0 %v7491
          %8483 = vmatpush1.bf16.msra.mxu0 %v7490
          %8484 = vmatprep.subr.bf16.mxu0 %v7475
          %8485 = vmatpush1.bf16.msra.mxu0 %v7474
          %8486 = vmatprep.subr.bf16.mxu0 %v7459
          %8487 = vmatpush1.bf16.msra.mxu0 %v7458
          %8488 = vmatprep.subr.bf16.mxu0 %v7443
          %8489 = vmatpush1.bf16.msra.mxu0 %v7442
          %8490 = vmatprep.subr.bf16.mxu0 %v7427
          %8491 = vmatpush1.bf16.msra.mxu0 %v7426
          %8492 = vmatprep.subr.bf16.mxu0 %v7411
          %8493 = vmatpush1.bf16.msra.mxu0 %v7410
          %8494 = vmatprep.subr.bf16.mxu0 %v7395
          %8495 = vmatpush1.bf16.msra.mxu0 %v7394
          %8496 = vmatprep.subr.bf16.mxu0 %v7379
          %8497 = vmatpush1.bf16.msra.mxu0 %v7378
          %8498 = vmatprep.subr.bf16.mxu0 %v7619
          %8499 = vmatpush2.bf16.msra.mxu0 %v7618
          %8500 = vmatprep.subr.bf16.mxu0 %v7603
          %8501 = vmatpush2.bf16.msra.mxu0 %v7602
          %8502 = vmatprep.subr.bf16.mxu0 %v7587
          %8503 = vmatpush2.bf16.msra.mxu0 %v7586
          %8504 = vmatprep.subr.bf16.mxu0 %v7571
          %8505 = vmatpush2.bf16.msra.mxu0 %v7570
          %8506 = vmatprep.subr.bf16.mxu0 %v7555
          %8507 = vmatpush2.bf16.msra.mxu0 %v7554
          %8508 = vmatprep.subr.bf16.mxu0 %v7539
          %8509 = vmatpush2.bf16.msra.mxu0 %v7538
          %8510 = vmatprep.subr.bf16.mxu0 %v7523
          %8511 = vmatpush2.bf16.msra.mxu0 %v7522
          %8512 = vmatprep.subr.bf16.mxu0 %v7507
          %8513 = vmatpush2.bf16.msra.mxu0 %v7506
          %8514 = vmatprep.mubr.bf16.mxu0 %v5325
          %8515 = vmatmul.mubr.bf16.gmra.mxu0 %v5324
          %v8516 = vpop.f32.mrf.mxu0
          %v8517 = vadd.f32 0.0, %v8516
          %v8518 = vpop.f32.mrf.mxu0
          %v8519 = vadd.f32 0.0, %v8518
          %v8520 = vpop.f32.mrf.mxu0
          %v8521 = vpop.f32.mrf.mxu0
          %8522 = vdwg.mxu0
          %8523 = vmatprep.subr.bf16.mxu0 %v7747
          %8524 = vmatpush1.bf16.msra.mxu0 %v7746
          %8525 = vmatprep.subr.bf16.mxu0 %v7731
          %8526 = vmatpush1.bf16.msra.mxu0 %v7730
          %8527 = vmatprep.subr.bf16.mxu0 %v7715
          %8528 = vmatpush1.bf16.msra.mxu0 %v7714
          %8529 = vmatprep.subr.bf16.mxu0 %v7699
          %8530 = vmatpush1.bf16.msra.mxu0 %v7698
          %8531 = vmatprep.subr.bf16.mxu0 %v7683
          %8532 = vmatpush1.bf16.msra.mxu0 %v7682
          %8533 = vmatprep.subr.bf16.mxu0 %v7667
          %8534 = vmatpush1.bf16.msra.mxu0 %v7666
          %8535 = vmatprep.subr.bf16.mxu0 %v7651
          %8536 = vmatpush1.bf16.msra.mxu0 %v7650
          %8537 = vmatprep.subr.bf16.mxu0 %v7635
          %8538 = vmatpush1.bf16.msra.mxu0 %v7634
          %8539 = vmatprep.subr.bf16.mxu0 %v7875
          %8540 = vmatpush2.bf16.msra.mxu0 %v7874
          %8541 = vmatprep.subr.bf16.mxu0 %v7859
          %8542 = vmatpush2.bf16.msra.mxu0 %v7858
          %8543 = vmatprep.subr.bf16.mxu0 %v7843
          %8544 = vmatpush2.bf16.msra.mxu0 %v7842
          %8545 = vmatprep.subr.bf16.mxu0 %v7827
          %8546 = vmatpush2.bf16.msra.mxu0 %v7826
          %8547 = vmatprep.subr.bf16.mxu0 %v7811
          %8548 = vmatpush2.bf16.msra.mxu0 %v7810
          %8549 = vmatprep.subr.bf16.mxu0 %v7795
          %8550 = vmatpush2.bf16.msra.mxu0 %v7794
          %8551 = vmatprep.subr.bf16.mxu0 %v7779
          %8552 = vmatpush2.bf16.msra.mxu0 %v7778
          %8553 = vmatprep.subr.bf16.mxu0 %v7763
          %8554 = vmatpush2.bf16.msra.mxu0 %v7762
          %8555 = vmatprep.mubr.bf16.mxu0 %v5327
          %8556 = vmatmul.mubr.bf16.gmra.mxu0 %v5326
          %v8557 = vpop.f32.mrf.mxu0
          %v8558 = vadd.f32 %v8517, %v8557
          %v8559 = vpop.f32.mrf.mxu0
          %v8560 = vadd.f32 %v8519, %v8559
          %v8561 = vpop.f32.mrf.mxu0
          %v8562 = vpop.f32.mrf.mxu0
          %8563 = vdwg.mxu0
          %8564 = vmatprep.subr.bf16.mxu0 %v7493
          %8565 = vmatpush1.bf16.msra.mxu0 %v7492
          %8566 = vmatprep.subr.bf16.mxu0 %v7477
          %8567 = vmatpush1.bf16.msra.mxu0 %v7476
          %8568 = vmatprep.subr.bf16.mxu0 %v7461
          %8569 = vmatpush1.bf16.msra.mxu0 %v7460
          %8570 = vmatprep.subr.bf16.mxu0 %v7445
          %8571 = vmatpush1.bf16.msra.mxu0 %v7444
          %8572 = vmatprep.subr.bf16.mxu0 %v7429
          %8573 = vmatpush1.bf16.msra.mxu0 %v7428
          %8574 = vmatprep.subr.bf16.mxu0 %v7413
          %8575 = vmatpush1.bf16.msra.mxu0 %v7412
          %8576 = vmatprep.subr.bf16.mxu0 %v7397
          %8577 = vmatpush1.bf16.msra.mxu0 %v7396
          %8578 = vmatprep.subr.bf16.mxu0 %v7381
          %8579 = vmatpush1.bf16.msra.mxu0 %v7380
          %8580 = vmatprep.subr.bf16.mxu0 %v7621
          %8581 = vmatpush2.bf16.msra.mxu0 %v7620
          %8582 = vmatprep.subr.bf16.mxu0 %v7605
          %8583 = vmatpush2.bf16.msra.mxu0 %v7604
          %8584 = vmatprep.subr.bf16.mxu0 %v7589
          %8585 = vmatpush2.bf16.msra.mxu0 %v7588
          %8586 = vmatprep.subr.bf16.mxu0 %v7573
          %8587 = vmatpush2.bf16.msra.mxu0 %v7572
          %8588 = vmatprep.subr.bf16.mxu0 %v7557
          %8589 = vmatpush2.bf16.msra.mxu0 %v7556
          %8590 = vmatprep.subr.bf16.mxu0 %v7541
          %8591 = vmatpush2.bf16.msra.mxu0 %v7540
          %8592 = vmatprep.subr.bf16.mxu0 %v7525
          %8593 = vmatpush2.bf16.msra.mxu0 %v7524
          %8594 = vmatprep.subr.bf16.mxu0 %v7509
          %8595 = vmatpush2.bf16.msra.mxu0 %v7508
          %8596 = vmatprep.mubr.bf16.mxu0 %v5325
          %8597 = vmatmul.mubr.bf16.gmra.mxu0 %v5324
          %v8598 = vpop.f32.mrf.mxu0
          %v8599 = vadd.f32 0.0, %v8598
          %v8600 = vpop.f32.mrf.mxu0
          %v8601 = vadd.f32 0.0, %v8600
          %v8602 = vpop.f32.mrf.mxu0
          %v8603 = vpop.f32.mrf.mxu0
          %8604 = vdwg.mxu0
          %8605 = vmatprep.subr.bf16.mxu0 %v7749
          %8606 = vmatpush1.bf16.msra.mxu0 %v7748
          %8607 = vmatprep.subr.bf16.mxu0 %v7733
          %8608 = vmatpush1.bf16.msra.mxu0 %v7732
          %8609 = vmatprep.subr.bf16.mxu0 %v7717
          %8610 = vmatpush1.bf16.msra.mxu0 %v7716
          %8611 = vmatprep.subr.bf16.mxu0 %v7701
          %8612 = vmatpush1.bf16.msra.mxu0 %v7700
          %8613 = vmatprep.subr.bf16.mxu0 %v7685
          %8614 = vmatpush1.bf16.msra.mxu0 %v7684
          %8615 = vmatprep.subr.bf16.mxu0 %v7669
          %8616 = vmatpush1.bf16.msra.mxu0 %v7668
          %8617 = vmatprep.subr.bf16.mxu0 %v7653
          %8618 = vmatpush1.bf16.msra.mxu0 %v7652
          %8619 = vmatprep.subr.bf16.mxu0 %v7637
          %8620 = vmatpush1.bf16.msra.mxu0 %v7636
          %8621 = vmatprep.subr.bf16.mxu0 %v7877
          %8622 = vmatpush2.bf16.msra.mxu0 %v7876
          %8623 = vmatprep.subr.bf16.mxu0 %v7861
          %8624 = vmatpush2.bf16.msra.mxu0 %v7860
          %8625 = vmatprep.subr.bf16.mxu0 %v7845
          %8626 = vmatpush2.bf16.msra.mxu0 %v7844
          %8627 = vmatprep.subr.bf16.mxu0 %v7829
          %8628 = vmatpush2.bf16.msra.mxu0 %v7828
          %8629 = vmatprep.subr.bf16.mxu0 %v7813
          %8630 = vmatpush2.bf16.msra.mxu0 %v7812
          %8631 = vmatprep.subr.bf16.mxu0 %v7797
          %8632 = vmatpush2.bf16.msra.mxu0 %v7796
          %8633 = vmatprep.subr.bf16.mxu0 %v7781
          %8634 = vmatpush2.bf16.msra.mxu0 %v7780
          %8635 = vmatprep.subr.bf16.mxu0 %v7765
          %8636 = vmatpush2.bf16.msra.mxu0 %v7764
          %8637 = vmatprep.mubr.bf16.mxu0 %v5327
          %8638 = vmatmul.mubr.bf16.gmra.mxu0 %v5326
          %v8639 = vpop.f32.mrf.mxu0
          %v8640 = vadd.f32 %v8599, %v8639
          %v8641 = vpop.f32.mrf.mxu0
          %v8642 = vadd.f32 %v8601, %v8641
          %v8643 = vpop.f32.mrf.mxu0
          %v8644 = vpop.f32.mrf.mxu0
          %8645 = vdwg.mxu0
          %8646 = vmatprep.subr.bf16.mxu0 %v7495
          %8647 = vmatpush1.bf16.msra.mxu0 %v7494
          %8648 = vmatprep.subr.bf16.mxu0 %v7479
          %8649 = vmatpush1.bf16.msra.mxu0 %v7478
          %8650 = vmatprep.subr.bf16.mxu0 %v7463
          %8651 = vmatpush1.bf16.msra.mxu0 %v7462
          %8652 = vmatprep.subr.bf16.mxu0 %v7447
          %8653 = vmatpush1.bf16.msra.mxu0 %v7446
          %8654 = vmatprep.subr.bf16.mxu0 %v7431
          %8655 = vmatpush1.bf16.msra.mxu0 %v7430
          %8656 = vmatprep.subr.bf16.mxu0 %v7415
          %8657 = vmatpush1.bf16.msra.mxu0 %v7414
          %8658 = vmatprep.subr.bf16.mxu0 %v7399
          %8659 = vmatpush1.bf16.msra.mxu0 %v7398
          %8660 = vmatprep.subr.bf16.mxu0 %v7383
          %8661 = vmatpush1.bf16.msra.mxu0 %v7382
          %8662 = vmatprep.subr.bf16.mxu0 %v7623
          %8663 = vmatpush2.bf16.msra.mxu0 %v7622
          %8664 = vmatprep.subr.bf16.mxu0 %v7607
          %8665 = vmatpush2.bf16.msra.mxu0 %v7606
          %8666 = vmatprep.subr.bf16.mxu0 %v7591
          %8667 = vmatpush2.bf16.msra.mxu0 %v7590
          %8668 = vmatprep.subr.bf16.mxu0 %v7575
          %8669 = vmatpush2.bf16.msra.mxu0 %v7574
          %8670 = vmatprep.subr.bf16.mxu0 %v7559
          %8671 = vmatpush2.bf16.msra.mxu0 %v7558
          %8672 = vmatprep.subr.bf16.mxu0 %v7543
          %8673 = vmatpush2.bf16.msra.mxu0 %v7542
          %8674 = vmatprep.subr.bf16.mxu0 %v7527
          %8675 = vmatpush2.bf16.msra.mxu0 %v7526
          %8676 = vmatprep.subr.bf16.mxu0 %v7511
          %8677 = vmatpush2.bf16.msra.mxu0 %v7510
          %8678 = vmatprep.mubr.bf16.mxu0 %v5325
          %8679 = vmatmul.mubr.bf16.gmra.mxu0 %v5324
          %v8680 = vpop.f32.mrf.mxu0
          %v8681 = vadd.f32 0.0, %v8680
          %v8682 = vpop.f32.mrf.mxu0
          %v8683 = vadd.f32 0.0, %v8682
          %v8684 = vpop.f32.mrf.mxu0
          %v8685 = vpop.f32.mrf.mxu0
          %8686 = vdwg.mxu0
          %8687 = vmatprep.subr.bf16.mxu0 %v7751
          %8688 = vmatpush1.bf16.msra.mxu0 %v7750
          %8689 = vmatprep.subr.bf16.mxu0 %v7735
          %8690 = vmatpush1.bf16.msra.mxu0 %v7734
          %8691 = vmatprep.subr.bf16.mxu0 %v7719
          %8692 = vmatpush1.bf16.msra.mxu0 %v7718
          %8693 = vmatprep.subr.bf16.mxu0 %v7703
          %8694 = vmatpush1.bf16.msra.mxu0 %v7702
          %8695 = vmatprep.subr.bf16.mxu0 %v7687
          %8696 = vmatpush1.bf16.msra.mxu0 %v7686
          %8697 = vmatprep.subr.bf16.mxu0 %v7671
          %8698 = vmatpush1.bf16.msra.mxu0 %v7670
          %8699 = vmatprep.subr.bf16.mxu0 %v7655
          %8700 = vmatpush1.bf16.msra.mxu0 %v7654
          %8701 = vmatprep.subr.bf16.mxu0 %v7639
          %8702 = vmatpush1.bf16.msra.mxu0 %v7638
          %8703 = vmatprep.subr.bf16.mxu0 %v7879
          %8704 = vmatpush2.bf16.msra.mxu0 %v7878
          %8705 = vmatprep.subr.bf16.mxu0 %v7863
          %8706 = vmatpush2.bf16.msra.mxu0 %v7862
          %8707 = vmatprep.subr.bf16.mxu0 %v7847
          %8708 = vmatpush2.bf16.msra.mxu0 %v7846
          %8709 = vmatprep.subr.bf16.mxu0 %v7831
          %8710 = vmatpush2.bf16.msra.mxu0 %v7830
          %8711 = vmatprep.subr.bf16.mxu0 %v7815
          %8712 = vmatpush2.bf16.msra.mxu0 %v7814
          %8713 = vmatprep.subr.bf16.mxu0 %v7799
          %8714 = vmatpush2.bf16.msra.mxu0 %v7798
          %8715 = vmatprep.subr.bf16.mxu0 %v7783
          %8716 = vmatpush2.bf16.msra.mxu0 %v7782
          %8717 = vmatprep.subr.bf16.mxu0 %v7767
          %8718 = vmatpush2.bf16.msra.mxu0 %v7766
          %8719 = vmatprep.mubr.bf16.mxu0 %v5327
          %8720 = vmatmul.mubr.bf16.gmra.mxu0 %v5326
          %v8721 = vpop.f32.mrf.mxu0
          %v8722 = vadd.f32 %v8681, %v8721
          %v8723 = vpop.f32.mrf.mxu0
          %v8724 = vadd.f32 %v8683, %v8723
          %v8725 = vpop.f32.mrf.mxu0
          %v8726 = vpop.f32.mrf.mxu0
          %8727 = vdwg.mxu0
          %8728 = vmatprep.subr.bf16.mxu0 %v7497
          %8729 = vmatpush1.bf16.msra.mxu0 %v7496
          %8730 = vmatprep.subr.bf16.mxu0 %v7481
          %8731 = vmatpush1.bf16.msra.mxu0 %v7480
          %8732 = vmatprep.subr.bf16.mxu0 %v7465
          %8733 = vmatpush1.bf16.msra.mxu0 %v7464
          %8734 = vmatprep.subr.bf16.mxu0 %v7449
          %8735 = vmatpush1.bf16.msra.mxu0 %v7448
          %8736 = vmatprep.subr.bf16.mxu0 %v7433
          %8737 = vmatpush1.bf16.msra.mxu0 %v7432
          %8738 = vmatprep.subr.bf16.mxu0 %v7417
          %8739 = vmatpush1.bf16.msra.mxu0 %v7416
          %8740 = vmatprep.subr.bf16.mxu0 %v7401
          %8741 = vmatpush1.bf16.msra.mxu0 %v7400
          %8742 = vmatprep.subr.bf16.mxu0 %v7385
          %8743 = vmatpush1.bf16.msra.mxu0 %v7384
          %8744 = vmatprep.subr.bf16.mxu0 %v7625
          %8745 = vmatpush2.bf16.msra.mxu0 %v7624
          %8746 = vmatprep.subr.bf16.mxu0 %v7609
          %8747 = vmatpush2.bf16.msra.mxu0 %v7608
          %8748 = vmatprep.subr.bf16.mxu0 %v7593
          %8749 = vmatpush2.bf16.msra.mxu0 %v7592
          %8750 = vmatprep.subr.bf16.mxu0 %v7577
          %8751 = vmatpush2.bf16.msra.mxu0 %v7576
          %8752 = vmatprep.subr.bf16.mxu0 %v7561
          %8753 = vmatpush2.bf16.msra.mxu0 %v7560
          %8754 = vmatprep.subr.bf16.mxu0 %v7545
          %8755 = vmatpush2.bf16.msra.mxu0 %v7544
          %8756 = vmatprep.subr.bf16.mxu0 %v7529
          %8757 = vmatpush2.bf16.msra.mxu0 %v7528
          %8758 = vmatprep.subr.bf16.mxu0 %v7513
          %8759 = vmatpush2.bf16.msra.mxu0 %v7512
          %8760 = vmatprep.mubr.bf16.mxu0 %v5325
          %8761 = vmatmul.mubr.bf16.gmra.mxu0 %v5324
          %v8762 = vpop.f32.mrf.mxu0
          %v8763 = vadd.f32 0.0, %v8762
          %v8764 = vpop.f32.mrf.mxu0
          %v8765 = vadd.f32 0.0, %v8764
          %v8766 = vpop.f32.mrf.mxu0
          %v8767 = vpop.f32.mrf.mxu0
          %8768 = vdwg.mxu0
          %8769 = vmatprep.subr.bf16.mxu0 %v7753
          %8770 = vmatpush1.bf16.msra.mxu0 %v7752
          %8771 = vmatprep.subr.bf16.mxu0 %v7737
          %8772 = vmatpush1.bf16.msra.mxu0 %v7736
          %8773 = vmatprep.subr.bf16.mxu0 %v7721
          %8774 = vmatpush1.bf16.msra.mxu0 %v7720
          %8775 = vmatprep.subr.bf16.mxu0 %v7705
          %8776 = vmatpush1.bf16.msra.mxu0 %v7704
          %8777 = vmatprep.subr.bf16.mxu0 %v7689
          %8778 = vmatpush1.bf16.msra.mxu0 %v7688
          %8779 = vmatprep.subr.bf16.mxu0 %v7673
          %8780 = vmatpush1.bf16.msra.mxu0 %v7672
          %8781 = vmatprep.subr.bf16.mxu0 %v7657
          %8782 = vmatpush1.bf16.msra.mxu0 %v7656
          %8783 = vmatprep.subr.bf16.mxu0 %v7641
          %8784 = vmatpush1.bf16.msra.mxu0 %v7640
          %8785 = vmatprep.subr.bf16.mxu0 %v7881
          %8786 = vmatpush2.bf16.msra.mxu0 %v7880
          %8787 = vmatprep.subr.bf16.mxu0 %v7865
          %8788 = vmatpush2.bf16.msra.mxu0 %v7864
          %8789 = vmatprep.subr.bf16.mxu0 %v7849
          %8790 = vmatpush2.bf16.msra.mxu0 %v7848
          %8791 = vmatprep.subr.bf16.mxu0 %v7833
          %8792 = vmatpush2.bf16.msra.mxu0 %v7832
          %8793 = vmatprep.subr.bf16.mxu0 %v7817
          %8794 = vmatpush2.bf16.msra.mxu0 %v7816
          %8795 = vmatprep.subr.bf16.mxu0 %v7801
          %8796 = vmatpush2.bf16.msra.mxu0 %v7800
          %8797 = vmatprep.subr.bf16.mxu0 %v7785
          %8798 = vmatpush2.bf16.msra.mxu0 %v7784
          %8799 = vmatprep.subr.bf16.mxu0 %v7769
          %8800 = vmatpush2.bf16.msra.mxu0 %v7768
          %8801 = vmatprep.mubr.bf16.mxu0 %v5327
          %8802 = vmatmul.mubr.bf16.gmra.mxu0 %v5326
          %v8803 = vpop.f32.mrf.mxu0
          %v8804 = vadd.f32 %v8763, %v8803
          %v8805 = vpop.f32.mrf.mxu0
          %v8806 = vadd.f32 %v8765, %v8805
          %v8807 = vpop.f32.mrf.mxu0
          %v8808 = vpop.f32.mrf.mxu0
          %8809 = vdwg.mxu0
          %8810 = vmatprep.subr.bf16.mxu0 %v7499
          %8811 = vmatpush1.bf16.msra.mxu0 %v7498
          %8812 = vmatprep.subr.bf16.mxu0 %v7483
          %8813 = vmatpush1.bf16.msra.mxu0 %v7482
          %8814 = vmatprep.subr.bf16.mxu0 %v7467
          %8815 = vmatpush1.bf16.msra.mxu0 %v7466
          %8816 = vmatprep.subr.bf16.mxu0 %v7451
          %8817 = vmatpush1.bf16.msra.mxu0 %v7450
          %8818 = vmatprep.subr.bf16.mxu0 %v7435
          %8819 = vmatpush1.bf16.msra.mxu0 %v7434
          %8820 = vmatprep.subr.bf16.mxu0 %v7419
          %8821 = vmatpush1.bf16.msra.mxu0 %v7418
          %8822 = vmatprep.subr.bf16.mxu0 %v7403
          %8823 = vmatpush1.bf16.msra.mxu0 %v7402
          %8824 = vmatprep.subr.bf16.mxu0 %v7387
          %8825 = vmatpush1.bf16.msra.mxu0 %v7386
          %8826 = vmatprep.subr.bf16.mxu0 %v7627
          %8827 = vmatpush2.bf16.msra.mxu0 %v7626
          %8828 = vmatprep.subr.bf16.mxu0 %v7611
          %8829 = vmatpush2.bf16.msra.mxu0 %v7610
          %8830 = vmatprep.subr.bf16.mxu0 %v7595
          %8831 = vmatpush2.bf16.msra.mxu0 %v7594
          %8832 = vmatprep.subr.bf16.mxu0 %v7579
          %8833 = vmatpush2.bf16.msra.mxu0 %v7578
          %8834 = vmatprep.subr.bf16.mxu0 %v7563
          %8835 = vmatpush2.bf16.msra.mxu0 %v7562
          %8836 = vmatprep.subr.bf16.mxu0 %v7547
          %8837 = vmatpush2.bf16.msra.mxu0 %v7546
          %8838 = vmatprep.subr.bf16.mxu0 %v7531
          %8839 = vmatpush2.bf16.msra.mxu0 %v7530
          %8840 = vmatprep.subr.bf16.mxu0 %v7515
          %8841 = vmatpush2.bf16.msra.mxu0 %v7514
          %8842 = vmatprep.mubr.bf16.mxu0 %v5325
          %8843 = vmatmul.mubr.bf16.gmra.mxu0 %v5324
          %v8844 = vpop.f32.mrf.mxu0
          %v8845 = vadd.f32 0.0, %v8844
          %v8846 = vpop.f32.mrf.mxu0
          %v8847 = vadd.f32 0.0, %v8846
          %v8848 = vpop.f32.mrf.mxu0
          %v8849 = vpop.f32.mrf.mxu0
          %8850 = vdwg.mxu0
          %8851 = vmatprep.subr.bf16.mxu0 %v7755
          %8852 = vmatpush1.bf16.msra.mxu0 %v7754
          %8853 = vmatprep.subr.bf16.mxu0 %v7739
          %8854 = vmatpush1.bf16.msra.mxu0 %v7738
          %8855 = vmatprep.subr.bf16.mxu0 %v7723
          %8856 = vmatpush1.bf16.msra.mxu0 %v7722
          %8857 = vmatprep.subr.bf16.mxu0 %v7707
          %8858 = vmatpush1.bf16.msra.mxu0 %v7706
          %8859 = vmatprep.subr.bf16.mxu0 %v7691
          %8860 = vmatpush1.bf16.msra.mxu0 %v7690
          %8861 = vmatprep.subr.bf16.mxu0 %v7675
          %8862 = vmatpush1.bf16.msra.mxu0 %v7674
          %8863 = vmatprep.subr.bf16.mxu0 %v7659
          %8864 = vmatpush1.bf16.msra.mxu0 %v7658
          %8865 = vmatprep.subr.bf16.mxu0 %v7643
          %8866 = vmatpush1.bf16.msra.mxu0 %v7642
          %8867 = vmatprep.subr.bf16.mxu0 %v7883
          %8868 = vmatpush2.bf16.msra.mxu0 %v7882
          %8869 = vmatprep.subr.bf16.mxu0 %v7867
          %8870 = vmatpush2.bf16.msra.mxu0 %v7866
          %8871 = vmatprep.subr.bf16.mxu0 %v7851
          %8872 = vmatpush2.bf16.msra.mxu0 %v7850
          %8873 = vmatprep.subr.bf16.mxu0 %v7835
          %8874 = vmatpush2.bf16.msra.mxu0 %v7834
          %8875 = vmatprep.subr.bf16.mxu0 %v7819
          %8876 = vmatpush2.bf16.msra.mxu0 %v7818
          %8877 = vmatprep.subr.bf16.mxu0 %v7803
          %8878 = vmatpush2.bf16.msra.mxu0 %v7802
          %8879 = vmatprep.subr.bf16.mxu0 %v7787
          %8880 = vmatpush2.bf16.msra.mxu0 %v7786
          %8881 = vmatprep.subr.bf16.mxu0 %v7771
          %8882 = vmatpush2.bf16.msra.mxu0 %v7770
          %8883 = vmatprep.mubr.bf16.mxu0 %v5327
          %8884 = vmatmul.mubr.bf16.gmra.mxu0 %v5326
          %v8885 = vpop.f32.mrf.mxu0
          %v8886 = vadd.f32 %v8845, %v8885
          %v8887 = vpop.f32.mrf.mxu0
          %v8888 = vadd.f32 %v8847, %v8887
          %v8889 = vpop.f32.mrf.mxu0
          %v8890 = vpop.f32.mrf.mxu0
          %8891 = vdwg.mxu0
          %8892 = vmatprep.subr.bf16.mxu0 %v7501
          %8893 = vmatpush1.bf16.msra.mxu0 %v7500
          %8894 = vmatprep.subr.bf16.mxu0 %v7485
          %8895 = vmatpush1.bf16.msra.mxu0 %v7484
          %8896 = vmatprep.subr.bf16.mxu0 %v7469
          %8897 = vmatpush1.bf16.msra.mxu0 %v7468
          %8898 = vmatprep.subr.bf16.mxu0 %v7453
          %8899 = vmatpush1.bf16.msra.mxu0 %v7452
          %8900 = vmatprep.subr.bf16.mxu0 %v7437
          %8901 = vmatpush1.bf16.msra.mxu0 %v7436
          %8902 = vmatprep.subr.bf16.mxu0 %v7421
          %8903 = vmatpush1.bf16.msra.mxu0 %v7420
          %8904 = vmatprep.subr.bf16.mxu0 %v7405
          %8905 = vmatpush1.bf16.msra.mxu0 %v7404
          %8906 = vmatprep.subr.bf16.mxu0 %v7389
          %8907 = vmatpush1.bf16.msra.mxu0 %v7388
          %8908 = vmatprep.subr.bf16.mxu0 %v7629
          %8909 = vmatpush2.bf16.msra.mxu0 %v7628
          %8910 = vmatprep.subr.bf16.mxu0 %v7613
          %8911 = vmatpush2.bf16.msra.mxu0 %v7612
          %8912 = vmatprep.subr.bf16.mxu0 %v7597
          %8913 = vmatpush2.bf16.msra.mxu0 %v7596
          %8914 = vmatprep.subr.bf16.mxu0 %v7581
          %8915 = vmatpush2.bf16.msra.mxu0 %v7580
          %8916 = vmatprep.subr.bf16.mxu0 %v7565
          %8917 = vmatpush2.bf16.msra.mxu0 %v7564
          %8918 = vmatprep.subr.bf16.mxu0 %v7549
          %8919 = vmatpush2.bf16.msra.mxu0 %v7548
          %8920 = vmatprep.subr.bf16.mxu0 %v7533
          %8921 = vmatpush2.bf16.msra.mxu0 %v7532
          %8922 = vmatprep.subr.bf16.mxu0 %v7517
          %8923 = vmatpush2.bf16.msra.mxu0 %v7516
          %8924 = vmatprep.mubr.bf16.mxu0 %v5325
          %8925 = vmatmul.mubr.bf16.gmra.mxu0 %v5324
          %v8926 = vpop.f32.mrf.mxu0
          %v8927 = vadd.f32 0.0, %v8926
          %v8928 = vpop.f32.mrf.mxu0
          %v8929 = vadd.f32 0.0, %v8928
          %v8930 = vpop.f32.mrf.mxu0
          %v8931 = vpop.f32.mrf.mxu0
          %8932 = vdwg.mxu0
          %8933 = vmatprep.subr.bf16.mxu0 %v7757
          %8934 = vmatpush1.bf16.msra.mxu0 %v7756
          %8935 = vmatprep.subr.bf16.mxu0 %v7741
          %8936 = vmatpush1.bf16.msra.mxu0 %v7740
          %8937 = vmatprep.subr.bf16.mxu0 %v7725
          %8938 = vmatpush1.bf16.msra.mxu0 %v7724
          %8939 = vmatprep.subr.bf16.mxu0 %v7709
          %8940 = vmatpush1.bf16.msra.mxu0 %v7708
          %8941 = vmatprep.subr.bf16.mxu0 %v7693
          %8942 = vmatpush1.bf16.msra.mxu0 %v7692
          %8943 = vmatprep.subr.bf16.mxu0 %v7677
          %8944 = vmatpush1.bf16.msra.mxu0 %v7676
          %8945 = vmatprep.subr.bf16.mxu0 %v7661
          %8946 = vmatpush1.bf16.msra.mxu0 %v7660
          %8947 = vmatprep.subr.bf16.mxu0 %v7645
          %8948 = vmatpush1.bf16.msra.mxu0 %v7644
          %8949 = vmatprep.subr.bf16.mxu0 %v7885
          %8950 = vmatpush2.bf16.msra.mxu0 %v7884
          %8951 = vmatprep.subr.bf16.mxu0 %v7869
          %8952 = vmatpush2.bf16.msra.mxu0 %v7868
          %8953 = vmatprep.subr.bf16.mxu0 %v7853
          %8954 = vmatpush2.bf16.msra.mxu0 %v7852
          %8955 = vmatprep.subr.bf16.mxu0 %v7837
          %8956 = vmatpush2.bf16.msra.mxu0 %v7836
          %8957 = vmatprep.subr.bf16.mxu0 %v7821
          %8958 = vmatpush2.bf16.msra.mxu0 %v7820
          %8959 = vmatprep.subr.bf16.mxu0 %v7805
          %8960 = vmatpush2.bf16.msra.mxu0 %v7804
          %8961 = vmatprep.subr.bf16.mxu0 %v7789
          %8962 = vmatpush2.bf16.msra.mxu0 %v7788
          %8963 = vmatprep.subr.bf16.mxu0 %v7773
          %8964 = vmatpush2.bf16.msra.mxu0 %v7772
          %8965 = vmatprep.mubr.bf16.mxu0 %v5327
          %8966 = vmatmul.mubr.bf16.gmra.mxu0 %v5326
          %v8967 = vpop.f32.mrf.mxu0
          %v8968 = vadd.f32 %v8927, %v8967
          %v8969 = vpop.f32.mrf.mxu0
          %v8970 = vadd.f32 %v8929, %v8969
          %v8971 = vpop.f32.mrf.mxu0
          %v8972 = vpop.f32.mrf.mxu0
          %8973 = vdwg.mxu0
          %8974 = vmatprep.subr.bf16.mxu0 %v7503
          %8975 = vmatpush1.bf16.msra.mxu0 %v7502
          %8976 = vmatprep.subr.bf16.mxu0 %v7487
          %8977 = vmatpush1.bf16.msra.mxu0 %v7486
          %8978 = vmatprep.subr.bf16.mxu0 %v7471
          %8979 = vmatpush1.bf16.msra.mxu0 %v7470
          %8980 = vmatprep.subr.bf16.mxu0 %v7455
          %8981 = vmatpush1.bf16.msra.mxu0 %v7454
          %8982 = vmatprep.subr.bf16.mxu0 %v7439
          %8983 = vmatpush1.bf16.msra.mxu0 %v7438
          %8984 = vmatprep.subr.bf16.mxu0 %v7423
          %8985 = vmatpush1.bf16.msra.mxu0 %v7422
          %8986 = vmatprep.subr.bf16.mxu0 %v7407
          %8987 = vmatpush1.bf16.msra.mxu0 %v7406
          %8988 = vmatprep.subr.bf16.mxu0 %v7391
          %8989 = vmatpush1.bf16.msra.mxu0 %v7390
          %8990 = vmatprep.subr.bf16.mxu0 %v7631
          %8991 = vmatpush2.bf16.msra.mxu0 %v7630
          %8992 = vmatprep.subr.bf16.mxu0 %v7615
          %8993 = vmatpush2.bf16.msra.mxu0 %v7614
          %8994 = vmatprep.subr.bf16.mxu0 %v7599
          %8995 = vmatpush2.bf16.msra.mxu0 %v7598
          %8996 = vmatprep.subr.bf16.mxu0 %v7583
          %8997 = vmatpush2.bf16.msra.mxu0 %v7582
          %8998 = vmatprep.subr.bf16.mxu0 %v7567
          %8999 = vmatpush2.bf16.msra.mxu0 %v7566
          %9000 = vmatprep.subr.bf16.mxu0 %v7551
          %9001 = vmatpush2.bf16.msra.mxu0 %v7550
          %9002 = vmatprep.subr.bf16.mxu0 %v7535
          %9003 = vmatpush2.bf16.msra.mxu0 %v7534
          %9004 = vmatprep.subr.bf16.mxu0 %v7519
          %9005 = vmatpush2.bf16.msra.mxu0 %v7518
          %9006 = vmatprep.mubr.bf16.mxu0 %v5325
          %9007 = vmatmul.mubr.bf16.gmra.mxu0 %v5324
          %v9008 = vpop.f32.mrf.mxu0
          %v9009 = vadd.f32 0.0, %v9008
          %v9010 = vpop.f32.mrf.mxu0
          %v9011 = vadd.f32 0.0, %v9010
          %v9012 = vpop.f32.mrf.mxu0
          %v9013 = vpop.f32.mrf.mxu0
          %9014 = vdwg.mxu0
          %9015 = vmatprep.subr.bf16.mxu0 %v7759
          %9016 = vmatpush1.bf16.msra.mxu0 %v7758
          %9017 = vmatprep.subr.bf16.mxu0 %v7743
          %9018 = vmatpush1.bf16.msra.mxu0 %v7742
          %9019 = vmatprep.subr.bf16.mxu0 %v7727
          %9020 = vmatpush1.bf16.msra.mxu0 %v7726
          %9021 = vmatprep.subr.bf16.mxu0 %v7711
          %9022 = vmatpush1.bf16.msra.mxu0 %v7710
          %9023 = vmatprep.subr.bf16.mxu0 %v7695
          %9024 = vmatpush1.bf16.msra.mxu0 %v7694
          %9025 = vmatprep.subr.bf16.mxu0 %v7679
          %9026 = vmatpush1.bf16.msra.mxu0 %v7678
          %9027 = vmatprep.subr.bf16.mxu0 %v7663
          %9028 = vmatpush1.bf16.msra.mxu0 %v7662
          %9029 = vmatprep.subr.bf16.mxu0 %v7647
          %9030 = vmatpush1.bf16.msra.mxu0 %v7646
          %9031 = vmatprep.subr.bf16.mxu0 %v7887
          %9032 = vmatpush2.bf16.msra.mxu0 %v7886
          %9033 = vmatprep.subr.bf16.mxu0 %v7871
          %9034 = vmatpush2.bf16.msra.mxu0 %v7870
          %9035 = vmatprep.subr.bf16.mxu0 %v7855
          %9036 = vmatpush2.bf16.msra.mxu0 %v7854
          %9037 = vmatprep.subr.bf16.mxu0 %v7839
          %9038 = vmatpush2.bf16.msra.mxu0 %v7838
          %9039 = vmatprep.subr.bf16.mxu0 %v7823
          %9040 = vmatpush2.bf16.msra.mxu0 %v7822
          %9041 = vmatprep.subr.bf16.mxu0 %v7807
          %9042 = vmatpush2.bf16.msra.mxu0 %v7806
          %9043 = vmatprep.subr.bf16.mxu0 %v7791
          %9044 = vmatpush2.bf16.msra.mxu0 %v7790
          %9045 = vmatprep.subr.bf16.mxu0 %v7775
          %9046 = vmatpush2.bf16.msra.mxu0 %v7774
          %9047 = vmatprep.mubr.bf16.mxu0 %v5327
          %9048 = vmatmul.mubr.bf16.gmra.mxu0 %v5326
          %v9049 = vpop.f32.mrf.mxu0
          %v9050 = vadd.f32 %v9009, %v9049
          %v9051 = vpop.f32.mrf.mxu0
          %v9052 = vadd.f32 %v9011, %v9051
          %v9053 = vpop.f32.mrf.mxu0
          %v9054 = vpop.f32.mrf.mxu0
          %9055 = vdwg.mxu0
          %v9072 = vcombine.low %v8476, %v8478
          %v9073 = vcombine.low %v8558, %v8560
          %v9074 = vcombine.low %v8640, %v8642
          %v9075 = vcombine.low %v8722, %v8724
          %v9077 = vunpack.c.l.s4 1966171168
          %v9078 = vunpack.c.0.s8 %v9077
          %v9079 = vlaneseq
          %v9080 = vshrl.u32 %v9079, 7
          %v9081 = vsub.s32 %v9078, %v9080
          %v9082 = vrot.slane %v9072, %v9081
          %v9084 = vunpack.c.l.s4 1966171168
          %v9085 = vunpack.c.0.s8 %v9084
          %v9086 = vlaneseq
          %v9087 = vshrl.u32 %v9086, 7
          %v9088 = vsub.s32 %v9085, %v9087
          %v9089 = vrot.slane %v9073, %v9088
          %v9091 = vunpack.c.l.s4 1966171168
          %v9092 = vunpack.c.0.s8 %v9091
          %v9093 = vlaneseq
          %v9094 = vshrl.u32 %v9093, 7
          %v9095 = vsub.s32 %v9092, %v9094
          %v9096 = vrot.slane %v9074, %v9095
          %v9098 = vunpack.c.l.s4 1966171168
          %v9099 = vunpack.c.0.s8 %v9098
          %v9100 = vlaneseq
          %v9101 = vshrl.u32 %v9100, 7
          %v9102 = vsub.s32 %v9099, %v9101
          %v9103 = vrot.slane %v9075, %v9102
          %v9104 = vcombine.low %v9082, %v9089
          %v9105 = vcombine.low %v9096, %v9103
          %v9107 = vunpack.c.l.s4 1966171168
          %v9108 = vunpack.c.0.s8 %v9107
          %v9109 = vlaneseq
          %v9110 = vshrl.u32 %v9109, 7
          %v9111 = vsub.s32 %v9108, %v9110
          %v9112 = vrot.slane %v9104, %v9111
          %v9114 = vunpack.c.l.s4 1966171168
          %v9115 = vunpack.c.0.s8 %v9114
          %v9116 = vlaneseq
          %v9117 = vshrl.u32 %v9116, 7
          %v9118 = vsub.s32 %v9115, %v9117
          %v9119 = vrot.slane %v9105, %v9118
          %v9120 = vcombine.low %v9112, %v9119
          %v9121 = vcombine.low %v8804, %v8806
          %v9122 = vcombine.low %v8886, %v8888
          %v9123 = vcombine.low %v8968, %v8970
          %v9124 = vcombine.low %v9050, %v9052
          %v9126 = vunpack.c.l.s4 1966171168
          %v9127 = vunpack.c.0.s8 %v9126
          %v9128 = vlaneseq
          %v9129 = vshrl.u32 %v9128, 7
          %v9130 = vsub.s32 %v9127, %v9129
          %v9131 = vrot.slane %v9121, %v9130
          %v9133 = vunpack.c.l.s4 1966171168
          %v9134 = vunpack.c.0.s8 %v9133
          %v9135 = vlaneseq
          %v9136 = vshrl.u32 %v9135, 7
          %v9137 = vsub.s32 %v9134, %v9136
          %v9138 = vrot.slane %v9122, %v9137
          %v9140 = vunpack.c.l.s4 1966171168
          %v9141 = vunpack.c.0.s8 %v9140
          %v9142 = vlaneseq
          %v9143 = vshrl.u32 %v9142, 7
          %v9144 = vsub.s32 %v9141, %v9143
          %v9145 = vrot.slane %v9123, %v9144
          %v9147 = vunpack.c.l.s4 1966171168
          %v9148 = vunpack.c.0.s8 %v9147
          %v9149 = vlaneseq
          %v9150 = vshrl.u32 %v9149, 7
          %v9151 = vsub.s32 %v9148, %v9150
          %v9152 = vrot.slane %v9124, %v9151
          %v9153 = vcombine.low %v9131, %v9138
          %v9154 = vcombine.low %v9145, %v9152
          %v9156 = vunpack.c.l.s4 1966171168
          %v9157 = vunpack.c.0.s8 %v9156
          %v9158 = vlaneseq
          %v9159 = vshrl.u32 %v9158, 7
          %v9160 = vsub.s32 %v9157, %v9159
          %v9161 = vrot.slane %v9153, %v9160
          %v9163 = vunpack.c.l.s4 1966171168
          %v9164 = vunpack.c.0.s8 %v9163
          %v9165 = vlaneseq
          %v9166 = vshrl.u32 %v9165, 7
          %v9167 = vsub.s32 %v9164, %v9166
          %v9168 = vrot.slane %v9154, %v9167
          %v9169 = vcombine.low %v9161, %v9168
          %v9172 = vadd.f32 %v5301, %v9120
          %v9173 = vadd.f32 %v5302, %v9169
          %s9174 = scalar_lea.vmem %s6, 1
          %v9175 = vld [vmem:[%s9174] ss:$2 sm:$0xf]
          %s9176 = scalar_lea.vmem %s7, 1
          %v9177 = vld [vmem:[%s9176] ss:$2 sm:$0xf]
          %s9178 = scalar_lea.vmem %s8, 32
          %v9179 = vld [vmem:[%s9178] sm:$0x1f]
          %v9180 = vld [vmem:[%s9178 + $0x8] sm:$0x1f]
          %v9181 = vld [vmem:[%s9178 + $0x10] sm:$0x1f]
          %v9182 = vld [vmem:[%s9178 + $0x18] sm:$0x1f]
          %v9183 = vadd.f32 %v9179, %v4892
          %v9184 = vadd.f32 %v9180, %v4893
          %v9185 = vadd.f32 %v9181, %v4894
          %v9186 = vadd.f32 %v9182, %v4895
          %v9187 = vxor.u32 %v9172, 2147483648
          %v9188 = vmul.f32 %v9187, 1.442695
          %v9189 = vpow.pop %v9188
          %v9190 = vadd.f32 %v9189, 1.0
          %v9191 = vrcp.pop %v9190
          %v9192 = vmul.f32 1.0, %v9191
          %v9194 = vrot.slane %v9172, 4
          %v9196 = vxor.u32 %v9194, 2147483648
          %v9197 = vmul.f32 %v9196, 1.442695
          %v9198 = vpow.pop %v9197
          %v9199 = vadd.f32 %v9198, 1.0
          %v9200 = vrcp.pop %v9199
          %v9201 = vmul.f32 1.0, %v9200
          %v9202 = vtanh.pop %v9173
          %v9204 = vrot.slane %v9173, 4
          %v9206 = vxor.u32 %v9204, 2147483648
          %v9207 = vmul.f32 %v9206, 1.442695
          %v9208 = vpow.pop %v9207
          %v9209 = vadd.f32 %v9208, 1.0
          %v9210 = vrcp.pop %v9209
          %v9211 = vmul.f32 1.0, %v9210
          %v9213 = vlaneseq
          %v9214 = vshrl.u32 %v9213, 7
          %v9215 = vsub.s32 0, %v9214
          %v9216 = vrot.slane %v9175, %v9215
          %v9217 = vlaneseq
          %v9218 = vshrl.u32 %v9217, 7
          %v9219 = vsub.s32 1, %v9218
          %v9220 = vrot.slane %v9175, %v9219
          %v9221 = vlaneseq
          %v9222 = vshrl.u32 %v9221, 7
          %v9223 = vsub.s32 2, %v9222
          %v9224 = vrot.slane %v9175, %v9223
          %v9225 = vlaneseq
          %v9226 = vshrl.u32 %v9225, 7
          %v9227 = vsub.s32 3, %v9226
          %v9228 = vrot.slane %v9175, %v9227
          %9233 = vmatprep.subr.mxu0 0.0
          %9234 = vmatpush1.xpose.msra.mxu0 0.0
          %9235 = vmatprep.subr.mxu0 0.0
          %9236 = vmatpush1.xpose.msra.mxu0 0.0
          %9237 = vmatprep.subr.mxu0 0.0
          %9238 = vmatpush1.xpose.msra.mxu0 0.0
          %9239 = vmatprep.subr.mxu0 0.0
          %9240 = vmatpush1.xpose.msra.mxu0 0.0
          %9241 = vmatprep.subr.mxu0 0.0
          %9242 = vmatpush1.xpose.msra.mxu0 0.0
          %9243 = vmatprep.subr.mxu0 0.0
          %9244 = vmatpush1.xpose.msra.mxu0 0.0
          %9245 = vmatprep.subr.mxu0 0.0
          %9246 = vmatpush1.xpose.msra.mxu0 0.0
          %9247 = vmatprep.subr.mxu0 0.0
          %9248 = vmatpush1.xpose.msra.mxu0 0.0
          %9249 = vmatprep.subr.mxu0 0.0
          %9250 = vmatpush1.xpose.msra.mxu0 0.0
          %9251 = vmatprep.subr.mxu0 0.0
          %9252 = vmatpush1.xpose.msra.mxu0 0.0
          %9253 = vmatprep.subr.mxu0 0.0
          %9254 = vmatpush1.xpose.msra.mxu0 0.0
          %9255 = vmatprep.subr.mxu0 0.0
          %9256 = vmatpush1.xpose.msra.mxu0 0.0
          %9257 = vmatprep.subr.mxu0 0.0
          %9258 = vmatpush1.xpose.msra.mxu0 0.0
          %9259 = vmatprep.subr.mxu0 0.0
          %9260 = vmatpush1.xpose.msra.mxu0 0.0
          %9261 = vmatprep.subr.mxu0 0.0
          %9262 = vmatpush1.xpose.msra.mxu0 0.0
          %9263 = vmatprep.subr.mxu0 %v9184
          %9264 = vmatpush1.xpose.msra.mxu0 %v9183
          %9265 = vmatprep.subr.mxu0 0.0
          %9266 = vmatpush2.xpose.msra.mxu0 0.0
          %9267 = vmatprep.subr.mxu0 0.0
          %9268 = vmatpush2.xpose.msra.mxu0 0.0
          %9269 = vmatprep.subr.mxu0 0.0
          %9270 = vmatpush2.xpose.msra.mxu0 0.0
          %9271 = vmatprep.subr.mxu0 0.0
          %9272 = vmatpush2.xpose.msra.mxu0 0.0
          %9273 = vmatprep.subr.mxu0 0.0
          %9274 = vmatpush2.xpose.msra.mxu0 0.0
          %9275 = vmatprep.subr.mxu0 0.0
          %9276 = vmatpush2.xpose.msra.mxu0 0.0
          %9277 = vmatprep.subr.mxu0 0.0
          %9278 = vmatpush2.xpose.msra.mxu0 0.0
          %9279 = vmatprep.subr.mxu0 0.0
          %9280 = vmatpush2.xpose.msra.mxu0 0.0
          %9281 = vmatprep.subr.mxu0 0.0
          %9282 = vmatpush2.xpose.msra.mxu0 0.0
          %9283 = vmatprep.subr.mxu0 0.0
          %9284 = vmatpush2.xpose.msra.mxu0 0.0
          %9285 = vmatprep.subr.mxu0 0.0
          %9286 = vmatpush2.xpose.msra.mxu0 0.0
          %9287 = vmatprep.subr.mxu0 0.0
          %9288 = vmatpush2.xpose.msra.mxu0 0.0
          %9289 = vmatprep.subr.mxu0 0.0
          %9290 = vmatpush2.xpose.msra.mxu0 0.0
          %9291 = vmatprep.subr.mxu0 0.0
          %9292 = vmatpush2.xpose.msra.mxu0 0.0
          %9293 = vmatprep.subr.mxu0 0.0
          %9294 = vmatpush2.xpose.msra.mxu0 0.0
          %9295 = vmatprep.subr.mxu0 0.0
          %9296 = vmatpush2.xpose.msra.mxu0 0.0
          %9297 = vmatprep.mubr.f32.mxu0 %v9220
          %9298 = vmatmul.mubr.f32.gmra.mxu0 %v9216
          %v9299 = vpop.f32.mrf.mxu0
          %v9300 = vadd.f32 0.0, %v9299
          %v9301 = vpop.f32.mrf.mxu0
          %9302 = vdwg.mxu0
          %9303 = vmatprep.subr.mxu0 0.0
          %9304 = vmatpush1.xpose.msra.mxu0 0.0
          %9305 = vmatprep.subr.mxu0 0.0
          %9306 = vmatpush1.xpose.msra.mxu0 0.0
          %9307 = vmatprep.subr.mxu0 0.0
          %9308 = vmatpush1.xpose.msra.mxu0 0.0
          %9309 = vmatprep.subr.mxu0 0.0
          %9310 = vmatpush1.xpose.msra.mxu0 0.0
          %9311 = vmatprep.subr.mxu0 0.0
          %9312 = vmatpush1.xpose.msra.mxu0 0.0
          %9313 = vmatprep.subr.mxu0 0.0
          %9314 = vmatpush1.xpose.msra.mxu0 0.0
          %9315 = vmatprep.subr.mxu0 0.0
          %9316 = vmatpush1.xpose.msra.mxu0 0.0
          %9317 = vmatprep.subr.mxu0 0.0
          %9318 = vmatpush1.xpose.msra.mxu0 0.0
          %9319 = vmatprep.subr.mxu0 0.0
          %9320 = vmatpush1.xpose.msra.mxu0 0.0
          %9321 = vmatprep.subr.mxu0 0.0
          %9322 = vmatpush1.xpose.msra.mxu0 0.0
          %9323 = vmatprep.subr.mxu0 0.0
          %9324 = vmatpush1.xpose.msra.mxu0 0.0
          %9325 = vmatprep.subr.mxu0 0.0
          %9326 = vmatpush1.xpose.msra.mxu0 0.0
          %9327 = vmatprep.subr.mxu0 0.0
          %9328 = vmatpush1.xpose.msra.mxu0 0.0
          %9329 = vmatprep.subr.mxu0 0.0
          %9330 = vmatpush1.xpose.msra.mxu0 0.0
          %9331 = vmatprep.subr.mxu0 0.0
          %9332 = vmatpush1.xpose.msra.mxu0 0.0
          %9333 = vmatprep.subr.mxu0 %v9186
          %9334 = vmatpush1.xpose.msra.mxu0 %v9185
          %9335 = vmatprep.subr.mxu0 0.0
          %9336 = vmatpush2.xpose.msra.mxu0 0.0
          %9337 = vmatprep.subr.mxu0 0.0
          %9338 = vmatpush2.xpose.msra.mxu0 0.0
          %9339 = vmatprep.subr.mxu0 0.0
          %9340 = vmatpush2.xpose.msra.mxu0 0.0
          %9341 = vmatprep.subr.mxu0 0.0
          %9342 = vmatpush2.xpose.msra.mxu0 0.0
          %9343 = vmatprep.subr.mxu0 0.0
          %9344 = vmatpush2.xpose.msra.mxu0 0.0
          %9345 = vmatprep.subr.mxu0 0.0
          %9346 = vmatpush2.xpose.msra.mxu0 0.0
          %9347 = vmatprep.subr.mxu0 0.0
          %9348 = vmatpush2.xpose.msra.mxu0 0.0
          %9349 = vmatprep.subr.mxu0 0.0
          %9350 = vmatpush2.xpose.msra.mxu0 0.0
          %9351 = vmatprep.subr.mxu0 0.0
          %9352 = vmatpush2.xpose.msra.mxu0 0.0
          %9353 = vmatprep.subr.mxu0 0.0
          %9354 = vmatpush2.xpose.msra.mxu0 0.0
          %9355 = vmatprep.subr.mxu0 0.0
          %9356 = vmatpush2.xpose.msra.mxu0 0.0
          %9357 = vmatprep.subr.mxu0 0.0
          %9358 = vmatpush2.xpose.msra.mxu0 0.0
          %9359 = vmatprep.subr.mxu0 0.0
          %9360 = vmatpush2.xpose.msra.mxu0 0.0
          %9361 = vmatprep.subr.mxu0 0.0
          %9362 = vmatpush2.xpose.msra.mxu0 0.0
          %9363 = vmatprep.subr.mxu0 0.0
          %9364 = vmatpush2.xpose.msra.mxu0 0.0
          %9365 = vmatprep.subr.mxu0 0.0
          %9366 = vmatpush2.xpose.msra.mxu0 0.0
          %9367 = vmatprep.mubr.f32.mxu0 %v9228
          %9368 = vmatmul.mubr.f32.gmra.mxu0 %v9224
          %v9369 = vpop.f32.mrf.mxu0
          %v9370 = vadd.f32 %v9300, %v9369
          %v9371 = vpop.f32.mrf.mxu0
          %9372 = vdwg.mxu0
          %v9373 = vmul.f32 %v9370, 0.044194173
          %v9374 = vsel %vm5095, %v9373, -inf
          %9375 = vmax.xlane.f32.xlu0 %v9374
          %v9376 = vpop.xlane.xlu0 %9375
          %v9377 = vsub.f32 %v9373, %v9376
          %v9378 = vmul.f32 %v9377, 1.442695
          %v9379 = vpow.pop %v9378
          %v9380 = vsel %vm5095, %v9379, 0.0
          %9381 = vadd.xlane.f32.xlu0 %v9380
          %v9382 = vpop.xlane.xlu0 %9381
          %v9383 = vrcp.pop %v9382
          %v9384 = vmul.f32 %v9379, %v9383
          %v9386 = vsel %vm5107, %v9384, 0
          %v9389 = vsel %vm5111, %v9183, 0
          %v9392 = vsel %vm5111, %v9184, 0
          %v9395 = vsel %vm5111, %v9185, 0
          %v9398 = vsel %vm5111, %v9186, 0
          %9400 = vmatprep.subr.mxu0 0.0
          %9401 = vmatpush1.msra.mxu0 0.0
          %9402 = vmatprep.subr.mxu0 0.0
          %9403 = vmatpush1.msra.mxu0 0.0
          %9404 = vmatprep.subr.mxu0 0.0
          %9405 = vmatpush1.msra.mxu0 0.0
          %9406 = vmatprep.subr.mxu0 0.0
          %9407 = vmatpush1.msra.mxu0 0.0
          %9408 = vmatprep.subr.mxu0 0.0
          %9409 = vmatpush1.msra.mxu0 0.0
          %9410 = vmatprep.subr.mxu0 0.0
          %9411 = vmatpush1.msra.mxu0 0.0
          %9412 = vmatprep.subr.mxu0 0.0
          %9413 = vmatpush1.msra.mxu0 0.0
          %9414 = vmatprep.subr.mxu0 0.0
          %9415 = vmatpush1.msra.mxu0 0.0
          %9416 = vmatprep.subr.mxu0 0.0
          %9417 = vmatpush1.msra.mxu0 0.0
          %9418 = vmatprep.subr.mxu0 0.0
          %9419 = vmatpush1.msra.mxu0 0.0
          %9420 = vmatprep.subr.mxu0 0.0
          %9421 = vmatpush1.msra.mxu0 0.0
          %9422 = vmatprep.subr.mxu0 0.0
          %9423 = vmatpush1.msra.mxu0 0.0
          %9424 = vmatprep.subr.mxu0 0.0
          %9425 = vmatpush1.msra.mxu0 0.0
          %9426 = vmatprep.subr.mxu0 0.0
          %9427 = vmatpush1.msra.mxu0 0.0
          %9428 = vmatprep.subr.mxu0 0.0
          %9429 = vmatpush1.msra.mxu0 0.0
          %9430 = vmatprep.subr.mxu0 %v9392
          %9431 = vmatpush1.msra.mxu0 %v9389
          %9432 = vmatprep.subr.mxu0 0.0
          %9433 = vmatpush2.msra.mxu0 0.0
          %9434 = vmatprep.subr.mxu0 0.0
          %9435 = vmatpush2.msra.mxu0 0.0
          %9436 = vmatprep.subr.mxu0 0.0
          %9437 = vmatpush2.msra.mxu0 0.0
          %9438 = vmatprep.subr.mxu0 0.0
          %9439 = vmatpush2.msra.mxu0 0.0
          %9440 = vmatprep.subr.mxu0 0.0
          %9441 = vmatpush2.msra.mxu0 0.0
          %9442 = vmatprep.subr.mxu0 0.0
          %9443 = vmatpush2.msra.mxu0 0.0
          %9444 = vmatprep.subr.mxu0 0.0
          %9445 = vmatpush2.msra.mxu0 0.0
          %9446 = vmatprep.subr.mxu0 0.0
          %9447 = vmatpush2.msra.mxu0 0.0
          %9448 = vmatprep.subr.mxu0 0.0
          %9449 = vmatpush2.msra.mxu0 0.0
          %9450 = vmatprep.subr.mxu0 0.0
          %9451 = vmatpush2.msra.mxu0 0.0
          %9452 = vmatprep.subr.mxu0 0.0
          %9453 = vmatpush2.msra.mxu0 0.0
          %9454 = vmatprep.subr.mxu0 0.0
          %9455 = vmatpush2.msra.mxu0 0.0
          %9456 = vmatprep.subr.mxu0 0.0
          %9457 = vmatpush2.msra.mxu0 0.0
          %9458 = vmatprep.subr.mxu0 0.0
          %9459 = vmatpush2.msra.mxu0 0.0
          %9460 = vmatprep.subr.mxu0 0.0
          %9461 = vmatpush2.msra.mxu0 0.0
          %9462 = vmatprep.subr.mxu0 0.0
          %9463 = vmatpush2.msra.mxu0 0.0
          %9464 = vmatprep.mubr.f32.mxu0 0.0
          %9465 = vmatmul.mubr.f32.gmra.mxu0 %v9386
          %v9466 = vpop.f32.mrf.mxu0
          %v9467 = vadd.f32 0.0, %v9466
          %v9468 = vpop.f32.mrf.mxu0
          %v9469 = vadd.f32 0.0, %v9468
          %9470 = vdwg.mxu0
          %9471 = vmatprep.subr.mxu0 0.0
          %9472 = vmatpush1.msra.mxu0 0.0
          %9473 = vmatprep.subr.mxu0 0.0
          %9474 = vmatpush1.msra.mxu0 0.0
          %9475 = vmatprep.subr.mxu0 0.0
          %9476 = vmatpush1.msra.mxu0 0.0
          %9477 = vmatprep.subr.mxu0 0.0
          %9478 = vmatpush1.msra.mxu0 0.0
          %9479 = vmatprep.subr.mxu0 0.0
          %9480 = vmatpush1.msra.mxu0 0.0
          %9481 = vmatprep.subr.mxu0 0.0
          %9482 = vmatpush1.msra.mxu0 0.0
          %9483 = vmatprep.subr.mxu0 0.0
          %9484 = vmatpush1.msra.mxu0 0.0
          %9485 = vmatprep.subr.mxu0 0.0
          %9486 = vmatpush1.msra.mxu0 0.0
          %9487 = vmatprep.subr.mxu0 0.0
          %9488 = vmatpush1.msra.mxu0 0.0
          %9489 = vmatprep.subr.mxu0 0.0
          %9490 = vmatpush1.msra.mxu0 0.0
          %9491 = vmatprep.subr.mxu0 0.0
          %9492 = vmatpush1.msra.mxu0 0.0
          %9493 = vmatprep.subr.mxu0 0.0
          %9494 = vmatpush1.msra.mxu0 0.0
          %9495 = vmatprep.subr.mxu0 0.0
          %9496 = vmatpush1.msra.mxu0 0.0
          %9497 = vmatprep.subr.mxu0 0.0
          %9498 = vmatpush1.msra.mxu0 0.0
          %9499 = vmatprep.subr.mxu0 0.0
          %9500 = vmatpush1.msra.mxu0 0.0
          %9501 = vmatprep.subr.mxu0 %v9398
          %9502 = vmatpush1.msra.mxu0 %v9395
          %9503 = vmatprep.subr.mxu0 0.0
          %9504 = vmatpush2.msra.mxu0 0.0
          %9505 = vmatprep.subr.mxu0 0.0
          %9506 = vmatpush2.msra.mxu0 0.0
          %9507 = vmatprep.subr.mxu0 0.0
          %9508 = vmatpush2.msra.mxu0 0.0
          %9509 = vmatprep.subr.mxu0 0.0
          %9510 = vmatpush2.msra.mxu0 0.0
          %9511 = vmatprep.subr.mxu0 0.0
          %9512 = vmatpush2.msra.mxu0 0.0
          %9513 = vmatprep.subr.mxu0 0.0
          %9514 = vmatpush2.msra.mxu0 0.0
          %9515 = vmatprep.subr.mxu0 0.0
          %9516 = vmatpush2.msra.mxu0 0.0
          %9517 = vmatprep.subr.mxu0 0.0
          %9518 = vmatpush2.msra.mxu0 0.0
          %9519 = vmatprep.subr.mxu0 0.0
          %9520 = vmatpush2.msra.mxu0 0.0
          %9521 = vmatprep.subr.mxu0 0.0
          %9522 = vmatpush2.msra.mxu0 0.0
          %9523 = vmatprep.subr.mxu0 0.0
          %9524 = vmatpush2.msra.mxu0 0.0
          %9525 = vmatprep.subr.mxu0 0.0
          %9526 = vmatpush2.msra.mxu0 0.0
          %9527 = vmatprep.subr.mxu0 0.0
          %9528 = vmatpush2.msra.mxu0 0.0
          %9529 = vmatprep.subr.mxu0 0.0
          %9530 = vmatpush2.msra.mxu0 0.0
          %9531 = vmatprep.subr.mxu0 0.0
          %9532 = vmatpush2.msra.mxu0 0.0
          %9533 = vmatprep.subr.mxu0 0.0
          %9534 = vmatpush2.msra.mxu0 0.0
          %9535 = vmatprep.mubr.f32.mxu0 0.0
          %9536 = vmatmul.mubr.f32.gmra.mxu0 %v9386
          %v9537 = vpop.f32.mrf.mxu0
          %v9538 = vadd.f32 0.0, %v9537
          %v9539 = vpop.f32.mrf.mxu0
          %v9540 = vadd.f32 0.0, %v9539
          %9541 = vdwg.mxu0
          %v9546 = vcombine.low %v9467, %v9469
          %v9547 = vcombine.low %v9538, %v9540
          %v9549 = vunpack.c.l.s4 1966171168
          %v9550 = vunpack.c.0.s8 %v9549
          %v9551 = vlaneseq
          %v9552 = vshrl.u32 %v9551, 7
          %v9553 = vsub.s32 %v9550, %v9552
          %v9554 = vrot.slane %v9546, %v9553
          %v9556 = vunpack.c.l.s4 1966171168
          %v9557 = vunpack.c.0.s8 %v9556
          %v9558 = vlaneseq
          %v9559 = vshrl.u32 %v9558, 7
          %v9560 = vsub.s32 %v9557, %v9559
          %v9561 = vrot.slane %v9547, %v9560
          %v9562 = vcombine.low %v9554, %v9561
          %v9564 = vunpack.c.l.s4 1966171168
          %v9565 = vunpack.c.0.s8 %v9564
          %v9566 = vlaneseq
          %v9567 = vshrl.u32 %v9566, 7
          %v9568 = vsub.s32 %v9565, %v9567
          %v9569 = vrot.slane %v9562, %v9568
          %v9571 = vadd.f32 %v9177, %v9569
          %v9572 = vmul.f32 %v9201, %v9571
          %v9573 = vmul.f32 %v9192, %v9202
          %v9574 = vadd.f32 %v9572, %v9573
          %v9575 = vtanh.pop %v9574
          %v9576 = vmul.f32 %v9211, %v9575
          %v9578 = vlaneseq
          %v9579 = vshrl.u32 %v9578, 7
          %v9580 = vsub.s32 0, %v9579
          %v9581 = vrot.slane %v9576, %v9580
          %v9582 = vlaneseq
          %v9583 = vshrl.u32 %v9582, 7
          %v9584 = vsub.s32 1, %v9583
          %v9585 = vrot.slane %v9576, %v9584
          %v9586 = vlaneseq
          %v9587 = vshrl.u32 %v9586, 7
          %v9588 = vsub.s32 2, %v9587
          %v9589 = vrot.slane %v9576, %v9588
          %v9590 = vlaneseq
          %v9591 = vshrl.u32 %v9590, 7
          %v9592 = vsub.s32 3, %v9591
          %v9593 = vrot.slane %v9576, %v9592
          %v9598 = vpack.c.bf16 %v9581, %v9581
          %v9599 = vpack.c.bf16 %v9585, %v9585
          %v9600 = vpack.c.bf16 %v9589, %v9589
          %v9601 = vpack.c.bf16 %v9593, %v9593
          %v9602 = vld [vmem:[#allocation12] sm:$0xf]
          %v9603 = vld [vmem:[#allocation12 + $0x4] sm:$0xf]
          %v9604 = vld [vmem:[#allocation12 + $0x8] sm:$0xf]
          %v9605 = vld [vmem:[#allocation12 + $0xc] sm:$0xf]
          %v9606 = vld [vmem:[#allocation12 + $0x10] sm:$0xf]
          %v9607 = vld [vmem:[#allocation12 + $0x14] sm:$0xf]
          %v9608 = vld [vmem:[#allocation12 + $0x18] sm:$0xf]
          %v9609 = vld [vmem:[#allocation12 + $0x1c] sm:$0xf]
          %v9610 = vld [vmem:[#allocation12 + $0x20] sm:$0xf]
          %v9611 = vld [vmem:[#allocation12 + $0x24] sm:$0xf]
          %v9612 = vld [vmem:[#allocation12 + $0x28] sm:$0xf]
          %v9613 = vld [vmem:[#allocation12 + $0x2c] sm:$0xf]
          %v9614 = vld [vmem:[#allocation12 + $0x30] sm:$0xf]
          %v9615 = vld [vmem:[#allocation12 + $0x34] sm:$0xf]
          %v9616 = vld [vmem:[#allocation12 + $0x38] sm:$0xf]
          %v9617 = vld [vmem:[#allocation12 + $0x3c] sm:$0xf]
          %v9618 = vld [vmem:[#allocation12 + $0x40] sm:$0xf]
          %v9619 = vld [vmem:[#allocation12 + $0x44] sm:$0xf]
          %v9620 = vld [vmem:[#allocation12 + $0x48] sm:$0xf]
          %v9621 = vld [vmem:[#allocation12 + $0x4c] sm:$0xf]
          %v9622 = vld [vmem:[#allocation12 + $0x50] sm:$0xf]
          %v9623 = vld [vmem:[#allocation12 + $0x54] sm:$0xf]
          %v9624 = vld [vmem:[#allocation12 + $0x58] sm:$0xf]
          %v9625 = vld [vmem:[#allocation12 + $0x5c] sm:$0xf]
          %v9626 = vld [vmem:[#allocation12 + $0x60] sm:$0xf]
          %v9627 = vld [vmem:[#allocation12 + $0x64] sm:$0xf]
          %v9628 = vld [vmem:[#allocation12 + $0x68] sm:$0xf]
          %v9629 = vld [vmem:[#allocation12 + $0x6c] sm:$0xf]
          %v9630 = vld [vmem:[#allocation12 + $0x70] sm:$0xf]
          %v9631 = vld [vmem:[#allocation12 + $0x74] sm:$0xf]
          %v9632 = vld [vmem:[#allocation12 + $0x78] sm:$0xf]
          %v9633 = vld [vmem:[#allocation12 + $0x7c] sm:$0xf]
          %v9634 = vld [vmem:[#allocation12 + $0x80] sm:$0xf]
          %v9635 = vld [vmem:[#allocation12 + $0x84] sm:$0xf]
          %v9636 = vld [vmem:[#allocation12 + $0x88] sm:$0xf]
          %v9637 = vld [vmem:[#allocation12 + $0x8c] sm:$0xf]
          %v9638 = vld [vmem:[#allocation12 + $0x90] sm:$0xf]
          %v9639 = vld [vmem:[#allocation12 + $0x94] sm:$0xf]
          %v9640 = vld [vmem:[#allocation12 + $0x98] sm:$0xf]
          %v9641 = vld [vmem:[#allocation12 + $0x9c] sm:$0xf]
          %v9642 = vld [vmem:[#allocation12 + $0xa0] sm:$0xf]
          %v9643 = vld [vmem:[#allocation12 + $0xa4] sm:$0xf]
          %v9644 = vld [vmem:[#allocation12 + $0xa8] sm:$0xf]
          %v9645 = vld [vmem:[#allocation12 + $0xac] sm:$0xf]
          %v9646 = vld [vmem:[#allocation12 + $0xb0] sm:$0xf]
          %v9647 = vld [vmem:[#allocation12 + $0xb4] sm:$0xf]
          %v9648 = vld [vmem:[#allocation12 + $0xb8] sm:$0xf]
          %v9649 = vld [vmem:[#allocation12 + $0xbc] sm:$0xf]
          %v9650 = vld [vmem:[#allocation12 + $0xc0] sm:$0xf]
          %v9651 = vld [vmem:[#allocation12 + $0xc4] sm:$0xf]
          %v9652 = vld [vmem:[#allocation12 + $0xc8] sm:$0xf]
          %v9653 = vld [vmem:[#allocation12 + $0xcc] sm:$0xf]
          %v9654 = vld [vmem:[#allocation12 + $0xd0] sm:$0xf]
          %v9655 = vld [vmem:[#allocation12 + $0xd4] sm:$0xf]
          %v9656 = vld [vmem:[#allocation12 + $0xd8] sm:$0xf]
          %v9657 = vld [vmem:[#allocation12 + $0xdc] sm:$0xf]
          %v9658 = vld [vmem:[#allocation12 + $0xe0] sm:$0xf]
          %v9659 = vld [vmem:[#allocation12 + $0xe4] sm:$0xf]
          %v9660 = vld [vmem:[#allocation12 + $0xe8] sm:$0xf]
          %v9661 = vld [vmem:[#allocation12 + $0xec] sm:$0xf]
          %v9662 = vld [vmem:[#allocation12 + $0xf0] sm:$0xf]
          %v9663 = vld [vmem:[#allocation12 + $0xf4] sm:$0xf]
          %v9664 = vld [vmem:[#allocation12 + $0xf8] sm:$0xf]
          %v9665 = vld [vmem:[#allocation12 + $0xfc] sm:$0xf]
          %v9666 = vld [vmem:[#allocation14] sm:$0x1]
          %v9731 = vunpack.c.l.b16 %v9602
          %v9732 = vunpack.c.l.b16 %v9603
          %v9733 = vunpack.c.l.b16 %v9604
          %v9734 = vunpack.c.l.b16 %v9605
          %v9735 = vunpack.c.l.b16 %v9606
          %v9736 = vunpack.c.l.b16 %v9607
          %v9737 = vunpack.c.l.b16 %v9608
          %v9738 = vunpack.c.l.b16 %v9609
          %v9739 = vunpack.c.l.b16 %v9610
          %v9740 = vunpack.c.l.b16 %v9611
          %v9741 = vunpack.c.l.b16 %v9612
          %v9742 = vunpack.c.l.b16 %v9613
          %v9743 = vunpack.c.l.b16 %v9614
          %v9744 = vunpack.c.l.b16 %v9615
          %v9745 = vunpack.c.l.b16 %v9616
          %v9746 = vunpack.c.l.b16 %v9617
          %v9747 = vunpack.c.l.b16 %v9618
          %v9748 = vunpack.c.l.b16 %v9619
          %v9749 = vunpack.c.l.b16 %v9620
          %v9750 = vunpack.c.l.b16 %v9621
          %v9751 = vunpack.c.l.b16 %v9622
          %v9752 = vunpack.c.l.b16 %v9623
          %v9753 = vunpack.c.l.b16 %v9624
          %v9754 = vunpack.c.l.b16 %v9625
          %v9755 = vunpack.c.l.b16 %v9626
          %v9756 = vunpack.c.l.b16 %v9627
          %v9757 = vunpack.c.l.b16 %v9628
          %v9758 = vunpack.c.l.b16 %v9629
          %v9759 = vunpack.c.l.b16 %v9630
          %v9760 = vunpack.c.l.b16 %v9631
          %v9761 = vunpack.c.l.b16 %v9632
          %v9762 = vunpack.c.l.b16 %v9633
          %v9763 = vunpack.c.l.b16 %v9634
          %v9764 = vunpack.c.l.b16 %v9635
          %v9765 = vunpack.c.l.b16 %v9636
          %v9766 = vunpack.c.l.b16 %v9637
          %v9767 = vunpack.c.l.b16 %v9638
          %v9768 = vunpack.c.l.b16 %v9639
          %v9769 = vunpack.c.l.b16 %v9640
          %v9770 = vunpack.c.l.b16 %v9641
          %v9771 = vunpack.c.l.b16 %v9642
          %v9772 = vunpack.c.l.b16 %v9643
          %v9773 = vunpack.c.l.b16 %v9644
          %v9774 = vunpack.c.l.b16 %v9645
          %v9775 = vunpack.c.l.b16 %v9646
          %v9776 = vunpack.c.l.b16 %v9647
          %v9777 = vunpack.c.l.b16 %v9648
          %v9778 = vunpack.c.l.b16 %v9649
          %v9779 = vunpack.c.l.b16 %v9650
          %v9780 = vunpack.c.l.b16 %v9651
          %v9781 = vunpack.c.l.b16 %v9652
          %v9782 = vunpack.c.l.b16 %v9653
          %v9783 = vunpack.c.l.b16 %v9654
          %v9784 = vunpack.c.l.b16 %v9655
          %v9785 = vunpack.c.l.b16 %v9656
          %v9786 = vunpack.c.l.b16 %v9657
          %v9787 = vunpack.c.l.b16 %v9658
          %v9788 = vunpack.c.l.b16 %v9659
          %v9789 = vunpack.c.l.b16 %v9660
          %v9790 = vunpack.c.l.b16 %v9661
          %v9791 = vunpack.c.l.b16 %v9662
          %v9792 = vunpack.c.l.b16 %v9663
          %v9793 = vunpack.c.l.b16 %v9664
          %v9794 = vunpack.c.l.b16 %v9665
          %v9795 = vpack.c.b16 %v9732, %v9731
          %v9796 = vpack.c.b16 %v9734, %v9733
          %v9797 = vpack.c.b16 %v9736, %v9735
          %v9798 = vpack.c.b16 %v9738, %v9737
          %v9799 = vpack.c.b16 %v9740, %v9739
          %v9800 = vpack.c.b16 %v9742, %v9741
          %v9801 = vpack.c.b16 %v9744, %v9743
          %v9802 = vpack.c.b16 %v9746, %v9745
          %v9803 = vpack.c.b16 %v9748, %v9747
          %v9804 = vpack.c.b16 %v9750, %v9749
          %v9805 = vpack.c.b16 %v9752, %v9751
          %v9806 = vpack.c.b16 %v9754, %v9753
          %v9807 = vpack.c.b16 %v9756, %v9755
          %v9808 = vpack.c.b16 %v9758, %v9757
          %v9809 = vpack.c.b16 %v9760, %v9759
          %v9810 = vpack.c.b16 %v9762, %v9761
          %v9811 = vpack.c.b16 %v9764, %v9763
          %v9812 = vpack.c.b16 %v9766, %v9765
          %v9813 = vpack.c.b16 %v9768, %v9767
          %v9814 = vpack.c.b16 %v9770, %v9769
          %v9815 = vpack.c.b16 %v9772, %v9771
          %v9816 = vpack.c.b16 %v9774, %v9773
          %v9817 = vpack.c.b16 %v9776, %v9775
          %v9818 = vpack.c.b16 %v9778, %v9777
          %v9819 = vpack.c.b16 %v9780, %v9779
          %v9820 = vpack.c.b16 %v9782, %v9781
          %v9821 = vpack.c.b16 %v9784, %v9783
          %v9822 = vpack.c.b16 %v9786, %v9785
          %v9823 = vpack.c.b16 %v9788, %v9787
          %v9824 = vpack.c.b16 %v9790, %v9789
          %v9825 = vpack.c.b16 %v9792, %v9791
          %v9826 = vpack.c.b16 %v9794, %v9793
          %9859 = vmatprep.subr.bf16.mxu0 0
          %9860 = vmatpush1.bf16.msra.mxu0 %v9802
          %9861 = vmatprep.subr.bf16.mxu0 0
          %9862 = vmatpush1.bf16.msra.mxu0 %v9801
          %9863 = vmatprep.subr.bf16.mxu0 0
          %9864 = vmatpush1.bf16.msra.mxu0 %v9800
          %9865 = vmatprep.subr.bf16.mxu0 0
          %9866 = vmatpush1.bf16.msra.mxu0 %v9799
          %9867 = vmatprep.subr.bf16.mxu0 0
          %9868 = vmatpush1.bf16.msra.mxu0 %v9798
          %9869 = vmatprep.subr.bf16.mxu0 0
          %9870 = vmatpush1.bf16.msra.mxu0 %v9797
          %9871 = vmatprep.subr.bf16.mxu0 0
          %9872 = vmatpush1.bf16.msra.mxu0 %v9796
          %9873 = vmatprep.subr.bf16.mxu0 0
          %9874 = vmatpush1.bf16.msra.mxu0 %v9795
          %9875 = vmatprep.subr.bf16.mxu0 0
          %9876 = vmatpush2.bf16.msra.mxu0 %v9810
          %9877 = vmatprep.subr.bf16.mxu0 0
          %9878 = vmatpush2.bf16.msra.mxu0 %v9809
          %9879 = vmatprep.subr.bf16.mxu0 0
          %9880 = vmatpush2.bf16.msra.mxu0 %v9808
          %9881 = vmatprep.subr.bf16.mxu0 0
          %9882 = vmatpush2.bf16.msra.mxu0 %v9807
          %9883 = vmatprep.subr.bf16.mxu0 0
          %9884 = vmatpush2.bf16.msra.mxu0 %v9806
          %9885 = vmatprep.subr.bf16.mxu0 0
          %9886 = vmatpush2.bf16.msra.mxu0 %v9805
          %9887 = vmatprep.subr.bf16.mxu0 0
          %9888 = vmatpush2.bf16.msra.mxu0 %v9804
          %9889 = vmatprep.subr.bf16.mxu0 0
          %9890 = vmatpush2.bf16.msra.mxu0 %v9803
          %9891 = vmatprep.mubr.bf16.mxu0 %v9599
          %9892 = vmatmul.mubr.bf16.gmra.mxu0 %v9598
          %v9893 = vpop.f32.mrf.mxu0
          %v9894 = vadd.f32 %v9666, %v9893
          %v9895 = vpop.f32.mrf.mxu0
          %v9896 = vpop.f32.mrf.mxu0
          %v9897 = vpop.f32.mrf.mxu0
          %9898 = vdwg.mxu0
          %9899 = vmatprep.subr.bf16.mxu0 0
          %9900 = vmatpush1.bf16.msra.mxu0 %v9818
          %9901 = vmatprep.subr.bf16.mxu0 0
          %9902 = vmatpush1.bf16.msra.mxu0 %v9817
          %9903 = vmatprep.subr.bf16.mxu0 0
          %9904 = vmatpush1.bf16.msra.mxu0 %v9816
          %9905 = vmatprep.subr.bf16.mxu0 0
          %9906 = vmatpush1.bf16.msra.mxu0 %v9815
          %9907 = vmatprep.subr.bf16.mxu0 0
          %9908 = vmatpush1.bf16.msra.mxu0 %v9814
          %9909 = vmatprep.subr.bf16.mxu0 0
          %9910 = vmatpush1.bf16.msra.mxu0 %v9813
          %9911 = vmatprep.subr.bf16.mxu0 0
          %9912 = vmatpush1.bf16.msra.mxu0 %v9812
          %9913 = vmatprep.subr.bf16.mxu0 0
          %9914 = vmatpush1.bf16.msra.mxu0 %v9811
          %9915 = vmatprep.subr.bf16.mxu0 0
          %9916 = vmatpush2.bf16.msra.mxu0 %v9826
          %9917 = vmatprep.subr.bf16.mxu0 0
          %9918 = vmatpush2.bf16.msra.mxu0 %v9825
          %9919 = vmatprep.subr.bf16.mxu0 0
          %9920 = vmatpush2.bf16.msra.mxu0 %v9824
          %9921 = vmatprep.subr.bf16.mxu0 0
          %9922 = vmatpush2.bf16.msra.mxu0 %v9823
          %9923 = vmatprep.subr.bf16.mxu0 0
          %9924 = vmatpush2.bf16.msra.mxu0 %v9822
          %9925 = vmatprep.subr.bf16.mxu0 0
          %9926 = vmatpush2.bf16.msra.mxu0 %v9821
          %9927 = vmatprep.subr.bf16.mxu0 0
          %9928 = vmatpush2.bf16.msra.mxu0 %v9820
          %9929 = vmatprep.subr.bf16.mxu0 0
          %9930 = vmatpush2.bf16.msra.mxu0 %v9819
          %9931 = vmatprep.mubr.bf16.mxu0 %v9601
          %9932 = vmatmul.mubr.bf16.gmra.mxu0 %v9600
          %v9933 = vpop.f32.mrf.mxu0
          %v9934 = vadd.f32 %v9894, %v9933
          %v9935 = vpop.f32.mrf.mxu0
          %v9936 = vpop.f32.mrf.mxu0
          %v9937 = vpop.f32.mrf.mxu0
          %9938 = vdwg.mxu0
          %9939 = vst [vmem:[%s13] sm:$0x1] %v9934
          %vm9940 = vcmp.lt.s32.totalorder %v4886, 512
          %vm9941 = vmand %vm4887, %vm9940
          %9942 = vst.msk [vmem:[%s14] ss:$2 sm:$0xf] %vm9941, %v5300
          %s9943 = scalar_lea.vmem %s14, 1
          %9944 = vst.msk [vmem:[%s9943] ss:$2 sm:$0xf] %vm9941, %v9576
          %9945 = vst.msk [vmem:[%s15] ss:$2 sm:$0xf] %vm9941, %v5298
          %s9946 = scalar_lea.vmem %s15, 1
          %9947 = vst.msk [vmem:[%s9946] ss:$2 sm:$0xf] %vm9941, %v9574
        $region132: #{_navigation_policy_step.1} parent=71 // pred_fallthru
          _
        // Predicated region
        $region133: #{_navigation_policy_step.1} parent=71 // pred_check
          %p9948 = pneg %p343
        $region134: #{_navigation_policy_step.1} parent=71 // pred_check_branch
          %9950 = sbr.rel (%p9948) target = $region136
        $region135: #{_navigation_policy_step.1} parent=71 // pred_region
          _
        $region136: #{_navigation_policy_step.1} parent=71 // pred_fallthru
          _
        // Predicated region
        $region137: #{_navigation_policy_step.1} parent=71 // pred_check
          %p9951 = pneg %p364
        $region138: #{_navigation_policy_step.1} parent=71 // pred_check_branch
          %9953 = sbr.rel (%p9951) target = $region140
        $region139: #{_navigation_policy_step.1} parent=71 // pred_region
          _
        $region140: #{_navigation_policy_step.1} parent=71 // pred_fallthru
          _
        // Predicated region
        $region141: #{_navigation_policy_step.1} parent=71 // pred_check
          %p9954 = pneg %p385
        $region142: #{_navigation_policy_step.1} parent=71 // pred_check_branch
          %9956 = sbr.rel (%p9954) target = $region144
        $region143: #{_navigation_policy_step.1} parent=71 // pred_region
          _
        $region144: #{_navigation_policy_step.1} parent=71 // pred_fallthru
          _
        // Predicated region
        $region145: #{_navigation_policy_step.1} parent=71 // pred_check
          %p9957 = pneg %p343
        $region146: #{_navigation_policy_step.1} parent=71 // pred_check_branch
          %9959 = sbr.rel (%p9957) target = $region148
        $region147: #{_navigation_policy_step.1} parent=71 // pred_region
          _
        $region148: #{_navigation_policy_step.1} parent=71 // pred_fallthru
          _
        // Predicated region
        $region149: #{_navigation_policy_step.1} parent=71 // pred_check
          %p9960 = pneg %p364
        $region150: #{_navigation_policy_step.1} parent=71 // pred_check_branch
          %9962 = sbr.rel (%p9960) target = $region152
        $region151: #{_navigation_policy_step.1} parent=71 // pred_region
          _
        $region152: #{_navigation_policy_step.1} parent=71 // pred_fallthru
          _
        // Predicated region
        $region153: #{_navigation_policy_step.1} parent=71 // pred_check
          %p9963 = pneg %p385
        $region154: #{_navigation_policy_step.1} parent=71 // pred_check_branch
          %9965 = sbr.rel (%p9963) target = $region156
        $region155: #{_navigation_policy_step.1} parent=71 // pred_region
          _
        $region156: #{_navigation_policy_step.1} parent=71 // pred_fallthru
          _
      $region72: #{_navigation_policy_step.1} parent=5 // pred_fallthru
        _
      %p9966 = scmp.le.s32.totalorder 2, %s32
      // Predicated region
      $region157: #{_navigation_policy_step.1} parent=5 // pred_check
        %p9967 = pneg %p9966
      $region158: #{_navigation_policy_step.1} parent=5 // pred_check_branch
        %9969 = sbr.rel (%p9967) target = $region160
      $region159: #{_navigation_policy_step.1} parent=5 // pred_region
        %s9970 = ssub.s32 %s32, 2
      $region160: #{_navigation_policy_step.1} parent=5 // pred_fallthru
        _
    $region6: #{_navigation_policy_step.1} parent=1 // loop_footer
      %s36 = sadd.s32 1, %s32
    $region7: #{_navigation_policy_step.1} parent=1 // loop_footer_branch
      %31 = sbr.rel target = $region3
    $region8: #{_navigation_policy_step.1} parent=1 // loop_exit
      _
    %9971 = vsyncpa [#allocation5], 1
    %s9972 = scalar_lea.sflag [#allocation5], 1
    %9973 = vsyncpa %s9972, 1
    %9974 = vsyncpa [#allocation7], 1
    %s9975 = scalar_lea.sflag [#allocation7], 1
    %9976 = vsyncpa %s9975, 1
    %9977 = vsyncpa [#allocation10], 1
    %s9978 = scalar_lea.sflag [#allocation10], 1
    %9979 = vsyncpa %s9978, 1
    %9980 = vsyncpa [#allocation13], 1

</llo_original>
